<compile_context>
chip_gen: v7x
topology: tpu7x:2x2x1
jax: 0.10.0
libtpu: 0.0.40
codegen_flags: <defaults>
</compile_context>

<pallas_src>
import jax
import jax.numpy as jnp
from jax import lax
from jax.experimental import pallas as pl
from jax.experimental.pallas import tpu as pltpu

# ---------------- configuration (small synthetic shapes) ----------------
B = 4          # batch (discourses)
BB = 2         # discourses per grid step (row-batching factor; B % BB == 0)
S = 2          # sentences per discourse
L = 32         # words per sentence (max_sent_len)
H = 128        # hidden_size (module default)
MID = 128      # MLP / attention mid_size
NUM_LOOP = 4   # gnn loops (module default is 10; reduced for the demo)
VOCAB = 50
M = 4          # coref mentions per discourse
KWIN = 16      # prediction window size (module default is 400; reduced for demo)
KPAD = 128     # lane-dense padded window width for the output store
T = S * L      # linearized discourse length (64)
R = BB * T     # matmul rows per grid step (128)
H3 = 3 * H


# -------- fused kernel: GNN loop + MLP + attention + window softmax (per BB block) --------
def gnn_fused_kernel(pos_smem, x_ref, adj_ref,
                     gw_ref, gb_ref, wih_ref, bih_ref, whh_ref, bhh_ref,
                     mw1_ref, mb1_ref, mw2_ref, mb2_ref, mw3_ref, mb3_ref,
                     aw1_ref, ab1_ref, aw2_ref, ab2_ref,
                     out_ref,
                     node_scr, ms_scr, sp_scr):
    f32 = jnp.float32
    h0 = x_ref[...].reshape(R, H)          # [BB*T, H] embedded words of this block
    adj = adj_ref[...]                     # [BB, T, T] block-diag per-discourse adjacency
    gw, gb = gw_ref[...], gb_ref[...]
    wih, bih = wih_ref[...], bih_ref[...]
    whh, bhh = whh_ref[...], bhh_ref[...]

    # ---- GNN message-passing loop (unrolled; zero-free GRU: two dots + VPU gates) ----
    def gnn_body(_, h):
        tmp = jnp.dot(h, gw, preferred_element_type=f32) + gb                 # [R, H]
        new = jnp.einsum('bij,bjh->bih', adj, tmp.reshape(BB, T, H),
                         preferred_element_type=f32).reshape(R, H)            # block-diag adj
        gi = jnp.dot(new, wih, preferred_element_type=f32) + bih              # [R, 3H]
        gh = jnp.dot(h, whh, preferred_element_type=f32) + bhh                # [R, 3H]
        r = jax.nn.sigmoid(gi[:, 0:H] + gh[:, 0:H])
        z = jax.nn.sigmoid(gi[:, H:2 * H] + gh[:, H:2 * H])
        n = jnp.tanh(gi[:, 2 * H:] + r * gh[:, 2 * H:])
        return (1.0 - z) * n + z * h

    node = lax.fori_loop(0, NUM_LOOP, gnn_body, h0, unroll=True)              # [R, H]
    node_scr[...] = node                       # scratch copy for scalar-indexed gathers

    # ---- mention-predictor MLP (3 layers, tanh) ----
    h1 = jnp.tanh(jnp.dot(node, mw1_ref[...], preferred_element_type=f32) + mb1_ref[...])
    h2 = jnp.tanh(jnp.dot(h1, mw2_ref[...], preferred_element_type=f32) + mb2_ref[...])
    ms = jnp.tanh(jnp.dot(h2, mw3_ref[...], preferred_element_type=f32) + mb3_ref[...])  # [R,1]
    ms_scr[...] = ms

    # ---- attention value projection for the whole block ----
    tv = jnp.dot(node, aw2_ref[...], preferred_element_type=f32) + ab2_ref[...]          # [R,MID]

    # ---- mention gathers via SMEM positions + dynamic-slice reads (no one-hot matmul) ----
    bblk = pl.program_id(0)
    mf_rows, msm_vals, ps = [], [], []
    for b in range(BB):
        for j in range(M):
            p = pos_smem[bblk * BB + b, j]        # int32 scalar from SMEM
            ps.append(p)
            gp = b * T + p
            mf_rows.append(node_scr[pl.ds(gp, 1), :])   # [1, H]
            msm_vals.append(ms_scr[pl.ds(gp, 1), :])    # [1, 1]
    mf_all = jnp.concatenate(mf_rows, axis=0)                                  # [BB*M, H]
    tk_all = jnp.dot(mf_all, aw1_ref[...], preferred_element_type=f32) + ab1_ref[...]

    # attention, transposed so the window axis lands on sublanes: att_t[b, t, m]
    att_all = jnp.einsum('btq,bmq->btm', tv.reshape(BB, T, MID),
                         tk_all.reshape(BB, M, MID), preferred_element_type=f32)

    lane1 = lax.broadcasted_iota(jnp.int32, (1, M), 1)
    lane_m = lax.broadcasted_iota(jnp.int32, (KWIN, M), 1)
    eye_k = (lax.broadcasted_iota(jnp.int32, (KWIN, KWIN), 0) ==
             lax.broadcasted_iota(jnp.int32, (KWIN, KWIN), 1)).astype(f32)

    # -10 prefix rows of the padded score (== the original concat(-10 block) semantics)
    sp_scr[0:KWIN, :] = jnp.full((KWIN, M), -10.0, f32)

    for b in range(BB):
        msm_row = jnp.zeros((1, M), f32)
        for j in range(M):
            msm_row = jnp.where(lane1 == j, msm_vals[b * M + j], msm_row)      # [1, M]
        score_t = att_all[b] + ms[b * T:(b + 1) * T, :] + msm_row              # [T, M]
        sp_scr[KWIN:KWIN + T, :] = score_t

        # per-mention K-window gather: dynamic sublane slice, O(M*KWIN) work
        win_t = jnp.zeros((KWIN, M), f32)
        for j in range(M):
            sl = sp_scr[pl.ds(ps[b * M + j], KWIN), :]                          # [KWIN, M]
            win_t = jnp.where(lane_m == j, sl, win_t)

        # softmax over the window (sublane axis), EUP reciprocal
        mx = jnp.max(win_t, axis=0, keepdims=True)
        e = jnp.exp(win_t - mx)
        den = jnp.sum(e, axis=0, keepdims=True)
        prob_t = e * pl.reciprocal(den, approx=True)                            # [KWIN, M]

        # transpose to [M, KWIN] via an identity contraction (MXU, no relayout risk)
        prob = lax.dot_general(prob_t, eye_k, (((0,), (0,)), ((), ())),
                               preferred_element_type=f32)                      # [M, KWIN]

        out_ref[b] = jnp.zeros((M, KPAD), f32)       # lane-dense block, padded lanes = 0
        out_ref[b, :, 0:KWIN] = prob


def run_gnn_fused(pos, node_emb_bt, adj_bd, params):
    assert B % BB == 0
    # one-time host-side weight prep: fold bilinear A into W1 / b1
    aw1p = jnp.dot(params["att_w1"], params["att_A"])
    ab1p = jnp.dot(params["att_b1"], params["att_A"])

    def blk(shape):   # grid-invariant weight operand (constant index_map -> not re-fetched)
        return pl.BlockSpec(shape, lambda i, pos_ref: (0,) * len(shape))

    in_specs = [
        pl.BlockSpec((BB, T, H), lambda i, pos_ref: (i, 0, 0)),   # embedded words
        pl.BlockSpec((BB, T, T), lambda i, pos_ref: (i, 0, 0)),   # block-diag adjacency
        blk((H, H)), blk((1, H)),                                 # gnn_w, gnn_b
        blk((H, H3)), blk((1, H3)), blk((H, H3)), blk((1, H3)),   # GRU W_ih/b_ih, W_hh/b_hh
        blk((H, MID)), blk((1, MID)), blk((MID, MID)), blk((1, MID)),  # mp layers 1-2
        blk((MID, 1)), blk((1, 1)),                               # mp layer 3
        blk((H, MID)), blk((1, MID)), blk((H, MID)), blk((1, MID)),    # att W1@A/b1@A, W2/b2
    ]
    grid_spec = pltpu.PrefetchScalarGridSpec(
        num_scalar_prefetch=1,                 # pos -> SMEM, visible to kernel + index maps
        grid=(B // BB,),
        in_specs=in_specs,
        out_specs=pl.BlockSpec((BB, M, KPAD), lambda i, pos_ref: (i, 0, 0)),
        scratch_shapes=[
            pltpu.VMEM((R, H), jnp.float32),         # node features (for row gathers)
            pltpu.VMEM((R, 1), jnp.float32),         # mention scores (for scalar gathers)
            pltpu.VMEM((KWIN + T, M), jnp.float32),  # [-10 | score] padded, window on sublanes
        ])
    # NOTE: demo footprint is far below the scoped VMEM limit; raise vmem_limit_bytes
    # here if BB / T grow at production sizes (especially on v7x's 64 MiB VMEM).
    return pl.pallas_call(
        gnn_fused_kernel,
        out_shape=jax.ShapeDtypeStruct((B, M, KPAD), jnp.float32),
        grid_spec=grid_spec,
        compiler_params=pltpu.CompilerParams(dimension_semantics=("parallel",)),
    )(pos, node_emb_bt, adj_bd,
      params["gnn_w"], params["gnn_b"].reshape(1, H),
      params["gru_wih_t"], params["gru_bih"].reshape(1, H3),
      params["gru_whh_t"], params["gru_bhh"].reshape(1, H3),
      params["mp_w1"], params["mp_b1"], params["mp_w2"], params["mp_b2"],
      params["mp_w3"], params["mp_b3"],
      aw1p, ab1p, params["att_w2"], params["att_b2"])


# ---------------- forward pass (thin glue around the fused kernel) ----------------
def gnn_forward(params, input_var, adjacency, linearized_coref_pos,
                linearized_last_coref):
    # TODO(synk): ragged list_padding / get_linearized_pos / coreference index
    # resolution over batch.index strings is host-side Python over ragged data and
    # stays in Python; here all sentences are full length so padding is identity.
    node_emb = jnp.take(params["emb"], input_var, axis=0).astype(jnp.float32)  # [B,S,L,H]
    node_emb_bt = node_emb.reshape(B, T, H)
    adj = adjacency.astype(jnp.float32)                                        # [B,S,L,L]
    # block-diagonal per-discourse adjacency [B, T, T] (one-time host op)
    eye_s = jnp.eye(S, dtype=jnp.float32)
    adj_bd = (adj[:, :, :, None, :] * eye_s[None, :, None, :, None]).reshape(B, T, T)
    pos = jnp.asarray(linearized_coref_pos, dtype=jnp.int32).reshape(B, M)

    out_pad = run_gnn_fused(pos, node_emb_bt, adj_bd, params)   # [B, M, KPAD]
    result = out_pad[:, :, :KWIN]                               # drop lane padding

    # target computation is pure Python arithmetic, as in the original module
    target = [[int(sample[i] != -1) * (KWIN - 1 + sample[i] - linearized_coref_pos[j][i])
               for i in range(len(sample))]
              for j, sample in enumerate(linearized_last_coref)]
    return result, target


# ---------------- pure-JAX reference (mirrors the PyTorch module math) ----------------
def reference_forward(params, input_var, adjacency, linearized_coref_pos):
    P = lax.Precision.HIGHEST
    nf = jnp.take(params["emb"], input_var, axis=0).astype(jnp.float32)      # [B,S,L,H]
    adj = adjacency.astype(jnp.float32)
    wih, whh = params["gru_wih_t"], params["gru_whh_t"]
    bih, bhh = params["gru_bih"], params["gru_bhh"]
    for _ in range(NUM_LOOP):
        tmp = jnp.einsum('bslh,hk->bslk', nf, params["gnn_w"], precision=P) + params["gnn_b"]
        new = jnp.einsum('bsij,bsjh->bsih', adj, tmp, precision=P)
        x2 = new.reshape(-1, H)
        h2 = nf.reshape(-1, H)
        gi = jnp.dot(x2, wih, precision=P) + bih
        gh = jnp.dot(h2, whh, precision=P) + bhh
        r = jax.nn.sigmoid(gi[:, :H] + gh[:, :H])
        z = jax.nn.sigmoid(gi[:, H:2 * H] + gh[:, H:2 * H])
        n = jnp.tanh(gi[:, 2 * H:] + r * gh[:, 2 * H:])
        nf = ((1.0 - z) * n + z * h2).reshape(B, S, L, H)
    node = nf.reshape(B, T, H)
    t1 = jnp.tanh(jnp.einsum('bth,hm->btm', node, params["mp_w1"], precision=P) + params["mp_b1"])
    t2 = jnp.tanh(jnp.einsum('btm,mk->btk', t1, params["mp_w2"], precision=P) + params["mp_b2"])
    ms = jnp.tanh(jnp.einsum('btm,mo->bto', t2, params["mp_w3"], precision=P)[..., 0]
                  + params["mp_b3"][0, 0])                                   # [B, T]
    pos = jnp.asarray(linearized_coref_pos, dtype=jnp.int32)
    bidx = jnp.arange(B)[:, None]
    mf = node[bidx, pos]                                                     # [B,M,H]
    msm = ms[bidx, pos]                                                      # [B,M]
    tk = jnp.einsum('bmh,hq->bmq', mf, params["att_w1"], precision=P) + params["att_b1"]
    tv = jnp.einsum('bth,hq->btq', node, params["att_w2"], precision=P) + params["att_b2"]
    tka = jnp.einsum('bmq,qr->bmr', tk, params["att_A"], precision=P)
    att = jnp.einsum('bmr,btr->bmt', tka, tv, precision=P)
    score = att + msm[..., None] + ms[:, None, :]
    score_cat = jnp.concatenate([jnp.full((B, M, KWIN), -10.0, jnp.float32), score], axis=-1)
    rows = []
    for i in range(B):
        rows.append(jnp.stack([score_cat[i, j, linearized_coref_pos[i][j]:
                                          linearized_coref_pos[i][j] + KWIN]
                               for j in range(M)]))
    return jax.nn.softmax(jnp.stack(rows), axis=-1)


# ---------------- deterministic parameter / input construction ----------------
def build_params(key):
    ks = jax.random.split(key, 20)
    u = lambda k, shape, a: jax.random.uniform(k, shape, jnp.float32, -a, a)
    bound = 1.0 / (H ** 0.5)
    return {
        "emb": jax.random.normal(ks[0], (VOCAB, H), jnp.float32),
        "gnn_w": u(ks[1], (H, H), 0.1),
        "gnn_b": u(ks[2], (H,), 0.1),
        # GRUCell weights pre-transposed to [H, 3H], gate order (r, z, n)
        "gru_wih_t": u(ks[3], (H, H3), bound),
        "gru_whh_t": u(ks[4], (H, H3), bound),
        "gru_bih": u(ks[5], (H3,), bound),
        "gru_bhh": u(ks[6], (H3,), bound),
        # mention_predictor MLP(3, H, 1): H->MID->MID->1, uniform(-0.08, 0.08)
        "mp_w1": u(ks[7], (H, MID), 0.08),
        "mp_b1": u(ks[8], (1, MID), 0.08),
        "mp_w2": u(ks[9], (MID, MID), 0.08),
        "mp_b2": u(ks[10], (1, MID), 0.08),
        "mp_w3": u(ks[11], (MID, 1), 0.08),
        "mp_b3": u(ks[12], (1, 1), 0.08),
        # attention: W1/W2 Linear(H, MID), A [MID, MID], uniform(-0.1, 0.1)
        "att_w1": u(ks[13], (H, MID), 0.1),
        "att_b1": u(ks[14], (1, MID), 0.1),
        "att_w2": u(ks[15], (H, MID), 0.1),
        "att_b2": u(ks[16], (1, MID), 0.1),
        "att_A": u(ks[17], (MID, MID), 0.1),
    }


if __name__ == "__main__":
    key = jax.random.PRNGKey(0)
    pkey, ikey, akey = jax.random.split(key, 3)
    params = build_params(pkey)

    # synthetic "batch": token ids and per-sentence adjacency matrices
    input_var = jax.random.randint(ikey, (B, S, L), 0, VOCAB, dtype=jnp.int32)
    adj_rand = jax.random.uniform(akey, (B, S, L, L))
    adjacency = (adj_rand > 0.6).astype(jnp.float32)
    adjacency = jnp.maximum(adjacency, jnp.swapaxes(adjacency, -1, -2))  # symmetric 0/1

    # synthetic gold-mention coreference bookkeeping (host-side lists, as in the module)
    linearized_coref_pos = [[1, 5, 20, 45], [0, 7, 33, 60],
                            [2, 10, 18, 40], [3, 15, 37, 63]]
    linearized_last_coref = [[-1, 1, -1, 20], [-1, 0, 7, -1],
                             [-1, 2, -1, 18], [-1, 3, 15, 37]]

    result, target = gnn_forward(params, input_var, adjacency,
                                 linearized_coref_pos, linearized_last_coref)
    result = jax.block_until_ready(result)

    ref = reference_forward(params, input_var, adjacency, linearized_coref_pos)

    assert result.shape == (B, M, KWIN)
    assert bool(jnp.all(jnp.isfinite(result)))
    assert bool(jnp.allclose(jnp.sum(result, axis=-1), 1.0, atol=5e-3))
    assert bool(jnp.allclose(result, ref, atol=1e-2, rtol=1e-2))
    print("KERNEL_OK")
</pallas_src>

<mosaic_0001>
module attributes {stable_mosaic.version = 11 : i64} {
  func.func @gnn_fused_kernel(%arg0: i32, %arg1: memref<4x4xi32, #tpu.memory_space<smem>>, %arg2: memref<2x64x128xf32, #tpu.memory_space<vmem>>, %arg3: memref<2x64x64xf32, #tpu.memory_space<vmem>>, %arg4: memref<128x128xf32, #tpu.memory_space<vmem>>, %arg5: memref<1x128xf32, #tpu.memory_space<vmem>>, %arg6: memref<128x384xf32, #tpu.memory_space<vmem>>, %arg7: memref<1x384xf32, #tpu.memory_space<vmem>>, %arg8: memref<128x384xf32, #tpu.memory_space<vmem>>, %arg9: memref<1x384xf32, #tpu.memory_space<vmem>>, %arg10: memref<128x128xf32, #tpu.memory_space<vmem>>, %arg11: memref<1x128xf32, #tpu.memory_space<vmem>>, %arg12: memref<128x128xf32, #tpu.memory_space<vmem>>, %arg13: memref<1x128xf32, #tpu.memory_space<vmem>>, %arg14: memref<128x1xf32, #tpu.memory_space<vmem>>, %arg15: memref<1x1xf32, #tpu.memory_space<vmem>>, %arg16: memref<128x128xf32, #tpu.memory_space<vmem>>, %arg17: memref<1x128xf32, #tpu.memory_space<vmem>>, %arg18: memref<128x128xf32, #tpu.memory_space<vmem>>, %arg19: memref<1x128xf32, #tpu.memory_space<vmem>>, %arg20: memref<2x4x128xf32, #tpu.memory_space<vmem>>, %arg21: memref<128x128xf32, #tpu.memory_space<vmem>>, %arg22: memref<128x1xf32, #tpu.memory_space<vmem>>, %arg23: memref<80x4xf32, #tpu.memory_space<vmem>>) attributes {dimension_semantics = [#tpu.dimension_semantics<parallel>], iteration_bounds = array<i64: 2>, scalar_prefetch = 1 : i64, scratch_operands = 3 : i64, tpu.core_type = #tpu.core_type<tc>, window_params = [{transform_indices = @transform_0, window_bounds = array<i64: 2, 64, 128>}, {transform_indices = @transform_1, window_bounds = array<i64: 2, 64, 64>}, {pipeline_mode = #tpu.pipeline_mode<synchronous>, transform_indices = @transform_2, window_bounds = array<i64: 128, 128>}, {pipeline_mode = #tpu.pipeline_mode<synchronous>, transform_indices = @transform_3, window_bounds = array<i64: 1, 128>}, {pipeline_mode = #tpu.pipeline_mode<synchronous>, transform_indices = @transform_4, window_bounds = array<i64: 128, 384>}, {pipeline_mode = #tpu.pipeline_mode<synchronous>, transform_indices = @transform_5, window_bounds = array<i64: 1, 384>}, {pipeline_mode = #tpu.pipeline_mode<synchronous>, transform_indices = @transform_6, window_bounds = array<i64: 128, 384>}, {pipeline_mode = #tpu.pipeline_mode<synchronous>, transform_indices = @transform_7, window_bounds = array<i64: 1, 384>}, {pipeline_mode = #tpu.pipeline_mode<synchronous>, transform_indices = @transform_8, window_bounds = array<i64: 128, 128>}, {pipeline_mode = #tpu.pipeline_mode<synchronous>, transform_indices = @transform_9, window_bounds = array<i64: 1, 128>}, {pipeline_mode = #tpu.pipeline_mode<synchronous>, transform_indices = @transform_10, window_bounds = array<i64: 128, 128>}, {pipeline_mode = #tpu.pipeline_mode<synchronous>, transform_indices = @transform_11, window_bounds = array<i64: 1, 128>}, {pipeline_mode = #tpu.pipeline_mode<synchronous>, transform_indices = @transform_12, window_bounds = array<i64: 128, 1>}, {pipeline_mode = #tpu.pipeline_mode<synchronous>, transform_indices = @transform_13, window_bounds = array<i64: 1, 1>}, {pipeline_mode = #tpu.pipeline_mode<synchronous>, transform_indices = @transform_14, window_bounds = array<i64: 128, 128>}, {pipeline_mode = #tpu.pipeline_mode<synchronous>, transform_indices = @transform_15, window_bounds = array<i64: 1, 128>}, {pipeline_mode = #tpu.pipeline_mode<synchronous>, transform_indices = @transform_16, window_bounds = array<i64: 128, 128>}, {pipeline_mode = #tpu.pipeline_mode<synchronous>, transform_indices = @transform_17, window_bounds = array<i64: 1, 128>}, {transform_indices = @transform_18, window_bounds = array<i64: 2, 4, 128>}]} {
    %c0 = arith.constant 0 : index
    %c0_0 = arith.constant 0 : index
    %c0_1 = arith.constant 0 : index
    %0 = vector.load %arg2[%c0, %c0_0, %c0_1] : memref<2x64x128xf32, #tpu.memory_space<vmem>>, vector<2x64x128xf32>
    %1 = vector.shape_cast %0 : vector<2x64x128xf32> to vector<128x128xf32>
    %c0_2 = arith.constant 0 : index
    %c0_3 = arith.constant 0 : index
    %c0_4 = arith.constant 0 : index
    %2 = vector.load %arg3[%c0_2, %c0_3, %c0_4] : memref<2x64x64xf32, #tpu.memory_space<vmem>>, vector<2x64x64xf32>
    %c0_5 = arith.constant 0 : index
    %c0_6 = arith.constant 0 : index
    %3 = vector.load %arg4[%c0_5, %c0_6] : memref<128x128xf32, #tpu.memory_space<vmem>>, vector<128x128xf32>
    %c0_7 = arith.constant 0 : index
    %c0_8 = arith.constant 0 : index
    %4 = vector.load %arg5[%c0_7, %c0_8] : memref<1x128xf32, #tpu.memory_space<vmem>>, vector<1x128xf32>
    %c0_9 = arith.constant 0 : index
    %c0_10 = arith.constant 0 : index
    %5 = vector.load %arg6[%c0_9, %c0_10] : memref<128x384xf32, #tpu.memory_space<vmem>>, vector<128x384xf32>
    %c0_11 = arith.constant 0 : index
    %c0_12 = arith.constant 0 : index
    %6 = vector.load %arg7[%c0_11, %c0_12] : memref<1x384xf32, #tpu.memory_space<vmem>>, vector<1x384xf32>
    %c0_13 = arith.constant 0 : index
    %c0_14 = arith.constant 0 : index
    %7 = vector.load %arg8[%c0_13, %c0_14] : memref<128x384xf32, #tpu.memory_space<vmem>>, vector<128x384xf32>
    %c0_15 = arith.constant 0 : index
    %c0_16 = arith.constant 0 : index
    %8 = vector.load %arg9[%c0_15, %c0_16] : memref<1x384xf32, #tpu.memory_space<vmem>>, vector<1x384xf32>
    %c0_i32 = arith.constant 0 : i32
    %cst = arith.constant dense<0.000000e+00> : vector<128x128xf32>
    %9 = tpu.matmul %1, %3, %cst {dimension_numbers = #tpu.dot_dimension_numbers<[1], [0], [0], [1], [0, 0, 1, 1], [], []>} : vector<128x128xf32>, vector<128x128xf32>, vector<128x128xf32> -> vector<128x128xf32>
    %10 = vector.broadcast %4 : vector<1x128xf32> to vector<128x128xf32>
    %11 = arith.addf %9, %10 : vector<128x128xf32>
    %12 = vector.shape_cast %11 : vector<128x128xf32> to vector<2x64x128xf32>
    "tpu.trace_start"() <{level = 10 : i32, message = "bij,bjh->bih"}> : () -> ()
    %cst_17 = arith.constant dense<0.000000e+00> : vector<2x64x128xf32>
    %13 = tpu.matmul %2, %12, %cst_17 {dimension_numbers = #tpu.dot_dimension_numbers<[2], [1], [1], [2], [0, 0, 0, 1, 1, 2], [0], [0]>} : vector<2x64x64xf32>, vector<2x64x128xf32>, vector<2x64x128xf32> -> vector<2x64x128xf32>
    "tpu.trace_stop"() : () -> ()
    %14 = vector.shape_cast %13 : vector<2x64x128xf32> to vector<128x128xf32>
    %cst_18 = arith.constant dense<0.000000e+00> : vector<128x384xf32>
    %15 = tpu.matmul %14, %5, %cst_18 {dimension_numbers = #tpu.dot_dimension_numbers<[1], [0], [0], [1], [0, 0, 1, 1], [], []>} : vector<128x128xf32>, vector<128x384xf32>, vector<128x384xf32> -> vector<128x384xf32>
    %16 = vector.broadcast %6 : vector<1x384xf32> to vector<128x384xf32>
    %17 = arith.addf %15, %16 : vector<128x384xf32>
    %cst_19 = arith.constant dense<0.000000e+00> : vector<128x384xf32>
    %18 = tpu.matmul %1, %7, %cst_19 {dimension_numbers = #tpu.dot_dimension_numbers<[1], [0], [0], [1], [0, 0, 1, 1], [], []>} : vector<128x128xf32>, vector<128x384xf32>, vector<128x384xf32> -> vector<128x384xf32>
    %19 = vector.broadcast %8 : vector<1x384xf32> to vector<128x384xf32>
    %20 = arith.addf %18, %19 : vector<128x384xf32>
    %21 = vector.extract_strided_slice %17 {offsets = [0, 0], sizes = [128, 128], strides = [1, 1]} : vector<128x384xf32> to vector<128x128xf32>
    %22 = vector.extract_strided_slice %20 {offsets = [0, 0], sizes = [128, 128], strides = [1, 1]} : vector<128x384xf32> to vector<128x128xf32>
    %23 = arith.addf %21, %22 : vector<128x128xf32>
    %24 = arith.negf %23 : vector<128x128xf32>
    %25 = math.exp %24 : vector<128x128xf32>
    %cst_20 = arith.constant 1.000000e+00 : f32
    %26 = vector.broadcast %cst_20 : f32 to vector<128x128xf32>
    %27 = arith.addf %26, %25 : vector<128x128xf32>
    %28 = arith.divf %26, %27 : vector<128x128xf32>
    %29 = vector.extract_strided_slice %17 {offsets = [0, 128], sizes = [128, 128], strides = [1, 1]} : vector<128x384xf32> to vector<128x128xf32>
    %30 = vector.extract_strided_slice %20 {offsets = [0, 128], sizes = [128, 128], strides = [1, 1]} : vector<128x384xf32> to vector<128x128xf32>
    %31 = arith.addf %29, %30 : vector<128x128xf32>
    %32 = arith.negf %31 : vector<128x128xf32>
    %33 = math.exp %32 : vector<128x128xf32>
    %cst_21 = arith.constant 1.000000e+00 : f32
    %34 = vector.broadcast %cst_21 : f32 to vector<128x128xf32>
    %35 = arith.addf %34, %33 : vector<128x128xf32>
    %36 = arith.divf %34, %35 : vector<128x128xf32>
    %37 = vector.extract_strided_slice %17 {offsets = [0, 256], sizes = [128, 128], strides = [1, 1]} : vector<128x384xf32> to vector<128x128xf32>
    %38 = vector.extract_strided_slice %20 {offsets = [0, 256], sizes = [128, 128], strides = [1, 1]} : vector<128x384xf32> to vector<128x128xf32>
    %39 = arith.mulf %28, %38 : vector<128x128xf32>
    %40 = arith.addf %37, %39 : vector<128x128xf32>
    %41 = math.tanh %40 : vector<128x128xf32>
    %cst_22 = arith.constant 1.000000e+00 : f32
    %42 = vector.broadcast %cst_22 : f32 to vector<128x128xf32>
    %43 = arith.subf %42, %36 : vector<128x128xf32>
    %44 = arith.mulf %43, %41 : vector<128x128xf32>
    %45 = arith.mulf %36, %1 : vector<128x128xf32>
    %46 = arith.addf %44, %45 : vector<128x128xf32>
    %c1_i32 = arith.constant 1 : i32
    %cst_23 = arith.constant dense<0.000000e+00> : vector<128x128xf32>
    %47 = tpu.matmul %46, %3, %cst_23 {dimension_numbers = #tpu.dot_dimension_numbers<[1], [0], [0], [1], [0, 0, 1, 1], [], []>} : vector<128x128xf32>, vector<128x128xf32>, vector<128x128xf32> -> vector<128x128xf32>
    %48 = vector.broadcast %4 : vector<1x128xf32> to vector<128x128xf32>
    %49 = arith.addf %47, %48 : vector<128x128xf32>
    %50 = vector.shape_cast %49 : vector<128x128xf32> to vector<2x64x128xf32>
    "tpu.trace_start"() <{level = 10 : i32, message = "bij,bjh->bih"}> : () -> ()
    %cst_24 = arith.constant dense<0.000000e+00> : vector<2x64x128xf32>
    %51 = tpu.matmul %2, %50, %cst_24 {dimension_numbers = #tpu.dot_dimension_numbers<[2], [1], [1], [2], [0, 0, 0, 1, 1, 2], [0], [0]>} : vector<2x64x64xf32>, vector<2x64x128xf32>, vector<2x64x128xf32> -> vector<2x64x128xf32>
    "tpu.trace_stop"() : () -> ()
    %52 = vector.shape_cast %51 : vector<2x64x128xf32> to vector<128x128xf32>
    %cst_25 = arith.constant dense<0.000000e+00> : vector<128x384xf32>
    %53 = tpu.matmul %52, %5, %cst_25 {dimension_numbers = #tpu.dot_dimension_numbers<[1], [0], [0], [1], [0, 0, 1, 1], [], []>} : vector<128x128xf32>, vector<128x384xf32>, vector<128x384xf32> -> vector<128x384xf32>
    %54 = vector.broadcast %6 : vector<1x384xf32> to vector<128x384xf32>
    %55 = arith.addf %53, %54 : vector<128x384xf32>
    %cst_26 = arith.constant dense<0.000000e+00> : vector<128x384xf32>
    %56 = tpu.matmul %46, %7, %cst_26 {dimension_numbers = #tpu.dot_dimension_numbers<[1], [0], [0], [1], [0, 0, 1, 1], [], []>} : vector<128x128xf32>, vector<128x384xf32>, vector<128x384xf32> -> vector<128x384xf32>
    %57 = vector.broadcast %8 : vector<1x384xf32> to vector<128x384xf32>
    %58 = arith.addf %56, %57 : vector<128x384xf32>
    %59 = vector.extract_strided_slice %55 {offsets = [0, 0], sizes = [128, 128], strides = [1, 1]} : vector<128x384xf32> to vector<128x128xf32>
    %60 = vector.extract_strided_slice %58 {offsets = [0, 0], sizes = [128, 128], strides = [1, 1]} : vector<128x384xf32> to vector<128x128xf32>
    %61 = arith.addf %59, %60 : vector<128x128xf32>
    %62 = arith.negf %61 : vector<128x128xf32>
    %63 = math.exp %62 : vector<128x128xf32>
    %cst_27 = arith.constant 1.000000e+00 : f32
    %64 = vector.broadcast %cst_27 : f32 to vector<128x128xf32>
    %65 = arith.addf %64, %63 : vector<128x128xf32>
    %66 = arith.divf %64, %65 : vector<128x128xf32>
    %67 = vector.extract_strided_slice %55 {offsets = [0, 128], sizes = [128, 128], strides = [1, 1]} : vector<128x384xf32> to vector<128x128xf32>
    %68 = vector.extract_strided_slice %58 {offsets = [0, 128], sizes = [128, 128], strides = [1, 1]} : vector<128x384xf32> to vector<128x128xf32>
    %69 = arith.addf %67, %68 : vector<128x128xf32>
    %70 = arith.negf %69 : vector<128x128xf32>
    %71 = math.exp %70 : vector<128x128xf32>
    %cst_28 = arith.constant 1.000000e+00 : f32
    %72 = vector.broadcast %cst_28 : f32 to vector<128x128xf32>
    %73 = arith.addf %72, %71 : vector<128x128xf32>
    %74 = arith.divf %72, %73 : vector<128x128xf32>
    %75 = vector.extract_strided_slice %55 {offsets = [0, 256], sizes = [128, 128], strides = [1, 1]} : vector<128x384xf32> to vector<128x128xf32>
    %76 = vector.extract_strided_slice %58 {offsets = [0, 256], sizes = [128, 128], strides = [1, 1]} : vector<128x384xf32> to vector<128x128xf32>
    %77 = arith.mulf %66, %76 : vector<128x128xf32>
    %78 = arith.addf %75, %77 : vector<128x128xf32>
    %79 = math.tanh %78 : vector<128x128xf32>
    %cst_29 = arith.constant 1.000000e+00 : f32
    %80 = vector.broadcast %cst_29 : f32 to vector<128x128xf32>
    %81 = arith.subf %80, %74 : vector<128x128xf32>
    %82 = arith.mulf %81, %79 : vector<128x128xf32>
    %83 = arith.mulf %74, %46 : vector<128x128xf32>
    %84 = arith.addf %82, %83 : vector<128x128xf32>
    %c2_i32 = arith.constant 2 : i32
    %cst_30 = arith.constant dense<0.000000e+00> : vector<128x128xf32>
    %85 = tpu.matmul %84, %3, %cst_30 {dimension_numbers = #tpu.dot_dimension_numbers<[1], [0], [0], [1], [0, 0, 1, 1], [], []>} : vector<128x128xf32>, vector<128x128xf32>, vector<128x128xf32> -> vector<128x128xf32>
    %86 = vector.broadcast %4 : vector<1x128xf32> to vector<128x128xf32>
    %87 = arith.addf %85, %86 : vector<128x128xf32>
    %88 = vector.shape_cast %87 : vector<128x128xf32> to vector<2x64x128xf32>
    "tpu.trace_start"() <{level = 10 : i32, message = "bij,bjh->bih"}> : () -> ()
    %cst_31 = arith.constant dense<0.000000e+00> : vector<2x64x128xf32>
    %89 = tpu.matmul %2, %88, %cst_31 {dimension_numbers = #tpu.dot_dimension_numbers<[2], [1], [1], [2], [0, 0, 0, 1, 1, 2], [0], [0]>} : vector<2x64x64xf32>, vector<2x64x128xf32>, vector<2x64x128xf32> -> vector<2x64x128xf32>
    "tpu.trace_stop"() : () -> ()
    %90 = vector.shape_cast %89 : vector<2x64x128xf32> to vector<128x128xf32>
    %cst_32 = arith.constant dense<0.000000e+00> : vector<128x384xf32>
    %91 = tpu.matmul %90, %5, %cst_32 {dimension_numbers = #tpu.dot_dimension_numbers<[1], [0], [0], [1], [0, 0, 1, 1], [], []>} : vector<128x128xf32>, vector<128x384xf32>, vector<128x384xf32> -> vector<128x384xf32>
    %92 = vector.broadcast %6 : vector<1x384xf32> to vector<128x384xf32>
    %93 = arith.addf %91, %92 : vector<128x384xf32>
    %cst_33 = arith.constant dense<0.000000e+00> : vector<128x384xf32>
    %94 = tpu.matmul %84, %7, %cst_33 {dimension_numbers = #tpu.dot_dimension_numbers<[1], [0], [0], [1], [0, 0, 1, 1], [], []>} : vector<128x128xf32>, vector<128x384xf32>, vector<128x384xf32> -> vector<128x384xf32>
    %95 = vector.broadcast %8 : vector<1x384xf32> to vector<128x384xf32>
    %96 = arith.addf %94, %95 : vector<128x384xf32>
    %97 = vector.extract_strided_slice %93 {offsets = [0, 0], sizes = [128, 128], strides = [1, 1]} : vector<128x384xf32> to vector<128x128xf32>
    %98 = vector.extract_strided_slice %96 {offsets = [0, 0], sizes = [128, 128], strides = [1, 1]} : vector<128x384xf32> to vector<128x128xf32>
    %99 = arith.addf %97, %98 : vector<128x128xf32>
    %100 = arith.negf %99 : vector<128x128xf32>
    %101 = math.exp %100 : vector<128x128xf32>
    %cst_34 = arith.constant 1.000000e+00 : f32
    %102 = vector.broadcast %cst_34 : f32 to vector<128x128xf32>
    %103 = arith.addf %102, %101 : vector<128x128xf32>
    %104 = arith.divf %102, %103 : vector<128x128xf32>
    %105 = vector.extract_strided_slice %93 {offsets = [0, 128], sizes = [128, 128], strides = [1, 1]} : vector<128x384xf32> to vector<128x128xf32>
    %106 = vector.extract_strided_slice %96 {offsets = [0, 128], sizes = [128, 128], strides = [1, 1]} : vector<128x384xf32> to vector<128x128xf32>
    %107 = arith.addf %105, %106 : vector<128x128xf32>
    %108 = arith.negf %107 : vector<128x128xf32>
    %109 = math.exp %108 : vector<128x128xf32>
    %cst_35 = arith.constant 1.000000e+00 : f32
    %110 = vector.broadcast %cst_35 : f32 to vector<128x128xf32>
    %111 = arith.addf %110, %109 : vector<128x128xf32>
    %112 = arith.divf %110, %111 : vector<128x128xf32>
    %113 = vector.extract_strided_slice %93 {offsets = [0, 256], sizes = [128, 128], strides = [1, 1]} : vector<128x384xf32> to vector<128x128xf32>
    %114 = vector.extract_strided_slice %96 {offsets = [0, 256], sizes = [128, 128], strides = [1, 1]} : vector<128x384xf32> to vector<128x128xf32>
    %115 = arith.mulf %104, %114 : vector<128x128xf32>
    %116 = arith.addf %113, %115 : vector<128x128xf32>
    %117 = math.tanh %116 : vector<128x128xf32>
    %cst_36 = arith.constant 1.000000e+00 : f32
    %118 = vector.broadcast %cst_36 : f32 to vector<128x128xf32>
    %119 = arith.subf %118, %112 : vector<128x128xf32>
    %120 = arith.mulf %119, %117 : vector<128x128xf32>
    %121 = arith.mulf %112, %84 : vector<128x128xf32>
    %122 = arith.addf %120, %121 : vector<128x128xf32>
    %c3_i32 = arith.constant 3 : i32
    %cst_37 = arith.constant dense<0.000000e+00> : vector<128x128xf32>
    %123 = tpu.matmul %122, %3, %cst_37 {dimension_numbers = #tpu.dot_dimension_numbers<[1], [0], [0], [1], [0, 0, 1, 1], [], []>} : vector<128x128xf32>, vector<128x128xf32>, vector<128x128xf32> -> vector<128x128xf32>
    %124 = vector.broadcast %4 : vector<1x128xf32> to vector<128x128xf32>
    %125 = arith.addf %123, %124 : vector<128x128xf32>
    %126 = vector.shape_cast %125 : vector<128x128xf32> to vector<2x64x128xf32>
    "tpu.trace_start"() <{level = 10 : i32, message = "bij,bjh->bih"}> : () -> ()
    %cst_38 = arith.constant dense<0.000000e+00> : vector<2x64x128xf32>
    %127 = tpu.matmul %2, %126, %cst_38 {dimension_numbers = #tpu.dot_dimension_numbers<[2], [1], [1], [2], [0, 0, 0, 1, 1, 2], [0], [0]>} : vector<2x64x64xf32>, vector<2x64x128xf32>, vector<2x64x128xf32> -> vector<2x64x128xf32>
    "tpu.trace_stop"() : () -> ()
    %128 = vector.shape_cast %127 : vector<2x64x128xf32> to vector<128x128xf32>
    %cst_39 = arith.constant dense<0.000000e+00> : vector<128x384xf32>
    %129 = tpu.matmul %128, %5, %cst_39 {dimension_numbers = #tpu.dot_dimension_numbers<[1], [0], [0], [1], [0, 0, 1, 1], [], []>} : vector<128x128xf32>, vector<128x384xf32>, vector<128x384xf32> -> vector<128x384xf32>
    %130 = vector.broadcast %6 : vector<1x384xf32> to vector<128x384xf32>
    %131 = arith.addf %129, %130 : vector<128x384xf32>
    %cst_40 = arith.constant dense<0.000000e+00> : vector<128x384xf32>
    %132 = tpu.matmul %122, %7, %cst_40 {dimension_numbers = #tpu.dot_dimension_numbers<[1], [0], [0], [1], [0, 0, 1, 1], [], []>} : vector<128x128xf32>, vector<128x384xf32>, vector<128x384xf32> -> vector<128x384xf32>
    %133 = vector.broadcast %8 : vector<1x384xf32> to vector<128x384xf32>
    %134 = arith.addf %132, %133 : vector<128x384xf32>
    %135 = vector.extract_strided_slice %131 {offsets = [0, 0], sizes = [128, 128], strides = [1, 1]} : vector<128x384xf32> to vector<128x128xf32>
    %136 = vector.extract_strided_slice %134 {offsets = [0, 0], sizes = [128, 128], strides = [1, 1]} : vector<128x384xf32> to vector<128x128xf32>
    %137 = arith.addf %135, %136 : vector<128x128xf32>
    %138 = arith.negf %137 : vector<128x128xf32>
    %139 = math.exp %138 : vector<128x128xf32>
    %cst_41 = arith.constant 1.000000e+00 : f32
    %140 = vector.broadcast %cst_41 : f32 to vector<128x128xf32>
    %141 = arith.addf %140, %139 : vector<128x128xf32>
    %142 = arith.divf %140, %141 : vector<128x128xf32>
    %143 = vector.extract_strided_slice %131 {offsets = [0, 128], sizes = [128, 128], strides = [1, 1]} : vector<128x384xf32> to vector<128x128xf32>
    %144 = vector.extract_strided_slice %134 {offsets = [0, 128], sizes = [128, 128], strides = [1, 1]} : vector<128x384xf32> to vector<128x128xf32>
    %145 = arith.addf %143, %144 : vector<128x128xf32>
    %146 = arith.negf %145 : vector<128x128xf32>
    %147 = math.exp %146 : vector<128x128xf32>
    %cst_42 = arith.constant 1.000000e+00 : f32
    %148 = vector.broadcast %cst_42 : f32 to vector<128x128xf32>
    %149 = arith.addf %148, %147 : vector<128x128xf32>
    %150 = arith.divf %148, %149 : vector<128x128xf32>
    %151 = vector.extract_strided_slice %131 {offsets = [0, 256], sizes = [128, 128], strides = [1, 1]} : vector<128x384xf32> to vector<128x128xf32>
    %152 = vector.extract_strided_slice %134 {offsets = [0, 256], sizes = [128, 128], strides = [1, 1]} : vector<128x384xf32> to vector<128x128xf32>
    %153 = arith.mulf %142, %152 : vector<128x128xf32>
    %154 = arith.addf %151, %153 : vector<128x128xf32>
    %155 = math.tanh %154 : vector<128x128xf32>
    %cst_43 = arith.constant 1.000000e+00 : f32
    %156 = vector.broadcast %cst_43 : f32 to vector<128x128xf32>
    %157 = arith.subf %156, %150 : vector<128x128xf32>
    %158 = arith.mulf %157, %155 : vector<128x128xf32>
    %159 = arith.mulf %150, %122 : vector<128x128xf32>
    %160 = arith.addf %158, %159 : vector<128x128xf32>
    %c0_44 = arith.constant 0 : index
    %c0_45 = arith.constant 0 : index
    %161 = vector.load %arg21[%c0_44, %c0_45] : memref<128x128xf32, #tpu.memory_space<vmem>>, vector<128x128xf32>
    tpu.vector_store %arg21[%c0_44, %c0_45], %160 {strides = array<i32>} : memref<128x128xf32, #tpu.memory_space<vmem>>, vector<128x128xf32>,
    %c0_46 = arith.constant 0 : index
    %c0_47 = arith.constant 0 : index
    %162 = vector.load %arg10[%c0_46, %c0_47] : memref<128x128xf32, #tpu.memory_space<vmem>>, vector<128x128xf32>
    %cst_48 = arith.constant dense<0.000000e+00> : vector<128x128xf32>
    %163 = tpu.matmul %160, %162, %cst_48 {dimension_numbers = #tpu.dot_dimension_numbers<[1], [0], [0], [1], [0, 0, 1, 1], [], []>} : vector<128x128xf32>, vector<128x128xf32>, vector<128x128xf32> -> vector<128x128xf32>
    %c0_49 = arith.constant 0 : index
    %c0_50 = arith.constant 0 : index
    %164 = vector.load %arg11[%c0_49, %c0_50] : memref<1x128xf32, #tpu.memory_space<vmem>>, vector<1x128xf32>
    %165 = vector.broadcast %164 : vector<1x128xf32> to vector<128x128xf32>
    %166 = arith.addf %163, %165 : vector<128x128xf32>
    %167 = math.tanh %166 : vector<128x128xf32>
    %c0_51 = arith.constant 0 : index
    %c0_52 = arith.constant 0 : index
    %168 = vector.load %arg12[%c0_51, %c0_52] : memref<128x128xf32, #tpu.memory_space<vmem>>, vector<128x128xf32>
    %cst_53 = arith.constant dense<0.000000e+00> : vector<128x128xf32>
    %169 = tpu.matmul %167, %168, %cst_53 {dimension_numbers = #tpu.dot_dimension_numbers<[1], [0], [0], [1], [0, 0, 1, 1], [], []>} : vector<128x128xf32>, vector<128x128xf32>, vector<128x128xf32> -> vector<128x128xf32>
    %c0_54 = arith.constant 0 : index
    %c0_55 = arith.constant 0 : index
    %170 = vector.load %arg13[%c0_54, %c0_55] : memref<1x128xf32, #tpu.memory_space<vmem>>, vector<1x128xf32>
    %171 = vector.broadcast %170 : vector<1x128xf32> to vector<128x128xf32>
    %172 = arith.addf %169, %171 : vector<128x128xf32>
    %173 = math.tanh %172 : vector<128x128xf32>
    %c0_56 = arith.constant 0 : index
    %c0_57 = arith.constant 0 : index
    %174 = vector.load %arg14[%c0_56, %c0_57] : memref<128x1xf32, #tpu.memory_space<vmem>>, vector<128x1xf32>
    %cst_58 = arith.constant dense<0.000000e+00> : vector<128x1xf32>
    %175 = tpu.matmul %173, %174, %cst_58 {dimension_numbers = #tpu.dot_dimension_numbers<[1], [0], [0], [1], [0, 0, 1, 1], [], []>} : vector<128x128xf32>, vector<128x1xf32>, vector<128x1xf32> -> vector<128x1xf32>
    %c0_59 = arith.constant 0 : index
    %c0_60 = arith.constant 0 : index
    %176 = vector.load %arg15[%c0_59, %c0_60] : memref<1x1xf32, #tpu.memory_space<vmem>>, vector<1x1xf32>
    %177 = vector.broadcast %176 : vector<1x1xf32> to vector<128x1xf32>
    %178 = arith.addf %175, %177 : vector<128x1xf32>
    %179 = math.tanh %178 : vector<128x1xf32>
    %c0_61 = arith.constant 0 : index
    %c0_62 = arith.constant 0 : index
    %180 = vector.load %arg22[%c0_61, %c0_62] : memref<128x1xf32, #tpu.memory_space<vmem>>, vector<128x1xf32>
    tpu.vector_store %arg22[%c0_61, %c0_62], %179 {strides = array<i32>} : memref<128x1xf32, #tpu.memory_space<vmem>>, vector<128x1xf32>,
    %c0_63 = arith.constant 0 : index
    %c0_64 = arith.constant 0 : index
    %181 = vector.load %arg18[%c0_63, %c0_64] : memref<128x128xf32, #tpu.memory_space<vmem>>, vector<128x128xf32>
    %cst_65 = arith.constant dense<0.000000e+00> : vector<128x128xf32>
    %182 = tpu.matmul %160, %181, %cst_65 {dimension_numbers = #tpu.dot_dimension_numbers<[1], [0], [0], [1], [0, 0, 1, 1], [], []>} : vector<128x128xf32>, vector<128x128xf32>, vector<128x128xf32> -> vector<128x128xf32>
    %c0_66 = arith.constant 0 : index
    %c0_67 = arith.constant 0 : index
    %183 = vector.load %arg19[%c0_66, %c0_67] : memref<1x128xf32, #tpu.memory_space<vmem>>, vector<1x128xf32>
    %184 = vector.broadcast %183 : vector<1x128xf32> to vector<128x128xf32>
    %185 = arith.addf %182, %184 : vector<128x128xf32>
    %c2_i32_68 = arith.constant 2 : i32
    %186 = arith.muli %arg0, %c2_i32_68 : i32
    %c0_i32_69 = arith.constant 0 : i32
    %187 = arith.addi %186, %c0_i32_69 : i32
    %188 = arith.index_cast %187 : i32 to index
    %c0_70 = arith.constant 0 : index
    %189 = memref.load %arg1[%188, %c0_70] : memref<4x4xi32, #tpu.memory_space<smem>>
    %c0_i32_71 = arith.constant 0 : i32
    %190 = arith.addi %c0_i32_71, %189 : i32
    %191 = arith.index_cast %190 : i32 to index
    %c0_72 = arith.constant 0 : index
    %192 = vector.load %arg21[%191, %c0_72] : memref<128x128xf32, #tpu.memory_space<vmem>>, vector<1x128xf32>
    %193 = arith.index_cast %190 : i32 to index
    %c0_73 = arith.constant 0 : index
    %194 = vector.load %arg22[%193, %c0_73] : memref<128x1xf32, #tpu.memory_space<vmem>>, vector<1x1xf32>
    %c2_i32_74 = arith.constant 2 : i32
    %195 = arith.muli %arg0, %c2_i32_74 : i32
    %c0_i32_75 = arith.constant 0 : i32
    %196 = arith.addi %195, %c0_i32_75 : i32
    %197 = arith.index_cast %196 : i32 to index
    %c1 = arith.constant 1 : index
    %198 = memref.load %arg1[%197, %c1] : memref<4x4xi32, #tpu.memory_space<smem>>
    %c0_i32_76 = arith.constant 0 : i32
    %199 = arith.addi %c0_i32_76, %198 : i32
    %200 = arith.index_cast %199 : i32 to index
    %c0_77 = arith.constant 0 : index
    %201 = vector.load %arg21[%200, %c0_77] : memref<128x128xf32, #tpu.memory_space<vmem>>, vector<1x128xf32>
    %202 = arith.index_cast %199 : i32 to index
    %c0_78 = arith.constant 0 : index
    %203 = vector.load %arg22[%202, %c0_78] : memref<128x1xf32, #tpu.memory_space<vmem>>, vector<1x1xf32>
    %c2_i32_79 = arith.constant 2 : i32
    %204 = arith.muli %arg0, %c2_i32_79 : i32
    %c0_i32_80 = arith.constant 0 : i32
    %205 = arith.addi %204, %c0_i32_80 : i32
    %206 = arith.index_cast %205 : i32 to index
    %c2 = arith.constant 2 : index
    %207 = memref.load %arg1[%206, %c2] : memref<4x4xi32, #tpu.memory_space<smem>>
    %c0_i32_81 = arith.constant 0 : i32
    %208 = arith.addi %c0_i32_81, %207 : i32
    %209 = arith.index_cast %208 : i32 to index
    %c0_82 = arith.constant 0 : index
    %210 = vector.load %arg21[%209, %c0_82] : memref<128x128xf32, #tpu.memory_space<vmem>>, vector<1x128xf32>
    %211 = arith.index_cast %208 : i32 to index
    %c0_83 = arith.constant 0 : index
    %212 = vector.load %arg22[%211, %c0_83] : memref<128x1xf32, #tpu.memory_space<vmem>>, vector<1x1xf32>
    %c2_i32_84 = arith.constant 2 : i32
    %213 = arith.muli %arg0, %c2_i32_84 : i32
    %c0_i32_85 = arith.constant 0 : i32
    %214 = arith.addi %213, %c0_i32_85 : i32
    %215 = arith.index_cast %214 : i32 to index
    %c3 = arith.constant 3 : index
    %216 = memref.load %arg1[%215, %c3] : memref<4x4xi32, #tpu.memory_space<smem>>
    %c0_i32_86 = arith.constant 0 : i32
    %217 = arith.addi %c0_i32_86, %216 : i32
    %218 = arith.index_cast %217 : i32 to index
    %c0_87 = arith.constant 0 : index
    %219 = vector.load %arg21[%218, %c0_87] : memref<128x128xf32, #tpu.memory_space<vmem>>, vector<1x128xf32>
    %220 = arith.index_cast %217 : i32 to index
    %c0_88 = arith.constant 0 : index
    %221 = vector.load %arg22[%220, %c0_88] : memref<128x1xf32, #tpu.memory_space<vmem>>, vector<1x1xf32>
    %c2_i32_89 = arith.constant 2 : i32
    %222 = arith.muli %arg0, %c2_i32_89 : i32
    %c1_i32_90 = arith.constant 1 : i32
    %223 = arith.addi %222, %c1_i32_90 : i32
    %224 = arith.index_cast %223 : i32 to index
    %c0_91 = arith.constant 0 : index
    %225 = memref.load %arg1[%224, %c0_91] : memref<4x4xi32, #tpu.memory_space<smem>>
    %c64_i32 = arith.constant 64 : i32
    %226 = arith.addi %c64_i32, %225 : i32
    %227 = arith.index_cast %226 : i32 to index
    %c0_92 = arith.constant 0 : index
    %228 = vector.load %arg21[%227, %c0_92] : memref<128x128xf32, #tpu.memory_space<vmem>>, vector<1x128xf32>
    %229 = arith.index_cast %226 : i32 to index
    %c0_93 = arith.constant 0 : index
    %230 = vector.load %arg22[%229, %c0_93] : memref<128x1xf32, #tpu.memory_space<vmem>>, vector<1x1xf32>
    %c2_i32_94 = arith.constant 2 : i32
    %231 = arith.muli %arg0, %c2_i32_94 : i32
    %c1_i32_95 = arith.constant 1 : i32
    %232 = arith.addi %231, %c1_i32_95 : i32
    %233 = arith.index_cast %232 : i32 to index
    %c1_96 = arith.constant 1 : index
    %234 = memref.load %arg1[%233, %c1_96] : memref<4x4xi32, #tpu.memory_space<smem>>
    %c64_i32_97 = arith.constant 64 : i32
    %235 = arith.addi %c64_i32_97, %234 : i32
    %236 = arith.index_cast %235 : i32 to index
    %c0_98 = arith.constant 0 : index
    %237 = vector.load %arg21[%236, %c0_98] : memref<128x128xf32, #tpu.memory_space<vmem>>, vector<1x128xf32>
    %238 = arith.index_cast %235 : i32 to index
    %c0_99 = arith.constant 0 : index
    %239 = vector.load %arg22[%238, %c0_99] : memref<128x1xf32, #tpu.memory_space<vmem>>, vector<1x1xf32>
    %c2_i32_100 = arith.constant 2 : i32
    %240 = arith.muli %arg0, %c2_i32_100 : i32
    %c1_i32_101 = arith.constant 1 : i32
    %241 = arith.addi %240, %c1_i32_101 : i32
    %242 = arith.index_cast %241 : i32 to index
    %c2_102 = arith.constant 2 : index
    %243 = memref.load %arg1[%242, %c2_102] : memref<4x4xi32, #tpu.memory_space<smem>>
    %c64_i32_103 = arith.constant 64 : i32
    %244 = arith.addi %c64_i32_103, %243 : i32
    %245 = arith.index_cast %244 : i32 to index
    %c0_104 = arith.constant 0 : index
    %246 = vector.load %arg21[%245, %c0_104] : memref<128x128xf32, #tpu.memory_space<vmem>>, vector<1x128xf32>
    %247 = arith.index_cast %244 : i32 to index
    %c0_105 = arith.constant 0 : index
    %248 = vector.load %arg22[%247, %c0_105] : memref<128x1xf32, #tpu.memory_space<vmem>>, vector<1x1xf32>
    %c2_i32_106 = arith.constant 2 : i32
    %249 = arith.muli %arg0, %c2_i32_106 : i32
    %c1_i32_107 = arith.constant 1 : i32
    %250 = arith.addi %249, %c1_i32_107 : i32
    %251 = arith.index_cast %250 : i32 to index
    %c3_108 = arith.constant 3 : index
    %252 = memref.load %arg1[%251, %c3_108] : memref<4x4xi32, #tpu.memory_space<smem>>
    %c64_i32_109 = arith.constant 64 : i32
    %253 = arith.addi %c64_i32_109, %252 : i32
    %254 = arith.index_cast %253 : i32 to index
    %c0_110 = arith.constant 0 : index
    %255 = vector.load %arg21[%254, %c0_110] : memref<128x128xf32, #tpu.memory_space<vmem>>, vector<1x128xf32>
    %256 = arith.index_cast %253 : i32 to index
    %c0_111 = arith.constant 0 : index
    %257 = vector.load %arg22[%256, %c0_111] : memref<128x1xf32, #tpu.memory_space<vmem>>, vector<1x1xf32>
    %258 = tpu.concatenate %192, %201, %210, %219, %228, %237, %246, %255 in 0 : vector<1x128xf32>, vector<1x128xf32>, vector<1x128xf32>, vector<1x128xf32>, vector<1x128xf32>, vector<1x128xf32>, vector<1x128xf32>, vector<1x128xf32> -> vector<8x128xf32>
    %c0_112 = arith.constant 0 : index
    %c0_113 = arith.constant 0 : index
    %259 = vector.load %arg16[%c0_112, %c0_113] : memref<128x128xf32, #tpu.memory_space<vmem>>, vector<128x128xf32>
    %cst_114 = arith.constant dense<0.000000e+00> : vector<8x128xf32>
    %260 = tpu.matmul %258, %259, %cst_114 {dimension_numbers = #tpu.dot_dimension_numbers<[1], [0], [0], [1], [0, 0, 1, 1], [], []>} : vector<8x128xf32>, vector<128x128xf32>, vector<8x128xf32> -> vector<8x128xf32>
    %c0_115 = arith.constant 0 : index
    %c0_116 = arith.constant 0 : index
    %261 = vector.load %arg17[%c0_115, %c0_116] : memref<1x128xf32, #tpu.memory_space<vmem>>, vector<1x128xf32>
    %262 = vector.broadcast %261 : vector<1x128xf32> to vector<8x128xf32>
    %263 = arith.addf %260, %262 : vector<8x128xf32>
    %264 = vector.shape_cast %185 : vector<128x128xf32> to vector<2x64x128xf32>
    %265 = vector.shape_cast %263 : vector<8x128xf32> to vector<2x4x128xf32>
    "tpu.trace_start"() <{level = 10 : i32, message = "btq,bmq->btm"}> : () -> ()
    %cst_117 = arith.constant dense<0.000000e+00> : vector<2x64x4xf32>
    %266 = tpu.matmul %264, %265, %cst_117 {dimension_numbers = #tpu.dot_dimension_numbers<[2], [2], [1], [1], [0, 0, 0, 1, 1, 1], [0], [0]>} : vector<2x64x128xf32>, vector<2x4x128xf32>, vector<2x64x4xf32> -> vector<2x64x4xf32>
    "tpu.trace_stop"() : () -> ()
    %267 = tpu.iota {dimensions = array<i32: 1>} : vector<1x4xi32>
    %268 = tpu.iota {dimensions = array<i32: 1>} : vector<16x4xi32>
    %269 = tpu.iota {dimensions = array<i32: 0>} : vector<16x16xi32>
    %270 = tpu.iota {dimensions = array<i32: 1>} : vector<16x16xi32>
    %271 = arith.cmpi eq, %269, %270 : vector<16x16xi32>
    %272 = arith.extui %271 : vector<16x16xi1> to vector<16x16xi32>
    %273 = arith.sitofp %272 : vector<16x16xi32> to vector<16x16xf32>
    %cst_118 = arith.constant -1.000000e+01 : f32
    %274 = vector.broadcast %cst_118 : f32 to vector<16x4xf32>
    %c0_119 = arith.constant 0 : index
    %c0_120 = arith.constant 0 : index
    %275 = vector.load %arg23[%c0_119, %c0_120] : memref<80x4xf32, #tpu.memory_space<vmem>>, vector<16x4xf32>
    tpu.vector_store %arg23[%c0_119, %c0_120], %274 {strides = array<i32>} : memref<80x4xf32, #tpu.memory_space<vmem>>, vector<16x4xf32>,
    %cst_121 = arith.constant 0.000000e+00 : f32
    %276 = vector.broadcast %cst_121 : f32 to vector<1x4xf32>
    %c0_i32_122 = arith.constant 0 : i32
    %277 = vector.broadcast %c0_i32_122 : i32 to vector<1x4xi32>
    %278 = arith.cmpi eq, %267, %277 : vector<1x4xi32>
    %279 = vector.shape_cast %194 : vector<1x1xf32> to vector<1x1xf32>
    %280 = vector.broadcast %279 : vector<1x1xf32> to vector<1x4xf32>
    %281 = arith.select %278, %280, %276 : vector<1x4xi1>, vector<1x4xf32>
    %c1_i32_123 = arith.constant 1 : i32
    %282 = vector.broadcast %c1_i32_123 : i32 to vector<1x4xi32>
    %283 = arith.cmpi eq, %267, %282 : vector<1x4xi32>
    %284 = vector.shape_cast %203 : vector<1x1xf32> to vector<1x1xf32>
    %285 = vector.broadcast %284 : vector<1x1xf32> to vector<1x4xf32>
    %286 = arith.select %283, %285, %281 : vector<1x4xi1>, vector<1x4xf32>
    %c2_i32_124 = arith.constant 2 : i32
    %287 = vector.broadcast %c2_i32_124 : i32 to vector<1x4xi32>
    %288 = arith.cmpi eq, %267, %287 : vector<1x4xi32>
    %289 = vector.shape_cast %212 : vector<1x1xf32> to vector<1x1xf32>
    %290 = vector.broadcast %289 : vector<1x1xf32> to vector<1x4xf32>
    %291 = arith.select %288, %290, %286 : vector<1x4xi1>, vector<1x4xf32>
    %c3_i32_125 = arith.constant 3 : i32
    %292 = vector.broadcast %c3_i32_125 : i32 to vector<1x4xi32>
    %293 = arith.cmpi eq, %267, %292 : vector<1x4xi32>
    %294 = vector.shape_cast %221 : vector<1x1xf32> to vector<1x1xf32>
    %295 = vector.broadcast %294 : vector<1x1xf32> to vector<1x4xf32>
    %296 = arith.select %293, %295, %291 : vector<1x4xi1>, vector<1x4xf32>
    %297 = vector.extract_strided_slice %266 {offsets = [0, 0, 0], sizes = [1, 64, 4], strides = [1, 1, 1]} : vector<2x64x4xf32> to vector<1x64x4xf32>
    %298 = vector.shape_cast %297 : vector<1x64x4xf32> to vector<64x4xf32>
    %299 = vector.extract_strided_slice %179 {offsets = [0, 0], sizes = [64, 1], strides = [1, 1]} : vector<128x1xf32> to vector<64x1xf32>
    %300 = vector.broadcast %299 : vector<64x1xf32> to vector<64x4xf32>
    %301 = arith.addf %298, %300 : vector<64x4xf32>
    %302 = vector.broadcast %296 : vector<1x4xf32> to vector<64x4xf32>
    %303 = arith.addf %301, %302 : vector<64x4xf32>
    %c16 = arith.constant 16 : index
    %c0_126 = arith.constant 0 : index
    %304 = vector.load %arg23[%c16, %c0_126] : memref<80x4xf32, #tpu.memory_space<vmem>>, vector<64x4xf32>
    tpu.vector_store %arg23[%c16, %c0_126], %303 {strides = array<i32>} : memref<80x4xf32, #tpu.memory_space<vmem>>, vector<64x4xf32>,
    %cst_127 = arith.constant 0.000000e+00 : f32
    %305 = vector.broadcast %cst_127 : f32 to vector<16x4xf32>
    %306 = arith.index_cast %189 : i32 to index
    %c0_128 = arith.constant 0 : index
    %307 = vector.load %arg23[%306, %c0_128] : memref<80x4xf32, #tpu.memory_space<vmem>>, vector<16x4xf32>
    %c0_i32_129 = arith.constant 0 : i32
    %308 = vector.broadcast %c0_i32_129 : i32 to vector<16x4xi32>
    %309 = arith.cmpi eq, %268, %308 : vector<16x4xi32>
    %310 = arith.select %309, %307, %305 : vector<16x4xi1>, vector<16x4xf32>
    %311 = arith.index_cast %198 : i32 to index
    %c0_130 = arith.constant 0 : index
    %312 = vector.load %arg23[%311, %c0_130] : memref<80x4xf32, #tpu.memory_space<vmem>>, vector<16x4xf32>
    %c1_i32_131 = arith.constant 1 : i32
    %313 = vector.broadcast %c1_i32_131 : i32 to vector<16x4xi32>
    %314 = arith.cmpi eq, %268, %313 : vector<16x4xi32>
    %315 = arith.select %314, %312, %310 : vector<16x4xi1>, vector<16x4xf32>
    %316 = arith.index_cast %207 : i32 to index
    %c0_132 = arith.constant 0 : index
    %317 = vector.load %arg23[%316, %c0_132] : memref<80x4xf32, #tpu.memory_space<vmem>>, vector<16x4xf32>
    %c2_i32_133 = arith.constant 2 : i32
    %318 = vector.broadcast %c2_i32_133 : i32 to vector<16x4xi32>
    %319 = arith.cmpi eq, %268, %318 : vector<16x4xi32>
    %320 = arith.select %319, %317, %315 : vector<16x4xi1>, vector<16x4xf32>
    %321 = arith.index_cast %216 : i32 to index
    %c0_134 = arith.constant 0 : index
    %322 = vector.load %arg23[%321, %c0_134] : memref<80x4xf32, #tpu.memory_space<vmem>>, vector<16x4xf32>
    %c3_i32_135 = arith.constant 3 : i32
    %323 = vector.broadcast %c3_i32_135 : i32 to vector<16x4xi32>
    %324 = arith.cmpi eq, %268, %323 : vector<16x4xi32>
    %325 = arith.select %324, %322, %320 : vector<16x4xi1>, vector<16x4xf32>
    %cst_136 = arith.constant dense<0xFF800000> : vector<4xf32>
    %326 = vector.multi_reduction <maximumf>, %325, %cst_136 [0] : vector<16x4xf32> to vector<4xf32>
    %327 = vector.shape_cast %326 : vector<4xf32> to vector<1x4xf32>
    %328 = vector.broadcast %327 : vector<1x4xf32> to vector<16x4xf32>
    %329 = arith.subf %325, %328 : vector<16x4xf32>
    %330 = math.exp %329 : vector<16x4xf32>
    %cst_137 = arith.constant dense<0.000000e+00> : vector<4xf32>
    %331 = vector.multi_reduction <add>, %330, %cst_137 [0] : vector<16x4xf32> to vector<4xf32>
    %332 = vector.shape_cast %331 : vector<4xf32> to vector<1x4xf32>
    %333 = tpu.reciprocal %332 {approx = true} : vector<1x4xf32> -> vector<1x4xf32>
    %334 = vector.broadcast %333 : vector<1x4xf32> to vector<16x4xf32>
    %335 = arith.mulf %330, %334 : vector<16x4xf32>
    %cst_138 = arith.constant dense<0.000000e+00> : vector<4x16xf32>
    %336 = tpu.matmul %335, %273, %cst_138 {dimension_numbers = #tpu.dot_dimension_numbers<[0], [0], [1], [1], [0, 1, 1, 1], [], []>} : vector<16x4xf32>, vector<16x16xf32>, vector<4x16xf32> -> vector<4x16xf32>
    %cst_139 = arith.constant 0.000000e+00 : f32
    %337 = vector.broadcast %cst_139 : f32 to vector<4x128xf32>
    %c0_140 = arith.constant 0 : index
    %c0_141 = arith.constant 0 : index
    %c0_142 = arith.constant 0 : index
    %338 = vector.load %arg20[%c0_140, %c0_141, %c0_142] : memref<2x4x128xf32, #tpu.memory_space<vmem>>, vector<1x4x128xf32>
    %339 = vector.shape_cast %338 : vector<1x4x128xf32> to vector<4x128xf32>
    %340 = vector.shape_cast %337 : vector<4x128xf32> to vector<1x4x128xf32>
    tpu.vector_store %arg20[%c0_140, %c0_141, %c0_142], %340 {strides = array<i32>} : memref<2x4x128xf32, #tpu.memory_space<vmem>>, vector<1x4x128xf32>,
    %c0_143 = arith.constant 0 : index
    %c0_144 = arith.constant 0 : index
    %c0_145 = arith.constant 0 : index
    %341 = vector.load %arg20[%c0_143, %c0_144, %c0_145] : memref<2x4x128xf32, #tpu.memory_space<vmem>>, vector<1x4x16xf32>
    %342 = vector.shape_cast %341 : vector<1x4x16xf32> to vector<4x16xf32>
    %343 = vector.shape_cast %336 : vector<4x16xf32> to vector<1x4x16xf32>
    tpu.vector_store %arg20[%c0_143, %c0_144, %c0_145], %343 {strides = array<i32>} : memref<2x4x128xf32, #tpu.memory_space<vmem>>, vector<1x4x16xf32>,
    %cst_146 = arith.constant 0.000000e+00 : f32
    %344 = vector.broadcast %cst_146 : f32 to vector<1x4xf32>
    %c0_i32_147 = arith.constant 0 : i32
    %345 = vector.broadcast %c0_i32_147 : i32 to vector<1x4xi32>
    %346 = arith.cmpi eq, %267, %345 : vector<1x4xi32>
    %347 = vector.shape_cast %230 : vector<1x1xf32> to vector<1x1xf32>
    %348 = vector.broadcast %347 : vector<1x1xf32> to vector<1x4xf32>
    %349 = arith.select %346, %348, %344 : vector<1x4xi1>, vector<1x4xf32>
    %c1_i32_148 = arith.constant 1 : i32
    %350 = vector.broadcast %c1_i32_148 : i32 to vector<1x4xi32>
    %351 = arith.cmpi eq, %267, %350 : vector<1x4xi32>
    %352 = vector.shape_cast %239 : vector<1x1xf32> to vector<1x1xf32>
    %353 = vector.broadcast %352 : vector<1x1xf32> to vector<1x4xf32>
    %354 = arith.select %351, %353, %349 : vector<1x4xi1>, vector<1x4xf32>
    %c2_i32_149 = arith.constant 2 : i32
    %355 = vector.broadcast %c2_i32_149 : i32 to vector<1x4xi32>
    %356 = arith.cmpi eq, %267, %355 : vector<1x4xi32>
    %357 = vector.shape_cast %248 : vector<1x1xf32> to vector<1x1xf32>
    %358 = vector.broadcast %357 : vector<1x1xf32> to vector<1x4xf32>
    %359 = arith.select %356, %358, %354 : vector<1x4xi1>, vector<1x4xf32>
    %c3_i32_150 = arith.constant 3 : i32
    %360 = vector.broadcast %c3_i32_150 : i32 to vector<1x4xi32>
    %361 = arith.cmpi eq, %267, %360 : vector<1x4xi32>
    %362 = vector.shape_cast %257 : vector<1x1xf32> to vector<1x1xf32>
    %363 = vector.broadcast %362 : vector<1x1xf32> to vector<1x4xf32>
    %364 = arith.select %361, %363, %359 : vector<1x4xi1>, vector<1x4xf32>
    %365 = vector.extract_strided_slice %266 {offsets = [1, 0, 0], sizes = [1, 64, 4], strides = [1, 1, 1]} : vector<2x64x4xf32> to vector<1x64x4xf32>
    %366 = vector.shape_cast %365 : vector<1x64x4xf32> to vector<64x4xf32>
    %367 = vector.extract_strided_slice %179 {offsets = [64, 0], sizes = [64, 1], strides = [1, 1]} : vector<128x1xf32> to vector<64x1xf32>
    %368 = vector.broadcast %367 : vector<64x1xf32> to vector<64x4xf32>
    %369 = arith.addf %366, %368 : vector<64x4xf32>
    %370 = vector.broadcast %364 : vector<1x4xf32> to vector<64x4xf32>
    %371 = arith.addf %369, %370 : vector<64x4xf32>
    %c16_151 = arith.constant 16 : index
    %c0_152 = arith.constant 0 : index
    %372 = vector.load %arg23[%c16_151, %c0_152] : memref<80x4xf32, #tpu.memory_space<vmem>>, vector<64x4xf32>
    tpu.vector_store %arg23[%c16_151, %c0_152], %371 {strides = array<i32>} : memref<80x4xf32, #tpu.memory_space<vmem>>, vector<64x4xf32>,
    %cst_153 = arith.constant 0.000000e+00 : f32
    %373 = vector.broadcast %cst_153 : f32 to vector<16x4xf32>
    %374 = arith.index_cast %225 : i32 to index
    %c0_154 = arith.constant 0 : index
    %375 = vector.load %arg23[%374, %c0_154] : memref<80x4xf32, #tpu.memory_space<vmem>>, vector<16x4xf32>
    %c0_i32_155 = arith.constant 0 : i32
    %376 = vector.broadcast %c0_i32_155 : i32 to vector<16x4xi32>
    %377 = arith.cmpi eq, %268, %376 : vector<16x4xi32>
    %378 = arith.select %377, %375, %373 : vector<16x4xi1>, vector<16x4xf32>
    %379 = arith.index_cast %234 : i32 to index
    %c0_156 = arith.constant 0 : index
    %380 = vector.load %arg23[%379, %c0_156] : memref<80x4xf32, #tpu.memory_space<vmem>>, vector<16x4xf32>
    %c1_i32_157 = arith.constant 1 : i32
    %381 = vector.broadcast %c1_i32_157 : i32 to vector<16x4xi32>
    %382 = arith.cmpi eq, %268, %381 : vector<16x4xi32>
    %383 = arith.select %382, %380, %378 : vector<16x4xi1>, vector<16x4xf32>
    %384 = arith.index_cast %243 : i32 to index
    %c0_158 = arith.constant 0 : index
    %385 = vector.load %arg23[%384, %c0_158] : memref<80x4xf32, #tpu.memory_space<vmem>>, vector<16x4xf32>
    %c2_i32_159 = arith.constant 2 : i32
    %386 = vector.broadcast %c2_i32_159 : i32 to vector<16x4xi32>
    %387 = arith.cmpi eq, %268, %386 : vector<16x4xi32>
    %388 = arith.select %387, %385, %383 : vector<16x4xi1>, vector<16x4xf32>
    %389 = arith.index_cast %252 : i32 to index
    %c0_160 = arith.constant 0 : index
    %390 = vector.load %arg23[%389, %c0_160] : memref<80x4xf32, #tpu.memory_space<vmem>>, vector<16x4xf32>
    %c3_i32_161 = arith.constant 3 : i32
    %391 = vector.broadcast %c3_i32_161 : i32 to vector<16x4xi32>
    %392 = arith.cmpi eq, %268, %391 : vector<16x4xi32>
    %393 = arith.select %392, %390, %388 : vector<16x4xi1>, vector<16x4xf32>
    %cst_162 = arith.constant dense<0xFF800000> : vector<4xf32>
    %394 = vector.multi_reduction <maximumf>, %393, %cst_162 [0] : vector<16x4xf32> to vector<4xf32>
    %395 = vector.shape_cast %394 : vector<4xf32> to vector<1x4xf32>
    %396 = vector.broadcast %395 : vector<1x4xf32> to vector<16x4xf32>
    %397 = arith.subf %393, %396 : vector<16x4xf32>
    %398 = math.exp %397 : vector<16x4xf32>
    %cst_163 = arith.constant dense<0.000000e+00> : vector<4xf32>
    %399 = vector.multi_reduction <add>, %398, %cst_163 [0] : vector<16x4xf32> to vector<4xf32>
    %400 = vector.shape_cast %399 : vector<4xf32> to vector<1x4xf32>
    %401 = tpu.reciprocal %400 {approx = true} : vector<1x4xf32> -> vector<1x4xf32>
    %402 = vector.broadcast %401 : vector<1x4xf32> to vector<16x4xf32>
    %403 = arith.mulf %398, %402 : vector<16x4xf32>
    %cst_164 = arith.constant dense<0.000000e+00> : vector<4x16xf32>
    %404 = tpu.matmul %403, %273, %cst_164 {dimension_numbers = #tpu.dot_dimension_numbers<[0], [0], [1], [1], [0, 1, 1, 1], [], []>} : vector<16x4xf32>, vector<16x16xf32>, vector<4x16xf32> -> vector<4x16xf32>
    %cst_165 = arith.constant 0.000000e+00 : f32
    %405 = vector.broadcast %cst_165 : f32 to vector<4x128xf32>
    %c1_166 = arith.constant 1 : index
    %c0_167 = arith.constant 0 : index
    %c0_168 = arith.constant 0 : index
    %406 = vector.load %arg20[%c1_166, %c0_167, %c0_168] : memref<2x4x128xf32, #tpu.memory_space<vmem>>, vector<1x4x128xf32>
    %407 = vector.shape_cast %406 : vector<1x4x128xf32> to vector<4x128xf32>
    %408 = vector.shape_cast %405 : vector<4x128xf32> to vector<1x4x128xf32>
    tpu.vector_store %arg20[%c1_166, %c0_167, %c0_168], %408 {strides = array<i32>} : memref<2x4x128xf32, #tpu.memory_space<vmem>>, vector<1x4x128xf32>,
    %c1_169 = arith.constant 1 : index
    %c0_170 = arith.constant 0 : index
    %c0_171 = arith.constant 0 : index
    %409 = vector.load %arg20[%c1_169, %c0_170, %c0_171] : memref<2x4x128xf32, #tpu.memory_space<vmem>>, vector<1x4x16xf32>
    %410 = vector.shape_cast %409 : vector<1x4x16xf32> to vector<4x16xf32>
    %411 = vector.shape_cast %404 : vector<4x16xf32> to vector<1x4x16xf32>
    tpu.vector_store %arg20[%c1_169, %c0_170, %c0_171], %411 {strides = array<i32>} : memref<2x4x128xf32, #tpu.memory_space<vmem>>, vector<1x4x16xf32>,
    return
  }
  func.func @transform_0(%arg0: i32, %arg1: memref<4x4xi32, #tpu.memory_space<smem>>) -> (i32, i32, i32) {
    %c0_i32 = arith.constant 0 : i32
    %c0_i32_0 = arith.constant 0 : i32
    %c0_i32_1 = arith.constant 0 : i32
    return %arg0, %c0_i32, %c0_i32_0 : i32, i32, i32
  }
  func.func @transform_1(%arg0: i32, %arg1: memref<4x4xi32, #tpu.memory_space<smem>>) -> (i32, i32, i32) {
    %c0_i32 = arith.constant 0 : i32
    %c0_i32_0 = arith.constant 0 : i32
    %c0_i32_1 = arith.constant 0 : i32
    return %arg0, %c0_i32, %c0_i32_0 : i32, i32, i32
  }
  func.func @transform_2(%arg0: i32, %arg1: memref<4x4xi32, #tpu.memory_space<smem>>) -> (i32, i32) {
    %c0_i32 = arith.constant 0 : i32
    %c0_i32_0 = arith.constant 0 : i32
    %c0_i32_1 = arith.constant 0 : i32
    return %c0_i32, %c0_i32_0 : i32, i32
  }
  func.func @transform_3(%arg0: i32, %arg1: memref<4x4xi32, #tpu.memory_space<smem>>) -> (i32, i32) {
    %c0_i32 = arith.constant 0 : i32
    %c0_i32_0 = arith.constant 0 : i32
    %c0_i32_1 = arith.constant 0 : i32
    return %c0_i32, %c0_i32_0 : i32, i32
  }
  func.func @transform_4(%arg0: i32, %arg1: memref<4x4xi32, #tpu.memory_space<smem>>) -> (i32, i32) {
    %c0_i32 = arith.constant 0 : i32
    %c0_i32_0 = arith.constant 0 : i32
    %c0_i32_1 = arith.constant 0 : i32
    return %c0_i32, %c0_i32_0 : i32, i32
  }
  func.func @transform_5(%arg0: i32, %arg1: memref<4x4xi32, #tpu.memory_space<smem>>) -> (i32, i32) {
    %c0_i32 = arith.constant 0 : i32
    %c0_i32_0 = arith.constant 0 : i32
    %c0_i32_1 = arith.constant 0 : i32
    return %c0_i32, %c0_i32_0 : i32, i32
  }
  func.func @transform_6(%arg0: i32, %arg1: memref<4x4xi32, #tpu.memory_space<smem>>) -> (i32, i32) {
    %c0_i32 = arith.constant 0 : i32
    %c0_i32_0 = arith.constant 0 : i32
    %c0_i32_1 = arith.constant 0 : i32
    return %c0_i32, %c0_i32_0 : i32, i32
  }
  func.func @transform_7(%arg0: i32, %arg1: memref<4x4xi32, #tpu.memory_space<smem>>) -> (i32, i32) {
    %c0_i32 = arith.constant 0 : i32
    %c0_i32_0 = arith.constant 0 : i32
    %c0_i32_1 = arith.constant 0 : i32
    return %c0_i32, %c0_i32_0 : i32, i32
  }
  func.func @transform_8(%arg0: i32, %arg1: memref<4x4xi32, #tpu.memory_space<smem>>) -> (i32, i32) {
    %c0_i32 = arith.constant 0 : i32
    %c0_i32_0 = arith.constant 0 : i32
    %c0_i32_1 = arith.constant 0 : i32
    return %c0_i32, %c0_i32_0 : i32, i32
  }
  func.func @transform_9(%arg0: i32, %arg1: memref<4x4xi32, #tpu.memory_space<smem>>) -> (i32, i32) {
    %c0_i32 = arith.constant 0 : i32
    %c0_i32_0 = arith.constant 0 : i32
    %c0_i32_1 = arith.constant 0 : i32
    return %c0_i32, %c0_i32_0 : i32, i32
  }
  func.func @transform_10(%arg0: i32, %arg1: memref<4x4xi32, #tpu.memory_space<smem>>) -> (i32, i32) {
    %c0_i32 = arith.constant 0 : i32
    %c0_i32_0 = arith.constant 0 : i32
    %c0_i32_1 = arith.constant 0 : i32
    return %c0_i32, %c0_i32_0 : i32, i32
  }
  func.func @transform_11(%arg0: i32, %arg1: memref<4x4xi32, #tpu.memory_space<smem>>) -> (i32, i32) {
    %c0_i32 = arith.constant 0 : i32
    %c0_i32_0 = arith.constant 0 : i32
    %c0_i32_1 = arith.constant 0 : i32
    return %c0_i32, %c0_i32_0 : i32, i32
  }
  func.func @transform_12(%arg0: i32, %arg1: memref<4x4xi32, #tpu.memory_space<smem>>) -> (i32, i32) {
    %c0_i32 = arith.constant 0 : i32
    %c0_i32_0 = arith.constant 0 : i32
    %c0_i32_1 = arith.constant 0 : i32
    return %c0_i32, %c0_i32_0 : i32, i32
  }
  func.func @transform_13(%arg0: i32, %arg1: memref<4x4xi32, #tpu.memory_space<smem>>) -> (i32, i32) {
    %c0_i32 = arith.constant 0 : i32
    %c0_i32_0 = arith.constant 0 : i32
    %c0_i32_1 = arith.constant 0 : i32
    return %c0_i32, %c0_i32_0 : i32, i32
  }
  func.func @transform_14(%arg0: i32, %arg1: memref<4x4xi32, #tpu.memory_space<smem>>) -> (i32, i32) {
    %c0_i32 = arith.constant 0 : i32
    %c0_i32_0 = arith.constant 0 : i32
    %c0_i32_1 = arith.constant 0 : i32
    return %c0_i32, %c0_i32_0 : i32, i32
  }
  func.func @transform_15(%arg0: i32, %arg1: memref<4x4xi32, #tpu.memory_space<smem>>) -> (i32, i32) {
    %c0_i32 = arith.constant 0 : i32
    %c0_i32_0 = arith.constant 0 : i32
    %c0_i32_1 = arith.constant 0 : i32
    return %c0_i32, %c0_i32_0 : i32, i32
  }
  func.func @transform_16(%arg0: i32, %arg1: memref<4x4xi32, #tpu.memory_space<smem>>) -> (i32, i32) {
    %c0_i32 = arith.constant 0 : i32
    %c0_i32_0 = arith.constant 0 : i32
    %c0_i32_1 = arith.constant 0 : i32
    return %c0_i32, %c0_i32_0 : i32, i32
  }
  func.func @transform_17(%arg0: i32, %arg1: memref<4x4xi32, #tpu.memory_space<smem>>) -> (i32, i32) {
    %c0_i32 = arith.constant 0 : i32
    %c0_i32_0 = arith.constant 0 : i32
    %c0_i32_1 = arith.constant 0 : i32
    return %c0_i32, %c0_i32_0 : i32, i32
  }
  func.func @transform_18(%arg0: i32, %arg1: memref<4x4xi32, #tpu.memory_space<smem>>) -> (i32, i32, i32) {
    %c0_i32 = arith.constant 0 : i32
    %c0_i32_0 = arith.constant 0 : i32
    %c0_i32_1 = arith.constant 0 : i32
    return %arg0, %c0_i32, %c0_i32_0 : i32, i32, i32
  }
}

</mosaic_0001>

<llo_original>
// kernel: tpu_custom_call.1
$region0: #{tpu_custom_call.1}
  #allocation0 [shape = 'u32[]', space=smem, size = 0x4, offset = 0x4, fixed_abs, tag = 'smem constant byte address 0x4 - core index']
  #allocation1 [shape = 'u32[144,128]{1,0:T(1,128)}', space=vmem, size = 0x12000, scoped, tag = 'internal scratch']
  #allocation2 [shape = 'f32[128,128]{1,0:T(8,128)}', space=vmem, size = 0x10000, scoped, tag = 'scratch operand']
  #allocation3 [shape = 'f32[128,1]{1,0:T(8,128)}', space=vmem, size = 0x10000, scoped, tag = 'scratch operand']
  #allocation4 [shape = 'f32[80,4]{1,0:T(8,128)}', space=vmem, size = 0xa000, scoped, tag = 'scratch operand']
  #allocation5 [shape = 's32[1]{0}', space=sflag, size = 0x4, scoped, tag = 'scoped memory for tpu_custom_call.1']
  #allocation6 [shape = 'u8[2048]{0}', space=smem, size = 0x800, scoped, tag = 'prefetched SMEM operand 0']
  #allocation7 [shape = 'f32[1,1]{1,0:T(1,128)S(1)}', space=vmem, size = 0x200, scoped, tag = 'scoped memory for tpu_custom_call.1']
  %s0 = inlined_call_operand.vmem [shape: s32[4,4], index: 0, kind: input, shape index: {}]
  %s1 = inlined_call_operand.hbm [shape: f32[4,64,128], index: 1, kind: input, shape index: {}]
  %s2 = inlined_call_operand.hbm [shape: f32[4,64,64], index: 2, kind: input, shape index: {}]
  %s3 = inlined_call_operand.vmem [shape: f32[128,128], index: 3, kind: input, shape index: {}]
  %s4 = inlined_call_operand.vmem [shape: f32[1,128], index: 4, kind: input, shape index: {}]
  %s5 = inlined_call_operand.hbm [shape: f32[128,384], index: 5, kind: input, shape index: {}]
  %s6 = inlined_call_operand.vmem [shape: f32[1,384], index: 6, kind: input, shape index: {}]
  %s7 = inlined_call_operand.hbm [shape: f32[128,384], index: 7, kind: input, shape index: {}]
  %s8 = inlined_call_operand.vmem [shape: f32[1,384], index: 8, kind: input, shape index: {}]
  %s9 = inlined_call_operand.hbm [shape: f32[128,128], index: 9, kind: input, shape index: {}]
  %s10 = inlined_call_operand.vmem [shape: f32[1,128], index: 10, kind: input, shape index: {}]
  %s11 = inlined_call_operand.hbm [shape: f32[128,128], index: 11, kind: input, shape index: {}]
  %s12 = inlined_call_operand.vmem [shape: f32[1,128], index: 12, kind: input, shape index: {}]
  %s13 = inlined_call_operand.vmem [shape: f32[128,1], index: 13, kind: input, shape index: {}]
  %s14 = inlined_call_operand.<no memory space> [shape: f32[1,1], index: 14, kind: input, shape index: {}]
  %s15 = inlined_call_operand.hbm [shape: f32[128,128], index: 15, kind: input, shape index: {}]
  %s16 = inlined_call_operand.vmem [shape: f32[1,128], index: 16, kind: input, shape index: {}]
  %s17 = inlined_call_operand.hbm [shape: f32[128,128], index: 17, kind: input, shape index: {}]
  %s18 = inlined_call_operand.vmem [shape: f32[1,128], index: 18, kind: input, shape index: {}]
  %s19 = inlined_call_operand.hbm [shape: f32[4,4,128], index: 19, kind: output, shape index: {}]
  %s20 = sld [smem:[#allocation0]]
  $region137: #{tpu_custom_call.1} parent=0
    _
  %s22 = ssub.s32 1, %s20
  %s23 = scalar_select 0, %s22, %s20
  %s24 = sshll.u32 %s0, 4
  %s25 = int_to_ptr.vmem [resolvable:$true] %s24
  %27 = dma.vmem_to_smem %s25, 64, [#allocation6], [#allocation5]
  %v28 = vstv %s14
  %29 = vst [vmem:[#allocation7] sm:$0x1] %v28
  %30 = dma.done [#allocation5], 64
  %31 = sfence
  $region1: #{tpu_custom_call.1} parent=0
    #allocation8 [shape = 'u8[131072]{0}', space=vmem, size = 0x20000, scoped, tag = 'input window, operand 1']
    #allocation9 [shape = 's32[2]{0}', space=sflag, size = 0x8, scoped, tag = 'scoped memory for tpu_custom_call.1']
    #allocation10 [shape = 's32[2]{0}', space=sflag, size = 0x8, scoped, tag = 'scoped memory for tpu_custom_call.1']
    #allocation11 [shape = 'u8[131072]{0}', space=vmem, size = 0x20000, scoped, tag = 'input window, operand 2']
    #allocation12 [shape = 's32[2]{0}', space=sflag, size = 0x8, scoped, tag = 'scoped memory for tpu_custom_call.1']
    #allocation13 [shape = 'u8[196608]{0}', space=vmem, size = 0x30000, scoped, tag = 'input window, operand 5, single buffered']
    #allocation14 [shape = 'u8[196608]{0}', space=vmem, size = 0x30000, scoped, tag = 'input window, operand 7, single buffered']
    #allocation15 [shape = 's32[1]{0}', space=sflag, size = 0x4, scoped, tag = 'scoped memory for tpu_custom_call.1']
    #allocation16 [shape = 'u8[65536]{0}', space=vmem, size = 0x10000, scoped, tag = 'input window, operand 9, single buffered']
    #allocation17 [shape = 'u8[65536]{0}', space=vmem, size = 0x10000, scoped, tag = 'input window, operand 11, single buffered']
    #allocation18 [shape = 's32[1]{0}', space=sflag, size = 0x4, scoped, tag = 'scoped memory for tpu_custom_call.1']
    #allocation19 [shape = 'u8[65536]{0}', space=vmem, size = 0x10000, scoped, tag = 'input window, operand 15, single buffered']
    #allocation20 [shape = 'u8[65536]{0}', space=vmem, size = 0x10000, scoped, tag = 'input window, operand 17, single buffered']
    #allocation21 [shape = 's32[1]{0}', space=sflag, size = 0x4, scoped, tag = 'scoped memory for tpu_custom_call.1']
    #allocation22 [shape = 'u8[8192]{0}', space=vmem, size = 0x2000, scoped, tag = 'output window, operand 0']
    %32 = vsyncpa [#allocation9], 0
    %s33 = scalar_lea.sflag [#allocation9], 1
    %34 = vsyncpa %s33, 0
    %35 = vsyncpa [#allocation12], 0
    %s36 = scalar_lea.sflag [#allocation12], 1
    %37 = vsyncpa %s36, 0
    %38 = vsyncpa [#allocation15], 0
    %39 = vsyncpa [#allocation18], 0
    %40 = vsyncpa [#allocation21], 0
    %41 = vsyncpa [#allocation10], 0
    %s42 = scalar_lea.sflag [#allocation10], 1
    %43 = vsyncpa %s42, 0
    loop: start=0, step=1, limit=4
    $region2: #{tpu_custom_call.1} parent=1 // loop_pre_header
      _
    $region3: #{tpu_custom_call.1} parent=1 // loop_header
      %s45 = sphi 0, %s49
      %p46 = scmp.ge.s32.totalorder %s45, 4
      %s55 = sphi 0, %s57
      %s58 = sphi 0, %s55
      %s59 = sphi 0, %s58
      %s75 = sphi 0, %s59
      %s81 = sphi 0, %s83
      %s84 = sphi 0, %s81
      %s85 = sphi 0, %s84
      %s101 = sphi 0, %s85
      %s105 = sphi 0, %s105
      %s107 = sphi 0, %s105
      %s108 = sphi 0, %s107
      %s122 = sphi 0, %s108
      %s126 = sphi 0, %s126
      %s128 = sphi 0, %s126
      %s129 = sphi 0, %s128
      %s143 = sphi 0, %s129
      %s147 = sphi 0, %s147
      %s149 = sphi 0, %s147
      %s150 = sphi 0, %s149
      %s164 = sphi 0, %s150
      %s168 = sphi 0, %s168
      %s170 = sphi 0, %s168
      %s171 = sphi 0, %s170
      %s185 = sphi 0, %s171
      %s189 = sphi 0, %s189
      %s191 = sphi 0, %s189
      %s192 = sphi 0, %s191
      %s206 = sphi 0, %s192
      %s210 = sphi 0, %s210
      %s212 = sphi 0, %s210
      %s213 = sphi 0, %s212
      %s227 = sphi 0, %s213
      %s231 = sphi 0, %s231
      %s233 = sphi 0, %s231
      %s234 = sphi 0, %s233
      %s248 = sphi 0, %s234
      %s252 = sphi 0, %s252
      %s254 = sphi 0, %s252
      %s255 = sphi 0, %s254
      %s269 = sphi 0, %s255
      %s273 = sphi 0, %s273
      %s275 = sphi 0, %s273
      %s276 = sphi 0, %s275
      %s290 = sphi 0, %s276
      %s294 = sphi 0, %s294
      %s296 = sphi 0, %s294
      %s297 = sphi 0, %s296
      %s311 = sphi 0, %s297
      %s315 = sphi 0, %s315
      %s317 = sphi 0, %s315
      %s318 = sphi 0, %s317
      %s332 = sphi 0, %s318
      %s336 = sphi 0, %s336
      %s338 = sphi 0, %s336
      %s339 = sphi 0, %s338
      %s353 = sphi 0, %s339
      %s357 = sphi 0, %s357
      %s359 = sphi 0, %s357
      %s360 = sphi 0, %s359
      %s374 = sphi 0, %s360
      %s378 = sphi 0, %s378
      %s380 = sphi 0, %s378
      %s381 = sphi 0, %s380
      %s395 = sphi 0, %s381
      %s399 = sphi 0, %s399
      %s401 = sphi 0, %s399
      %s402 = sphi 0, %s401
      %s416 = sphi 0, %s402
      %s420 = sphi 0, %s420
      %s422 = sphi 0, %s420
      %s423 = sphi 0, %s422
      %s437 = sphi 0, %s423
      %s443 = sphi 0, %s445
      %s446 = sphi 0, %s443
      %s447 = sphi 0, %s446
      %s463 = sphi 0, %s447
    $region4: #{tpu_custom_call.1} parent=1 // loop_header_branch
      %48 = sbr.rel (%p46) target = $region8
    $region5: #{tpu_custom_call.1} parent=1 // loop_body
      %s50 = ssub.s32 %s45, 1
      %s51 = ssub.s32 %s45, 2
      %s52 = sadd.s32 %s45, 1
      %s53 = ssub.s32 %s45, %s52
      %p54 = scmp.eq.s32.totalorder %s53, 0
      %s56 = sadd.s32 %s55, 1
      %s57 = scalar_select %p54, %s55, %s56
      %p60 = pneg %p54
      %p61 = scmp.eq.s32.totalorder %s45, 1
      %p62 = por %p60, %p61
      %p63 = scmp.ne.s32.totalorder %s55, %s58
      %p64 = scmp.eq.s32.totalorder %s45, 0
      %p65 = por %p63, %p64
      %p66 = scmp.ne.s32.totalorder %s55, %s58
      %p67 = scmp.eq.s32.totalorder %s50, 1
      %p68 = por %p66, %p67
      %p69 = scmp.ne.s32.totalorder %s58, %s59
      %p70 = scmp.eq.s32.totalorder %s50, 0
      %p71 = por %p69, %p70
      %p72 = scmp.ne.s32.totalorder %s58, %s59
      %p73 = scmp.eq.s32.totalorder %s51, 1
      %p74 = por %p72, %p73
      %p76 = scmp.ne.s32.totalorder %s59, %s75
      %p77 = scmp.eq.s32.totalorder %s51, 0
      %p78 = por %p76, %p77
      %s79 = ssub.s32 %s45, %s52
      %p80 = scmp.eq.s32.totalorder %s79, 0
      %s82 = sadd.s32 %s81, 1
      %s83 = scalar_select %p80, %s81, %s82
      %p86 = pneg %p80
      %p87 = scmp.eq.s32.totalorder %s45, 1
      %p88 = por %p86, %p87
      %p89 = scmp.ne.s32.totalorder %s81, %s84
      %p90 = scmp.eq.s32.totalorder %s45, 0
      %p91 = por %p89, %p90
      %p92 = scmp.ne.s32.totalorder %s81, %s84
      %p93 = scmp.eq.s32.totalorder %s50, 1
      %p94 = por %p92, %p93
      %p95 = scmp.ne.s32.totalorder %s84, %s85
      %p96 = scmp.eq.s32.totalorder %s50, 0
      %p97 = por %p95, %p96
      %p98 = scmp.ne.s32.totalorder %s84, %s85
      %p99 = scmp.eq.s32.totalorder %s51, 1
      %p100 = por %p98, %p99
      %p102 = scmp.ne.s32.totalorder %s85, %s101
      %p103 = scmp.eq.s32.totalorder %s51, 0
      %p104 = por %p102, %p103
      %s106 = sadd.s32 %s105, 1
      %p109 = scmp.eq.s32.totalorder %s45, 1
      %p110 = scmp.ne.s32.totalorder %s105, %s107
      %p111 = scmp.eq.s32.totalorder %s45, 0
      %p112 = por %p110, %p111
      %p113 = scmp.ne.s32.totalorder %s105, %s107
      %p114 = scmp.eq.s32.totalorder %s50, 1
      %p115 = por %p113, %p114
      %p116 = scmp.ne.s32.totalorder %s107, %s108
      %p117 = scmp.eq.s32.totalorder %s50, 0
      %p118 = por %p116, %p117
      %p119 = scmp.ne.s32.totalorder %s107, %s108
      %p120 = scmp.eq.s32.totalorder %s51, 1
      %p121 = por %p119, %p120
      %p123 = scmp.ne.s32.totalorder %s108, %s122
      %p124 = scmp.eq.s32.totalorder %s51, 0
      %p125 = por %p123, %p124
      %s127 = sadd.s32 %s126, 1
      %p130 = scmp.eq.s32.totalorder %s45, 1
      %p131 = scmp.ne.s32.totalorder %s126, %s128
      %p132 = scmp.eq.s32.totalorder %s45, 0
      %p133 = por %p131, %p132
      %p134 = scmp.ne.s32.totalorder %s126, %s128
      %p135 = scmp.eq.s32.totalorder %s50, 1
      %p136 = por %p134, %p135
      %p137 = scmp.ne.s32.totalorder %s128, %s129
      %p138 = scmp.eq.s32.totalorder %s50, 0
      %p139 = por %p137, %p138
      %p140 = scmp.ne.s32.totalorder %s128, %s129
      %p141 = scmp.eq.s32.totalorder %s51, 1
      %p142 = por %p140, %p141
      %p144 = scmp.ne.s32.totalorder %s129, %s143
      %p145 = scmp.eq.s32.totalorder %s51, 0
      %p146 = por %p144, %p145
      %s148 = sadd.s32 %s147, 1
      %p151 = scmp.eq.s32.totalorder %s45, 1
      %p152 = scmp.ne.s32.totalorder %s147, %s149
      %p153 = scmp.eq.s32.totalorder %s45, 0
      %p154 = por %p152, %p153
      %p155 = scmp.ne.s32.totalorder %s147, %s149
      %p156 = scmp.eq.s32.totalorder %s50, 1
      %p157 = por %p155, %p156
      %p158 = scmp.ne.s32.totalorder %s149, %s150
      %p159 = scmp.eq.s32.totalorder %s50, 0
      %p160 = por %p158, %p159
      %p161 = scmp.ne.s32.totalorder %s149, %s150
      %p162 = scmp.eq.s32.totalorder %s51, 1
      %p163 = por %p161, %p162
      %p165 = scmp.ne.s32.totalorder %s150, %s164
      %p166 = scmp.eq.s32.totalorder %s51, 0
      %p167 = por %p165, %p166
      %s169 = sadd.s32 %s168, 1
      %p172 = scmp.eq.s32.totalorder %s45, 1
      %p173 = scmp.ne.s32.totalorder %s168, %s170
      %p174 = scmp.eq.s32.totalorder %s45, 0
      %p175 = por %p173, %p174
      %p176 = scmp.ne.s32.totalorder %s168, %s170
      %p177 = scmp.eq.s32.totalorder %s50, 1
      %p178 = por %p176, %p177
      %p179 = scmp.ne.s32.totalorder %s170, %s171
      %p180 = scmp.eq.s32.totalorder %s50, 0
      %p181 = por %p179, %p180
      %p182 = scmp.ne.s32.totalorder %s170, %s171
      %p183 = scmp.eq.s32.totalorder %s51, 1
      %p184 = por %p182, %p183
      %p186 = scmp.ne.s32.totalorder %s171, %s185
      %p187 = scmp.eq.s32.totalorder %s51, 0
      %p188 = por %p186, %p187
      %s190 = sadd.s32 %s189, 1
      %p193 = scmp.eq.s32.totalorder %s45, 1
      %p194 = scmp.ne.s32.totalorder %s189, %s191
      %p195 = scmp.eq.s32.totalorder %s45, 0
      %p196 = por %p194, %p195
      %p197 = scmp.ne.s32.totalorder %s189, %s191
      %p198 = scmp.eq.s32.totalorder %s50, 1
      %p199 = por %p197, %p198
      %p200 = scmp.ne.s32.totalorder %s191, %s192
      %p201 = scmp.eq.s32.totalorder %s50, 0
      %p202 = por %p200, %p201
      %p203 = scmp.ne.s32.totalorder %s191, %s192
      %p204 = scmp.eq.s32.totalorder %s51, 1
      %p205 = por %p203, %p204
      %p207 = scmp.ne.s32.totalorder %s192, %s206
      %p208 = scmp.eq.s32.totalorder %s51, 0
      %p209 = por %p207, %p208
      %s211 = sadd.s32 %s210, 1
      %p214 = scmp.eq.s32.totalorder %s45, 1
      %p215 = scmp.ne.s32.totalorder %s210, %s212
      %p216 = scmp.eq.s32.totalorder %s45, 0
      %p217 = por %p215, %p216
      %p218 = scmp.ne.s32.totalorder %s210, %s212
      %p219 = scmp.eq.s32.totalorder %s50, 1
      %p220 = por %p218, %p219
      %p221 = scmp.ne.s32.totalorder %s212, %s213
      %p222 = scmp.eq.s32.totalorder %s50, 0
      %p223 = por %p221, %p222
      %p224 = scmp.ne.s32.totalorder %s212, %s213
      %p225 = scmp.eq.s32.totalorder %s51, 1
      %p226 = por %p224, %p225
      %p228 = scmp.ne.s32.totalorder %s213, %s227
      %p229 = scmp.eq.s32.totalorder %s51, 0
      %p230 = por %p228, %p229
      %s232 = sadd.s32 %s231, 1
      %p235 = scmp.eq.s32.totalorder %s45, 1
      %p236 = scmp.ne.s32.totalorder %s231, %s233
      %p237 = scmp.eq.s32.totalorder %s45, 0
      %p238 = por %p236, %p237
      %p239 = scmp.ne.s32.totalorder %s231, %s233
      %p240 = scmp.eq.s32.totalorder %s50, 1
      %p241 = por %p239, %p240
      %p242 = scmp.ne.s32.totalorder %s233, %s234
      %p243 = scmp.eq.s32.totalorder %s50, 0
      %p244 = por %p242, %p243
      %p245 = scmp.ne.s32.totalorder %s233, %s234
      %p246 = scmp.eq.s32.totalorder %s51, 1
      %p247 = por %p245, %p246
      %p249 = scmp.ne.s32.totalorder %s234, %s248
      %p250 = scmp.eq.s32.totalorder %s51, 0
      %p251 = por %p249, %p250
      %s253 = sadd.s32 %s252, 1
      %p256 = scmp.eq.s32.totalorder %s45, 1
      %p257 = scmp.ne.s32.totalorder %s252, %s254
      %p258 = scmp.eq.s32.totalorder %s45, 0
      %p259 = por %p257, %p258
      %p260 = scmp.ne.s32.totalorder %s252, %s254
      %p261 = scmp.eq.s32.totalorder %s50, 1
      %p262 = por %p260, %p261
      %p263 = scmp.ne.s32.totalorder %s254, %s255
      %p264 = scmp.eq.s32.totalorder %s50, 0
      %p265 = por %p263, %p264
      %p266 = scmp.ne.s32.totalorder %s254, %s255
      %p267 = scmp.eq.s32.totalorder %s51, 1
      %p268 = por %p266, %p267
      %p270 = scmp.ne.s32.totalorder %s255, %s269
      %p271 = scmp.eq.s32.totalorder %s51, 0
      %p272 = por %p270, %p271
      %s274 = sadd.s32 %s273, 1
      %p277 = scmp.eq.s32.totalorder %s45, 1
      %p278 = scmp.ne.s32.totalorder %s273, %s275
      %p279 = scmp.eq.s32.totalorder %s45, 0
      %p280 = por %p278, %p279
      %p281 = scmp.ne.s32.totalorder %s273, %s275
      %p282 = scmp.eq.s32.totalorder %s50, 1
      %p283 = por %p281, %p282
      %p284 = scmp.ne.s32.totalorder %s275, %s276
      %p285 = scmp.eq.s32.totalorder %s50, 0
      %p286 = por %p284, %p285
      %p287 = scmp.ne.s32.totalorder %s275, %s276
      %p288 = scmp.eq.s32.totalorder %s51, 1
      %p289 = por %p287, %p288
      %p291 = scmp.ne.s32.totalorder %s276, %s290
      %p292 = scmp.eq.s32.totalorder %s51, 0
      %p293 = por %p291, %p292
      %s295 = sadd.s32 %s294, 1
      %p298 = scmp.eq.s32.totalorder %s45, 1
      %p299 = scmp.ne.s32.totalorder %s294, %s296
      %p300 = scmp.eq.s32.totalorder %s45, 0
      %p301 = por %p299, %p300
      %p302 = scmp.ne.s32.totalorder %s294, %s296
      %p303 = scmp.eq.s32.totalorder %s50, 1
      %p304 = por %p302, %p303
      %p305 = scmp.ne.s32.totalorder %s296, %s297
      %p306 = scmp.eq.s32.totalorder %s50, 0
      %p307 = por %p305, %p306
      %p308 = scmp.ne.s32.totalorder %s296, %s297
      %p309 = scmp.eq.s32.totalorder %s51, 1
      %p310 = por %p308, %p309
      %p312 = scmp.ne.s32.totalorder %s297, %s311
      %p313 = scmp.eq.s32.totalorder %s51, 0
      %p314 = por %p312, %p313
      %s316 = sadd.s32 %s315, 1
      %p319 = scmp.eq.s32.totalorder %s45, 1
      %p320 = scmp.ne.s32.totalorder %s315, %s317
      %p321 = scmp.eq.s32.totalorder %s45, 0
      %p322 = por %p320, %p321
      %p323 = scmp.ne.s32.totalorder %s315, %s317
      %p324 = scmp.eq.s32.totalorder %s50, 1
      %p325 = por %p323, %p324
      %p326 = scmp.ne.s32.totalorder %s317, %s318
      %p327 = scmp.eq.s32.totalorder %s50, 0
      %p328 = por %p326, %p327
      %p329 = scmp.ne.s32.totalorder %s317, %s318
      %p330 = scmp.eq.s32.totalorder %s51, 1
      %p331 = por %p329, %p330
      %p333 = scmp.ne.s32.totalorder %s318, %s332
      %p334 = scmp.eq.s32.totalorder %s51, 0
      %p335 = por %p333, %p334
      %s337 = sadd.s32 %s336, 1
      %p340 = scmp.eq.s32.totalorder %s45, 1
      %p341 = scmp.ne.s32.totalorder %s336, %s338
      %p342 = scmp.eq.s32.totalorder %s45, 0
      %p343 = por %p341, %p342
      %p344 = scmp.ne.s32.totalorder %s336, %s338
      %p345 = scmp.eq.s32.totalorder %s50, 1
      %p346 = por %p344, %p345
      %p347 = scmp.ne.s32.totalorder %s338, %s339
      %p348 = scmp.eq.s32.totalorder %s50, 0
      %p349 = por %p347, %p348
      %p350 = scmp.ne.s32.totalorder %s338, %s339
      %p351 = scmp.eq.s32.totalorder %s51, 1
      %p352 = por %p350, %p351
      %p354 = scmp.ne.s32.totalorder %s339, %s353
      %p355 = scmp.eq.s32.totalorder %s51, 0
      %p356 = por %p354, %p355
      %s358 = sadd.s32 %s357, 1
      %p361 = scmp.eq.s32.totalorder %s45, 1
      %p362 = scmp.ne.s32.totalorder %s357, %s359
      %p363 = scmp.eq.s32.totalorder %s45, 0
      %p364 = por %p362, %p363
      %p365 = scmp.ne.s32.totalorder %s357, %s359
      %p366 = scmp.eq.s32.totalorder %s50, 1
      %p367 = por %p365, %p366
      %p368 = scmp.ne.s32.totalorder %s359, %s360
      %p369 = scmp.eq.s32.totalorder %s50, 0
      %p370 = por %p368, %p369
      %p371 = scmp.ne.s32.totalorder %s359, %s360
      %p372 = scmp.eq.s32.totalorder %s51, 1
      %p373 = por %p371, %p372
      %p375 = scmp.ne.s32.totalorder %s360, %s374
      %p376 = scmp.eq.s32.totalorder %s51, 0
      %p377 = por %p375, %p376
      %s379 = sadd.s32 %s378, 1
      %p382 = scmp.eq.s32.totalorder %s45, 1
      %p383 = scmp.ne.s32.totalorder %s378, %s380
      %p384 = scmp.eq.s32.totalorder %s45, 0
      %p385 = por %p383, %p384
      %p386 = scmp.ne.s32.totalorder %s378, %s380
      %p387 = scmp.eq.s32.totalorder %s50, 1
      %p388 = por %p386, %p387
      %p389 = scmp.ne.s32.totalorder %s380, %s381
      %p390 = scmp.eq.s32.totalorder %s50, 0
      %p391 = por %p389, %p390
      %p392 = scmp.ne.s32.totalorder %s380, %s381
      %p393 = scmp.eq.s32.totalorder %s51, 1
      %p394 = por %p392, %p393
      %p396 = scmp.ne.s32.totalorder %s381, %s395
      %p397 = scmp.eq.s32.totalorder %s51, 0
      %p398 = por %p396, %p397
      %s400 = sadd.s32 %s399, 1
      %p403 = scmp.eq.s32.totalorder %s45, 1
      %p404 = scmp.ne.s32.totalorder %s399, %s401
      %p405 = scmp.eq.s32.totalorder %s45, 0
      %p406 = por %p404, %p405
      %p407 = scmp.ne.s32.totalorder %s399, %s401
      %p408 = scmp.eq.s32.totalorder %s50, 1
      %p409 = por %p407, %p408
      %p410 = scmp.ne.s32.totalorder %s401, %s402
      %p411 = scmp.eq.s32.totalorder %s50, 0
      %p412 = por %p410, %p411
      %p413 = scmp.ne.s32.totalorder %s401, %s402
      %p414 = scmp.eq.s32.totalorder %s51, 1
      %p415 = por %p413, %p414
      %p417 = scmp.ne.s32.totalorder %s402, %s416
      %p418 = scmp.eq.s32.totalorder %s51, 0
      %p419 = por %p417, %p418
      %s421 = sadd.s32 %s420, 1
      %p424 = scmp.eq.s32.totalorder %s45, 1
      %p425 = scmp.ne.s32.totalorder %s420, %s422
      %p426 = scmp.eq.s32.totalorder %s45, 0
      %p427 = por %p425, %p426
      %p428 = scmp.ne.s32.totalorder %s420, %s422
      %p429 = scmp.eq.s32.totalorder %s50, 1
      %p430 = por %p428, %p429
      %p431 = scmp.ne.s32.totalorder %s422, %s423
      %p432 = scmp.eq.s32.totalorder %s50, 0
      %p433 = por %p431, %p432
      %p434 = scmp.ne.s32.totalorder %s422, %s423
      %p435 = scmp.eq.s32.totalorder %s51, 1
      %p436 = por %p434, %p435
      %p438 = scmp.ne.s32.totalorder %s423, %s437
      %p439 = scmp.eq.s32.totalorder %s51, 0
      %p440 = por %p438, %p439
      %s441 = ssub.s32 %s45, %s52
      %p442 = scmp.eq.s32.totalorder %s441, 0
      %s444 = sadd.s32 %s443, 1
      %s445 = scalar_select %p442, %s443, %s444
      %p448 = pneg %p442
      %p449 = scmp.eq.s32.totalorder %s45, 1
      %p450 = por %p448, %p449
      %p451 = scmp.ne.s32.totalorder %s443, %s446
      %p452 = scmp.eq.s32.totalorder %s45, 0
      %p453 = por %p451, %p452
      %p454 = scmp.ne.s32.totalorder %s443, %s446
      %p455 = scmp.eq.s32.totalorder %s50, 1
      %p456 = por %p454, %p455
      %p457 = scmp.ne.s32.totalorder %s446, %s447
      %p458 = scmp.eq.s32.totalorder %s50, 0
      %p459 = por %p457, %p458
      %p460 = scmp.ne.s32.totalorder %s446, %s447
      %p461 = scmp.eq.s32.totalorder %s51, 1
      %p462 = por %p460, %p461
      %p464 = scmp.ne.s32.totalorder %s447, %s463
      %p465 = scmp.eq.s32.totalorder %s51, 0
      %p466 = por %p464, %p465
      %p467 = scmp.le.s32.totalorder 1, %s45
      %p468 = scmp.lt.s32.totalorder %s45, 3
      %p469 = pnand %p467, %p468
      %p470 = pneg %p469
      // Predicated region
      $region9: #{tpu_custom_call.1} parent=5 // pred_check
        _
      $region10: #{tpu_custom_call.1} parent=5 // pred_check_branch
        %472 = sbr.rel (%p469) target = $region12
      $region11: #{tpu_custom_call.1} parent=5 // pred_region
        %s473 = ssub.s32 %s45, 1
        // Predicated region
        $region13: #{tpu_custom_call.1} parent=11 // pred_check
          %p474 = pneg %p118
        $region14: #{tpu_custom_call.1} parent=11 // pred_check_branch
          %476 = sbr.rel (%p474) target = $region16
        $region15: #{tpu_custom_call.1} parent=11 // pred_region
          _
        $region16: #{tpu_custom_call.1} parent=11 // pred_fallthru
          _
        // Predicated region
        $region17: #{tpu_custom_call.1} parent=11 // pred_check
          %p477 = pneg %p139
        $region18: #{tpu_custom_call.1} parent=11 // pred_check_branch
          %479 = sbr.rel (%p477) target = $region20
        $region19: #{tpu_custom_call.1} parent=11 // pred_region
          _
        $region20: #{tpu_custom_call.1} parent=11 // pred_fallthru
          _
        // Predicated region
        $region21: #{tpu_custom_call.1} parent=11 // pred_check
          %p480 = pneg %p160
        $region22: #{tpu_custom_call.1} parent=11 // pred_check_branch
          %482 = sbr.rel (%p480) target = $region24
        $region23: #{tpu_custom_call.1} parent=11 // pred_region
          %s484 = ssub.s32 6144, 6144
          %485 = vsyncadd [#allocation12], %s484
          %s486 = sshll.u32 [#allocation13], 4
          %s487 = int_to_ptr.vmem [resolvable:$true] %s486
          %492 = dma.hbm_to_vmem [thread:$0]  %s5, 6144, %s487, [#allocation12], 384, 384, 24
        $region24: #{tpu_custom_call.1} parent=11 // pred_fallthru
          _
        // Predicated region
        $region25: #{tpu_custom_call.1} parent=11 // pred_check
          %p493 = pneg %p181
        $region26: #{tpu_custom_call.1} parent=11 // pred_check_branch
          %495 = sbr.rel (%p493) target = $region28
        $region27: #{tpu_custom_call.1} parent=11 // pred_region
          _
        $region28: #{tpu_custom_call.1} parent=11 // pred_fallthru
          _
        // Predicated region
        $region29: #{tpu_custom_call.1} parent=11 // pred_check
          %p496 = pneg %p202
        $region30: #{tpu_custom_call.1} parent=11 // pred_check_branch
          %498 = sbr.rel (%p496) target = $region32
        $region31: #{tpu_custom_call.1} parent=11 // pred_region
          %s500 = ssub.s32 6144, 6144
          %501 = vsyncadd [#allocation15], %s500
          %s502 = sshll.u32 [#allocation14], 4
          %s503 = int_to_ptr.vmem [resolvable:$true] %s502
          %508 = dma.hbm_to_vmem [thread:$0]  %s7, 6144, %s503, [#allocation15], 384, 384, 24
        $region32: #{tpu_custom_call.1} parent=11 // pred_fallthru
          _
        // Predicated region
        $region33: #{tpu_custom_call.1} parent=11 // pred_check
          %p509 = pneg %p223
        $region34: #{tpu_custom_call.1} parent=11 // pred_check_branch
          %511 = sbr.rel (%p509) target = $region36
        $region35: #{tpu_custom_call.1} parent=11 // pred_region
          _
        $region36: #{tpu_custom_call.1} parent=11 // pred_fallthru
          _
        // Predicated region
        $region37: #{tpu_custom_call.1} parent=11 // pred_check
          %p512 = pneg %p244
        $region38: #{tpu_custom_call.1} parent=11 // pred_check_branch
          %514 = sbr.rel (%p512) target = $region40
        $region39: #{tpu_custom_call.1} parent=11 // pred_region
          %s516 = ssub.s32 2048, 2048
          %517 = vsyncadd [#allocation15], %s516
          %s518 = sshll.u32 [#allocation16], 4
          %s519 = int_to_ptr.vmem [resolvable:$true] %s518
          %524 = dma.hbm_to_vmem [thread:$0]  %s9, 2048, %s519, [#allocation15], 128, 128, 8
        $region40: #{tpu_custom_call.1} parent=11 // pred_fallthru
          _
        // Predicated region
        $region41: #{tpu_custom_call.1} parent=11 // pred_check
          %p525 = pneg %p265
        $region42: #{tpu_custom_call.1} parent=11 // pred_check_branch
          %527 = sbr.rel (%p525) target = $region44
        $region43: #{tpu_custom_call.1} parent=11 // pred_region
          _
        $region44: #{tpu_custom_call.1} parent=11 // pred_fallthru
          _
        // Predicated region
        $region45: #{tpu_custom_call.1} parent=11 // pred_check
          %p528 = pneg %p286
        $region46: #{tpu_custom_call.1} parent=11 // pred_check_branch
          %530 = sbr.rel (%p528) target = $region48
        $region47: #{tpu_custom_call.1} parent=11 // pred_region
          %s532 = ssub.s32 2048, 2048
          %533 = vsyncadd [#allocation18], %s532
          %s534 = sshll.u32 [#allocation17], 4
          %s535 = int_to_ptr.vmem [resolvable:$true] %s534
          %540 = dma.hbm_to_vmem [thread:$0]  %s11, 2048, %s535, [#allocation18], 128, 128, 8
        $region48: #{tpu_custom_call.1} parent=11 // pred_fallthru
          _
        // Predicated region
        $region49: #{tpu_custom_call.1} parent=11 // pred_check
          %p541 = pneg %p307
        $region50: #{tpu_custom_call.1} parent=11 // pred_check_branch
          %543 = sbr.rel (%p541) target = $region52
        $region51: #{tpu_custom_call.1} parent=11 // pred_region
          _
        $region52: #{tpu_custom_call.1} parent=11 // pred_fallthru
          _
        // Predicated region
        $region53: #{tpu_custom_call.1} parent=11 // pred_check
          %p544 = pneg %p328
        $region54: #{tpu_custom_call.1} parent=11 // pred_check_branch
          %546 = sbr.rel (%p544) target = $region56
        $region55: #{tpu_custom_call.1} parent=11 // pred_region
          _
        $region56: #{tpu_custom_call.1} parent=11 // pred_fallthru
          _
        // Predicated region
        $region57: #{tpu_custom_call.1} parent=11 // pred_check
          %p547 = pneg %p349
        $region58: #{tpu_custom_call.1} parent=11 // pred_check_branch
          %549 = sbr.rel (%p547) target = $region60
        $region59: #{tpu_custom_call.1} parent=11 // pred_region
          _
        $region60: #{tpu_custom_call.1} parent=11 // pred_fallthru
          _
        // Predicated region
        $region61: #{tpu_custom_call.1} parent=11 // pred_check
          %p550 = pneg %p370
        $region62: #{tpu_custom_call.1} parent=11 // pred_check_branch
          %552 = sbr.rel (%p550) target = $region64
        $region63: #{tpu_custom_call.1} parent=11 // pred_region
          %s554 = ssub.s32 2048, 2048
          %555 = vsyncadd [#allocation18], %s554
          %s556 = sshll.u32 [#allocation19], 4
          %s557 = int_to_ptr.vmem [resolvable:$true] %s556
          %562 = dma.hbm_to_vmem [thread:$0]  %s15, 2048, %s557, [#allocation18], 128, 128, 8
        $region64: #{tpu_custom_call.1} parent=11 // pred_fallthru
          _
        // Predicated region
        $region65: #{tpu_custom_call.1} parent=11 // pred_check
          %p563 = pneg %p391
        $region66: #{tpu_custom_call.1} parent=11 // pred_check_branch
          %565 = sbr.rel (%p563) target = $region68
        $region67: #{tpu_custom_call.1} parent=11 // pred_region
          _
        $region68: #{tpu_custom_call.1} parent=11 // pred_fallthru
          _
        // Predicated region
        $region69: #{tpu_custom_call.1} parent=11 // pred_check
          %p566 = pneg %p412
        $region70: #{tpu_custom_call.1} parent=11 // pred_check_branch
          %568 = sbr.rel (%p566) target = $region72
        $region71: #{tpu_custom_call.1} parent=11 // pred_region
          %s570 = ssub.s32 2048, 2048
          %571 = vsyncadd [#allocation21], %s570
          %s572 = sshll.u32 [#allocation20], 4
          %s573 = int_to_ptr.vmem [resolvable:$true] %s572
          %578 = dma.hbm_to_vmem [thread:$0]  %s17, 2048, %s573, [#allocation21], 128, 128, 8
        $region72: #{tpu_custom_call.1} parent=11 // pred_fallthru
          _
        // Predicated region
        $region73: #{tpu_custom_call.1} parent=11 // pred_check
          %p579 = pneg %p433
        $region74: #{tpu_custom_call.1} parent=11 // pred_check_branch
          %581 = sbr.rel (%p579) target = $region76
        $region75: #{tpu_custom_call.1} parent=11 // pred_region
          _
        $region76: #{tpu_custom_call.1} parent=11 // pred_fallthru
          _
      $region12: #{tpu_custom_call.1} parent=5 // pred_fallthru
        _
      %p582 = scmp.lt.s32.totalorder %s45, 2
      // Predicated region
      $region77: #{tpu_custom_call.1} parent=5 // pred_check
        %p583 = pneg %p582
      $region78: #{tpu_custom_call.1} parent=5 // pred_check_branch
        %585 = sbr.rel (%p583) target = $region80
      $region79: #{tpu_custom_call.1} parent=5 // pred_region
        // Predicated region
        $region81: #{tpu_custom_call.1} parent=79 // pred_check
          %p586 = pneg %p65
        $region82: #{tpu_custom_call.1} parent=79 // pred_check_branch
          %588 = sbr.rel (%p586) target = $region84
        $region83: #{tpu_custom_call.1} parent=79 // pred_region
          %s589 = sand.u32 %s55, 1
          %s590 = scalar_lea.sflag [#allocation9], %s589
          %s591 = sand.u32 %s55, 1
          %s592 = smul.addr %s591, 128
          %s593 = scalar_lea.vmem [#allocation8], %s592
          %s594 = smul.u32 2, %s45
          %s596 = ssub.s32 2048, 2048
          %597 = vsyncadd %s590, %s596
          %s598 = smul.addr %s594, 8
          %s599 = smul.addr %s598, 128
          %s600 = scalar_lea.hbm %s1, %s599
          %s601 = sshll.u32 %s593, 4
          %s602 = int_to_ptr.vmem [resolvable:$true] %s601
          %607 = dma.hbm_to_vmem [thread:$0]  %s600, 2048, %s602, %s590, 128, 128, 8
        $region84: #{tpu_custom_call.1} parent=79 // pred_fallthru
          _
        // Predicated region
        $region85: #{tpu_custom_call.1} parent=79 // pred_check
          %p608 = pneg %p91
        $region86: #{tpu_custom_call.1} parent=79 // pred_check_branch
          %610 = sbr.rel (%p608) target = $region88
        $region87: #{tpu_custom_call.1} parent=79 // pred_region
          %s611 = sand.u32 %s45, 1
          %s612 = scalar_lea.sflag [#allocation12], %s611
          %s613 = sand.u32 %s81, 1
          %s614 = smul.addr %s613, 128
          %s615 = scalar_lea.vmem [#allocation11], %s614
          %s616 = smul.u32 2, %s45
          %s618 = ssub.s32 2048, 2048
          %619 = vsyncadd %s612, %s618
          %s620 = smul.addr %s616, 8
          %s621 = smul.addr %s620, 128
          %s622 = scalar_lea.hbm %s2, %s621
          %s623 = sshll.u32 %s615, 4
          %s624 = int_to_ptr.vmem [resolvable:$true] %s623
          %629 = dma.hbm_to_vmem [thread:$0]  %s622, 2048, %s624, %s612, 128, 128, 8
        $region88: #{tpu_custom_call.1} parent=79 // pred_fallthru
          _
      $region80: #{tpu_custom_call.1} parent=5 // pred_fallthru
        _
      %p630 = scmp.le.s32.totalorder 1, %s45
      %p631 = scmp.lt.s32.totalorder %s45, 3
      %p632 = pnand %p630, %p631
      %p633 = pneg %p632
      // Predicated region
      $region89: #{tpu_custom_call.1} parent=5 // pred_check
        _
      $region90: #{tpu_custom_call.1} parent=5 // pred_check_branch
        %635 = sbr.rel (%p632) target = $region92
      $region91: #{tpu_custom_call.1} parent=5 // pred_region
        %s636 = ssub.s32 %s45, 1
        %s637 = sand.u32 %s58, 1
        %s638 = scalar_lea.sflag [#allocation9], %s637
        %s639 = sand.u32 %s58, 1
        %s640 = smul.addr %s639, 128
        %s641 = scalar_lea.vmem [#allocation8], %s640
        // Predicated region
        $region93: #{tpu_custom_call.1} parent=91 // pred_check
          %p642 = pneg %p71
        $region94: #{tpu_custom_call.1} parent=91 // pred_check_branch
          %644 = sbr.rel (%p642) target = $region96
        $region95: #{tpu_custom_call.1} parent=91 // pred_region
          %645 = dma.done %s638, 2048
        $region96: #{tpu_custom_call.1} parent=91 // pred_fallthru
          _
        %s646 = sand.u32 %s50, 1
        %s647 = scalar_lea.sflag [#allocation12], %s646
        %s648 = sand.u32 %s84, 1
        %s649 = smul.addr %s648, 128
        %s650 = scalar_lea.vmem [#allocation11], %s649
        // Predicated region
        $region97: #{tpu_custom_call.1} parent=91 // pred_check
          %p651 = pneg %p97
        $region98: #{tpu_custom_call.1} parent=91 // pred_check_branch
          %653 = sbr.rel (%p651) target = $region100
        $region99: #{tpu_custom_call.1} parent=91 // pred_region
          %654 = dma.done %s647, 2048
        $region100: #{tpu_custom_call.1} parent=91 // pred_fallthru
          _
        // Predicated region
        $region101: #{tpu_custom_call.1} parent=91 // pred_check
          %p655 = pneg %p160
        $region102: #{tpu_custom_call.1} parent=91 // pred_check_branch
          %657 = sbr.rel (%p655) target = $region104
        $region103: #{tpu_custom_call.1} parent=91 // pred_region
          %658 = dma.done [#allocation12], 6144
        $region104: #{tpu_custom_call.1} parent=91 // pred_fallthru
          _
        // Predicated region
        $region105: #{tpu_custom_call.1} parent=91 // pred_check
          %p659 = pneg %p202
        $region106: #{tpu_custom_call.1} parent=91 // pred_check_branch
          %661 = sbr.rel (%p659) target = $region108
        $region107: #{tpu_custom_call.1} parent=91 // pred_region
          %662 = dma.done [#allocation15], 6144
        $region108: #{tpu_custom_call.1} parent=91 // pred_fallthru
          _
        // Predicated region
        $region109: #{tpu_custom_call.1} parent=91 // pred_check
          %p663 = pneg %p244
        $region110: #{tpu_custom_call.1} parent=91 // pred_check_branch
          %665 = sbr.rel (%p663) target = $region112
        $region111: #{tpu_custom_call.1} parent=91 // pred_region
          %666 = dma.done [#allocation15], 2048
        $region112: #{tpu_custom_call.1} parent=91 // pred_fallthru
          _
        // Predicated region
        $region113: #{tpu_custom_call.1} parent=91 // pred_check
          %p667 = pneg %p286
        $region114: #{tpu_custom_call.1} parent=91 // pred_check_branch
          %669 = sbr.rel (%p667) target = $region116
        $region115: #{tpu_custom_call.1} parent=91 // pred_region
          %670 = dma.done [#allocation18], 2048
        $region116: #{tpu_custom_call.1} parent=91 // pred_fallthru
          _
        // Predicated region
        $region117: #{tpu_custom_call.1} parent=91 // pred_check
          %p671 = pneg %p370
        $region118: #{tpu_custom_call.1} parent=91 // pred_check_branch
          %673 = sbr.rel (%p671) target = $region120
        $region119: #{tpu_custom_call.1} parent=91 // pred_region
          %674 = dma.done [#allocation18], 2048
        $region120: #{tpu_custom_call.1} parent=91 // pred_fallthru
          _
        // Predicated region
        $region121: #{tpu_custom_call.1} parent=91 // pred_check
          %p675 = pneg %p412
        $region122: #{tpu_custom_call.1} parent=91 // pred_check_branch
          %677 = sbr.rel (%p675) target = $region124
        $region123: #{tpu_custom_call.1} parent=91 // pred_region
          %678 = dma.done [#allocation21], 2048
        $region124: #{tpu_custom_call.1} parent=91 // pred_fallthru
          _
        %s679 = sand.u32 %s58, 1
        %s680 = scalar_lea.sflag [#allocation9], %s679
        %s681 = sand.u32 %s58, 1
        %s682 = smul.addr %s681, 128
        %s683 = scalar_lea.vmem [#allocation8], %s682
        %p684 = pneg %p71
        %p685 = pneg %p68
        %s686 = sand.u32 %s50, 1
        %s687 = scalar_lea.sflag [#allocation12], %s686
        %s688 = sand.u32 %s84, 1
        %s689 = smul.addr %s688, 128
        %s690 = scalar_lea.vmem [#allocation11], %s689
        %p691 = pneg %p97
        %p692 = pneg %p94
        %p693 = pneg %p118
        %p694 = pneg %p115
        %p695 = pneg %p139
        %p696 = pneg %p136
        %p697 = pneg %p160
        %p698 = pneg %p157
        %p699 = pneg %p181
        %p700 = pneg %p178
        %p701 = pneg %p202
        %p702 = pneg %p199
        %p703 = pneg %p223
        %p704 = pneg %p220
        %p705 = pneg %p244
        %p706 = pneg %p241
        %p707 = pneg %p265
        %p708 = pneg %p262
        %p709 = pneg %p286
        %p710 = pneg %p283
        %p711 = pneg %p307
        %p712 = pneg %p304
        %p713 = pneg %p328
        %p714 = pneg %p325
        %p715 = pneg %p349
        %p716 = pneg %p346
        %p717 = pneg %p370
        %p718 = pneg %p367
        %p719 = pneg %p391
        %p720 = pneg %p388
        %p721 = pneg %p412
        %p722 = pneg %p409
        %p723 = pneg %p433
        %p724 = pneg %p430
        %p725 = pneg %p459
        %p726 = pneg %p456
        %s727 = sand.u32 %s446, 1
        %s728 = scalar_lea.sflag [#allocation10], %s727
        %s729 = sand.u32 %s446, 1
        %s730 = smul.addr %s729, 8
        %s731 = scalar_lea.vmem [#allocation22], %s730
        %s732 = smul.u32 2, %s50
        %s733 = smul.u32 2, %s50
        %s734 = smul.u32 2, %s50
        %v735 = vld [vmem:[%s641] sm:$0xff]
        %v736 = vld [vmem:[%s641 + $0x8] sm:$0xff]
        %v737 = vld [vmem:[%s641 + $0x10] sm:$0xff]
        %v738 = vld [vmem:[%s641 + $0x18] sm:$0xff]
        %v739 = vld [vmem:[%s641 + $0x20] sm:$0xff]
        %v740 = vld [vmem:[%s641 + $0x28] sm:$0xff]
        %v741 = vld [vmem:[%s641 + $0x30] sm:$0xff]
        %v742 = vld [vmem:[%s641 + $0x38] sm:$0xff]
        %v743 = vld [vmem:[%s641 + $0x40] sm:$0xff]
        %v744 = vld [vmem:[%s641 + $0x48] sm:$0xff]
        %v745 = vld [vmem:[%s641 + $0x50] sm:$0xff]
        %v746 = vld [vmem:[%s641 + $0x58] sm:$0xff]
        %v747 = vld [vmem:[%s641 + $0x60] sm:$0xff]
        %v748 = vld [vmem:[%s641 + $0x68] sm:$0xff]
        %v749 = vld [vmem:[%s641 + $0x70] sm:$0xff]
        %v750 = vld [vmem:[%s641 + $0x78] sm:$0xff]
        %v751 = vld [vmem:[%s650] sm:$0xff]
        %v752 = vld [vmem:[%s650 + $0x8] sm:$0xff]
        %v753 = vld [vmem:[%s650 + $0x10] sm:$0xff]
        %v754 = vld [vmem:[%s650 + $0x18] sm:$0xff]
        %v755 = vld [vmem:[%s650 + $0x20] sm:$0xff]
        %v756 = vld [vmem:[%s650 + $0x28] sm:$0xff]
        %v757 = vld [vmem:[%s650 + $0x30] sm:$0xff]
        %v758 = vld [vmem:[%s650 + $0x38] sm:$0xff]
        %v759 = vld [vmem:[%s650 + $0x40] sm:$0xff]
        %v760 = vld [vmem:[%s650 + $0x48] sm:$0xff]
        %v761 = vld [vmem:[%s650 + $0x50] sm:$0xff]
        %v762 = vld [vmem:[%s650 + $0x58] sm:$0xff]
        %v763 = vld [vmem:[%s650 + $0x60] sm:$0xff]
        %v764 = vld [vmem:[%s650 + $0x68] sm:$0xff]
        %v765 = vld [vmem:[%s650 + $0x70] sm:$0xff]
        %v766 = vld [vmem:[%s650 + $0x78] sm:$0xff]
        %v767 = vld [vmem:[%s3] sm:$0xff]
        %v768 = vld [vmem:[%s3 + $0x8] sm:$0xff]
        %v769 = vld [vmem:[%s3 + $0x10] sm:$0xff]
        %v770 = vld [vmem:[%s3 + $0x18] sm:$0xff]
        %v771 = vld [vmem:[%s3 + $0x20] sm:$0xff]
        %v772 = vld [vmem:[%s3 + $0x28] sm:$0xff]
        %v773 = vld [vmem:[%s3 + $0x30] sm:$0xff]
        %v774 = vld [vmem:[%s3 + $0x38] sm:$0xff]
        %v775 = vld [vmem:[%s3 + $0x40] sm:$0xff]
        %v776 = vld [vmem:[%s3 + $0x48] sm:$0xff]
        %v777 = vld [vmem:[%s3 + $0x50] sm:$0xff]
        %v778 = vld [vmem:[%s3 + $0x58] sm:$0xff]
        %v779 = vld [vmem:[%s3 + $0x60] sm:$0xff]
        %v780 = vld [vmem:[%s3 + $0x68] sm:$0xff]
        %v781 = vld [vmem:[%s3 + $0x70] sm:$0xff]
        %v782 = vld [vmem:[%s3 + $0x78] sm:$0xff]
        %v783 = vld [vmem:[%s4] sm:$0x1]
        %v784 = vld [vmem:[#allocation13] sm:$0xff]
        %v785 = vld [vmem:[#allocation13 + $0x8] sm:$0xff]
        %v786 = vld [vmem:[#allocation13 + $0x10] sm:$0xff]
        %v787 = vld [vmem:[#allocation13 + $0x18] sm:$0xff]
        %v788 = vld [vmem:[#allocation13 + $0x20] sm:$0xff]
        %v789 = vld [vmem:[#allocation13 + $0x28] sm:$0xff]
        %v790 = vld [vmem:[#allocation13 + $0x30] sm:$0xff]
        %v791 = vld [vmem:[#allocation13 + $0x38] sm:$0xff]
        %v792 = vld [vmem:[#allocation13 + $0x40] sm:$0xff]
        %v793 = vld [vmem:[#allocation13 + $0x48] sm:$0xff]
        %v794 = vld [vmem:[#allocation13 + $0x50] sm:$0xff]
        %v795 = vld [vmem:[#allocation13 + $0x58] sm:$0xff]
        %v796 = vld [vmem:[#allocation13 + $0x60] sm:$0xff]
        %v797 = vld [vmem:[#allocation13 + $0x68] sm:$0xff]
        %v798 = vld [vmem:[#allocation13 + $0x70] sm:$0xff]
        %v799 = vld [vmem:[#allocation13 + $0x78] sm:$0xff]
        %v800 = vld [vmem:[#allocation13 + $0x80] sm:$0xff]
        %v801 = vld [vmem:[#allocation13 + $0x88] sm:$0xff]
        %v802 = vld [vmem:[#allocation13 + $0x90] sm:$0xff]
        %v803 = vld [vmem:[#allocation13 + $0x98] sm:$0xff]
        %v804 = vld [vmem:[#allocation13 + $0xa0] sm:$0xff]
        %v805 = vld [vmem:[#allocation13 + $0xa8] sm:$0xff]
        %v806 = vld [vmem:[#allocation13 + $0xb0] sm:$0xff]
        %v807 = vld [vmem:[#allocation13 + $0xb8] sm:$0xff]
        %v808 = vld [vmem:[#allocation13 + $0xc0] sm:$0xff]
        %v809 = vld [vmem:[#allocation13 + $0xc8] sm:$0xff]
        %v810 = vld [vmem:[#allocation13 + $0xd0] sm:$0xff]
        %v811 = vld [vmem:[#allocation13 + $0xd8] sm:$0xff]
        %v812 = vld [vmem:[#allocation13 + $0xe0] sm:$0xff]
        %v813 = vld [vmem:[#allocation13 + $0xe8] sm:$0xff]
        %v814 = vld [vmem:[#allocation13 + $0xf0] sm:$0xff]
        %v815 = vld [vmem:[#allocation13 + $0xf8] sm:$0xff]
        %v816 = vld [vmem:[#allocation13 + $0x100] sm:$0xff]
        %v817 = vld [vmem:[#allocation13 + $0x108] sm:$0xff]
        %v818 = vld [vmem:[#allocation13 + $0x110] sm:$0xff]
        %v819 = vld [vmem:[#allocation13 + $0x118] sm:$0xff]
        %v820 = vld [vmem:[#allocation13 + $0x120] sm:$0xff]
        %v821 = vld [vmem:[#allocation13 + $0x128] sm:$0xff]
        %v822 = vld [vmem:[#allocation13 + $0x130] sm:$0xff]
        %v823 = vld [vmem:[#allocation13 + $0x138] sm:$0xff]
        %v824 = vld [vmem:[#allocation13 + $0x140] sm:$0xff]
        %v825 = vld [vmem:[#allocation13 + $0x148] sm:$0xff]
        %v826 = vld [vmem:[#allocation13 + $0x150] sm:$0xff]
        %v827 = vld [vmem:[#allocation13 + $0x158] sm:$0xff]
        %v828 = vld [vmem:[#allocation13 + $0x160] sm:$0xff]
        %v829 = vld [vmem:[#allocation13 + $0x168] sm:$0xff]
        %v830 = vld [vmem:[#allocation13 + $0x170] sm:$0xff]
        %v831 = vld [vmem:[#allocation13 + $0x178] sm:$0xff]
        %v832 = vld [vmem:[%s6] sm:$0x7]
        %v833 = vld [vmem:[#allocation14] sm:$0xff]
        %v834 = vld [vmem:[#allocation14 + $0x8] sm:$0xff]
        %v835 = vld [vmem:[#allocation14 + $0x10] sm:$0xff]
        %v836 = vld [vmem:[#allocation14 + $0x18] sm:$0xff]
        %v837 = vld [vmem:[#allocation14 + $0x20] sm:$0xff]
        %v838 = vld [vmem:[#allocation14 + $0x28] sm:$0xff]
        %v839 = vld [vmem:[#allocation14 + $0x30] sm:$0xff]
        %v840 = vld [vmem:[#allocation14 + $0x38] sm:$0xff]
        %v841 = vld [vmem:[#allocation14 + $0x40] sm:$0xff]
        %v842 = vld [vmem:[#allocation14 + $0x48] sm:$0xff]
        %v843 = vld [vmem:[#allocation14 + $0x50] sm:$0xff]
        %v844 = vld [vmem:[#allocation14 + $0x58] sm:$0xff]
        %v845 = vld [vmem:[#allocation14 + $0x60] sm:$0xff]
        %v846 = vld [vmem:[#allocation14 + $0x68] sm:$0xff]
        %v847 = vld [vmem:[#allocation14 + $0x70] sm:$0xff]
        %v848 = vld [vmem:[#allocation14 + $0x78] sm:$0xff]
        %v849 = vld [vmem:[#allocation14 + $0x80] sm:$0xff]
        %v850 = vld [vmem:[#allocation14 + $0x88] sm:$0xff]
        %v851 = vld [vmem:[#allocation14 + $0x90] sm:$0xff]
        %v852 = vld [vmem:[#allocation14 + $0x98] sm:$0xff]
        %v853 = vld [vmem:[#allocation14 + $0xa0] sm:$0xff]
        %v854 = vld [vmem:[#allocation14 + $0xa8] sm:$0xff]
        %v855 = vld [vmem:[#allocation14 + $0xb0] sm:$0xff]
        %v856 = vld [vmem:[#allocation14 + $0xb8] sm:$0xff]
        %v857 = vld [vmem:[#allocation14 + $0xc0] sm:$0xff]
        %v858 = vld [vmem:[#allocation14 + $0xc8] sm:$0xff]
        %v859 = vld [vmem:[#allocation14 + $0xd0] sm:$0xff]
        %v860 = vld [vmem:[#allocation14 + $0xd8] sm:$0xff]
        %v861 = vld [vmem:[#allocation14 + $0xe0] sm:$0xff]
        %v862 = vld [vmem:[#allocation14 + $0xe8] sm:$0xff]
        %v863 = vld [vmem:[#allocation14 + $0xf0] sm:$0xff]
        %v864 = vld [vmem:[#allocation14 + $0xf8] sm:$0xff]
        %v865 = vld [vmem:[#allocation14 + $0x100] sm:$0xff]
        %v866 = vld [vmem:[#allocation14 + $0x108] sm:$0xff]
        %v867 = vld [vmem:[#allocation14 + $0x110] sm:$0xff]
        %v868 = vld [vmem:[#allocation14 + $0x118] sm:$0xff]
        %v869 = vld [vmem:[#allocation14 + $0x120] sm:$0xff]
        %v870 = vld [vmem:[#allocation14 + $0x128] sm:$0xff]
        %v871 = vld [vmem:[#allocation14 + $0x130] sm:$0xff]
        %v872 = vld [vmem:[#allocation14 + $0x138] sm:$0xff]
        %v873 = vld [vmem:[#allocation14 + $0x140] sm:$0xff]
        %v874 = vld [vmem:[#allocation14 + $0x148] sm:$0xff]
        %v875 = vld [vmem:[#allocation14 + $0x150] sm:$0xff]
        %v876 = vld [vmem:[#allocation14 + $0x158] sm:$0xff]
        %v877 = vld [vmem:[#allocation14 + $0x160] sm:$0xff]
        %v878 = vld [vmem:[#allocation14 + $0x168] sm:$0xff]
        %v879 = vld [vmem:[#allocation14 + $0x170] sm:$0xff]
        %v880 = vld [vmem:[#allocation14 + $0x178] sm:$0xff]
        %v881 = vld [vmem:[%s8] sm:$0x7]
        %v883 = vlaneseq
        %v884 = vshrl.u32 %v883, 7
        %v885 = vsub.s32 0, %v884
        %v886 = vrot.slane %v783, %v885
        %888 = vmatprep.subr.mxu0 0.0
        %889 = vmatpush1.msra.mxu0 %v767
        %890 = vmatprep.subr.mxu0 0.0
        %891 = vmatpush1.msra.mxu0 %v768
        %892 = vmatprep.subr.mxu0 0.0
        %893 = vmatpush1.msra.mxu0 %v769
        %894 = vmatprep.subr.mxu0 0.0
        %895 = vmatpush1.msra.mxu0 %v770
        %896 = vmatprep.subr.mxu0 0.0
        %897 = vmatpush1.msra.mxu0 %v771
        %898 = vmatprep.subr.mxu0 0.0
        %899 = vmatpush1.msra.mxu0 %v772
        %900 = vmatprep.subr.mxu0 0.0
        %901 = vmatpush1.msra.mxu0 %v773
        %902 = vmatprep.subr.mxu0 0.0
        %903 = vmatpush1.msra.mxu0 %v774
        %904 = vmatprep.subr.mxu0 0.0
        %905 = vmatpush1.msra.mxu0 %v775
        %906 = vmatprep.subr.mxu0 0.0
        %907 = vmatpush1.msra.mxu0 %v776
        %908 = vmatprep.subr.mxu0 0.0
        %909 = vmatpush1.msra.mxu0 %v777
        %910 = vmatprep.subr.mxu0 0.0
        %911 = vmatpush1.msra.mxu0 %v778
        %912 = vmatprep.subr.mxu0 0.0
        %913 = vmatpush1.msra.mxu0 %v779
        %914 = vmatprep.subr.mxu0 0.0
        %915 = vmatpush1.msra.mxu0 %v780
        %916 = vmatprep.subr.mxu0 0.0
        %917 = vmatpush1.msra.mxu0 %v781
        %918 = vmatprep.subr.mxu0 0.0
        %919 = vmatpush1.msra.mxu0 %v782
        %920 = vmatprep.subr.mxu0 0.0
        %921 = vmatpush1.msra.mxu0 0.0
        %922 = vmatprep.subr.mxu0 0.0
        %923 = vmatpush1.msra.mxu0 0.0
        %924 = vmatprep.subr.mxu0 0.0
        %925 = vmatpush1.msra.mxu0 0.0
        %926 = vmatprep.subr.mxu0 0.0
        %927 = vmatpush1.msra.mxu0 0.0
        %928 = vmatprep.subr.mxu0 0.0
        %929 = vmatpush1.msra.mxu0 0.0
        %930 = vmatprep.subr.mxu0 0.0
        %931 = vmatpush1.msra.mxu0 0.0
        %932 = vmatprep.subr.mxu0 0.0
        %933 = vmatpush1.msra.mxu0 0.0
        %934 = vmatprep.subr.mxu0 0.0
        %935 = vmatpush1.msra.mxu0 0.0
        %936 = vmatprep.subr.mxu0 0.0
        %937 = vmatpush1.msra.mxu0 0.0
        %938 = vmatprep.subr.mxu0 0.0
        %939 = vmatpush1.msra.mxu0 0.0
        %940 = vmatprep.subr.mxu0 0.0
        %941 = vmatpush1.msra.mxu0 0.0
        %942 = vmatprep.subr.mxu0 0.0
        %943 = vmatpush1.msra.mxu0 0.0
        %944 = vmatprep.subr.mxu0 0.0
        %945 = vmatpush1.msra.mxu0 0.0
        %946 = vmatprep.subr.mxu0 0.0
        %947 = vmatpush1.msra.mxu0 0.0
        %948 = vmatprep.subr.mxu0 0.0
        %949 = vmatpush1.msra.mxu0 0.0
        %950 = vmatprep.subr.mxu0 0.0
        %951 = vmatpush1.msra.mxu0 0.0
        %952 = vmatprep.mubr.f32.mxu0 0.0
        %953 = vmatmul.mubr.f32.gmra.mrb[0].mxu0 %v735
        %v954 = vpop.f32.mrb[0].mxu0
        %v955 = vadd.f32 %v886, %v954
        %v956 = vpop.f32.mrb[0].mxu0
        %957 = vmatprep.mubr.f32.mxu0 0.0
        %958 = vmatmul.mubr.f32.gmra.mrb[0].mxu0 %v736
        %v959 = vpop.f32.mrb[0].mxu0
        %v960 = vadd.f32 %v886, %v959
        %v961 = vpop.f32.mrb[0].mxu0
        %962 = vmatprep.mubr.f32.mxu0 0.0
        %963 = vmatmul.mubr.f32.gmra.mrb[0].mxu0 %v737
        %v964 = vpop.f32.mrb[0].mxu0
        %v965 = vadd.f32 %v886, %v964
        %v966 = vpop.f32.mrb[0].mxu0
        %967 = vmatprep.mubr.f32.mxu0 0.0
        %968 = vmatmul.mubr.f32.gmra.mrb[0].mxu0 %v738
        %v969 = vpop.f32.mrb[0].mxu0
        %v970 = vadd.f32 %v886, %v969
        %v971 = vpop.f32.mrb[0].mxu0
        %972 = vmatprep.mubr.f32.mxu0 0.0
        %973 = vmatmul.mubr.f32.gmra.mrb[0].mxu0 %v739
        %v974 = vpop.f32.mrb[0].mxu0
        %v975 = vadd.f32 %v886, %v974
        %v976 = vpop.f32.mrb[0].mxu0
        %977 = vmatprep.mubr.f32.mxu0 0.0
        %978 = vmatmul.mubr.f32.gmra.mrb[0].mxu0 %v740
        %v979 = vpop.f32.mrb[0].mxu0
        %v980 = vadd.f32 %v886, %v979
        %v981 = vpop.f32.mrb[0].mxu0
        %982 = vmatprep.mubr.f32.mxu0 0.0
        %983 = vmatmul.mubr.f32.gmra.mrb[0].mxu0 %v741
        %v984 = vpop.f32.mrb[0].mxu0
        %v985 = vadd.f32 %v886, %v984
        %v986 = vpop.f32.mrb[0].mxu0
        %987 = vmatprep.mubr.f32.mxu0 0.0
        %988 = vmatmul.mubr.f32.gmra.mrb[0].mxu0 %v742
        %v989 = vpop.f32.mrb[0].mxu0
        %v990 = vadd.f32 %v886, %v989
        %v991 = vpop.f32.mrb[0].mxu0
        %992 = vmatprep.mubr.f32.mxu0 0.0
        %993 = vmatmul.mubr.f32.gmra.mrb[0].mxu0 %v743
        %v994 = vpop.f32.mrb[0].mxu0
        %v995 = vadd.f32 %v886, %v994
        %v996 = vpop.f32.mrb[0].mxu0
        %997 = vmatprep.mubr.f32.mxu0 0.0
        %998 = vmatmul.mubr.f32.gmra.mrb[0].mxu0 %v744
        %v999 = vpop.f32.mrb[0].mxu0
        %v1000 = vadd.f32 %v886, %v999
        %v1001 = vpop.f32.mrb[0].mxu0
        %1002 = vmatprep.mubr.f32.mxu0 0.0
        %1003 = vmatmul.mubr.f32.gmra.mrb[0].mxu0 %v745
        %v1004 = vpop.f32.mrb[0].mxu0
        %v1005 = vadd.f32 %v886, %v1004
        %v1006 = vpop.f32.mrb[0].mxu0
        %1007 = vmatprep.mubr.f32.mxu0 0.0
        %1008 = vmatmul.mubr.f32.gmra.mrb[0].mxu0 %v746
        %v1009 = vpop.f32.mrb[0].mxu0
        %v1010 = vadd.f32 %v886, %v1009
        %v1011 = vpop.f32.mrb[0].mxu0
        %1012 = vmatprep.mubr.f32.mxu0 0.0
        %1013 = vmatmul.mubr.f32.gmra.mrb[0].mxu0 %v747
        %v1014 = vpop.f32.mrb[0].mxu0
        %v1015 = vadd.f32 %v886, %v1014
        %v1016 = vpop.f32.mrb[0].mxu0
        %1017 = vmatprep.mubr.f32.mxu0 0.0
        %1018 = vmatmul.mubr.f32.gmra.mrb[0].mxu0 %v748
        %v1019 = vpop.f32.mrb[0].mxu0
        %v1020 = vadd.f32 %v886, %v1019
        %v1021 = vpop.f32.mrb[0].mxu0
        %1022 = vmatprep.mubr.f32.mxu0 0.0
        %1023 = vmatmul.mubr.f32.gmra.mrb[0].mxu0 %v749
        %v1024 = vpop.f32.mrb[0].mxu0
        %v1025 = vadd.f32 %v886, %v1024
        %v1026 = vpop.f32.mrb[0].mxu0
        %1027 = vmatprep.mubr.f32.mxu0 0.0
        %1028 = vmatmul.mubr.f32.gmra.mrb[0].mxu0 %v750
        %v1029 = vpop.f32.mrb[0].mxu0
        %v1030 = vadd.f32 %v886, %v1029
        %v1031 = vpop.f32.mrb[0].mxu0
        %1032 = vdwg.mxu0
        %vm1033 = vcmask 523264
        %v1035 = vsel %vm1033, %v751, 0
        %v1038 = vsel %vm1033, %v752, 0
        %v1041 = vsel %vm1033, %v753, 0
        %v1044 = vsel %vm1033, %v754, 0
        %v1047 = vsel %vm1033, %v755, 0
        %v1050 = vsel %vm1033, %v756, 0
        %v1053 = vsel %vm1033, %v757, 0
        %v1056 = vsel %vm1033, %v758, 0
        %1058 = vmatprep.subr.mxu0 0.0
        %1059 = vmatpush1.msra.mxu0 %v955
        %1060 = vmatprep.subr.mxu0 0.0
        %1061 = vmatpush1.msra.mxu0 %v960
        %1062 = vmatprep.subr.mxu0 0.0
        %1063 = vmatpush1.msra.mxu0 %v965
        %1064 = vmatprep.subr.mxu0 0.0
        %1065 = vmatpush1.msra.mxu0 %v970
        %1066 = vmatprep.subr.mxu0 0.0
        %1067 = vmatpush1.msra.mxu0 %v975
        %1068 = vmatprep.subr.mxu0 0.0
        %1069 = vmatpush1.msra.mxu0 %v980
        %1070 = vmatprep.subr.mxu0 0.0
        %1071 = vmatpush1.msra.mxu0 %v985
        %1072 = vmatprep.subr.mxu0 0.0
        %1073 = vmatpush1.msra.mxu0 %v990
        %1074 = vmatprep.subr.mxu0 0.0
        %1075 = vmatpush1.msra.mxu0 0.0
        %1076 = vmatprep.subr.mxu0 0.0
        %1077 = vmatpush1.msra.mxu0 0.0
        %1078 = vmatprep.subr.mxu0 0.0
        %1079 = vmatpush1.msra.mxu0 0.0
        %1080 = vmatprep.subr.mxu0 0.0
        %1081 = vmatpush1.msra.mxu0 0.0
        %1082 = vmatprep.subr.mxu0 0.0
        %1083 = vmatpush1.msra.mxu0 0.0
        %1084 = vmatprep.subr.mxu0 0.0
        %1085 = vmatpush1.msra.mxu0 0.0
        %1086 = vmatprep.subr.mxu0 0.0
        %1087 = vmatpush1.msra.mxu0 0.0
        %1088 = vmatprep.subr.mxu0 0.0
        %1089 = vmatpush1.msra.mxu0 0.0
        %1090 = vmatprep.subr.mxu0 0.0
        %1091 = vmatpush1.msra.mxu0 0.0
        %1092 = vmatprep.subr.mxu0 0.0
        %1093 = vmatpush1.msra.mxu0 0.0
        %1094 = vmatprep.subr.mxu0 0.0
        %1095 = vmatpush1.msra.mxu0 0.0
        %1096 = vmatprep.subr.mxu0 0.0
        %1097 = vmatpush1.msra.mxu0 0.0
        %1098 = vmatprep.subr.mxu0 0.0
        %1099 = vmatpush1.msra.mxu0 0.0
        %1100 = vmatprep.subr.mxu0 0.0
        %1101 = vmatpush1.msra.mxu0 0.0
        %1102 = vmatprep.subr.mxu0 0.0
        %1103 = vmatpush1.msra.mxu0 0.0
        %1104 = vmatprep.subr.mxu0 0.0
        %1105 = vmatpush1.msra.mxu0 0.0
        %1106 = vmatprep.subr.mxu0 0.0
        %1107 = vmatpush1.msra.mxu0 0.0
        %1108 = vmatprep.subr.mxu0 0.0
        %1109 = vmatpush1.msra.mxu0 0.0
        %1110 = vmatprep.subr.mxu0 0.0
        %1111 = vmatpush1.msra.mxu0 0.0
        %1112 = vmatprep.subr.mxu0 0.0
        %1113 = vmatpush1.msra.mxu0 0.0
        %1114 = vmatprep.subr.mxu0 0.0
        %1115 = vmatpush1.msra.mxu0 0.0
        %1116 = vmatprep.subr.mxu0 0.0
        %1117 = vmatpush1.msra.mxu0 0.0
        %1118 = vmatprep.subr.mxu0 0.0
        %1119 = vmatpush1.msra.mxu0 0.0
        %1120 = vmatprep.subr.mxu0 0.0
        %1121 = vmatpush1.msra.mxu0 0.0
        %1122 = vmatprep.mubr.f32.mxu0 0.0
        %1123 = vmatmul.mubr.f32.gmra.mrb[0].mxu0 %v1035
        %v1124 = vpop.f32.mrb[0].mxu0
        %v1125 = vadd.f32 0.0, %v1124
        %v1126 = vpop.f32.mrb[0].mxu0
        %1127 = vmatprep.mubr.f32.mxu0 0.0
        %1128 = vmatmul.mubr.f32.gmra.mrb[0].mxu0 %v1038
        %v1129 = vpop.f32.mrb[0].mxu0
        %v1130 = vadd.f32 0.0, %v1129
        %v1131 = vpop.f32.mrb[0].mxu0
        %1132 = vmatprep.mubr.f32.mxu0 0.0
        %1133 = vmatmul.mubr.f32.gmra.mrb[0].mxu0 %v1041
        %v1134 = vpop.f32.mrb[0].mxu0
        %v1135 = vadd.f32 0.0, %v1134
        %v1136 = vpop.f32.mrb[0].mxu0
        %1137 = vmatprep.mubr.f32.mxu0 0.0
        %1138 = vmatmul.mubr.f32.gmra.mrb[0].mxu0 %v1044
        %v1139 = vpop.f32.mrb[0].mxu0
        %v1140 = vadd.f32 0.0, %v1139
        %v1141 = vpop.f32.mrb[0].mxu0
        %1142 = vmatprep.mubr.f32.mxu0 0.0
        %1143 = vmatmul.mubr.f32.gmra.mrb[0].mxu0 %v1047
        %v1144 = vpop.f32.mrb[0].mxu0
        %v1145 = vadd.f32 0.0, %v1144
        %v1146 = vpop.f32.mrb[0].mxu0
        %1147 = vmatprep.mubr.f32.mxu0 0.0
        %1148 = vmatmul.mubr.f32.gmra.mrb[0].mxu0 %v1050
        %v1149 = vpop.f32.mrb[0].mxu0
        %v1150 = vadd.f32 0.0, %v1149
        %v1151 = vpop.f32.mrb[0].mxu0
        %1152 = vmatprep.mubr.f32.mxu0 0.0
        %1153 = vmatmul.mubr.f32.gmra.mrb[0].mxu0 %v1053
        %v1154 = vpop.f32.mrb[0].mxu0
        %v1155 = vadd.f32 0.0, %v1154
        %v1156 = vpop.f32.mrb[0].mxu0
        %1157 = vmatprep.mubr.f32.mxu0 0.0
        %1158 = vmatmul.mubr.f32.gmra.mrb[0].mxu0 %v1056
        %v1159 = vpop.f32.mrb[0].mxu0
        %v1160 = vadd.f32 0.0, %v1159
        %v1161 = vpop.f32.mrb[0].mxu0
        %1162 = vdwg.mxu0
        %v1164 = vsel %vm1033, %v759, 0
        %v1167 = vsel %vm1033, %v760, 0
        %v1170 = vsel %vm1033, %v761, 0
        %v1173 = vsel %vm1033, %v762, 0
        %v1176 = vsel %vm1033, %v763, 0
        %v1179 = vsel %vm1033, %v764, 0
        %v1182 = vsel %vm1033, %v765, 0
        %v1185 = vsel %vm1033, %v766, 0
        %1187 = vmatprep.subr.mxu0 0.0
        %1188 = vmatpush1.msra.mxu0 %v995
        %1189 = vmatprep.subr.mxu0 0.0
        %1190 = vmatpush1.msra.mxu0 %v1000
        %1191 = vmatprep.subr.mxu0 0.0
        %1192 = vmatpush1.msra.mxu0 %v1005
        %1193 = vmatprep.subr.mxu0 0.0
        %1194 = vmatpush1.msra.mxu0 %v1010
        %1195 = vmatprep.subr.mxu0 0.0
        %1196 = vmatpush1.msra.mxu0 %v1015
        %1197 = vmatprep.subr.mxu0 0.0
        %1198 = vmatpush1.msra.mxu0 %v1020
        %1199 = vmatprep.subr.mxu0 0.0
        %1200 = vmatpush1.msra.mxu0 %v1025
        %1201 = vmatprep.subr.mxu0 0.0
        %1202 = vmatpush1.msra.mxu0 %v1030
        %1203 = vmatprep.subr.mxu0 0.0
        %1204 = vmatpush1.msra.mxu0 0.0
        %1205 = vmatprep.subr.mxu0 0.0
        %1206 = vmatpush1.msra.mxu0 0.0
        %1207 = vmatprep.subr.mxu0 0.0
        %1208 = vmatpush1.msra.mxu0 0.0
        %1209 = vmatprep.subr.mxu0 0.0
        %1210 = vmatpush1.msra.mxu0 0.0
        %1211 = vmatprep.subr.mxu0 0.0
        %1212 = vmatpush1.msra.mxu0 0.0
        %1213 = vmatprep.subr.mxu0 0.0
        %1214 = vmatpush1.msra.mxu0 0.0
        %1215 = vmatprep.subr.mxu0 0.0
        %1216 = vmatpush1.msra.mxu0 0.0
        %1217 = vmatprep.subr.mxu0 0.0
        %1218 = vmatpush1.msra.mxu0 0.0
        %1219 = vmatprep.subr.mxu0 0.0
        %1220 = vmatpush1.msra.mxu0 0.0
        %1221 = vmatprep.subr.mxu0 0.0
        %1222 = vmatpush1.msra.mxu0 0.0
        %1223 = vmatprep.subr.mxu0 0.0
        %1224 = vmatpush1.msra.mxu0 0.0
        %1225 = vmatprep.subr.mxu0 0.0
        %1226 = vmatpush1.msra.mxu0 0.0
        %1227 = vmatprep.subr.mxu0 0.0
        %1228 = vmatpush1.msra.mxu0 0.0
        %1229 = vmatprep.subr.mxu0 0.0
        %1230 = vmatpush1.msra.mxu0 0.0
        %1231 = vmatprep.subr.mxu0 0.0
        %1232 = vmatpush1.msra.mxu0 0.0
        %1233 = vmatprep.subr.mxu0 0.0
        %1234 = vmatpush1.msra.mxu0 0.0
        %1235 = vmatprep.subr.mxu0 0.0
        %1236 = vmatpush1.msra.mxu0 0.0
        %1237 = vmatprep.subr.mxu0 0.0
        %1238 = vmatpush1.msra.mxu0 0.0
        %1239 = vmatprep.subr.mxu0 0.0
        %1240 = vmatpush1.msra.mxu0 0.0
        %1241 = vmatprep.subr.mxu0 0.0
        %1242 = vmatpush1.msra.mxu0 0.0
        %1243 = vmatprep.subr.mxu0 0.0
        %1244 = vmatpush1.msra.mxu0 0.0
        %1245 = vmatprep.subr.mxu0 0.0
        %1246 = vmatpush1.msra.mxu0 0.0
        %1247 = vmatprep.subr.mxu0 0.0
        %1248 = vmatpush1.msra.mxu0 0.0
        %1249 = vmatprep.subr.mxu0 0.0
        %1250 = vmatpush1.msra.mxu0 0.0
        %1251 = vmatprep.mubr.f32.mxu0 0.0
        %1252 = vmatmul.mubr.f32.gmra.mrb[0].mxu0 %v1164
        %v1253 = vpop.f32.mrb[0].mxu0
        %v1254 = vadd.f32 0.0, %v1253
        %v1255 = vpop.f32.mrb[0].mxu0
        %1256 = vmatprep.mubr.f32.mxu0 0.0
        %1257 = vmatmul.mubr.f32.gmra.mrb[0].mxu0 %v1167
        %v1258 = vpop.f32.mrb[0].mxu0
        %v1259 = vadd.f32 0.0, %v1258
        %v1260 = vpop.f32.mrb[0].mxu0
        %1261 = vmatprep.mubr.f32.mxu0 0.0
        %1262 = vmatmul.mubr.f32.gmra.mrb[0].mxu0 %v1170
        %v1263 = vpop.f32.mrb[0].mxu0
        %v1264 = vadd.f32 0.0, %v1263
        %v1265 = vpop.f32.mrb[0].mxu0
        %1266 = vmatprep.mubr.f32.mxu0 0.0
        %1267 = vmatmul.mubr.f32.gmra.mrb[0].mxu0 %v1173
        %v1268 = vpop.f32.mrb[0].mxu0
        %v1269 = vadd.f32 0.0, %v1268
        %v1270 = vpop.f32.mrb[0].mxu0
        %1271 = vmatprep.mubr.f32.mxu0 0.0
        %1272 = vmatmul.mubr.f32.gmra.mrb[0].mxu0 %v1176
        %v1273 = vpop.f32.mrb[0].mxu0
        %v1274 = vadd.f32 0.0, %v1273
        %v1275 = vpop.f32.mrb[0].mxu0
        %1276 = vmatprep.mubr.f32.mxu0 0.0
        %1277 = vmatmul.mubr.f32.gmra.mrb[0].mxu0 %v1179
        %v1278 = vpop.f32.mrb[0].mxu0
        %v1279 = vadd.f32 0.0, %v1278
        %v1280 = vpop.f32.mrb[0].mxu0
        %1281 = vmatprep.mubr.f32.mxu0 0.0
        %1282 = vmatmul.mubr.f32.gmra.mrb[0].mxu0 %v1182
        %v1283 = vpop.f32.mrb[0].mxu0
        %v1284 = vadd.f32 0.0, %v1283
        %v1285 = vpop.f32.mrb[0].mxu0
        %1286 = vmatprep.mubr.f32.mxu0 0.0
        %1287 = vmatmul.mubr.f32.gmra.mrb[0].mxu0 %v1185
        %v1288 = vpop.f32.mrb[0].mxu0
        %v1289 = vadd.f32 0.0, %v1288
        %v1290 = vpop.f32.mrb[0].mxu0
        %1291 = vdwg.mxu0
        %v1293 = vlaneseq
        %v1294 = vshrl.u32 %v1293, 7
        %v1295 = vsub.s32 0, %v1294
        %v1296 = vrot.slane %v832, %v1295
        %v1297 = vlaneseq
        %v1298 = vshrl.u32 %v1297, 7
        %v1299 = vsub.s32 1, %v1298
        %v1300 = vrot.slane %v832, %v1299
        %v1301 = vlaneseq
        %v1302 = vshrl.u32 %v1301, 7
        %v1303 = vsub.s32 2, %v1302
        %v1304 = vrot.slane %v832, %v1303
        %1308 = vmatprep.subr.mxu0 %v785
        %1309 = vmatpush1.msra.mxu0 %v784
        %1310 = vmatprep.subr.mxu0 %v788
        %1311 = vmatpush1.msra.mxu0 %v787
        %1312 = vmatprep.subr.mxu0 %v791
        %1313 = vmatpush1.msra.mxu0 %v790
        %1314 = vmatprep.subr.mxu0 %v794
        %1315 = vmatpush1.msra.mxu0 %v793
        %1316 = vmatprep.subr.mxu0 %v797
        %1317 = vmatpush1.msra.mxu0 %v796
        %1318 = vmatprep.subr.mxu0 %v800
        %1319 = vmatpush1.msra.mxu0 %v799
        %1320 = vmatprep.subr.mxu0 %v803
        %1321 = vmatpush1.msra.mxu0 %v802
        %1322 = vmatprep.subr.mxu0 %v806
        %1323 = vmatpush1.msra.mxu0 %v805
        %1324 = vmatprep.subr.mxu0 %v809
        %1325 = vmatpush1.msra.mxu0 %v808
        %1326 = vmatprep.subr.mxu0 %v812
        %1327 = vmatpush1.msra.mxu0 %v811
        %1328 = vmatprep.subr.mxu0 %v815
        %1329 = vmatpush1.msra.mxu0 %v814
        %1330 = vmatprep.subr.mxu0 %v818
        %1331 = vmatpush1.msra.mxu0 %v817
        %1332 = vmatprep.subr.mxu0 %v821
        %1333 = vmatpush1.msra.mxu0 %v820
        %1334 = vmatprep.subr.mxu0 %v824
        %1335 = vmatpush1.msra.mxu0 %v823
        %1336 = vmatprep.subr.mxu0 %v827
        %1337 = vmatpush1.msra.mxu0 %v826
        %1338 = vmatprep.subr.mxu0 %v830
        %1339 = vmatpush1.msra.mxu0 %v829
        %1340 = vmatprep.subr.mxu0 0.0
        %1341 = vmatpush1.msra.mxu0 0.0
        %1342 = vmatprep.subr.mxu0 0.0
        %1343 = vmatpush1.msra.mxu0 0.0
        %1344 = vmatprep.subr.mxu0 0.0
        %1345 = vmatpush1.msra.mxu0 0.0
        %1346 = vmatprep.subr.mxu0 0.0
        %1347 = vmatpush1.msra.mxu0 0.0
        %1348 = vmatprep.subr.mxu0 0.0
        %1349 = vmatpush1.msra.mxu0 0.0
        %1350 = vmatprep.subr.mxu0 0.0
        %1351 = vmatpush1.msra.mxu0 0.0
        %1352 = vmatprep.subr.mxu0 0.0
        %1353 = vmatpush1.msra.mxu0 0.0
        %1354 = vmatprep.subr.mxu0 0.0
        %1355 = vmatpush1.msra.mxu0 0.0
        %1356 = vmatprep.subr.mxu0 0.0
        %1357 = vmatpush1.msra.mxu0 0.0
        %1358 = vmatprep.subr.mxu0 0.0
        %1359 = vmatpush1.msra.mxu0 0.0
        %1360 = vmatprep.subr.mxu0 0.0
        %1361 = vmatpush1.msra.mxu0 0.0
        %1362 = vmatprep.subr.mxu0 0.0
        %1363 = vmatpush1.msra.mxu0 0.0
        %1364 = vmatprep.subr.mxu0 0.0
        %1365 = vmatpush1.msra.mxu0 0.0
        %1366 = vmatprep.subr.mxu0 0.0
        %1367 = vmatpush1.msra.mxu0 0.0
        %1368 = vmatprep.subr.mxu0 0.0
        %1369 = vmatpush1.msra.mxu0 0.0
        %1370 = vmatprep.subr.mxu0 0.0
        %1371 = vmatpush1.msra.mxu0 0.0
        %1372 = vmatprep.mubr.f32.mxu0 0.0
        %1373 = vmatmul.mubr.f32.gmra.mrb[0].mxu0 %v1125
        %v1374 = vpop.f32.mrb[0].mxu0
        %v1375 = vadd.f32 %v1296, %v1374
        %v1376 = vpop.f32.mrb[0].mxu0
        %v1377 = vadd.f32 %v1300, %v1376
        %1378 = vmatprep.mubr.f32.mxu0 0.0
        %1379 = vmatmul.mubr.f32.gmra.mrb[0].mxu0 %v1130
        %v1380 = vpop.f32.mrb[0].mxu0
        %v1381 = vadd.f32 %v1296, %v1380
        %v1382 = vpop.f32.mrb[0].mxu0
        %v1383 = vadd.f32 %v1300, %v1382
        %1384 = vmatprep.mubr.f32.mxu0 0.0
        %1385 = vmatmul.mubr.f32.gmra.mrb[0].mxu0 %v1135
        %v1386 = vpop.f32.mrb[0].mxu0
        %v1387 = vadd.f32 %v1296, %v1386
        %v1388 = vpop.f32.mrb[0].mxu0
        %v1389 = vadd.f32 %v1300, %v1388
        %1390 = vmatprep.mubr.f32.mxu0 0.0
        %1391 = vmatmul.mubr.f32.gmra.mrb[0].mxu0 %v1140
        %v1392 = vpop.f32.mrb[0].mxu0
        %v1393 = vadd.f32 %v1296, %v1392
        %v1394 = vpop.f32.mrb[0].mxu0
        %v1395 = vadd.f32 %v1300, %v1394
        %1396 = vmatprep.mubr.f32.mxu0 0.0
        %1397 = vmatmul.mubr.f32.gmra.mrb[0].mxu0 %v1145
        %v1398 = vpop.f32.mrb[0].mxu0
        %v1399 = vadd.f32 %v1296, %v1398
        %v1400 = vpop.f32.mrb[0].mxu0
        %v1401 = vadd.f32 %v1300, %v1400
        %1402 = vmatprep.mubr.f32.mxu0 0.0
        %1403 = vmatmul.mubr.f32.gmra.mrb[0].mxu0 %v1150
        %v1404 = vpop.f32.mrb[0].mxu0
        %v1405 = vadd.f32 %v1296, %v1404
        %v1406 = vpop.f32.mrb[0].mxu0
        %v1407 = vadd.f32 %v1300, %v1406
        %1408 = vmatprep.mubr.f32.mxu0 0.0
        %1409 = vmatmul.mubr.f32.gmra.mrb[0].mxu0 %v1155
        %v1410 = vpop.f32.mrb[0].mxu0
        %v1411 = vadd.f32 %v1296, %v1410
        %v1412 = vpop.f32.mrb[0].mxu0
        %v1413 = vadd.f32 %v1300, %v1412
        %1414 = vmatprep.mubr.f32.mxu0 0.0
        %1415 = vmatmul.mubr.f32.gmra.mrb[0].mxu0 %v1160
        %v1416 = vpop.f32.mrb[0].mxu0
        %v1417 = vadd.f32 %v1296, %v1416
        %v1418 = vpop.f32.mrb[0].mxu0
        %v1419 = vadd.f32 %v1300, %v1418
        %1420 = vmatprep.mubr.f32.mxu0 0.0
        %1421 = vmatmul.mubr.f32.gmra.mrb[0].mxu0 %v1254
        %v1422 = vpop.f32.mrb[0].mxu0
        %v1423 = vadd.f32 %v1296, %v1422
        %v1424 = vpop.f32.mrb[0].mxu0
        %v1425 = vadd.f32 %v1300, %v1424
        %1426 = vmatprep.mubr.f32.mxu0 0.0
        %1427 = vmatmul.mubr.f32.gmra.mrb[0].mxu0 %v1259
        %v1428 = vpop.f32.mrb[0].mxu0
        %v1429 = vadd.f32 %v1296, %v1428
        %v1430 = vpop.f32.mrb[0].mxu0
        %v1431 = vadd.f32 %v1300, %v1430
        %1432 = vmatprep.mubr.f32.mxu0 0.0
        %1433 = vmatmul.mubr.f32.gmra.mrb[0].mxu0 %v1264
        %v1434 = vpop.f32.mrb[0].mxu0
        %v1435 = vadd.f32 %v1296, %v1434
        %v1436 = vpop.f32.mrb[0].mxu0
        %v1437 = vadd.f32 %v1300, %v1436
        %1438 = vmatprep.mubr.f32.mxu0 0.0
        %1439 = vmatmul.mubr.f32.gmra.mrb[0].mxu0 %v1269
        %v1440 = vpop.f32.mrb[0].mxu0
        %v1441 = vadd.f32 %v1296, %v1440
        %v1442 = vpop.f32.mrb[0].mxu0
        %v1443 = vadd.f32 %v1300, %v1442
        %1444 = vmatprep.mubr.f32.mxu0 0.0
        %1445 = vmatmul.mubr.f32.gmra.mrb[0].mxu0 %v1274
        %v1446 = vpop.f32.mrb[0].mxu0
        %v1447 = vadd.f32 %v1296, %v1446
        %v1448 = vpop.f32.mrb[0].mxu0
        %v1449 = vadd.f32 %v1300, %v1448
        %1450 = vmatprep.mubr.f32.mxu0 0.0
        %1451 = vmatmul.mubr.f32.gmra.mrb[0].mxu0 %v1279
        %v1452 = vpop.f32.mrb[0].mxu0
        %v1453 = vadd.f32 %v1296, %v1452
        %v1454 = vpop.f32.mrb[0].mxu0
        %v1455 = vadd.f32 %v1300, %v1454
        %1456 = vmatprep.mubr.f32.mxu0 0.0
        %1457 = vmatmul.mubr.f32.gmra.mrb[0].mxu0 %v1284
        %v1458 = vpop.f32.mrb[0].mxu0
        %v1459 = vadd.f32 %v1296, %v1458
        %v1460 = vpop.f32.mrb[0].mxu0
        %v1461 = vadd.f32 %v1300, %v1460
        %1462 = vmatprep.mubr.f32.mxu0 0.0
        %1463 = vmatmul.mubr.f32.gmra.mrb[0].mxu0 %v1289
        %v1464 = vpop.f32.mrb[0].mxu0
        %v1465 = vadd.f32 %v1296, %v1464
        %v1466 = vpop.f32.mrb[0].mxu0
        %v1467 = vadd.f32 %v1300, %v1466
        %1468 = vdwg.mxu0
        %1469 = vmatprep.subr.mxu0 0.0
        %1470 = vmatpush1.msra.mxu0 %v786
        %1471 = vmatprep.subr.mxu0 0.0
        %1472 = vmatpush1.msra.mxu0 %v789
        %1473 = vmatprep.subr.mxu0 0.0
        %1474 = vmatpush1.msra.mxu0 %v792
        %1475 = vmatprep.subr.mxu0 0.0
        %1476 = vmatpush1.msra.mxu0 %v795
        %1477 = vmatprep.subr.mxu0 0.0
        %1478 = vmatpush1.msra.mxu0 %v798
        %1479 = vmatprep.subr.mxu0 0.0
        %1480 = vmatpush1.msra.mxu0 %v801
        %1481 = vmatprep.subr.mxu0 0.0
        %1482 = vmatpush1.msra.mxu0 %v804
        %1483 = vmatprep.subr.mxu0 0.0
        %1484 = vmatpush1.msra.mxu0 %v807
        %1485 = vmatprep.subr.mxu0 0.0
        %1486 = vmatpush1.msra.mxu0 %v810
        %1487 = vmatprep.subr.mxu0 0.0
        %1488 = vmatpush1.msra.mxu0 %v813
        %1489 = vmatprep.subr.mxu0 0.0
        %1490 = vmatpush1.msra.mxu0 %v816
        %1491 = vmatprep.subr.mxu0 0.0
        %1492 = vmatpush1.msra.mxu0 %v819
        %1493 = vmatprep.subr.mxu0 0.0
        %1494 = vmatpush1.msra.mxu0 %v822
        %1495 = vmatprep.subr.mxu0 0.0
        %1496 = vmatpush1.msra.mxu0 %v825
        %1497 = vmatprep.subr.mxu0 0.0
        %1498 = vmatpush1.msra.mxu0 %v828
        %1499 = vmatprep.subr.mxu0 0.0
        %1500 = vmatpush1.msra.mxu0 %v831
        %1501 = vmatprep.subr.mxu0 0.0
        %1502 = vmatpush1.msra.mxu0 0.0
        %1503 = vmatprep.subr.mxu0 0.0
        %1504 = vmatpush1.msra.mxu0 0.0
        %1505 = vmatprep.subr.mxu0 0.0
        %1506 = vmatpush1.msra.mxu0 0.0
        %1507 = vmatprep.subr.mxu0 0.0
        %1508 = vmatpush1.msra.mxu0 0.0
        %1509 = vmatprep.subr.mxu0 0.0
        %1510 = vmatpush1.msra.mxu0 0.0
        %1511 = vmatprep.subr.mxu0 0.0
        %1512 = vmatpush1.msra.mxu0 0.0
        %1513 = vmatprep.subr.mxu0 0.0
        %1514 = vmatpush1.msra.mxu0 0.0
        %1515 = vmatprep.subr.mxu0 0.0
        %1516 = vmatpush1.msra.mxu0 0.0
        %1517 = vmatprep.subr.mxu0 0.0
        %1518 = vmatpush1.msra.mxu0 0.0
        %1519 = vmatprep.subr.mxu0 0.0
        %1520 = vmatpush1.msra.mxu0 0.0
        %1521 = vmatprep.subr.mxu0 0.0
        %1522 = vmatpush1.msra.mxu0 0.0
        %1523 = vmatprep.subr.mxu0 0.0
        %1524 = vmatpush1.msra.mxu0 0.0
        %1525 = vmatprep.subr.mxu0 0.0
        %1526 = vmatpush1.msra.mxu0 0.0
        %1527 = vmatprep.subr.mxu0 0.0
        %1528 = vmatpush1.msra.mxu0 0.0
        %1529 = vmatprep.subr.mxu0 0.0
        %1530 = vmatpush1.msra.mxu0 0.0
        %1531 = vmatprep.subr.mxu0 0.0
        %1532 = vmatpush1.msra.mxu0 0.0
        %1533 = vmatprep.mubr.f32.mxu0 0.0
        %1534 = vmatmul.mubr.f32.gmra.mrb[0].mxu0 %v1125
        %v1535 = vpop.f32.mrb[0].mxu0
        %v1536 = vadd.f32 %v1304, %v1535
        %v1537 = vpop.f32.mrb[0].mxu0
        %1538 = vmatprep.mubr.f32.mxu0 0.0
        %1539 = vmatmul.mubr.f32.gmra.mrb[0].mxu0 %v1130
        %v1540 = vpop.f32.mrb[0].mxu0
        %v1541 = vadd.f32 %v1304, %v1540
        %v1542 = vpop.f32.mrb[0].mxu0
        %1543 = vmatprep.mubr.f32.mxu0 0.0
        %1544 = vmatmul.mubr.f32.gmra.mrb[0].mxu0 %v1135
        %v1545 = vpop.f32.mrb[0].mxu0
        %v1546 = vadd.f32 %v1304, %v1545
        %v1547 = vpop.f32.mrb[0].mxu0
        %1548 = vmatprep.mubr.f32.mxu0 0.0
        %1549 = vmatmul.mubr.f32.gmra.mrb[0].mxu0 %v1140
        %v1550 = vpop.f32.mrb[0].mxu0
        %v1551 = vadd.f32 %v1304, %v1550
        %v1552 = vpop.f32.mrb[0].mxu0
        %1553 = vmatprep.mubr.f32.mxu0 0.0
        %1554 = vmatmul.mubr.f32.gmra.mrb[0].mxu0 %v1145
        %v1555 = vpop.f32.mrb[0].mxu0
        %v1556 = vadd.f32 %v1304, %v1555
        %v1557 = vpop.f32.mrb[0].mxu0
        %1558 = vmatprep.mubr.f32.mxu0 0.0
        %1559 = vmatmul.mubr.f32.gmra.mrb[0].mxu0 %v1150
        %v1560 = vpop.f32.mrb[0].mxu0
        %v1561 = vadd.f32 %v1304, %v1560
        %v1562 = vpop.f32.mrb[0].mxu0
        %1563 = vmatprep.mubr.f32.mxu0 0.0
        %1564 = vmatmul.mubr.f32.gmra.mrb[0].mxu0 %v1155
        %v1565 = vpop.f32.mrb[0].mxu0
        %v1566 = vadd.f32 %v1304, %v1565
        %v1567 = vpop.f32.mrb[0].mxu0
        %1568 = vmatprep.mubr.f32.mxu0 0.0
        %1569 = vmatmul.mubr.f32.gmra.mrb[0].mxu0 %v1160
        %v1570 = vpop.f32.mrb[0].mxu0
        %v1571 = vadd.f32 %v1304, %v1570
        %v1572 = vpop.f32.mrb[0].mxu0
        %1573 = vmatprep.mubr.f32.mxu0 0.0
        %1574 = vmatmul.mubr.f32.gmra.mrb[0].mxu0 %v1254
        %v1575 = vpop.f32.mrb[0].mxu0
        %v1576 = vadd.f32 %v1304, %v1575
        %v1577 = vpop.f32.mrb[0].mxu0
        %1578 = vmatprep.mubr.f32.mxu0 0.0
        %1579 = vmatmul.mubr.f32.gmra.mrb[0].mxu0 %v1259
        %v1580 = vpop.f32.mrb[0].mxu0
        %v1581 = vadd.f32 %v1304, %v1580
        %v1582 = vpop.f32.mrb[0].mxu0
        %1583 = vmatprep.mubr.f32.mxu0 0.0
        %1584 = vmatmul.mubr.f32.gmra.mrb[0].mxu0 %v1264
        %v1585 = vpop.f32.mrb[0].mxu0
        %v1586 = vadd.f32 %v1304, %v1585
        %v1587 = vpop.f32.mrb[0].mxu0
        %1588 = vmatprep.mubr.f32.mxu0 0.0
        %1589 = vmatmul.mubr.f32.gmra.mrb[0].mxu0 %v1269
        %v1590 = vpop.f32.mrb[0].mxu0
        %v1591 = vadd.f32 %v1304, %v1590
        %v1592 = vpop.f32.mrb[0].mxu0
        %1593 = vmatprep.mubr.f32.mxu0 0.0
        %1594 = vmatmul.mubr.f32.gmra.mrb[0].mxu0 %v1274
        %v1595 = vpop.f32.mrb[0].mxu0
        %v1596 = vadd.f32 %v1304, %v1595
        %v1597 = vpop.f32.mrb[0].mxu0
        %1598 = vmatprep.mubr.f32.mxu0 0.0
        %1599 = vmatmul.mubr.f32.gmra.mrb[0].mxu0 %v1279
        %v1600 = vpop.f32.mrb[0].mxu0
        %v1601 = vadd.f32 %v1304, %v1600
        %v1602 = vpop.f32.mrb[0].mxu0
        %1603 = vmatprep.mubr.f32.mxu0 0.0
        %1604 = vmatmul.mubr.f32.gmra.mrb[0].mxu0 %v1284
        %v1605 = vpop.f32.mrb[0].mxu0
        %v1606 = vadd.f32 %v1304, %v1605
        %v1607 = vpop.f32.mrb[0].mxu0
        %1608 = vmatprep.mubr.f32.mxu0 0.0
        %1609 = vmatmul.mubr.f32.gmra.mrb[0].mxu0 %v1289
        %v1610 = vpop.f32.mrb[0].mxu0
        %v1611 = vadd.f32 %v1304, %v1610
        %v1612 = vpop.f32.mrb[0].mxu0
        %1613 = vdwg.mxu0
        %v1615 = vlaneseq
        %v1616 = vshrl.u32 %v1615, 7
        %v1617 = vsub.s32 0, %v1616
        %v1618 = vrot.slane %v881, %v1617
        %v1619 = vlaneseq
        %v1620 = vshrl.u32 %v1619, 7
        %v1621 = vsub.s32 1, %v1620
        %v1622 = vrot.slane %v881, %v1621
        %v1623 = vlaneseq
        %v1624 = vshrl.u32 %v1623, 7
        %v1625 = vsub.s32 2, %v1624
        %v1626 = vrot.slane %v881, %v1625
        %1630 = vmatprep.subr.mxu0 %v834
        %1631 = vmatpush1.msra.mxu0 %v833
        %1632 = vmatprep.subr.mxu0 %v837
        %1633 = vmatpush1.msra.mxu0 %v836
        %1634 = vmatprep.subr.mxu0 %v840
        %1635 = vmatpush1.msra.mxu0 %v839
        %1636 = vmatprep.subr.mxu0 %v843
        %1637 = vmatpush1.msra.mxu0 %v842
        %1638 = vmatprep.subr.mxu0 %v846
        %1639 = vmatpush1.msra.mxu0 %v845
        %1640 = vmatprep.subr.mxu0 %v849
        %1641 = vmatpush1.msra.mxu0 %v848
        %1642 = vmatprep.subr.mxu0 %v852
        %1643 = vmatpush1.msra.mxu0 %v851
        %1644 = vmatprep.subr.mxu0 %v855
        %1645 = vmatpush1.msra.mxu0 %v854
        %1646 = vmatprep.subr.mxu0 %v858
        %1647 = vmatpush1.msra.mxu0 %v857
        %1648 = vmatprep.subr.mxu0 %v861
        %1649 = vmatpush1.msra.mxu0 %v860
        %1650 = vmatprep.subr.mxu0 %v864
        %1651 = vmatpush1.msra.mxu0 %v863
        %1652 = vmatprep.subr.mxu0 %v867
        %1653 = vmatpush1.msra.mxu0 %v866
        %1654 = vmatprep.subr.mxu0 %v870
        %1655 = vmatpush1.msra.mxu0 %v869
        %1656 = vmatprep.subr.mxu0 %v873
        %1657 = vmatpush1.msra.mxu0 %v872
        %1658 = vmatprep.subr.mxu0 %v876
        %1659 = vmatpush1.msra.mxu0 %v875
        %1660 = vmatprep.subr.mxu0 %v879
        %1661 = vmatpush1.msra.mxu0 %v878
        %1662 = vmatprep.subr.mxu0 0.0
        %1663 = vmatpush1.msra.mxu0 0.0
        %1664 = vmatprep.subr.mxu0 0.0
        %1665 = vmatpush1.msra.mxu0 0.0
        %1666 = vmatprep.subr.mxu0 0.0
        %1667 = vmatpush1.msra.mxu0 0.0
        %1668 = vmatprep.subr.mxu0 0.0
        %1669 = vmatpush1.msra.mxu0 0.0
        %1670 = vmatprep.subr.mxu0 0.0
        %1671 = vmatpush1.msra.mxu0 0.0
        %1672 = vmatprep.subr.mxu0 0.0
        %1673 = vmatpush1.msra.mxu0 0.0
        %1674 = vmatprep.subr.mxu0 0.0
        %1675 = vmatpush1.msra.mxu0 0.0
        %1676 = vmatprep.subr.mxu0 0.0
        %1677 = vmatpush1.msra.mxu0 0.0
        %1678 = vmatprep.subr.mxu0 0.0
        %1679 = vmatpush1.msra.mxu0 0.0
        %1680 = vmatprep.subr.mxu0 0.0
        %1681 = vmatpush1.msra.mxu0 0.0
        %1682 = vmatprep.subr.mxu0 0.0
        %1683 = vmatpush1.msra.mxu0 0.0
        %1684 = vmatprep.subr.mxu0 0.0
        %1685 = vmatpush1.msra.mxu0 0.0
        %1686 = vmatprep.subr.mxu0 0.0
        %1687 = vmatpush1.msra.mxu0 0.0
        %1688 = vmatprep.subr.mxu0 0.0
        %1689 = vmatpush1.msra.mxu0 0.0
        %1690 = vmatprep.subr.mxu0 0.0
        %1691 = vmatpush1.msra.mxu0 0.0
        %1692 = vmatprep.subr.mxu0 0.0
        %1693 = vmatpush1.msra.mxu0 0.0
        %1694 = vmatprep.mubr.f32.mxu0 0.0
        %1695 = vmatmul.mubr.f32.gmra.mrb[0].mxu0 %v735
        %v1696 = vpop.f32.mrb[0].mxu0
        %v1697 = vadd.f32 %v1618, %v1696
        %v1698 = vpop.f32.mrb[0].mxu0
        %v1699 = vadd.f32 %v1622, %v1698
        %1700 = vmatprep.mubr.f32.mxu0 0.0
        %1701 = vmatmul.mubr.f32.gmra.mrb[0].mxu0 %v736
        %v1702 = vpop.f32.mrb[0].mxu0
        %v1703 = vadd.f32 %v1618, %v1702
        %v1704 = vpop.f32.mrb[0].mxu0
        %v1705 = vadd.f32 %v1622, %v1704
        %1706 = vmatprep.mubr.f32.mxu0 0.0
        %1707 = vmatmul.mubr.f32.gmra.mrb[0].mxu0 %v737
        %v1708 = vpop.f32.mrb[0].mxu0
        %v1709 = vadd.f32 %v1618, %v1708
        %v1710 = vpop.f32.mrb[0].mxu0
        %v1711 = vadd.f32 %v1622, %v1710
        %1712 = vmatprep.mubr.f32.mxu0 0.0
        %1713 = vmatmul.mubr.f32.gmra.mrb[0].mxu0 %v738
        %v1714 = vpop.f32.mrb[0].mxu0
        %v1715 = vadd.f32 %v1618, %v1714
        %v1716 = vpop.f32.mrb[0].mxu0
        %v1717 = vadd.f32 %v1622, %v1716
        %1718 = vmatprep.mubr.f32.mxu0 0.0
        %1719 = vmatmul.mubr.f32.gmra.mrb[0].mxu0 %v739
        %v1720 = vpop.f32.mrb[0].mxu0
        %v1721 = vadd.f32 %v1618, %v1720
        %v1722 = vpop.f32.mrb[0].mxu0
        %v1723 = vadd.f32 %v1622, %v1722
        %1724 = vmatprep.mubr.f32.mxu0 0.0
        %1725 = vmatmul.mubr.f32.gmra.mrb[0].mxu0 %v740
        %v1726 = vpop.f32.mrb[0].mxu0
        %v1727 = vadd.f32 %v1618, %v1726
        %v1728 = vpop.f32.mrb[0].mxu0
        %v1729 = vadd.f32 %v1622, %v1728
        %1730 = vmatprep.mubr.f32.mxu0 0.0
        %1731 = vmatmul.mubr.f32.gmra.mrb[0].mxu0 %v741
        %v1732 = vpop.f32.mrb[0].mxu0
        %v1733 = vadd.f32 %v1618, %v1732
        %v1734 = vpop.f32.mrb[0].mxu0
        %v1735 = vadd.f32 %v1622, %v1734
        %1736 = vmatprep.mubr.f32.mxu0 0.0
        %1737 = vmatmul.mubr.f32.gmra.mrb[0].mxu0 %v742
        %v1738 = vpop.f32.mrb[0].mxu0
        %v1739 = vadd.f32 %v1618, %v1738
        %v1740 = vpop.f32.mrb[0].mxu0
        %v1741 = vadd.f32 %v1622, %v1740
        %1742 = vmatprep.mubr.f32.mxu0 0.0
        %1743 = vmatmul.mubr.f32.gmra.mrb[0].mxu0 %v743
        %v1744 = vpop.f32.mrb[0].mxu0
        %v1745 = vadd.f32 %v1618, %v1744
        %v1746 = vpop.f32.mrb[0].mxu0
        %v1747 = vadd.f32 %v1622, %v1746
        %1748 = vmatprep.mubr.f32.mxu0 0.0
        %1749 = vmatmul.mubr.f32.gmra.mrb[0].mxu0 %v744
        %v1750 = vpop.f32.mrb[0].mxu0
        %v1751 = vadd.f32 %v1618, %v1750
        %v1752 = vpop.f32.mrb[0].mxu0
        %v1753 = vadd.f32 %v1622, %v1752
        %1754 = vmatprep.mubr.f32.mxu0 0.0
        %1755 = vmatmul.mubr.f32.gmra.mrb[0].mxu0 %v745
        %v1756 = vpop.f32.mrb[0].mxu0
        %v1757 = vadd.f32 %v1618, %v1756
        %v1758 = vpop.f32.mrb[0].mxu0
        %v1759 = vadd.f32 %v1622, %v1758
        %1760 = vmatprep.mubr.f32.mxu0 0.0
        %1761 = vmatmul.mubr.f32.gmra.mrb[0].mxu0 %v746
        %v1762 = vpop.f32.mrb[0].mxu0
        %v1763 = vadd.f32 %v1618, %v1762
        %v1764 = vpop.f32.mrb[0].mxu0
        %v1765 = vadd.f32 %v1622, %v1764
        %1766 = vmatprep.mubr.f32.mxu0 0.0
        %1767 = vmatmul.mubr.f32.gmra.mrb[0].mxu0 %v747
        %v1768 = vpop.f32.mrb[0].mxu0
        %v1769 = vadd.f32 %v1618, %v1768
        %v1770 = vpop.f32.mrb[0].mxu0
        %v1771 = vadd.f32 %v1622, %v1770
        %1772 = vmatprep.mubr.f32.mxu0 0.0
        %1773 = vmatmul.mubr.f32.gmra.mrb[0].mxu0 %v748
        %v1774 = vpop.f32.mrb[0].mxu0
        %v1775 = vadd.f32 %v1618, %v1774
        %v1776 = vpop.f32.mrb[0].mxu0
        %v1777 = vadd.f32 %v1622, %v1776
        %1778 = vmatprep.mubr.f32.mxu0 0.0
        %1779 = vmatmul.mubr.f32.gmra.mrb[0].mxu0 %v749
        %v1780 = vpop.f32.mrb[0].mxu0
        %v1781 = vadd.f32 %v1618, %v1780
        %v1782 = vpop.f32.mrb[0].mxu0
        %v1783 = vadd.f32 %v1622, %v1782
        %1784 = vmatprep.mubr.f32.mxu0 0.0
        %1785 = vmatmul.mubr.f32.gmra.mrb[0].mxu0 %v750
        %v1786 = vpop.f32.mrb[0].mxu0
        %v1787 = vadd.f32 %v1618, %v1786
        %v1788 = vpop.f32.mrb[0].mxu0
        %v1789 = vadd.f32 %v1622, %v1788
        %1790 = vdwg.mxu0
        %1791 = vmatprep.subr.mxu0 0.0
        %1792 = vmatpush1.msra.mxu0 %v835
        %1793 = vmatprep.subr.mxu0 0.0
        %1794 = vmatpush1.msra.mxu0 %v838
        %1795 = vmatprep.subr.mxu0 0.0
        %1796 = vmatpush1.msra.mxu0 %v841
        %1797 = vmatprep.subr.mxu0 0.0
        %1798 = vmatpush1.msra.mxu0 %v844
        %1799 = vmatprep.subr.mxu0 0.0
        %1800 = vmatpush1.msra.mxu0 %v847
        %1801 = vmatprep.subr.mxu0 0.0
        %1802 = vmatpush1.msra.mxu0 %v850
        %1803 = vmatprep.subr.mxu0 0.0
        %1804 = vmatpush1.msra.mxu0 %v853
        %1805 = vmatprep.subr.mxu0 0.0
        %1806 = vmatpush1.msra.mxu0 %v856
        %1807 = vmatprep.subr.mxu0 0.0
        %1808 = vmatpush1.msra.mxu0 %v859
        %1809 = vmatprep.subr.mxu0 0.0
        %1810 = vmatpush1.msra.mxu0 %v862
        %1811 = vmatprep.subr.mxu0 0.0
        %1812 = vmatpush1.msra.mxu0 %v865
        %1813 = vmatprep.subr.mxu0 0.0
        %1814 = vmatpush1.msra.mxu0 %v868
        %1815 = vmatprep.subr.mxu0 0.0
        %1816 = vmatpush1.msra.mxu0 %v871
        %1817 = vmatprep.subr.mxu0 0.0
        %1818 = vmatpush1.msra.mxu0 %v874
        %1819 = vmatprep.subr.mxu0 0.0
        %1820 = vmatpush1.msra.mxu0 %v877
        %1821 = vmatprep.subr.mxu0 0.0
        %1822 = vmatpush1.msra.mxu0 %v880
        %1823 = vmatprep.subr.mxu0 0.0
        %1824 = vmatpush1.msra.mxu0 0.0
        %1825 = vmatprep.subr.mxu0 0.0
        %1826 = vmatpush1.msra.mxu0 0.0
        %1827 = vmatprep.subr.mxu0 0.0
        %1828 = vmatpush1.msra.mxu0 0.0
        %1829 = vmatprep.subr.mxu0 0.0
        %1830 = vmatpush1.msra.mxu0 0.0
        %1831 = vmatprep.subr.mxu0 0.0
        %1832 = vmatpush1.msra.mxu0 0.0
        %1833 = vmatprep.subr.mxu0 0.0
        %1834 = vmatpush1.msra.mxu0 0.0
        %1835 = vmatprep.subr.mxu0 0.0
        %1836 = vmatpush1.msra.mxu0 0.0
        %1837 = vmatprep.subr.mxu0 0.0
        %1838 = vmatpush1.msra.mxu0 0.0
        %1839 = vmatprep.subr.mxu0 0.0
        %1840 = vmatpush1.msra.mxu0 0.0
        %1841 = vmatprep.subr.mxu0 0.0
        %1842 = vmatpush1.msra.mxu0 0.0
        %1843 = vmatprep.subr.mxu0 0.0
        %1844 = vmatpush1.msra.mxu0 0.0
        %1845 = vmatprep.subr.mxu0 0.0
        %1846 = vmatpush1.msra.mxu0 0.0
        %1847 = vmatprep.subr.mxu0 0.0
        %1848 = vmatpush1.msra.mxu0 0.0
        %1849 = vmatprep.subr.mxu0 0.0
        %1850 = vmatpush1.msra.mxu0 0.0
        %1851 = vmatprep.subr.mxu0 0.0
        %1852 = vmatpush1.msra.mxu0 0.0
        %1853 = vmatprep.subr.mxu0 0.0
        %1854 = vmatpush1.msra.mxu0 0.0
        %1855 = vmatprep.mubr.f32.mxu0 0.0
        %1856 = vmatmul.mubr.f32.gmra.mrb[0].mxu0 %v735
        %v1857 = vpop.f32.mrb[0].mxu0
        %v1858 = vadd.f32 %v1626, %v1857
        %v1859 = vpop.f32.mrb[0].mxu0
        %1860 = vmatprep.mubr.f32.mxu0 0.0
        %1861 = vmatmul.mubr.f32.gmra.mrb[0].mxu0 %v736
        %v1862 = vpop.f32.mrb[0].mxu0
        %v1863 = vadd.f32 %v1626, %v1862
        %v1864 = vpop.f32.mrb[0].mxu0
        %1865 = vmatprep.mubr.f32.mxu0 0.0
        %1866 = vmatmul.mubr.f32.gmra.mrb[0].mxu0 %v737
        %v1867 = vpop.f32.mrb[0].mxu0
        %v1868 = vadd.f32 %v1626, %v1867
        %v1869 = vpop.f32.mrb[0].mxu0
        %1870 = vmatprep.mubr.f32.mxu0 0.0
        %1871 = vmatmul.mubr.f32.gmra.mrb[0].mxu0 %v738
        %v1872 = vpop.f32.mrb[0].mxu0
        %v1873 = vadd.f32 %v1626, %v1872
        %v1874 = vpop.f32.mrb[0].mxu0
        %1875 = vmatprep.mubr.f32.mxu0 0.0
        %1876 = vmatmul.mubr.f32.gmra.mrb[0].mxu0 %v739
        %v1877 = vpop.f32.mrb[0].mxu0
        %v1878 = vadd.f32 %v1626, %v1877
        %v1879 = vpop.f32.mrb[0].mxu0
        %1880 = vmatprep.mubr.f32.mxu0 0.0
        %1881 = vmatmul.mubr.f32.gmra.mrb[0].mxu0 %v740
        %v1882 = vpop.f32.mrb[0].mxu0
        %v1883 = vadd.f32 %v1626, %v1882
        %v1884 = vpop.f32.mrb[0].mxu0
        %1885 = vmatprep.mubr.f32.mxu0 0.0
        %1886 = vmatmul.mubr.f32.gmra.mrb[0].mxu0 %v741
        %v1887 = vpop.f32.mrb[0].mxu0
        %v1888 = vadd.f32 %v1626, %v1887
        %v1889 = vpop.f32.mrb[0].mxu0
        %1890 = vmatprep.mubr.f32.mxu0 0.0
        %1891 = vmatmul.mubr.f32.gmra.mrb[0].mxu0 %v742
        %v1892 = vpop.f32.mrb[0].mxu0
        %v1893 = vadd.f32 %v1626, %v1892
        %v1894 = vpop.f32.mrb[0].mxu0
        %1895 = vmatprep.mubr.f32.mxu0 0.0
        %1896 = vmatmul.mubr.f32.gmra.mrb[0].mxu0 %v743
        %v1897 = vpop.f32.mrb[0].mxu0
        %v1898 = vadd.f32 %v1626, %v1897
        %v1899 = vpop.f32.mrb[0].mxu0
        %1900 = vmatprep.mubr.f32.mxu0 0.0
        %1901 = vmatmul.mubr.f32.gmra.mrb[0].mxu0 %v744
        %v1902 = vpop.f32.mrb[0].mxu0
        %v1903 = vadd.f32 %v1626, %v1902
        %v1904 = vpop.f32.mrb[0].mxu0
        %1905 = vmatprep.mubr.f32.mxu0 0.0
        %1906 = vmatmul.mubr.f32.gmra.mrb[0].mxu0 %v745
        %v1907 = vpop.f32.mrb[0].mxu0
        %v1908 = vadd.f32 %v1626, %v1907
        %v1909 = vpop.f32.mrb[0].mxu0
        %1910 = vmatprep.mubr.f32.mxu0 0.0
        %1911 = vmatmul.mubr.f32.gmra.mrb[0].mxu0 %v746
        %v1912 = vpop.f32.mrb[0].mxu0
        %v1913 = vadd.f32 %v1626, %v1912
        %v1914 = vpop.f32.mrb[0].mxu0
        %1915 = vmatprep.mubr.f32.mxu0 0.0
        %1916 = vmatmul.mubr.f32.gmra.mrb[0].mxu0 %v747
        %v1917 = vpop.f32.mrb[0].mxu0
        %v1918 = vadd.f32 %v1626, %v1917
        %v1919 = vpop.f32.mrb[0].mxu0
        %1920 = vmatprep.mubr.f32.mxu0 0.0
        %1921 = vmatmul.mubr.f32.gmra.mrb[0].mxu0 %v748
        %v1922 = vpop.f32.mrb[0].mxu0
        %v1923 = vadd.f32 %v1626, %v1922
        %v1924 = vpop.f32.mrb[0].mxu0
        %1925 = vmatprep.mubr.f32.mxu0 0.0
        %1926 = vmatmul.mubr.f32.gmra.mrb[0].mxu0 %v749
        %v1927 = vpop.f32.mrb[0].mxu0
        %v1928 = vadd.f32 %v1626, %v1927
        %v1929 = vpop.f32.mrb[0].mxu0
        %1930 = vmatprep.mubr.f32.mxu0 0.0
        %1931 = vmatmul.mubr.f32.gmra.mrb[0].mxu0 %v750
        %v1932 = vpop.f32.mrb[0].mxu0
        %v1933 = vadd.f32 %v1626, %v1932
        %v1934 = vpop.f32.mrb[0].mxu0
        %1935 = vdwg.mxu0
        %v1936 = vadd.f32 %v1375, %v1697
        %v1937 = vadd.f32 %v1381, %v1703
        %v1938 = vadd.f32 %v1387, %v1709
        %v1939 = vadd.f32 %v1393, %v1715
        %v1940 = vadd.f32 %v1399, %v1721
        %v1941 = vadd.f32 %v1405, %v1727
        %v1942 = vadd.f32 %v1411, %v1733
        %v1943 = vadd.f32 %v1417, %v1739
        %v1944 = vadd.f32 %v1423, %v1745
        %v1945 = vadd.f32 %v1429, %v1751
        %v1946 = vadd.f32 %v1435, %v1757
        %v1947 = vadd.f32 %v1441, %v1763
        %v1948 = vadd.f32 %v1447, %v1769
        %v1949 = vadd.f32 %v1453, %v1775
        %v1950 = vadd.f32 %v1459, %v1781
        %v1951 = vadd.f32 %v1465, %v1787
        %v1952 = vxor.u32 %v1936, 2147483648
        %v1953 = vxor.u32 %v1937, 2147483648
        %v1954 = vxor.u32 %v1938, 2147483648
        %v1955 = vxor.u32 %v1939, 2147483648
        %v1956 = vxor.u32 %v1940, 2147483648
        %v1957 = vxor.u32 %v1941, 2147483648
        %v1958 = vxor.u32 %v1942, 2147483648
        %v1959 = vxor.u32 %v1943, 2147483648
        %v1960 = vxor.u32 %v1944, 2147483648
        %v1961 = vxor.u32 %v1945, 2147483648
        %v1962 = vxor.u32 %v1946, 2147483648
        %v1963 = vxor.u32 %v1947, 2147483648
        %v1964 = vxor.u32 %v1948, 2147483648
        %v1965 = vxor.u32 %v1949, 2147483648
        %v1966 = vxor.u32 %v1950, 2147483648
        %v1967 = vxor.u32 %v1951, 2147483648
        %v1968 = vmul.f32 %v1952, 1.442695
        %v1969 = vpow.pop %v1968
        %v1970 = vmul.f32 %v1953, 1.442695
        %v1971 = vpow.pop %v1970
        %v1972 = vmul.f32 %v1954, 1.442695
        %v1973 = vpow.pop %v1972
        %v1974 = vmul.f32 %v1955, 1.442695
        %v1975 = vpow.pop %v1974
        %v1976 = vmul.f32 %v1956, 1.442695
        %v1977 = vpow.pop %v1976
        %v1978 = vmul.f32 %v1957, 1.442695
        %v1979 = vpow.pop %v1978
        %v1980 = vmul.f32 %v1958, 1.442695
        %v1981 = vpow.pop %v1980
        %v1982 = vmul.f32 %v1959, 1.442695
        %v1983 = vpow.pop %v1982
        %v1984 = vmul.f32 %v1960, 1.442695
        %v1985 = vpow.pop %v1984
        %v1986 = vmul.f32 %v1961, 1.442695
        %v1987 = vpow.pop %v1986
        %v1988 = vmul.f32 %v1962, 1.442695
        %v1989 = vpow.pop %v1988
        %v1990 = vmul.f32 %v1963, 1.442695
        %v1991 = vpow.pop %v1990
        %v1992 = vmul.f32 %v1964, 1.442695
        %v1993 = vpow.pop %v1992
        %v1994 = vmul.f32 %v1965, 1.442695
        %v1995 = vpow.pop %v1994
        %v1996 = vmul.f32 %v1966, 1.442695
        %v1997 = vpow.pop %v1996
        %v1998 = vmul.f32 %v1967, 1.442695
        %v1999 = vpow.pop %v1998
        %v2000 = vadd.f32 %v1969, 1.0
        %v2001 = vadd.f32 %v1971, 1.0
        %v2002 = vadd.f32 %v1973, 1.0
        %v2003 = vadd.f32 %v1975, 1.0
        %v2004 = vadd.f32 %v1977, 1.0
        %v2005 = vadd.f32 %v1979, 1.0
        %v2006 = vadd.f32 %v1981, 1.0
        %v2007 = vadd.f32 %v1983, 1.0
        %v2008 = vadd.f32 %v1985, 1.0
        %v2009 = vadd.f32 %v1987, 1.0
        %v2010 = vadd.f32 %v1989, 1.0
        %v2011 = vadd.f32 %v1991, 1.0
        %v2012 = vadd.f32 %v1993, 1.0
        %v2013 = vadd.f32 %v1995, 1.0
        %v2014 = vadd.f32 %v1997, 1.0
        %v2015 = vadd.f32 %v1999, 1.0
        %v2016 = vrcp.pop %v2000
        %v2017 = vmul.f32 1.0, %v2016
        %v2018 = vrcp.pop %v2001
        %v2019 = vmul.f32 1.0, %v2018
        %v2020 = vrcp.pop %v2002
        %v2021 = vmul.f32 1.0, %v2020
        %v2022 = vrcp.pop %v2003
        %v2023 = vmul.f32 1.0, %v2022
        %v2024 = vrcp.pop %v2004
        %v2025 = vmul.f32 1.0, %v2024
        %v2026 = vrcp.pop %v2005
        %v2027 = vmul.f32 1.0, %v2026
        %v2028 = vrcp.pop %v2006
        %v2029 = vmul.f32 1.0, %v2028
        %v2030 = vrcp.pop %v2007
        %v2031 = vmul.f32 1.0, %v2030
        %v2032 = vrcp.pop %v2008
        %v2033 = vmul.f32 1.0, %v2032
        %v2034 = vrcp.pop %v2009
        %v2035 = vmul.f32 1.0, %v2034
        %v2036 = vrcp.pop %v2010
        %v2037 = vmul.f32 1.0, %v2036
        %v2038 = vrcp.pop %v2011
        %v2039 = vmul.f32 1.0, %v2038
        %v2040 = vrcp.pop %v2012
        %v2041 = vmul.f32 1.0, %v2040
        %v2042 = vrcp.pop %v2013
        %v2043 = vmul.f32 1.0, %v2042
        %v2044 = vrcp.pop %v2014
        %v2045 = vmul.f32 1.0, %v2044
        %v2046 = vrcp.pop %v2015
        %v2047 = vmul.f32 1.0, %v2046
        %v2048 = vadd.f32 %v1377, %v1699
        %v2049 = vadd.f32 %v1383, %v1705
        %v2050 = vadd.f32 %v1389, %v1711
        %v2051 = vadd.f32 %v1395, %v1717
        %v2052 = vadd.f32 %v1401, %v1723
        %v2053 = vadd.f32 %v1407, %v1729
        %v2054 = vadd.f32 %v1413, %v1735
        %v2055 = vadd.f32 %v1419, %v1741
        %v2056 = vadd.f32 %v1425, %v1747
        %v2057 = vadd.f32 %v1431, %v1753
        %v2058 = vadd.f32 %v1437, %v1759
        %v2059 = vadd.f32 %v1443, %v1765
        %v2060 = vadd.f32 %v1449, %v1771
        %v2061 = vadd.f32 %v1455, %v1777
        %v2062 = vadd.f32 %v1461, %v1783
        %v2063 = vadd.f32 %v1467, %v1789
        %v2064 = vxor.u32 %v2048, 2147483648
        %v2065 = vxor.u32 %v2049, 2147483648
        %v2066 = vxor.u32 %v2050, 2147483648
        %v2067 = vxor.u32 %v2051, 2147483648
        %v2068 = vxor.u32 %v2052, 2147483648
        %v2069 = vxor.u32 %v2053, 2147483648
        %v2070 = vxor.u32 %v2054, 2147483648
        %v2071 = vxor.u32 %v2055, 2147483648
        %v2072 = vxor.u32 %v2056, 2147483648
        %v2073 = vxor.u32 %v2057, 2147483648
        %v2074 = vxor.u32 %v2058, 2147483648
        %v2075 = vxor.u32 %v2059, 2147483648
        %v2076 = vxor.u32 %v2060, 2147483648
        %v2077 = vxor.u32 %v2061, 2147483648
        %v2078 = vxor.u32 %v2062, 2147483648
        %v2079 = vxor.u32 %v2063, 2147483648
        %v2080 = vmul.f32 %v2064, 1.442695
        %v2081 = vpow.pop %v2080
        %v2082 = vmul.f32 %v2065, 1.442695
        %v2083 = vpow.pop %v2082
        %v2084 = vmul.f32 %v2066, 1.442695
        %v2085 = vpow.pop %v2084
        %v2086 = vmul.f32 %v2067, 1.442695
        %v2087 = vpow.pop %v2086
        %v2088 = vmul.f32 %v2068, 1.442695
        %v2089 = vpow.pop %v2088
        %v2090 = vmul.f32 %v2069, 1.442695
        %v2091 = vpow.pop %v2090
        %v2092 = vmul.f32 %v2070, 1.442695
        %v2093 = vpow.pop %v2092
        %v2094 = vmul.f32 %v2071, 1.442695
        %v2095 = vpow.pop %v2094
        %v2096 = vmul.f32 %v2072, 1.442695
        %v2097 = vpow.pop %v2096
        %v2098 = vmul.f32 %v2073, 1.442695
        %v2099 = vpow.pop %v2098
        %v2100 = vmul.f32 %v2074, 1.442695
        %v2101 = vpow.pop %v2100
        %v2102 = vmul.f32 %v2075, 1.442695
        %v2103 = vpow.pop %v2102
        %v2104 = vmul.f32 %v2076, 1.442695
        %v2105 = vpow.pop %v2104
        %v2106 = vmul.f32 %v2077, 1.442695
        %v2107 = vpow.pop %v2106
        %v2108 = vmul.f32 %v2078, 1.442695
        %v2109 = vpow.pop %v2108
        %v2110 = vmul.f32 %v2079, 1.442695
        %v2111 = vpow.pop %v2110
        %v2112 = vadd.f32 %v2081, 1.0
        %v2113 = vadd.f32 %v2083, 1.0
        %v2114 = vadd.f32 %v2085, 1.0
        %v2115 = vadd.f32 %v2087, 1.0
        %v2116 = vadd.f32 %v2089, 1.0
        %v2117 = vadd.f32 %v2091, 1.0
        %v2118 = vadd.f32 %v2093, 1.0
        %v2119 = vadd.f32 %v2095, 1.0
        %v2120 = vadd.f32 %v2097, 1.0
        %v2121 = vadd.f32 %v2099, 1.0
        %v2122 = vadd.f32 %v2101, 1.0
        %v2123 = vadd.f32 %v2103, 1.0
        %v2124 = vadd.f32 %v2105, 1.0
        %v2125 = vadd.f32 %v2107, 1.0
        %v2126 = vadd.f32 %v2109, 1.0
        %v2127 = vadd.f32 %v2111, 1.0
        %v2128 = vrcp.pop %v2112
        %v2129 = vmul.f32 1.0, %v2128
        %v2130 = vrcp.pop %v2113
        %v2131 = vmul.f32 1.0, %v2130
        %v2132 = vrcp.pop %v2114
        %v2133 = vmul.f32 1.0, %v2132
        %v2134 = vrcp.pop %v2115
        %v2135 = vmul.f32 1.0, %v2134
        %v2136 = vrcp.pop %v2116
        %v2137 = vmul.f32 1.0, %v2136
        %v2138 = vrcp.pop %v2117
        %v2139 = vmul.f32 1.0, %v2138
        %v2140 = vrcp.pop %v2118
        %v2141 = vmul.f32 1.0, %v2140
        %v2142 = vrcp.pop %v2119
        %v2143 = vmul.f32 1.0, %v2142
        %v2144 = vrcp.pop %v2120
        %v2145 = vmul.f32 1.0, %v2144
        %v2146 = vrcp.pop %v2121
        %v2147 = vmul.f32 1.0, %v2146
        %v2148 = vrcp.pop %v2122
        %v2149 = vmul.f32 1.0, %v2148
        %v2150 = vrcp.pop %v2123
        %v2151 = vmul.f32 1.0, %v2150
        %v2152 = vrcp.pop %v2124
        %v2153 = vmul.f32 1.0, %v2152
        %v2154 = vrcp.pop %v2125
        %v2155 = vmul.f32 1.0, %v2154
        %v2156 = vrcp.pop %v2126
        %v2157 = vmul.f32 1.0, %v2156
        %v2158 = vrcp.pop %v2127
        %v2159 = vmul.f32 1.0, %v2158
        %v2160 = vmul.f32 %v2017, %v1858
        %v2161 = vmul.f32 %v2019, %v1863
        %v2162 = vmul.f32 %v2021, %v1868
        %v2163 = vmul.f32 %v2023, %v1873
        %v2164 = vmul.f32 %v2025, %v1878
        %v2165 = vmul.f32 %v2027, %v1883
        %v2166 = vmul.f32 %v2029, %v1888
        %v2167 = vmul.f32 %v2031, %v1893
        %v2168 = vmul.f32 %v2033, %v1898
        %v2169 = vmul.f32 %v2035, %v1903
        %v2170 = vmul.f32 %v2037, %v1908
        %v2171 = vmul.f32 %v2039, %v1913
        %v2172 = vmul.f32 %v2041, %v1918
        %v2173 = vmul.f32 %v2043, %v1923
        %v2174 = vmul.f32 %v2045, %v1928
        %v2175 = vmul.f32 %v2047, %v1933
        %v2176 = vadd.f32 %v1536, %v2160
        %v2177 = vadd.f32 %v1541, %v2161
        %v2178 = vadd.f32 %v1546, %v2162
        %v2179 = vadd.f32 %v1551, %v2163
        %v2180 = vadd.f32 %v1556, %v2164
        %v2181 = vadd.f32 %v1561, %v2165
        %v2182 = vadd.f32 %v1566, %v2166
        %v2183 = vadd.f32 %v1571, %v2167
        %v2184 = vadd.f32 %v1576, %v2168
        %v2185 = vadd.f32 %v1581, %v2169
        %v2186 = vadd.f32 %v1586, %v2170
        %v2187 = vadd.f32 %v1591, %v2171
        %v2188 = vadd.f32 %v1596, %v2172
        %v2189 = vadd.f32 %v1601, %v2173
        %v2190 = vadd.f32 %v1606, %v2174
        %v2191 = vadd.f32 %v1611, %v2175
        %v2192 = vtanh.pop %v2176
        %v2193 = vtanh.pop %v2177
        %v2194 = vtanh.pop %v2178
        %v2195 = vtanh.pop %v2179
        %v2196 = vtanh.pop %v2180
        %v2197 = vtanh.pop %v2181
        %v2198 = vtanh.pop %v2182
        %v2199 = vtanh.pop %v2183
        %v2200 = vtanh.pop %v2184
        %v2201 = vtanh.pop %v2185
        %v2202 = vtanh.pop %v2186
        %v2203 = vtanh.pop %v2187
        %v2204 = vtanh.pop %v2188
        %v2205 = vtanh.pop %v2189
        %v2206 = vtanh.pop %v2190
        %v2207 = vtanh.pop %v2191
        %v2208 = vsub.f32 1.0, %v2129
        %v2209 = vsub.f32 1.0, %v2131
        %v2210 = vsub.f32 1.0, %v2133
        %v2211 = vsub.f32 1.0, %v2135
        %v2212 = vsub.f32 1.0, %v2137
        %v2213 = vsub.f32 1.0, %v2139
        %v2214 = vsub.f32 1.0, %v2141
        %v2215 = vsub.f32 1.0, %v2143
        %v2216 = vsub.f32 1.0, %v2145
        %v2217 = vsub.f32 1.0, %v2147
        %v2218 = vsub.f32 1.0, %v2149
        %v2219 = vsub.f32 1.0, %v2151
        %v2220 = vsub.f32 1.0, %v2153
        %v2221 = vsub.f32 1.0, %v2155
        %v2222 = vsub.f32 1.0, %v2157
        %v2223 = vsub.f32 1.0, %v2159
        %v2224 = vmul.f32 %v2208, %v2192
        %v2225 = vmul.f32 %v2209, %v2193
        %v2226 = vmul.f32 %v2210, %v2194
        %v2227 = vmul.f32 %v2211, %v2195
        %v2228 = vmul.f32 %v2212, %v2196
        %v2229 = vmul.f32 %v2213, %v2197
        %v2230 = vmul.f32 %v2214, %v2198
        %v2231 = vmul.f32 %v2215, %v2199
        %v2232 = vmul.f32 %v2216, %v2200
        %v2233 = vmul.f32 %v2217, %v2201
        %v2234 = vmul.f32 %v2218, %v2202
        %v2235 = vmul.f32 %v2219, %v2203
        %v2236 = vmul.f32 %v2220, %v2204
        %v2237 = vmul.f32 %v2221, %v2205
        %v2238 = vmul.f32 %v2222, %v2206
        %v2239 = vmul.f32 %v2223, %v2207
        %v2240 = vmul.f32 %v2129, %v735
        %v2241 = vmul.f32 %v2131, %v736
        %v2242 = vmul.f32 %v2133, %v737
        %v2243 = vmul.f32 %v2135, %v738
        %v2244 = vmul.f32 %v2137, %v739
        %v2245 = vmul.f32 %v2139, %v740
        %v2246 = vmul.f32 %v2141, %v741
        %v2247 = vmul.f32 %v2143, %v742
        %v2248 = vmul.f32 %v2145, %v743
        %v2249 = vmul.f32 %v2147, %v744
        %v2250 = vmul.f32 %v2149, %v745
        %v2251 = vmul.f32 %v2151, %v746
        %v2252 = vmul.f32 %v2153, %v747
        %v2253 = vmul.f32 %v2155, %v748
        %v2254 = vmul.f32 %v2157, %v749
        %v2255 = vmul.f32 %v2159, %v750
        %v2256 = vadd.f32 %v2224, %v2240
        %v2257 = vadd.f32 %v2225, %v2241
        %v2258 = vadd.f32 %v2226, %v2242
        %v2259 = vadd.f32 %v2227, %v2243
        %v2260 = vadd.f32 %v2228, %v2244
        %v2261 = vadd.f32 %v2229, %v2245
        %v2262 = vadd.f32 %v2230, %v2246
        %v2263 = vadd.f32 %v2231, %v2247
        %v2264 = vadd.f32 %v2232, %v2248
        %v2265 = vadd.f32 %v2233, %v2249
        %v2266 = vadd.f32 %v2234, %v2250
        %v2267 = vadd.f32 %v2235, %v2251
        %v2268 = vadd.f32 %v2236, %v2252
        %v2269 = vadd.f32 %v2237, %v2253
        %v2270 = vadd.f32 %v2238, %v2254
        %v2271 = vadd.f32 %v2239, %v2255
        %2272 = vmatprep.subr.mxu0 0.0
        %2273 = vmatpush1.msra.mxu0 %v767
        %2274 = vmatprep.subr.mxu0 0.0
        %2275 = vmatpush1.msra.mxu0 %v768
        %2276 = vmatprep.subr.mxu0 0.0
        %2277 = vmatpush1.msra.mxu0 %v769
        %2278 = vmatprep.subr.mxu0 0.0
        %2279 = vmatpush1.msra.mxu0 %v770
        %2280 = vmatprep.subr.mxu0 0.0
        %2281 = vmatpush1.msra.mxu0 %v771
        %2282 = vmatprep.subr.mxu0 0.0
        %2283 = vmatpush1.msra.mxu0 %v772
        %2284 = vmatprep.subr.mxu0 0.0
        %2285 = vmatpush1.msra.mxu0 %v773
        %2286 = vmatprep.subr.mxu0 0.0
        %2287 = vmatpush1.msra.mxu0 %v774
        %2288 = vmatprep.subr.mxu0 0.0
        %2289 = vmatpush1.msra.mxu0 %v775
        %2290 = vmatprep.subr.mxu0 0.0
        %2291 = vmatpush1.msra.mxu0 %v776
        %2292 = vmatprep.subr.mxu0 0.0
        %2293 = vmatpush1.msra.mxu0 %v777
        %2294 = vmatprep.subr.mxu0 0.0
        %2295 = vmatpush1.msra.mxu0 %v778
        %2296 = vmatprep.subr.mxu0 0.0
        %2297 = vmatpush1.msra.mxu0 %v779
        %2298 = vmatprep.subr.mxu0 0.0
        %2299 = vmatpush1.msra.mxu0 %v780
        %2300 = vmatprep.subr.mxu0 0.0
        %2301 = vmatpush1.msra.mxu0 %v781
        %2302 = vmatprep.subr.mxu0 0.0
        %2303 = vmatpush1.msra.mxu0 %v782
        %2304 = vmatprep.subr.mxu0 0.0
        %2305 = vmatpush1.msra.mxu0 0.0
        %2306 = vmatprep.subr.mxu0 0.0
        %2307 = vmatpush1.msra.mxu0 0.0
        %2308 = vmatprep.subr.mxu0 0.0
        %2309 = vmatpush1.msra.mxu0 0.0
        %2310 = vmatprep.subr.mxu0 0.0
        %2311 = vmatpush1.msra.mxu0 0.0
        %2312 = vmatprep.subr.mxu0 0.0
        %2313 = vmatpush1.msra.mxu0 0.0
        %2314 = vmatprep.subr.mxu0 0.0
        %2315 = vmatpush1.msra.mxu0 0.0
        %2316 = vmatprep.subr.mxu0 0.0
        %2317 = vmatpush1.msra.mxu0 0.0
        %2318 = vmatprep.subr.mxu0 0.0
        %2319 = vmatpush1.msra.mxu0 0.0
        %2320 = vmatprep.subr.mxu0 0.0
        %2321 = vmatpush1.msra.mxu0 0.0
        %2322 = vmatprep.subr.mxu0 0.0
        %2323 = vmatpush1.msra.mxu0 0.0
        %2324 = vmatprep.subr.mxu0 0.0
        %2325 = vmatpush1.msra.mxu0 0.0
        %2326 = vmatprep.subr.mxu0 0.0
        %2327 = vmatpush1.msra.mxu0 0.0
        %2328 = vmatprep.subr.mxu0 0.0
        %2329 = vmatpush1.msra.mxu0 0.0
        %2330 = vmatprep.subr.mxu0 0.0
        %2331 = vmatpush1.msra.mxu0 0.0
        %2332 = vmatprep.subr.mxu0 0.0
        %2333 = vmatpush1.msra.mxu0 0.0
        %2334 = vmatprep.subr.mxu0 0.0
        %2335 = vmatpush1.msra.mxu0 0.0
        %2336 = vmatprep.mubr.f32.mxu0 0.0
        %2337 = vmatmul.mubr.f32.gmra.mrb[0].mxu0 %v2256
        %v2338 = vpop.f32.mrb[0].mxu0
        %v2339 = vadd.f32 %v886, %v2338
        %v2340 = vpop.f32.mrb[0].mxu0
        %2341 = vmatprep.mubr.f32.mxu0 0.0
        %2342 = vmatmul.mubr.f32.gmra.mrb[0].mxu0 %v2257
        %v2343 = vpop.f32.mrb[0].mxu0
        %v2344 = vadd.f32 %v886, %v2343
        %v2345 = vpop.f32.mrb[0].mxu0
        %2346 = vmatprep.mubr.f32.mxu0 0.0
        %2347 = vmatmul.mubr.f32.gmra.mrb[0].mxu0 %v2258
        %v2348 = vpop.f32.mrb[0].mxu0
        %v2349 = vadd.f32 %v886, %v2348
        %v2350 = vpop.f32.mrb[0].mxu0
        %2351 = vmatprep.mubr.f32.mxu0 0.0
        %2352 = vmatmul.mubr.f32.gmra.mrb[0].mxu0 %v2259
        %v2353 = vpop.f32.mrb[0].mxu0
        %v2354 = vadd.f32 %v886, %v2353
        %v2355 = vpop.f32.mrb[0].mxu0
        %2356 = vmatprep.mubr.f32.mxu0 0.0
        %2357 = vmatmul.mubr.f32.gmra.mrb[0].mxu0 %v2260
        %v2358 = vpop.f32.mrb[0].mxu0
        %v2359 = vadd.f32 %v886, %v2358
        %v2360 = vpop.f32.mrb[0].mxu0
        %2361 = vmatprep.mubr.f32.mxu0 0.0
        %2362 = vmatmul.mubr.f32.gmra.mrb[0].mxu0 %v2261
        %v2363 = vpop.f32.mrb[0].mxu0
        %v2364 = vadd.f32 %v886, %v2363
        %v2365 = vpop.f32.mrb[0].mxu0
        %2366 = vmatprep.mubr.f32.mxu0 0.0
        %2367 = vmatmul.mubr.f32.gmra.mrb[0].mxu0 %v2262
        %v2368 = vpop.f32.mrb[0].mxu0
        %v2369 = vadd.f32 %v886, %v2368
        %v2370 = vpop.f32.mrb[0].mxu0
        %2371 = vmatprep.mubr.f32.mxu0 0.0
        %2372 = vmatmul.mubr.f32.gmra.mrb[0].mxu0 %v2263
        %v2373 = vpop.f32.mrb[0].mxu0
        %v2374 = vadd.f32 %v886, %v2373
        %v2375 = vpop.f32.mrb[0].mxu0
        %2376 = vmatprep.mubr.f32.mxu0 0.0
        %2377 = vmatmul.mubr.f32.gmra.mrb[0].mxu0 %v2264
        %v2378 = vpop.f32.mrb[0].mxu0
        %v2379 = vadd.f32 %v886, %v2378
        %v2380 = vpop.f32.mrb[0].mxu0
        %2381 = vmatprep.mubr.f32.mxu0 0.0
        %2382 = vmatmul.mubr.f32.gmra.mrb[0].mxu0 %v2265
        %v2383 = vpop.f32.mrb[0].mxu0
        %v2384 = vadd.f32 %v886, %v2383
        %v2385 = vpop.f32.mrb[0].mxu0
        %2386 = vmatprep.mubr.f32.mxu0 0.0
        %2387 = vmatmul.mubr.f32.gmra.mrb[0].mxu0 %v2266
        %v2388 = vpop.f32.mrb[0].mxu0
        %v2389 = vadd.f32 %v886, %v2388
        %v2390 = vpop.f32.mrb[0].mxu0
        %2391 = vmatprep.mubr.f32.mxu0 0.0
        %2392 = vmatmul.mubr.f32.gmra.mrb[0].mxu0 %v2267
        %v2393 = vpop.f32.mrb[0].mxu0
        %v2394 = vadd.f32 %v886, %v2393
        %v2395 = vpop.f32.mrb[0].mxu0
        %2396 = vmatprep.mubr.f32.mxu0 0.0
        %2397 = vmatmul.mubr.f32.gmra.mrb[0].mxu0 %v2268
        %v2398 = vpop.f32.mrb[0].mxu0
        %v2399 = vadd.f32 %v886, %v2398
        %v2400 = vpop.f32.mrb[0].mxu0
        %2401 = vmatprep.mubr.f32.mxu0 0.0
        %2402 = vmatmul.mubr.f32.gmra.mrb[0].mxu0 %v2269
        %v2403 = vpop.f32.mrb[0].mxu0
        %v2404 = vadd.f32 %v886, %v2403
        %v2405 = vpop.f32.mrb[0].mxu0
        %2406 = vmatprep.mubr.f32.mxu0 0.0
        %2407 = vmatmul.mubr.f32.gmra.mrb[0].mxu0 %v2270
        %v2408 = vpop.f32.mrb[0].mxu0
        %v2409 = vadd.f32 %v886, %v2408
        %v2410 = vpop.f32.mrb[0].mxu0
        %2411 = vmatprep.mubr.f32.mxu0 0.0
        %2412 = vmatmul.mubr.f32.gmra.mrb[0].mxu0 %v2271
        %v2413 = vpop.f32.mrb[0].mxu0
        %v2414 = vadd.f32 %v886, %v2413
        %v2415 = vpop.f32.mrb[0].mxu0
        %2416 = vdwg.mxu0
        %2417 = vmatprep.subr.mxu0 0.0
        %2418 = vmatpush1.msra.mxu0 %v2339
        %2419 = vmatprep.subr.mxu0 0.0
        %2420 = vmatpush1.msra.mxu0 %v2344
        %2421 = vmatprep.subr.mxu0 0.0
        %2422 = vmatpush1.msra.mxu0 %v2349
        %2423 = vmatprep.subr.mxu0 0.0
        %2424 = vmatpush1.msra.mxu0 %v2354
        %2425 = vmatprep.subr.mxu0 0.0
        %2426 = vmatpush1.msra.mxu0 %v2359
        %2427 = vmatprep.subr.mxu0 0.0
        %2428 = vmatpush1.msra.mxu0 %v2364
        %2429 = vmatprep.subr.mxu0 0.0
        %2430 = vmatpush1.msra.mxu0 %v2369
        %2431 = vmatprep.subr.mxu0 0.0
        %2432 = vmatpush1.msra.mxu0 %v2374
        %2433 = vmatprep.subr.mxu0 0.0
        %2434 = vmatpush1.msra.mxu0 0.0
        %2435 = vmatprep.subr.mxu0 0.0
        %2436 = vmatpush1.msra.mxu0 0.0
        %2437 = vmatprep.subr.mxu0 0.0
        %2438 = vmatpush1.msra.mxu0 0.0
        %2439 = vmatprep.subr.mxu0 0.0
        %2440 = vmatpush1.msra.mxu0 0.0
        %2441 = vmatprep.subr.mxu0 0.0
        %2442 = vmatpush1.msra.mxu0 0.0
        %2443 = vmatprep.subr.mxu0 0.0
        %2444 = vmatpush1.msra.mxu0 0.0
        %2445 = vmatprep.subr.mxu0 0.0
        %2446 = vmatpush1.msra.mxu0 0.0
        %2447 = vmatprep.subr.mxu0 0.0
        %2448 = vmatpush1.msra.mxu0 0.0
        %2449 = vmatprep.subr.mxu0 0.0
        %2450 = vmatpush1.msra.mxu0 0.0
        %2451 = vmatprep.subr.mxu0 0.0
        %2452 = vmatpush1.msra.mxu0 0.0
        %2453 = vmatprep.subr.mxu0 0.0
        %2454 = vmatpush1.msra.mxu0 0.0
        %2455 = vmatprep.subr.mxu0 0.0
        %2456 = vmatpush1.msra.mxu0 0.0
        %2457 = vmatprep.subr.mxu0 0.0
        %2458 = vmatpush1.msra.mxu0 0.0
        %2459 = vmatprep.subr.mxu0 0.0
        %2460 = vmatpush1.msra.mxu0 0.0
        %2461 = vmatprep.subr.mxu0 0.0
        %2462 = vmatpush1.msra.mxu0 0.0
        %2463 = vmatprep.subr.mxu0 0.0
        %2464 = vmatpush1.msra.mxu0 0.0
        %2465 = vmatprep.subr.mxu0 0.0
        %2466 = vmatpush1.msra.mxu0 0.0
        %2467 = vmatprep.subr.mxu0 0.0
        %2468 = vmatpush1.msra.mxu0 0.0
        %2469 = vmatprep.subr.mxu0 0.0
        %2470 = vmatpush1.msra.mxu0 0.0
        %2471 = vmatprep.subr.mxu0 0.0
        %2472 = vmatpush1.msra.mxu0 0.0
        %2473 = vmatprep.subr.mxu0 0.0
        %2474 = vmatpush1.msra.mxu0 0.0
        %2475 = vmatprep.subr.mxu0 0.0
        %2476 = vmatpush1.msra.mxu0 0.0
        %2477 = vmatprep.subr.mxu0 0.0
        %2478 = vmatpush1.msra.mxu0 0.0
        %2479 = vmatprep.subr.mxu0 0.0
        %2480 = vmatpush1.msra.mxu0 0.0
        %2481 = vmatprep.mubr.f32.mxu0 0.0
        %2482 = vmatmul.mubr.f32.gmra.mrb[0].mxu0 %v1035
        %v2483 = vpop.f32.mrb[0].mxu0
        %v2484 = vadd.f32 0.0, %v2483
        %v2485 = vpop.f32.mrb[0].mxu0
        %2486 = vmatprep.mubr.f32.mxu0 0.0
        %2487 = vmatmul.mubr.f32.gmra.mrb[0].mxu0 %v1038
        %v2488 = vpop.f32.mrb[0].mxu0
        %v2489 = vadd.f32 0.0, %v2488
        %v2490 = vpop.f32.mrb[0].mxu0
        %2491 = vmatprep.mubr.f32.mxu0 0.0
        %2492 = vmatmul.mubr.f32.gmra.mrb[0].mxu0 %v1041
        %v2493 = vpop.f32.mrb[0].mxu0
        %v2494 = vadd.f32 0.0, %v2493
        %v2495 = vpop.f32.mrb[0].mxu0
        %2496 = vmatprep.mubr.f32.mxu0 0.0
        %2497 = vmatmul.mubr.f32.gmra.mrb[0].mxu0 %v1044
        %v2498 = vpop.f32.mrb[0].mxu0
        %v2499 = vadd.f32 0.0, %v2498
        %v2500 = vpop.f32.mrb[0].mxu0
        %2501 = vmatprep.mubr.f32.mxu0 0.0
        %2502 = vmatmul.mubr.f32.gmra.mrb[0].mxu0 %v1047
        %v2503 = vpop.f32.mrb[0].mxu0
        %v2504 = vadd.f32 0.0, %v2503
        %v2505 = vpop.f32.mrb[0].mxu0
        %2506 = vmatprep.mubr.f32.mxu0 0.0
        %2507 = vmatmul.mubr.f32.gmra.mrb[0].mxu0 %v1050
        %v2508 = vpop.f32.mrb[0].mxu0
        %v2509 = vadd.f32 0.0, %v2508
        %v2510 = vpop.f32.mrb[0].mxu0
        %2511 = vmatprep.mubr.f32.mxu0 0.0
        %2512 = vmatmul.mubr.f32.gmra.mrb[0].mxu0 %v1053
        %v2513 = vpop.f32.mrb[0].mxu0
        %v2514 = vadd.f32 0.0, %v2513
        %v2515 = vpop.f32.mrb[0].mxu0
        %2516 = vmatprep.mubr.f32.mxu0 0.0
        %2517 = vmatmul.mubr.f32.gmra.mrb[0].mxu0 %v1056
        %v2518 = vpop.f32.mrb[0].mxu0
        %v2519 = vadd.f32 0.0, %v2518
        %v2520 = vpop.f32.mrb[0].mxu0
        %2521 = vdwg.mxu0
        %2522 = vmatprep.subr.mxu0 0.0
        %2523 = vmatpush1.msra.mxu0 %v2379
        %2524 = vmatprep.subr.mxu0 0.0
        %2525 = vmatpush1.msra.mxu0 %v2384
        %2526 = vmatprep.subr.mxu0 0.0
        %2527 = vmatpush1.msra.mxu0 %v2389
        %2528 = vmatprep.subr.mxu0 0.0
        %2529 = vmatpush1.msra.mxu0 %v2394
        %2530 = vmatprep.subr.mxu0 0.0
        %2531 = vmatpush1.msra.mxu0 %v2399
        %2532 = vmatprep.subr.mxu0 0.0
        %2533 = vmatpush1.msra.mxu0 %v2404
        %2534 = vmatprep.subr.mxu0 0.0
        %2535 = vmatpush1.msra.mxu0 %v2409
        %2536 = vmatprep.subr.mxu0 0.0
        %2537 = vmatpush1.msra.mxu0 %v2414
        %2538 = vmatprep.subr.mxu0 0.0
        %2539 = vmatpush1.msra.mxu0 0.0
        %2540 = vmatprep.subr.mxu0 0.0
        %2541 = vmatpush1.msra.mxu0 0.0
        %2542 = vmatprep.subr.mxu0 0.0
        %2543 = vmatpush1.msra.mxu0 0.0
        %2544 = vmatprep.subr.mxu0 0.0
        %2545 = vmatpush1.msra.mxu0 0.0
        %2546 = vmatprep.subr.mxu0 0.0
        %2547 = vmatpush1.msra.mxu0 0.0
        %2548 = vmatprep.subr.mxu0 0.0
        %2549 = vmatpush1.msra.mxu0 0.0
        %2550 = vmatprep.subr.mxu0 0.0
        %2551 = vmatpush1.msra.mxu0 0.0
        %2552 = vmatprep.subr.mxu0 0.0
        %2553 = vmatpush1.msra.mxu0 0.0
        %2554 = vmatprep.subr.mxu0 0.0
        %2555 = vmatpush1.msra.mxu0 0.0
        %2556 = vmatprep.subr.mxu0 0.0
        %2557 = vmatpush1.msra.mxu0 0.0
        %2558 = vmatprep.subr.mxu0 0.0
        %2559 = vmatpush1.msra.mxu0 0.0
        %2560 = vmatprep.subr.mxu0 0.0
        %2561 = vmatpush1.msra.mxu0 0.0
        %2562 = vmatprep.subr.mxu0 0.0
        %2563 = vmatpush1.msra.mxu0 0.0
        %2564 = vmatprep.subr.mxu0 0.0
        %2565 = vmatpush1.msra.mxu0 0.0
        %2566 = vmatprep.subr.mxu0 0.0
        %2567 = vmatpush1.msra.mxu0 0.0
        %2568 = vmatprep.subr.mxu0 0.0
        %2569 = vmatpush1.msra.mxu0 0.0
        %2570 = vmatprep.subr.mxu0 0.0
        %2571 = vmatpush1.msra.mxu0 0.0
        %2572 = vmatprep.subr.mxu0 0.0
        %2573 = vmatpush1.msra.mxu0 0.0
        %2574 = vmatprep.subr.mxu0 0.0
        %2575 = vmatpush1.msra.mxu0 0.0
        %2576 = vmatprep.subr.mxu0 0.0
        %2577 = vmatpush1.msra.mxu0 0.0
        %2578 = vmatprep.subr.mxu0 0.0
        %2579 = vmatpush1.msra.mxu0 0.0
        %2580 = vmatprep.subr.mxu0 0.0
        %2581 = vmatpush1.msra.mxu0 0.0
        %2582 = vmatprep.subr.mxu0 0.0
        %2583 = vmatpush1.msra.mxu0 0.0
        %2584 = vmatprep.subr.mxu0 0.0
        %2585 = vmatpush1.msra.mxu0 0.0
        %2586 = vmatprep.mubr.f32.mxu0 0.0
        %2587 = vmatmul.mubr.f32.gmra.mrb[0].mxu0 %v1164
        %v2588 = vpop.f32.mrb[0].mxu0
        %v2589 = vadd.f32 0.0, %v2588
        %v2590 = vpop.f32.mrb[0].mxu0
        %2591 = vmatprep.mubr.f32.mxu0 0.0
        %2592 = vmatmul.mubr.f32.gmra.mrb[0].mxu0 %v1167
        %v2593 = vpop.f32.mrb[0].mxu0
        %v2594 = vadd.f32 0.0, %v2593
        %v2595 = vpop.f32.mrb[0].mxu0
        %2596 = vmatprep.mubr.f32.mxu0 0.0
        %2597 = vmatmul.mubr.f32.gmra.mrb[0].mxu0 %v1170
        %v2598 = vpop.f32.mrb[0].mxu0
        %v2599 = vadd.f32 0.0, %v2598
        %v2600 = vpop.f32.mrb[0].mxu0
        %2601 = vmatprep.mubr.f32.mxu0 0.0
        %2602 = vmatmul.mubr.f32.gmra.mrb[0].mxu0 %v1173
        %v2603 = vpop.f32.mrb[0].mxu0
        %v2604 = vadd.f32 0.0, %v2603
        %v2605 = vpop.f32.mrb[0].mxu0
        %2606 = vmatprep.mubr.f32.mxu0 0.0
        %2607 = vmatmul.mubr.f32.gmra.mrb[0].mxu0 %v1176
        %v2608 = vpop.f32.mrb[0].mxu0
        %v2609 = vadd.f32 0.0, %v2608
        %v2610 = vpop.f32.mrb[0].mxu0
        %2611 = vmatprep.mubr.f32.mxu0 0.0
        %2612 = vmatmul.mubr.f32.gmra.mrb[0].mxu0 %v1179
        %v2613 = vpop.f32.mrb[0].mxu0
        %v2614 = vadd.f32 0.0, %v2613
        %v2615 = vpop.f32.mrb[0].mxu0
        %2616 = vmatprep.mubr.f32.mxu0 0.0
        %2617 = vmatmul.mubr.f32.gmra.mrb[0].mxu0 %v1182
        %v2618 = vpop.f32.mrb[0].mxu0
        %v2619 = vadd.f32 0.0, %v2618
        %v2620 = vpop.f32.mrb[0].mxu0
        %2621 = vmatprep.mubr.f32.mxu0 0.0
        %2622 = vmatmul.mubr.f32.gmra.mrb[0].mxu0 %v1185
        %v2623 = vpop.f32.mrb[0].mxu0
        %v2624 = vadd.f32 0.0, %v2623
        %v2625 = vpop.f32.mrb[0].mxu0
        %2626 = vdwg.mxu0
        %2627 = vmatprep.subr.mxu0 %v785
        %2628 = vmatpush1.msra.mxu0 %v784
        %2629 = vmatprep.subr.mxu0 %v788
        %2630 = vmatpush1.msra.mxu0 %v787
        %2631 = vmatprep.subr.mxu0 %v791
        %2632 = vmatpush1.msra.mxu0 %v790
        %2633 = vmatprep.subr.mxu0 %v794
        %2634 = vmatpush1.msra.mxu0 %v793
        %2635 = vmatprep.subr.mxu0 %v797
        %2636 = vmatpush1.msra.mxu0 %v796
        %2637 = vmatprep.subr.mxu0 %v800
        %2638 = vmatpush1.msra.mxu0 %v799
        %2639 = vmatprep.subr.mxu0 %v803
        %2640 = vmatpush1.msra.mxu0 %v802
        %2641 = vmatprep.subr.mxu0 %v806
        %2642 = vmatpush1.msra.mxu0 %v805
        %2643 = vmatprep.subr.mxu0 %v809
        %2644 = vmatpush1.msra.mxu0 %v808
        %2645 = vmatprep.subr.mxu0 %v812
        %2646 = vmatpush1.msra.mxu0 %v811
        %2647 = vmatprep.subr.mxu0 %v815
        %2648 = vmatpush1.msra.mxu0 %v814
        %2649 = vmatprep.subr.mxu0 %v818
        %2650 = vmatpush1.msra.mxu0 %v817
        %2651 = vmatprep.subr.mxu0 %v821
        %2652 = vmatpush1.msra.mxu0 %v820
        %2653 = vmatprep.subr.mxu0 %v824
        %2654 = vmatpush1.msra.mxu0 %v823
        %2655 = vmatprep.subr.mxu0 %v827
        %2656 = vmatpush1.msra.mxu0 %v826
        %2657 = vmatprep.subr.mxu0 %v830
        %2658 = vmatpush1.msra.mxu0 %v829
        %2659 = vmatprep.subr.mxu0 0.0
        %2660 = vmatpush1.msra.mxu0 0.0
        %2661 = vmatprep.subr.mxu0 0.0
        %2662 = vmatpush1.msra.mxu0 0.0
        %2663 = vmatprep.subr.mxu0 0.0
        %2664 = vmatpush1.msra.mxu0 0.0
        %2665 = vmatprep.subr.mxu0 0.0
        %2666 = vmatpush1.msra.mxu0 0.0
        %2667 = vmatprep.subr.mxu0 0.0
        %2668 = vmatpush1.msra.mxu0 0.0
        %2669 = vmatprep.subr.mxu0 0.0
        %2670 = vmatpush1.msra.mxu0 0.0
        %2671 = vmatprep.subr.mxu0 0.0
        %2672 = vmatpush1.msra.mxu0 0.0
        %2673 = vmatprep.subr.mxu0 0.0
        %2674 = vmatpush1.msra.mxu0 0.0
        %2675 = vmatprep.subr.mxu0 0.0
        %2676 = vmatpush1.msra.mxu0 0.0
        %2677 = vmatprep.subr.mxu0 0.0
        %2678 = vmatpush1.msra.mxu0 0.0
        %2679 = vmatprep.subr.mxu0 0.0
        %2680 = vmatpush1.msra.mxu0 0.0
        %2681 = vmatprep.subr.mxu0 0.0
        %2682 = vmatpush1.msra.mxu0 0.0
        %2683 = vmatprep.subr.mxu0 0.0
        %2684 = vmatpush1.msra.mxu0 0.0
        %2685 = vmatprep.subr.mxu0 0.0
        %2686 = vmatpush1.msra.mxu0 0.0
        %2687 = vmatprep.subr.mxu0 0.0
        %2688 = vmatpush1.msra.mxu0 0.0
        %2689 = vmatprep.subr.mxu0 0.0
        %2690 = vmatpush1.msra.mxu0 0.0
        %2691 = vmatprep.mubr.f32.mxu0 0.0
        %2692 = vmatmul.mubr.f32.gmra.mrb[0].mxu0 %v2484
        %v2693 = vpop.f32.mrb[0].mxu0
        %v2694 = vadd.f32 %v1296, %v2693
        %v2695 = vpop.f32.mrb[0].mxu0
        %v2696 = vadd.f32 %v1300, %v2695
        %2697 = vmatprep.mubr.f32.mxu0 0.0
        %2698 = vmatmul.mubr.f32.gmra.mrb[0].mxu0 %v2489
        %v2699 = vpop.f32.mrb[0].mxu0
        %v2700 = vadd.f32 %v1296, %v2699
        %v2701 = vpop.f32.mrb[0].mxu0
        %v2702 = vadd.f32 %v1300, %v2701
        %2703 = vmatprep.mubr.f32.mxu0 0.0
        %2704 = vmatmul.mubr.f32.gmra.mrb[0].mxu0 %v2494
        %v2705 = vpop.f32.mrb[0].mxu0
        %v2706 = vadd.f32 %v1296, %v2705
        %v2707 = vpop.f32.mrb[0].mxu0
        %v2708 = vadd.f32 %v1300, %v2707
        %2709 = vmatprep.mubr.f32.mxu0 0.0
        %2710 = vmatmul.mubr.f32.gmra.mrb[0].mxu0 %v2499
        %v2711 = vpop.f32.mrb[0].mxu0
        %v2712 = vadd.f32 %v1296, %v2711
        %v2713 = vpop.f32.mrb[0].mxu0
        %v2714 = vadd.f32 %v1300, %v2713
        %2715 = vmatprep.mubr.f32.mxu0 0.0
        %2716 = vmatmul.mubr.f32.gmra.mrb[0].mxu0 %v2504
        %v2717 = vpop.f32.mrb[0].mxu0
        %v2718 = vadd.f32 %v1296, %v2717
        %v2719 = vpop.f32.mrb[0].mxu0
        %v2720 = vadd.f32 %v1300, %v2719
        %2721 = vmatprep.mubr.f32.mxu0 0.0
        %2722 = vmatmul.mubr.f32.gmra.mrb[0].mxu0 %v2509
        %v2723 = vpop.f32.mrb[0].mxu0
        %v2724 = vadd.f32 %v1296, %v2723
        %v2725 = vpop.f32.mrb[0].mxu0
        %v2726 = vadd.f32 %v1300, %v2725
        %2727 = vmatprep.mubr.f32.mxu0 0.0
        %2728 = vmatmul.mubr.f32.gmra.mrb[0].mxu0 %v2514
        %v2729 = vpop.f32.mrb[0].mxu0
        %v2730 = vadd.f32 %v1296, %v2729
        %v2731 = vpop.f32.mrb[0].mxu0
        %v2732 = vadd.f32 %v1300, %v2731
        %2733 = vmatprep.mubr.f32.mxu0 0.0
        %2734 = vmatmul.mubr.f32.gmra.mrb[0].mxu0 %v2519
        %v2735 = vpop.f32.mrb[0].mxu0
        %v2736 = vadd.f32 %v1296, %v2735
        %v2737 = vpop.f32.mrb[0].mxu0
        %v2738 = vadd.f32 %v1300, %v2737
        %2739 = vmatprep.mubr.f32.mxu0 0.0
        %2740 = vmatmul.mubr.f32.gmra.mrb[0].mxu0 %v2589
        %v2741 = vpop.f32.mrb[0].mxu0
        %v2742 = vadd.f32 %v1296, %v2741
        %v2743 = vpop.f32.mrb[0].mxu0
        %v2744 = vadd.f32 %v1300, %v2743
        %2745 = vmatprep.mubr.f32.mxu0 0.0
        %2746 = vmatmul.mubr.f32.gmra.mrb[0].mxu0 %v2594
        %v2747 = vpop.f32.mrb[0].mxu0
        %v2748 = vadd.f32 %v1296, %v2747
        %v2749 = vpop.f32.mrb[0].mxu0
        %v2750 = vadd.f32 %v1300, %v2749
        %2751 = vmatprep.mubr.f32.mxu0 0.0
        %2752 = vmatmul.mubr.f32.gmra.mrb[0].mxu0 %v2599
        %v2753 = vpop.f32.mrb[0].mxu0
        %v2754 = vadd.f32 %v1296, %v2753
        %v2755 = vpop.f32.mrb[0].mxu0
        %v2756 = vadd.f32 %v1300, %v2755
        %2757 = vmatprep.mubr.f32.mxu0 0.0
        %2758 = vmatmul.mubr.f32.gmra.mrb[0].mxu0 %v2604
        %v2759 = vpop.f32.mrb[0].mxu0
        %v2760 = vadd.f32 %v1296, %v2759
        %v2761 = vpop.f32.mrb[0].mxu0
        %v2762 = vadd.f32 %v1300, %v2761
        %2763 = vmatprep.mubr.f32.mxu0 0.0
        %2764 = vmatmul.mubr.f32.gmra.mrb[0].mxu0 %v2609
        %v2765 = vpop.f32.mrb[0].mxu0
        %v2766 = vadd.f32 %v1296, %v2765
        %v2767 = vpop.f32.mrb[0].mxu0
        %v2768 = vadd.f32 %v1300, %v2767
        %2769 = vmatprep.mubr.f32.mxu0 0.0
        %2770 = vmatmul.mubr.f32.gmra.mrb[0].mxu0 %v2614
        %v2771 = vpop.f32.mrb[0].mxu0
        %v2772 = vadd.f32 %v1296, %v2771
        %v2773 = vpop.f32.mrb[0].mxu0
        %v2774 = vadd.f32 %v1300, %v2773
        %2775 = vmatprep.mubr.f32.mxu0 0.0
        %2776 = vmatmul.mubr.f32.gmra.mrb[0].mxu0 %v2619
        %v2777 = vpop.f32.mrb[0].mxu0
        %v2778 = vadd.f32 %v1296, %v2777
        %v2779 = vpop.f32.mrb[0].mxu0
        %v2780 = vadd.f32 %v1300, %v2779
        %2781 = vmatprep.mubr.f32.mxu0 0.0
        %2782 = vmatmul.mubr.f32.gmra.mrb[0].mxu0 %v2624
        %v2783 = vpop.f32.mrb[0].mxu0
        %v2784 = vadd.f32 %v1296, %v2783
        %v2785 = vpop.f32.mrb[0].mxu0
        %v2786 = vadd.f32 %v1300, %v2785
        %2787 = vdwg.mxu0
        %2788 = vmatprep.subr.mxu0 0.0
        %2789 = vmatpush1.msra.mxu0 %v786
        %2790 = vmatprep.subr.mxu0 0.0
        %2791 = vmatpush1.msra.mxu0 %v789
        %2792 = vmatprep.subr.mxu0 0.0
        %2793 = vmatpush1.msra.mxu0 %v792
        %2794 = vmatprep.subr.mxu0 0.0
        %2795 = vmatpush1.msra.mxu0 %v795
        %2796 = vmatprep.subr.mxu0 0.0
        %2797 = vmatpush1.msra.mxu0 %v798
        %2798 = vmatprep.subr.mxu0 0.0
        %2799 = vmatpush1.msra.mxu0 %v801
        %2800 = vmatprep.subr.mxu0 0.0
        %2801 = vmatpush1.msra.mxu0 %v804
        %2802 = vmatprep.subr.mxu0 0.0
        %2803 = vmatpush1.msra.mxu0 %v807
        %2804 = vmatprep.subr.mxu0 0.0
        %2805 = vmatpush1.msra.mxu0 %v810
        %2806 = vmatprep.subr.mxu0 0.0
        %2807 = vmatpush1.msra.mxu0 %v813
        %2808 = vmatprep.subr.mxu0 0.0
        %2809 = vmatpush1.msra.mxu0 %v816
        %2810 = vmatprep.subr.mxu0 0.0
        %2811 = vmatpush1.msra.mxu0 %v819
        %2812 = vmatprep.subr.mxu0 0.0
        %2813 = vmatpush1.msra.mxu0 %v822
        %2814 = vmatprep.subr.mxu0 0.0
        %2815 = vmatpush1.msra.mxu0 %v825
        %2816 = vmatprep.subr.mxu0 0.0
        %2817 = vmatpush1.msra.mxu0 %v828
        %2818 = vmatprep.subr.mxu0 0.0
        %2819 = vmatpush1.msra.mxu0 %v831
        %2820 = vmatprep.subr.mxu0 0.0
        %2821 = vmatpush1.msra.mxu0 0.0
        %2822 = vmatprep.subr.mxu0 0.0
        %2823 = vmatpush1.msra.mxu0 0.0
        %2824 = vmatprep.subr.mxu0 0.0
        %2825 = vmatpush1.msra.mxu0 0.0
        %2826 = vmatprep.subr.mxu0 0.0
        %2827 = vmatpush1.msra.mxu0 0.0
        %2828 = vmatprep.subr.mxu0 0.0
        %2829 = vmatpush1.msra.mxu0 0.0
        %2830 = vmatprep.subr.mxu0 0.0
        %2831 = vmatpush1.msra.mxu0 0.0
        %2832 = vmatprep.subr.mxu0 0.0
        %2833 = vmatpush1.msra.mxu0 0.0
        %2834 = vmatprep.subr.mxu0 0.0
        %2835 = vmatpush1.msra.mxu0 0.0
        %2836 = vmatprep.subr.mxu0 0.0
        %2837 = vmatpush1.msra.mxu0 0.0
        %2838 = vmatprep.subr.mxu0 0.0
        %2839 = vmatpush1.msra.mxu0 0.0
        %2840 = vmatprep.subr.mxu0 0.0
        %2841 = vmatpush1.msra.mxu0 0.0
        %2842 = vmatprep.subr.mxu0 0.0
        %2843 = vmatpush1.msra.mxu0 0.0
        %2844 = vmatprep.subr.mxu0 0.0
        %2845 = vmatpush1.msra.mxu0 0.0
        %2846 = vmatprep.subr.mxu0 0.0
        %2847 = vmatpush1.msra.mxu0 0.0
        %2848 = vmatprep.subr.mxu0 0.0
        %2849 = vmatpush1.msra.mxu0 0.0
        %2850 = vmatprep.subr.mxu0 0.0
        %2851 = vmatpush1.msra.mxu0 0.0
        %2852 = vmatprep.mubr.f32.mxu0 0.0
        %2853 = vmatmul.mubr.f32.gmra.mrb[0].mxu0 %v2484
        %v2854 = vpop.f32.mrb[0].mxu0
        %v2855 = vadd.f32 %v1304, %v2854
        %v2856 = vpop.f32.mrb[0].mxu0
        %2857 = vmatprep.mubr.f32.mxu0 0.0
        %2858 = vmatmul.mubr.f32.gmra.mrb[0].mxu0 %v2489
        %v2859 = vpop.f32.mrb[0].mxu0
        %v2860 = vadd.f32 %v1304, %v2859
        %v2861 = vpop.f32.mrb[0].mxu0
        %2862 = vmatprep.mubr.f32.mxu0 0.0
        %2863 = vmatmul.mubr.f32.gmra.mrb[0].mxu0 %v2494
        %v2864 = vpop.f32.mrb[0].mxu0
        %v2865 = vadd.f32 %v1304, %v2864
        %v2866 = vpop.f32.mrb[0].mxu0
        %2867 = vmatprep.mubr.f32.mxu0 0.0
        %2868 = vmatmul.mubr.f32.gmra.mrb[0].mxu0 %v2499
        %v2869 = vpop.f32.mrb[0].mxu0
        %v2870 = vadd.f32 %v1304, %v2869
        %v2871 = vpop.f32.mrb[0].mxu0
        %2872 = vmatprep.mubr.f32.mxu0 0.0
        %2873 = vmatmul.mubr.f32.gmra.mrb[0].mxu0 %v2504
        %v2874 = vpop.f32.mrb[0].mxu0
        %v2875 = vadd.f32 %v1304, %v2874
        %v2876 = vpop.f32.mrb[0].mxu0
        %2877 = vmatprep.mubr.f32.mxu0 0.0
        %2878 = vmatmul.mubr.f32.gmra.mrb[0].mxu0 %v2509
        %v2879 = vpop.f32.mrb[0].mxu0
        %v2880 = vadd.f32 %v1304, %v2879
        %v2881 = vpop.f32.mrb[0].mxu0
        %2882 = vmatprep.mubr.f32.mxu0 0.0
        %2883 = vmatmul.mubr.f32.gmra.mrb[0].mxu0 %v2514
        %v2884 = vpop.f32.mrb[0].mxu0
        %v2885 = vadd.f32 %v1304, %v2884
        %v2886 = vpop.f32.mrb[0].mxu0
        %2887 = vmatprep.mubr.f32.mxu0 0.0
        %2888 = vmatmul.mubr.f32.gmra.mrb[0].mxu0 %v2519
        %v2889 = vpop.f32.mrb[0].mxu0
        %v2890 = vadd.f32 %v1304, %v2889
        %v2891 = vpop.f32.mrb[0].mxu0
        %2892 = vmatprep.mubr.f32.mxu0 0.0
        %2893 = vmatmul.mubr.f32.gmra.mrb[0].mxu0 %v2589
        %v2894 = vpop.f32.mrb[0].mxu0
        %v2895 = vadd.f32 %v1304, %v2894
        %v2896 = vpop.f32.mrb[0].mxu0
        %2897 = vmatprep.mubr.f32.mxu0 0.0
        %2898 = vmatmul.mubr.f32.gmra.mrb[0].mxu0 %v2594
        %v2899 = vpop.f32.mrb[0].mxu0
        %v2900 = vadd.f32 %v1304, %v2899
        %v2901 = vpop.f32.mrb[0].mxu0
        %2902 = vmatprep.mubr.f32.mxu0 0.0
        %2903 = vmatmul.mubr.f32.gmra.mrb[0].mxu0 %v2599
        %v2904 = vpop.f32.mrb[0].mxu0
        %v2905 = vadd.f32 %v1304, %v2904
        %v2906 = vpop.f32.mrb[0].mxu0
        %2907 = vmatprep.mubr.f32.mxu0 0.0
        %2908 = vmatmul.mubr.f32.gmra.mrb[0].mxu0 %v2604
        %v2909 = vpop.f32.mrb[0].mxu0
        %v2910 = vadd.f32 %v1304, %v2909
        %v2911 = vpop.f32.mrb[0].mxu0
        %2912 = vmatprep.mubr.f32.mxu0 0.0
        %2913 = vmatmul.mubr.f32.gmra.mrb[0].mxu0 %v2609
        %v2914 = vpop.f32.mrb[0].mxu0
        %v2915 = vadd.f32 %v1304, %v2914
        %v2916 = vpop.f32.mrb[0].mxu0
        %2917 = vmatprep.mubr.f32.mxu0 0.0
        %2918 = vmatmul.mubr.f32.gmra.mrb[0].mxu0 %v2614
        %v2919 = vpop.f32.mrb[0].mxu0
        %v2920 = vadd.f32 %v1304, %v2919
        %v2921 = vpop.f32.mrb[0].mxu0
        %2922 = vmatprep.mubr.f32.mxu0 0.0
        %2923 = vmatmul.mubr.f32.gmra.mrb[0].mxu0 %v2619
        %v2924 = vpop.f32.mrb[0].mxu0
        %v2925 = vadd.f32 %v1304, %v2924
        %v2926 = vpop.f32.mrb[0].mxu0
        %2927 = vmatprep.mubr.f32.mxu0 0.0
        %2928 = vmatmul.mubr.f32.gmra.mrb[0].mxu0 %v2624
        %v2929 = vpop.f32.mrb[0].mxu0
        %v2930 = vadd.f32 %v1304, %v2929
        %v2931 = vpop.f32.mrb[0].mxu0
        %2932 = vdwg.mxu0
        %2933 = vmatprep.subr.mxu0 %v834
        %2934 = vmatpush1.msra.mxu0 %v833
        %2935 = vmatprep.subr.mxu0 %v837
        %2936 = vmatpush1.msra.mxu0 %v836
        %2937 = vmatprep.subr.mxu0 %v840
        %2938 = vmatpush1.msra.mxu0 %v839
        %2939 = vmatprep.subr.mxu0 %v843
        %2940 = vmatpush1.msra.mxu0 %v842
        %2941 = vmatprep.subr.mxu0 %v846
        %2942 = vmatpush1.msra.mxu0 %v845
        %2943 = vmatprep.subr.mxu0 %v849
        %2944 = vmatpush1.msra.mxu0 %v848
        %2945 = vmatprep.subr.mxu0 %v852
        %2946 = vmatpush1.msra.mxu0 %v851
        %2947 = vmatprep.subr.mxu0 %v855
        %2948 = vmatpush1.msra.mxu0 %v854
        %2949 = vmatprep.subr.mxu0 %v858
        %2950 = vmatpush1.msra.mxu0 %v857
        %2951 = vmatprep.subr.mxu0 %v861
        %2952 = vmatpush1.msra.mxu0 %v860
        %2953 = vmatprep.subr.mxu0 %v864
        %2954 = vmatpush1.msra.mxu0 %v863
        %2955 = vmatprep.subr.mxu0 %v867
        %2956 = vmatpush1.msra.mxu0 %v866
        %2957 = vmatprep.subr.mxu0 %v870
        %2958 = vmatpush1.msra.mxu0 %v869
        %2959 = vmatprep.subr.mxu0 %v873
        %2960 = vmatpush1.msra.mxu0 %v872
        %2961 = vmatprep.subr.mxu0 %v876
        %2962 = vmatpush1.msra.mxu0 %v875
        %2963 = vmatprep.subr.mxu0 %v879
        %2964 = vmatpush1.msra.mxu0 %v878
        %2965 = vmatprep.subr.mxu0 0.0
        %2966 = vmatpush1.msra.mxu0 0.0
        %2967 = vmatprep.subr.mxu0 0.0
        %2968 = vmatpush1.msra.mxu0 0.0
        %2969 = vmatprep.subr.mxu0 0.0
        %2970 = vmatpush1.msra.mxu0 0.0
        %2971 = vmatprep.subr.mxu0 0.0
        %2972 = vmatpush1.msra.mxu0 0.0
        %2973 = vmatprep.subr.mxu0 0.0
        %2974 = vmatpush1.msra.mxu0 0.0
        %2975 = vmatprep.subr.mxu0 0.0
        %2976 = vmatpush1.msra.mxu0 0.0
        %2977 = vmatprep.subr.mxu0 0.0
        %2978 = vmatpush1.msra.mxu0 0.0
        %2979 = vmatprep.subr.mxu0 0.0
        %2980 = vmatpush1.msra.mxu0 0.0
        %2981 = vmatprep.subr.mxu0 0.0
        %2982 = vmatpush1.msra.mxu0 0.0
        %2983 = vmatprep.subr.mxu0 0.0
        %2984 = vmatpush1.msra.mxu0 0.0
        %2985 = vmatprep.subr.mxu0 0.0
        %2986 = vmatpush1.msra.mxu0 0.0
        %2987 = vmatprep.subr.mxu0 0.0
        %2988 = vmatpush1.msra.mxu0 0.0
        %2989 = vmatprep.subr.mxu0 0.0
        %2990 = vmatpush1.msra.mxu0 0.0
        %2991 = vmatprep.subr.mxu0 0.0
        %2992 = vmatpush1.msra.mxu0 0.0
        %2993 = vmatprep.subr.mxu0 0.0
        %2994 = vmatpush1.msra.mxu0 0.0
        %2995 = vmatprep.subr.mxu0 0.0
        %2996 = vmatpush1.msra.mxu0 0.0
        %2997 = vmatprep.mubr.f32.mxu0 0.0
        %2998 = vmatmul.mubr.f32.gmra.mrb[0].mxu0 %v2256
        %v2999 = vpop.f32.mrb[0].mxu0
        %v3000 = vadd.f32 %v1618, %v2999
        %v3001 = vpop.f32.mrb[0].mxu0
        %v3002 = vadd.f32 %v1622, %v3001
        %3003 = vmatprep.mubr.f32.mxu0 0.0
        %3004 = vmatmul.mubr.f32.gmra.mrb[0].mxu0 %v2257
        %v3005 = vpop.f32.mrb[0].mxu0
        %v3006 = vadd.f32 %v1618, %v3005
        %v3007 = vpop.f32.mrb[0].mxu0
        %v3008 = vadd.f32 %v1622, %v3007
        %3009 = vmatprep.mubr.f32.mxu0 0.0
        %3010 = vmatmul.mubr.f32.gmra.mrb[0].mxu0 %v2258
        %v3011 = vpop.f32.mrb[0].mxu0
        %v3012 = vadd.f32 %v1618, %v3011
        %v3013 = vpop.f32.mrb[0].mxu0
        %v3014 = vadd.f32 %v1622, %v3013
        %3015 = vmatprep.mubr.f32.mxu0 0.0
        %3016 = vmatmul.mubr.f32.gmra.mrb[0].mxu0 %v2259
        %v3017 = vpop.f32.mrb[0].mxu0
        %v3018 = vadd.f32 %v1618, %v3017
        %v3019 = vpop.f32.mrb[0].mxu0
        %v3020 = vadd.f32 %v1622, %v3019
        %3021 = vmatprep.mubr.f32.mxu0 0.0
        %3022 = vmatmul.mubr.f32.gmra.mrb[0].mxu0 %v2260
        %v3023 = vpop.f32.mrb[0].mxu0
        %v3024 = vadd.f32 %v1618, %v3023
        %v3025 = vpop.f32.mrb[0].mxu0
        %v3026 = vadd.f32 %v1622, %v3025
        %3027 = vmatprep.mubr.f32.mxu0 0.0
        %3028 = vmatmul.mubr.f32.gmra.mrb[0].mxu0 %v2261
        %v3029 = vpop.f32.mrb[0].mxu0
        %v3030 = vadd.f32 %v1618, %v3029
        %v3031 = vpop.f32.mrb[0].mxu0
        %v3032 = vadd.f32 %v1622, %v3031
        %3033 = vmatprep.mubr.f32.mxu0 0.0
        %3034 = vmatmul.mubr.f32.gmra.mrb[0].mxu0 %v2262
        %v3035 = vpop.f32.mrb[0].mxu0
        %v3036 = vadd.f32 %v1618, %v3035
        %v3037 = vpop.f32.mrb[0].mxu0
        %v3038 = vadd.f32 %v1622, %v3037
        %3039 = vmatprep.mubr.f32.mxu0 0.0
        %3040 = vmatmul.mubr.f32.gmra.mrb[0].mxu0 %v2263
        %v3041 = vpop.f32.mrb[0].mxu0
        %v3042 = vadd.f32 %v1618, %v3041
        %v3043 = vpop.f32.mrb[0].mxu0
        %v3044 = vadd.f32 %v1622, %v3043
        %3045 = vmatprep.mubr.f32.mxu0 0.0
        %3046 = vmatmul.mubr.f32.gmra.mrb[0].mxu0 %v2264
        %v3047 = vpop.f32.mrb[0].mxu0
        %v3048 = vadd.f32 %v1618, %v3047
        %v3049 = vpop.f32.mrb[0].mxu0
        %v3050 = vadd.f32 %v1622, %v3049
        %3051 = vmatprep.mubr.f32.mxu0 0.0
        %3052 = vmatmul.mubr.f32.gmra.mrb[0].mxu0 %v2265
        %v3053 = vpop.f32.mrb[0].mxu0
        %v3054 = vadd.f32 %v1618, %v3053
        %v3055 = vpop.f32.mrb[0].mxu0
        %v3056 = vadd.f32 %v1622, %v3055
        %3057 = vmatprep.mubr.f32.mxu0 0.0
        %3058 = vmatmul.mubr.f32.gmra.mrb[0].mxu0 %v2266
        %v3059 = vpop.f32.mrb[0].mxu0
        %v3060 = vadd.f32 %v1618, %v3059
        %v3061 = vpop.f32.mrb[0].mxu0
        %v3062 = vadd.f32 %v1622, %v3061
        %3063 = vmatprep.mubr.f32.mxu0 0.0
        %3064 = vmatmul.mubr.f32.gmra.mrb[0].mxu0 %v2267
        %v3065 = vpop.f32.mrb[0].mxu0
        %v3066 = vadd.f32 %v1618, %v3065
        %v3067 = vpop.f32.mrb[0].mxu0
        %v3068 = vadd.f32 %v1622, %v3067
        %3069 = vmatprep.mubr.f32.mxu0 0.0
        %3070 = vmatmul.mubr.f32.gmra.mrb[0].mxu0 %v2268
        %v3071 = vpop.f32.mrb[0].mxu0
        %v3072 = vadd.f32 %v1618, %v3071
        %v3073 = vpop.f32.mrb[0].mxu0
        %v3074 = vadd.f32 %v1622, %v3073
        %3075 = vmatprep.mubr.f32.mxu0 0.0
        %3076 = vmatmul.mubr.f32.gmra.mrb[0].mxu0 %v2269
        %v3077 = vpop.f32.mrb[0].mxu0
        %v3078 = vadd.f32 %v1618, %v3077
        %v3079 = vpop.f32.mrb[0].mxu0
        %v3080 = vadd.f32 %v1622, %v3079
        %3081 = vmatprep.mubr.f32.mxu0 0.0
        %3082 = vmatmul.mubr.f32.gmra.mrb[0].mxu0 %v2270
        %v3083 = vpop.f32.mrb[0].mxu0
        %v3084 = vadd.f32 %v1618, %v3083
        %v3085 = vpop.f32.mrb[0].mxu0
        %v3086 = vadd.f32 %v1622, %v3085
        %3087 = vmatprep.mubr.f32.mxu0 0.0
        %3088 = vmatmul.mubr.f32.gmra.mrb[0].mxu0 %v2271
        %v3089 = vpop.f32.mrb[0].mxu0
        %v3090 = vadd.f32 %v1618, %v3089
        %v3091 = vpop.f32.mrb[0].mxu0
        %v3092 = vadd.f32 %v1622, %v3091
        %3093 = vdwg.mxu0
        %3094 = vmatprep.subr.mxu0 0.0
        %3095 = vmatpush1.msra.mxu0 %v835
        %3096 = vmatprep.subr.mxu0 0.0
        %3097 = vmatpush1.msra.mxu0 %v838
        %3098 = vmatprep.subr.mxu0 0.0
        %3099 = vmatpush1.msra.mxu0 %v841
        %3100 = vmatprep.subr.mxu0 0.0
        %3101 = vmatpush1.msra.mxu0 %v844
        %3102 = vmatprep.subr.mxu0 0.0
        %3103 = vmatpush1.msra.mxu0 %v847
        %3104 = vmatprep.subr.mxu0 0.0
        %3105 = vmatpush1.msra.mxu0 %v850
        %3106 = vmatprep.subr.mxu0 0.0
        %3107 = vmatpush1.msra.mxu0 %v853
        %3108 = vmatprep.subr.mxu0 0.0
        %3109 = vmatpush1.msra.mxu0 %v856
        %3110 = vmatprep.subr.mxu0 0.0
        %3111 = vmatpush1.msra.mxu0 %v859
        %3112 = vmatprep.subr.mxu0 0.0
        %3113 = vmatpush1.msra.mxu0 %v862
        %3114 = vmatprep.subr.mxu0 0.0
        %3115 = vmatpush1.msra.mxu0 %v865
        %3116 = vmatprep.subr.mxu0 0.0
        %3117 = vmatpush1.msra.mxu0 %v868
        %3118 = vmatprep.subr.mxu0 0.0
        %3119 = vmatpush1.msra.mxu0 %v871
        %3120 = vmatprep.subr.mxu0 0.0
        %3121 = vmatpush1.msra.mxu0 %v874
        %3122 = vmatprep.subr.mxu0 0.0
        %3123 = vmatpush1.msra.mxu0 %v877
        %3124 = vmatprep.subr.mxu0 0.0
        %3125 = vmatpush1.msra.mxu0 %v880
        %3126 = vmatprep.subr.mxu0 0.0
        %3127 = vmatpush1.msra.mxu0 0.0
        %3128 = vmatprep.subr.mxu0 0.0
        %3129 = vmatpush1.msra.mxu0 0.0
        %3130 = vmatprep.subr.mxu0 0.0
        %3131 = vmatpush1.msra.mxu0 0.0
        %3132 = vmatprep.subr.mxu0 0.0
        %3133 = vmatpush1.msra.mxu0 0.0
        %3134 = vmatprep.subr.mxu0 0.0
        %3135 = vmatpush1.msra.mxu0 0.0
        %3136 = vmatprep.subr.mxu0 0.0
        %3137 = vmatpush1.msra.mxu0 0.0
        %3138 = vmatprep.subr.mxu0 0.0
        %3139 = vmatpush1.msra.mxu0 0.0
        %3140 = vmatprep.subr.mxu0 0.0
        %3141 = vmatpush1.msra.mxu0 0.0
        %3142 = vmatprep.subr.mxu0 0.0
        %3143 = vmatpush1.msra.mxu0 0.0
        %3144 = vmatprep.subr.mxu0 0.0
        %3145 = vmatpush1.msra.mxu0 0.0
        %3146 = vmatprep.subr.mxu0 0.0
        %3147 = vmatpush1.msra.mxu0 0.0
        %3148 = vmatprep.subr.mxu0 0.0
        %3149 = vmatpush1.msra.mxu0 0.0
        %3150 = vmatprep.subr.mxu0 0.0
        %3151 = vmatpush1.msra.mxu0 0.0
        %3152 = vmatprep.subr.mxu0 0.0
        %3153 = vmatpush1.msra.mxu0 0.0
        %3154 = vmatprep.subr.mxu0 0.0
        %3155 = vmatpush1.msra.mxu0 0.0
        %3156 = vmatprep.subr.mxu0 0.0
        %3157 = vmatpush1.msra.mxu0 0.0
        %3158 = vmatprep.mubr.f32.mxu0 0.0
        %3159 = vmatmul.mubr.f32.gmra.mrb[0].mxu0 %v2256
        %v3160 = vpop.f32.mrb[0].mxu0
        %v3161 = vadd.f32 %v1626, %v3160
        %v3162 = vpop.f32.mrb[0].mxu0
        %3163 = vmatprep.mubr.f32.mxu0 0.0
        %3164 = vmatmul.mubr.f32.gmra.mrb[0].mxu0 %v2257
        %v3165 = vpop.f32.mrb[0].mxu0
        %v3166 = vadd.f32 %v1626, %v3165
        %v3167 = vpop.f32.mrb[0].mxu0
        %3168 = vmatprep.mubr.f32.mxu0 0.0
        %3169 = vmatmul.mubr.f32.gmra.mrb[0].mxu0 %v2258
        %v3170 = vpop.f32.mrb[0].mxu0
        %v3171 = vadd.f32 %v1626, %v3170
        %v3172 = vpop.f32.mrb[0].mxu0
        %3173 = vmatprep.mubr.f32.mxu0 0.0
        %3174 = vmatmul.mubr.f32.gmra.mrb[0].mxu0 %v2259
        %v3175 = vpop.f32.mrb[0].mxu0
        %v3176 = vadd.f32 %v1626, %v3175
        %v3177 = vpop.f32.mrb[0].mxu0
        %3178 = vmatprep.mubr.f32.mxu0 0.0
        %3179 = vmatmul.mubr.f32.gmra.mrb[0].mxu0 %v2260
        %v3180 = vpop.f32.mrb[0].mxu0
        %v3181 = vadd.f32 %v1626, %v3180
        %v3182 = vpop.f32.mrb[0].mxu0
        %3183 = vmatprep.mubr.f32.mxu0 0.0
        %3184 = vmatmul.mubr.f32.gmra.mrb[0].mxu0 %v2261
        %v3185 = vpop.f32.mrb[0].mxu0
        %v3186 = vadd.f32 %v1626, %v3185
        %v3187 = vpop.f32.mrb[0].mxu0
        %3188 = vmatprep.mubr.f32.mxu0 0.0
        %3189 = vmatmul.mubr.f32.gmra.mrb[0].mxu0 %v2262
        %v3190 = vpop.f32.mrb[0].mxu0
        %v3191 = vadd.f32 %v1626, %v3190
        %v3192 = vpop.f32.mrb[0].mxu0
        %3193 = vmatprep.mubr.f32.mxu0 0.0
        %3194 = vmatmul.mubr.f32.gmra.mrb[0].mxu0 %v2263
        %v3195 = vpop.f32.mrb[0].mxu0
        %v3196 = vadd.f32 %v1626, %v3195
        %v3197 = vpop.f32.mrb[0].mxu0
        %3198 = vmatprep.mubr.f32.mxu0 0.0
        %3199 = vmatmul.mubr.f32.gmra.mrb[0].mxu0 %v2264
        %v3200 = vpop.f32.mrb[0].mxu0
        %v3201 = vadd.f32 %v1626, %v3200
        %v3202 = vpop.f32.mrb[0].mxu0
        %3203 = vmatprep.mubr.f32.mxu0 0.0
        %3204 = vmatmul.mubr.f32.gmra.mrb[0].mxu0 %v2265
        %v3205 = vpop.f32.mrb[0].mxu0
        %v3206 = vadd.f32 %v1626, %v3205
        %v3207 = vpop.f32.mrb[0].mxu0
        %3208 = vmatprep.mubr.f32.mxu0 0.0
        %3209 = vmatmul.mubr.f32.gmra.mrb[0].mxu0 %v2266
        %v3210 = vpop.f32.mrb[0].mxu0
        %v3211 = vadd.f32 %v1626, %v3210
        %v3212 = vpop.f32.mrb[0].mxu0
        %3213 = vmatprep.mubr.f32.mxu0 0.0
        %3214 = vmatmul.mubr.f32.gmra.mrb[0].mxu0 %v2267
        %v3215 = vpop.f32.mrb[0].mxu0
        %v3216 = vadd.f32 %v1626, %v3215
        %v3217 = vpop.f32.mrb[0].mxu0
        %3218 = vmatprep.mubr.f32.mxu0 0.0
        %3219 = vmatmul.mubr.f32.gmra.mrb[0].mxu0 %v2268
        %v3220 = vpop.f32.mrb[0].mxu0
        %v3221 = vadd.f32 %v1626, %v3220
        %v3222 = vpop.f32.mrb[0].mxu0
        %3223 = vmatprep.mubr.f32.mxu0 0.0
        %3224 = vmatmul.mubr.f32.gmra.mrb[0].mxu0 %v2269
        %v3225 = vpop.f32.mrb[0].mxu0
        %v3226 = vadd.f32 %v1626, %v3225
        %v3227 = vpop.f32.mrb[0].mxu0
        %3228 = vmatprep.mubr.f32.mxu0 0.0
        %3229 = vmatmul.mubr.f32.gmra.mrb[0].mxu0 %v2270
        %v3230 = vpop.f32.mrb[0].mxu0
        %v3231 = vadd.f32 %v1626, %v3230
        %v3232 = vpop.f32.mrb[0].mxu0
        %3233 = vmatprep.mubr.f32.mxu0 0.0
        %3234 = vmatmul.mubr.f32.gmra.mrb[0].mxu0 %v2271
        %v3235 = vpop.f32.mrb[0].mxu0
        %v3236 = vadd.f32 %v1626, %v3235
        %v3237 = vpop.f32.mrb[0].mxu0
        %3238 = vdwg.mxu0
        %v3239 = vadd.f32 %v2694, %v3000
        %v3240 = vadd.f32 %v2700, %v3006
        %v3241 = vadd.f32 %v2706, %v3012
        %v3242 = vadd.f32 %v2712, %v3018
        %v3243 = vadd.f32 %v2718, %v3024
        %v3244 = vadd.f32 %v2724, %v3030
        %v3245 = vadd.f32 %v2730, %v3036
        %v3246 = vadd.f32 %v2736, %v3042
        %v3247 = vadd.f32 %v2742, %v3048
        %v3248 = vadd.f32 %v2748, %v3054
        %v3249 = vadd.f32 %v2754, %v3060
        %v3250 = vadd.f32 %v2760, %v3066
        %v3251 = vadd.f32 %v2766, %v3072
        %v3252 = vadd.f32 %v2772, %v3078
        %v3253 = vadd.f32 %v2778, %v3084
        %v3254 = vadd.f32 %v2784, %v3090
        %v3255 = vxor.u32 %v3239, 2147483648
        %v3256 = vxor.u32 %v3240, 2147483648
        %v3257 = vxor.u32 %v3241, 2147483648
        %v3258 = vxor.u32 %v3242, 2147483648
        %v3259 = vxor.u32 %v3243, 2147483648
        %v3260 = vxor.u32 %v3244, 2147483648
        %v3261 = vxor.u32 %v3245, 2147483648
        %v3262 = vxor.u32 %v3246, 2147483648
        %v3263 = vxor.u32 %v3247, 2147483648
        %v3264 = vxor.u32 %v3248, 2147483648
        %v3265 = vxor.u32 %v3249, 2147483648
        %v3266 = vxor.u32 %v3250, 2147483648
        %v3267 = vxor.u32 %v3251, 2147483648
        %v3268 = vxor.u32 %v3252, 2147483648
        %v3269 = vxor.u32 %v3253, 2147483648
        %v3270 = vxor.u32 %v3254, 2147483648
        %v3271 = vmul.f32 %v3255, 1.442695
        %v3272 = vpow.pop %v3271
        %v3273 = vmul.f32 %v3256, 1.442695
        %v3274 = vpow.pop %v3273
        %v3275 = vmul.f32 %v3257, 1.442695
        %v3276 = vpow.pop %v3275
        %v3277 = vmul.f32 %v3258, 1.442695
        %v3278 = vpow.pop %v3277
        %v3279 = vmul.f32 %v3259, 1.442695
        %v3280 = vpow.pop %v3279
        %v3281 = vmul.f32 %v3260, 1.442695
        %v3282 = vpow.pop %v3281
        %v3283 = vmul.f32 %v3261, 1.442695
        %v3284 = vpow.pop %v3283
        %v3285 = vmul.f32 %v3262, 1.442695
        %v3286 = vpow.pop %v3285
        %v3287 = vmul.f32 %v3263, 1.442695
        %v3288 = vpow.pop %v3287
        %v3289 = vmul.f32 %v3264, 1.442695
        %v3290 = vpow.pop %v3289
        %v3291 = vmul.f32 %v3265, 1.442695
        %v3292 = vpow.pop %v3291
        %v3293 = vmul.f32 %v3266, 1.442695
        %v3294 = vpow.pop %v3293
        %v3295 = vmul.f32 %v3267, 1.442695
        %v3296 = vpow.pop %v3295
        %v3297 = vmul.f32 %v3268, 1.442695
        %v3298 = vpow.pop %v3297
        %v3299 = vmul.f32 %v3269, 1.442695
        %v3300 = vpow.pop %v3299
        %v3301 = vmul.f32 %v3270, 1.442695
        %v3302 = vpow.pop %v3301
        %v3303 = vadd.f32 %v3272, 1.0
        %v3304 = vadd.f32 %v3274, 1.0
        %v3305 = vadd.f32 %v3276, 1.0
        %v3306 = vadd.f32 %v3278, 1.0
        %v3307 = vadd.f32 %v3280, 1.0
        %v3308 = vadd.f32 %v3282, 1.0
        %v3309 = vadd.f32 %v3284, 1.0
        %v3310 = vadd.f32 %v3286, 1.0
        %v3311 = vadd.f32 %v3288, 1.0
        %v3312 = vadd.f32 %v3290, 1.0
        %v3313 = vadd.f32 %v3292, 1.0
        %v3314 = vadd.f32 %v3294, 1.0
        %v3315 = vadd.f32 %v3296, 1.0
        %v3316 = vadd.f32 %v3298, 1.0
        %v3317 = vadd.f32 %v3300, 1.0
        %v3318 = vadd.f32 %v3302, 1.0
        %v3319 = vrcp.pop %v3303
        %v3320 = vmul.f32 1.0, %v3319
        %v3321 = vrcp.pop %v3304
        %v3322 = vmul.f32 1.0, %v3321
        %v3323 = vrcp.pop %v3305
        %v3324 = vmul.f32 1.0, %v3323
        %v3325 = vrcp.pop %v3306
        %v3326 = vmul.f32 1.0, %v3325
        %v3327 = vrcp.pop %v3307
        %v3328 = vmul.f32 1.0, %v3327
        %v3329 = vrcp.pop %v3308
        %v3330 = vmul.f32 1.0, %v3329
        %v3331 = vrcp.pop %v3309
        %v3332 = vmul.f32 1.0, %v3331
        %v3333 = vrcp.pop %v3310
        %v3334 = vmul.f32 1.0, %v3333
        %v3335 = vrcp.pop %v3311
        %v3336 = vmul.f32 1.0, %v3335
        %v3337 = vrcp.pop %v3312
        %v3338 = vmul.f32 1.0, %v3337
        %v3339 = vrcp.pop %v3313
        %v3340 = vmul.f32 1.0, %v3339
        %v3341 = vrcp.pop %v3314
        %v3342 = vmul.f32 1.0, %v3341
        %v3343 = vrcp.pop %v3315
        %v3344 = vmul.f32 1.0, %v3343
        %v3345 = vrcp.pop %v3316
        %v3346 = vmul.f32 1.0, %v3345
        %v3347 = vrcp.pop %v3317
        %v3348 = vmul.f32 1.0, %v3347
        %v3349 = vrcp.pop %v3318
        %v3350 = vmul.f32 1.0, %v3349
        %v3351 = vadd.f32 %v2696, %v3002
        %v3352 = vadd.f32 %v2702, %v3008
        %v3353 = vadd.f32 %v2708, %v3014
        %v3354 = vadd.f32 %v2714, %v3020
        %v3355 = vadd.f32 %v2720, %v3026
        %v3356 = vadd.f32 %v2726, %v3032
        %v3357 = vadd.f32 %v2732, %v3038
        %v3358 = vadd.f32 %v2738, %v3044
        %v3359 = vadd.f32 %v2744, %v3050
        %v3360 = vadd.f32 %v2750, %v3056
        %v3361 = vadd.f32 %v2756, %v3062
        %v3362 = vadd.f32 %v2762, %v3068
        %v3363 = vadd.f32 %v2768, %v3074
        %v3364 = vadd.f32 %v2774, %v3080
        %v3365 = vadd.f32 %v2780, %v3086
        %v3366 = vadd.f32 %v2786, %v3092
        %v3367 = vxor.u32 %v3351, 2147483648
        %v3368 = vxor.u32 %v3352, 2147483648
        %v3369 = vxor.u32 %v3353, 2147483648
        %v3370 = vxor.u32 %v3354, 2147483648
        %v3371 = vxor.u32 %v3355, 2147483648
        %v3372 = vxor.u32 %v3356, 2147483648
        %v3373 = vxor.u32 %v3357, 2147483648
        %v3374 = vxor.u32 %v3358, 2147483648
        %v3375 = vxor.u32 %v3359, 2147483648
        %v3376 = vxor.u32 %v3360, 2147483648
        %v3377 = vxor.u32 %v3361, 2147483648
        %v3378 = vxor.u32 %v3362, 2147483648
        %v3379 = vxor.u32 %v3363, 2147483648
        %v3380 = vxor.u32 %v3364, 2147483648
        %v3381 = vxor.u32 %v3365, 2147483648
        %v3382 = vxor.u32 %v3366, 2147483648
        %v3383 = vmul.f32 %v3367, 1.442695
        %v3384 = vpow.pop %v3383
        %v3385 = vmul.f32 %v3368, 1.442695
        %v3386 = vpow.pop %v3385
        %v3387 = vmul.f32 %v3369, 1.442695
        %v3388 = vpow.pop %v3387
        %v3389 = vmul.f32 %v3370, 1.442695
        %v3390 = vpow.pop %v3389
        %v3391 = vmul.f32 %v3371, 1.442695
        %v3392 = vpow.pop %v3391
        %v3393 = vmul.f32 %v3372, 1.442695
        %v3394 = vpow.pop %v3393
        %v3395 = vmul.f32 %v3373, 1.442695
        %v3396 = vpow.pop %v3395
        %v3397 = vmul.f32 %v3374, 1.442695
        %v3398 = vpow.pop %v3397
        %v3399 = vmul.f32 %v3375, 1.442695
        %v3400 = vpow.pop %v3399
        %v3401 = vmul.f32 %v3376, 1.442695
        %v3402 = vpow.pop %v3401
        %v3403 = vmul.f32 %v3377, 1.442695
        %v3404 = vpow.pop %v3403
        %v3405 = vmul.f32 %v3378, 1.442695
        %v3406 = vpow.pop %v3405
        %v3407 = vmul.f32 %v3379, 1.442695
        %v3408 = vpow.pop %v3407
        %v3409 = vmul.f32 %v3380, 1.442695
        %v3410 = vpow.pop %v3409
        %v3411 = vmul.f32 %v3381, 1.442695
        %v3412 = vpow.pop %v3411
        %v3413 = vmul.f32 %v3382, 1.442695
        %v3414 = vpow.pop %v3413
        %v3415 = vadd.f32 %v3384, 1.0
        %v3416 = vadd.f32 %v3386, 1.0
        %v3417 = vadd.f32 %v3388, 1.0
        %v3418 = vadd.f32 %v3390, 1.0
        %v3419 = vadd.f32 %v3392, 1.0
        %v3420 = vadd.f32 %v3394, 1.0
        %v3421 = vadd.f32 %v3396, 1.0
        %v3422 = vadd.f32 %v3398, 1.0
        %v3423 = vadd.f32 %v3400, 1.0
        %v3424 = vadd.f32 %v3402, 1.0
        %v3425 = vadd.f32 %v3404, 1.0
        %v3426 = vadd.f32 %v3406, 1.0
        %v3427 = vadd.f32 %v3408, 1.0
        %v3428 = vadd.f32 %v3410, 1.0
        %v3429 = vadd.f32 %v3412, 1.0
        %v3430 = vadd.f32 %v3414, 1.0
        %v3431 = vrcp.pop %v3415
        %v3432 = vmul.f32 1.0, %v3431
        %v3433 = vrcp.pop %v3416
        %v3434 = vmul.f32 1.0, %v3433
        %v3435 = vrcp.pop %v3417
        %v3436 = vmul.f32 1.0, %v3435
        %v3437 = vrcp.pop %v3418
        %v3438 = vmul.f32 1.0, %v3437
        %v3439 = vrcp.pop %v3419
        %v3440 = vmul.f32 1.0, %v3439
        %v3441 = vrcp.pop %v3420
        %v3442 = vmul.f32 1.0, %v3441
        %v3443 = vrcp.pop %v3421
        %v3444 = vmul.f32 1.0, %v3443
        %v3445 = vrcp.pop %v3422
        %v3446 = vmul.f32 1.0, %v3445
        %v3447 = vrcp.pop %v3423
        %v3448 = vmul.f32 1.0, %v3447
        %v3449 = vrcp.pop %v3424
        %v3450 = vmul.f32 1.0, %v3449
        %v3451 = vrcp.pop %v3425
        %v3452 = vmul.f32 1.0, %v3451
        %v3453 = vrcp.pop %v3426
        %v3454 = vmul.f32 1.0, %v3453
        %v3455 = vrcp.pop %v3427
        %v3456 = vmul.f32 1.0, %v3455
        %v3457 = vrcp.pop %v3428
        %v3458 = vmul.f32 1.0, %v3457
        %v3459 = vrcp.pop %v3429
        %v3460 = vmul.f32 1.0, %v3459
        %v3461 = vrcp.pop %v3430
        %v3462 = vmul.f32 1.0, %v3461
        %v3463 = vmul.f32 %v3320, %v3161
        %v3464 = vmul.f32 %v3322, %v3166
        %v3465 = vmul.f32 %v3324, %v3171
        %v3466 = vmul.f32 %v3326, %v3176
        %v3467 = vmul.f32 %v3328, %v3181
        %v3468 = vmul.f32 %v3330, %v3186
        %v3469 = vmul.f32 %v3332, %v3191
        %v3470 = vmul.f32 %v3334, %v3196
        %v3471 = vmul.f32 %v3336, %v3201
        %v3472 = vmul.f32 %v3338, %v3206
        %v3473 = vmul.f32 %v3340, %v3211
        %v3474 = vmul.f32 %v3342, %v3216
        %v3475 = vmul.f32 %v3344, %v3221
        %v3476 = vmul.f32 %v3346, %v3226
        %v3477 = vmul.f32 %v3348, %v3231
        %v3478 = vmul.f32 %v3350, %v3236
        %v3479 = vadd.f32 %v2855, %v3463
        %v3480 = vadd.f32 %v2860, %v3464
        %v3481 = vadd.f32 %v2865, %v3465
        %v3482 = vadd.f32 %v2870, %v3466
        %v3483 = vadd.f32 %v2875, %v3467
        %v3484 = vadd.f32 %v2880, %v3468
        %v3485 = vadd.f32 %v2885, %v3469
        %v3486 = vadd.f32 %v2890, %v3470
        %v3487 = vadd.f32 %v2895, %v3471
        %v3488 = vadd.f32 %v2900, %v3472
        %v3489 = vadd.f32 %v2905, %v3473
        %v3490 = vadd.f32 %v2910, %v3474
        %v3491 = vadd.f32 %v2915, %v3475
        %v3492 = vadd.f32 %v2920, %v3476
        %v3493 = vadd.f32 %v2925, %v3477
        %v3494 = vadd.f32 %v2930, %v3478
        %v3495 = vtanh.pop %v3479
        %v3496 = vtanh.pop %v3480
        %v3497 = vtanh.pop %v3481
        %v3498 = vtanh.pop %v3482
        %v3499 = vtanh.pop %v3483
        %v3500 = vtanh.pop %v3484
        %v3501 = vtanh.pop %v3485
        %v3502 = vtanh.pop %v3486
        %v3503 = vtanh.pop %v3487
        %v3504 = vtanh.pop %v3488
        %v3505 = vtanh.pop %v3489
        %v3506 = vtanh.pop %v3490
        %v3507 = vtanh.pop %v3491
        %v3508 = vtanh.pop %v3492
        %v3509 = vtanh.pop %v3493
        %v3510 = vtanh.pop %v3494
        %v3511 = vsub.f32 1.0, %v3432
        %v3512 = vsub.f32 1.0, %v3434
        %v3513 = vsub.f32 1.0, %v3436
        %v3514 = vsub.f32 1.0, %v3438
        %v3515 = vsub.f32 1.0, %v3440
        %v3516 = vsub.f32 1.0, %v3442
        %v3517 = vsub.f32 1.0, %v3444
        %v3518 = vsub.f32 1.0, %v3446
        %v3519 = vsub.f32 1.0, %v3448
        %v3520 = vsub.f32 1.0, %v3450
        %v3521 = vsub.f32 1.0, %v3452
        %v3522 = vsub.f32 1.0, %v3454
        %v3523 = vsub.f32 1.0, %v3456
        %v3524 = vsub.f32 1.0, %v3458
        %v3525 = vsub.f32 1.0, %v3460
        %v3526 = vsub.f32 1.0, %v3462
        %v3527 = vmul.f32 %v3511, %v3495
        %v3528 = vmul.f32 %v3512, %v3496
        %v3529 = vmul.f32 %v3513, %v3497
        %v3530 = vmul.f32 %v3514, %v3498
        %v3531 = vmul.f32 %v3515, %v3499
        %v3532 = vmul.f32 %v3516, %v3500
        %v3533 = vmul.f32 %v3517, %v3501
        %v3534 = vmul.f32 %v3518, %v3502
        %v3535 = vmul.f32 %v3519, %v3503
        %v3536 = vmul.f32 %v3520, %v3504
        %v3537 = vmul.f32 %v3521, %v3505
        %v3538 = vmul.f32 %v3522, %v3506
        %v3539 = vmul.f32 %v3523, %v3507
        %v3540 = vmul.f32 %v3524, %v3508
        %v3541 = vmul.f32 %v3525, %v3509
        %v3542 = vmul.f32 %v3526, %v3510
        %v3543 = vmul.f32 %v3432, %v2256
        %v3544 = vmul.f32 %v3434, %v2257
        %v3545 = vmul.f32 %v3436, %v2258
        %v3546 = vmul.f32 %v3438, %v2259
        %v3547 = vmul.f32 %v3440, %v2260
        %v3548 = vmul.f32 %v3442, %v2261
        %v3549 = vmul.f32 %v3444, %v2262
        %v3550 = vmul.f32 %v3446, %v2263
        %v3551 = vmul.f32 %v3448, %v2264
        %v3552 = vmul.f32 %v3450, %v2265
        %v3553 = vmul.f32 %v3452, %v2266
        %v3554 = vmul.f32 %v3454, %v2267
        %v3555 = vmul.f32 %v3456, %v2268
        %v3556 = vmul.f32 %v3458, %v2269
        %v3557 = vmul.f32 %v3460, %v2270
        %v3558 = vmul.f32 %v3462, %v2271
        %v3559 = vadd.f32 %v3527, %v3543
        %v3560 = vadd.f32 %v3528, %v3544
        %v3561 = vadd.f32 %v3529, %v3545
        %v3562 = vadd.f32 %v3530, %v3546
        %v3563 = vadd.f32 %v3531, %v3547
        %v3564 = vadd.f32 %v3532, %v3548
        %v3565 = vadd.f32 %v3533, %v3549
        %v3566 = vadd.f32 %v3534, %v3550
        %v3567 = vadd.f32 %v3535, %v3551
        %v3568 = vadd.f32 %v3536, %v3552
        %v3569 = vadd.f32 %v3537, %v3553
        %v3570 = vadd.f32 %v3538, %v3554
        %v3571 = vadd.f32 %v3539, %v3555
        %v3572 = vadd.f32 %v3540, %v3556
        %v3573 = vadd.f32 %v3541, %v3557
        %v3574 = vadd.f32 %v3542, %v3558
        %3575 = vmatprep.subr.mxu0 0.0
        %3576 = vmatpush1.msra.mxu0 %v767
        %3577 = vmatprep.subr.mxu0 0.0
        %3578 = vmatpush1.msra.mxu0 %v768
        %3579 = vmatprep.subr.mxu0 0.0
        %3580 = vmatpush1.msra.mxu0 %v769
        %3581 = vmatprep.subr.mxu0 0.0
        %3582 = vmatpush1.msra.mxu0 %v770
        %3583 = vmatprep.subr.mxu0 0.0
        %3584 = vmatpush1.msra.mxu0 %v771
        %3585 = vmatprep.subr.mxu0 0.0
        %3586 = vmatpush1.msra.mxu0 %v772
        %3587 = vmatprep.subr.mxu0 0.0
        %3588 = vmatpush1.msra.mxu0 %v773
        %3589 = vmatprep.subr.mxu0 0.0
        %3590 = vmatpush1.msra.mxu0 %v774
        %3591 = vmatprep.subr.mxu0 0.0
        %3592 = vmatpush1.msra.mxu0 %v775
        %3593 = vmatprep.subr.mxu0 0.0
        %3594 = vmatpush1.msra.mxu0 %v776
        %3595 = vmatprep.subr.mxu0 0.0
        %3596 = vmatpush1.msra.mxu0 %v777
        %3597 = vmatprep.subr.mxu0 0.0
        %3598 = vmatpush1.msra.mxu0 %v778
        %3599 = vmatprep.subr.mxu0 0.0
        %3600 = vmatpush1.msra.mxu0 %v779
        %3601 = vmatprep.subr.mxu0 0.0
        %3602 = vmatpush1.msra.mxu0 %v780
        %3603 = vmatprep.subr.mxu0 0.0
        %3604 = vmatpush1.msra.mxu0 %v781
        %3605 = vmatprep.subr.mxu0 0.0
        %3606 = vmatpush1.msra.mxu0 %v782
        %3607 = vmatprep.subr.mxu0 0.0
        %3608 = vmatpush1.msra.mxu0 0.0
        %3609 = vmatprep.subr.mxu0 0.0
        %3610 = vmatpush1.msra.mxu0 0.0
        %3611 = vmatprep.subr.mxu0 0.0
        %3612 = vmatpush1.msra.mxu0 0.0
        %3613 = vmatprep.subr.mxu0 0.0
        %3614 = vmatpush1.msra.mxu0 0.0
        %3615 = vmatprep.subr.mxu0 0.0
        %3616 = vmatpush1.msra.mxu0 0.0
        %3617 = vmatprep.subr.mxu0 0.0
        %3618 = vmatpush1.msra.mxu0 0.0
        %3619 = vmatprep.subr.mxu0 0.0
        %3620 = vmatpush1.msra.mxu0 0.0
        %3621 = vmatprep.subr.mxu0 0.0
        %3622 = vmatpush1.msra.mxu0 0.0
        %3623 = vmatprep.subr.mxu0 0.0
        %3624 = vmatpush1.msra.mxu0 0.0
        %3625 = vmatprep.subr.mxu0 0.0
        %3626 = vmatpush1.msra.mxu0 0.0
        %3627 = vmatprep.subr.mxu0 0.0
        %3628 = vmatpush1.msra.mxu0 0.0
        %3629 = vmatprep.subr.mxu0 0.0
        %3630 = vmatpush1.msra.mxu0 0.0
        %3631 = vmatprep.subr.mxu0 0.0
        %3632 = vmatpush1.msra.mxu0 0.0
        %3633 = vmatprep.subr.mxu0 0.0
        %3634 = vmatpush1.msra.mxu0 0.0
        %3635 = vmatprep.subr.mxu0 0.0
        %3636 = vmatpush1.msra.mxu0 0.0
        %3637 = vmatprep.subr.mxu0 0.0
        %3638 = vmatpush1.msra.mxu0 0.0
        %3639 = vmatprep.mubr.f32.mxu0 0.0
        %3640 = vmatmul.mubr.f32.gmra.mrb[0].mxu0 %v3559
        %v3641 = vpop.f32.mrb[0].mxu0
        %v3642 = vadd.f32 %v886, %v3641
        %v3643 = vpop.f32.mrb[0].mxu0
        %3644 = vmatprep.mubr.f32.mxu0 0.0
        %3645 = vmatmul.mubr.f32.gmra.mrb[0].mxu0 %v3560
        %v3646 = vpop.f32.mrb[0].mxu0
        %v3647 = vadd.f32 %v886, %v3646
        %v3648 = vpop.f32.mrb[0].mxu0
        %3649 = vmatprep.mubr.f32.mxu0 0.0
        %3650 = vmatmul.mubr.f32.gmra.mrb[0].mxu0 %v3561
        %v3651 = vpop.f32.mrb[0].mxu0
        %v3652 = vadd.f32 %v886, %v3651
        %v3653 = vpop.f32.mrb[0].mxu0
        %3654 = vmatprep.mubr.f32.mxu0 0.0
        %3655 = vmatmul.mubr.f32.gmra.mrb[0].mxu0 %v3562
        %v3656 = vpop.f32.mrb[0].mxu0
        %v3657 = vadd.f32 %v886, %v3656
        %v3658 = vpop.f32.mrb[0].mxu0
        %3659 = vmatprep.mubr.f32.mxu0 0.0
        %3660 = vmatmul.mubr.f32.gmra.mrb[0].mxu0 %v3563
        %v3661 = vpop.f32.mrb[0].mxu0
        %v3662 = vadd.f32 %v886, %v3661
        %v3663 = vpop.f32.mrb[0].mxu0
        %3664 = vmatprep.mubr.f32.mxu0 0.0
        %3665 = vmatmul.mubr.f32.gmra.mrb[0].mxu0 %v3564
        %v3666 = vpop.f32.mrb[0].mxu0
        %v3667 = vadd.f32 %v886, %v3666
        %v3668 = vpop.f32.mrb[0].mxu0
        %3669 = vmatprep.mubr.f32.mxu0 0.0
        %3670 = vmatmul.mubr.f32.gmra.mrb[0].mxu0 %v3565
        %v3671 = vpop.f32.mrb[0].mxu0
        %v3672 = vadd.f32 %v886, %v3671
        %v3673 = vpop.f32.mrb[0].mxu0
        %3674 = vmatprep.mubr.f32.mxu0 0.0
        %3675 = vmatmul.mubr.f32.gmra.mrb[0].mxu0 %v3566
        %v3676 = vpop.f32.mrb[0].mxu0
        %v3677 = vadd.f32 %v886, %v3676
        %v3678 = vpop.f32.mrb[0].mxu0
        %3679 = vmatprep.mubr.f32.mxu0 0.0
        %3680 = vmatmul.mubr.f32.gmra.mrb[0].mxu0 %v3567
        %v3681 = vpop.f32.mrb[0].mxu0
        %v3682 = vadd.f32 %v886, %v3681
        %v3683 = vpop.f32.mrb[0].mxu0
        %3684 = vmatprep.mubr.f32.mxu0 0.0
        %3685 = vmatmul.mubr.f32.gmra.mrb[0].mxu0 %v3568
        %v3686 = vpop.f32.mrb[0].mxu0
        %v3687 = vadd.f32 %v886, %v3686
        %v3688 = vpop.f32.mrb[0].mxu0
        %3689 = vmatprep.mubr.f32.mxu0 0.0
        %3690 = vmatmul.mubr.f32.gmra.mrb[0].mxu0 %v3569
        %v3691 = vpop.f32.mrb[0].mxu0
        %v3692 = vadd.f32 %v886, %v3691
        %v3693 = vpop.f32.mrb[0].mxu0
        %3694 = vmatprep.mubr.f32.mxu0 0.0
        %3695 = vmatmul.mubr.f32.gmra.mrb[0].mxu0 %v3570
        %v3696 = vpop.f32.mrb[0].mxu0
        %v3697 = vadd.f32 %v886, %v3696
        %v3698 = vpop.f32.mrb[0].mxu0
        %3699 = vmatprep.mubr.f32.mxu0 0.0
        %3700 = vmatmul.mubr.f32.gmra.mrb[0].mxu0 %v3571
        %v3701 = vpop.f32.mrb[0].mxu0
        %v3702 = vadd.f32 %v886, %v3701
        %v3703 = vpop.f32.mrb[0].mxu0
        %3704 = vmatprep.mubr.f32.mxu0 0.0
        %3705 = vmatmul.mubr.f32.gmra.mrb[0].mxu0 %v3572
        %v3706 = vpop.f32.mrb[0].mxu0
        %v3707 = vadd.f32 %v886, %v3706
        %v3708 = vpop.f32.mrb[0].mxu0
        %3709 = vmatprep.mubr.f32.mxu0 0.0
        %3710 = vmatmul.mubr.f32.gmra.mrb[0].mxu0 %v3573
        %v3711 = vpop.f32.mrb[0].mxu0
        %v3712 = vadd.f32 %v886, %v3711
        %v3713 = vpop.f32.mrb[0].mxu0
        %3714 = vmatprep.mubr.f32.mxu0 0.0
        %3715 = vmatmul.mubr.f32.gmra.mrb[0].mxu0 %v3574
        %v3716 = vpop.f32.mrb[0].mxu0
        %v3717 = vadd.f32 %v886, %v3716
        %v3718 = vpop.f32.mrb[0].mxu0
        %3719 = vdwg.mxu0
        %3720 = vmatprep.subr.mxu0 0.0
        %3721 = vmatpush1.msra.mxu0 %v3642
        %3722 = vmatprep.subr.mxu0 0.0
        %3723 = vmatpush1.msra.mxu0 %v3647
        %3724 = vmatprep.subr.mxu0 0.0
        %3725 = vmatpush1.msra.mxu0 %v3652
        %3726 = vmatprep.subr.mxu0 0.0
        %3727 = vmatpush1.msra.mxu0 %v3657
        %3728 = vmatprep.subr.mxu0 0.0
        %3729 = vmatpush1.msra.mxu0 %v3662
        %3730 = vmatprep.subr.mxu0 0.0
        %3731 = vmatpush1.msra.mxu0 %v3667
        %3732 = vmatprep.subr.mxu0 0.0
        %3733 = vmatpush1.msra.mxu0 %v3672
        %3734 = vmatprep.subr.mxu0 0.0
        %3735 = vmatpush1.msra.mxu0 %v3677
        %3736 = vmatprep.subr.mxu0 0.0
        %3737 = vmatpush1.msra.mxu0 0.0
        %3738 = vmatprep.subr.mxu0 0.0
        %3739 = vmatpush1.msra.mxu0 0.0
        %3740 = vmatprep.subr.mxu0 0.0
        %3741 = vmatpush1.msra.mxu0 0.0
        %3742 = vmatprep.subr.mxu0 0.0
        %3743 = vmatpush1.msra.mxu0 0.0
        %3744 = vmatprep.subr.mxu0 0.0
        %3745 = vmatpush1.msra.mxu0 0.0
        %3746 = vmatprep.subr.mxu0 0.0
        %3747 = vmatpush1.msra.mxu0 0.0
        %3748 = vmatprep.subr.mxu0 0.0
        %3749 = vmatpush1.msra.mxu0 0.0
        %3750 = vmatprep.subr.mxu0 0.0
        %3751 = vmatpush1.msra.mxu0 0.0
        %3752 = vmatprep.subr.mxu0 0.0
        %3753 = vmatpush1.msra.mxu0 0.0
        %3754 = vmatprep.subr.mxu0 0.0
        %3755 = vmatpush1.msra.mxu0 0.0
        %3756 = vmatprep.subr.mxu0 0.0
        %3757 = vmatpush1.msra.mxu0 0.0
        %3758 = vmatprep.subr.mxu0 0.0
        %3759 = vmatpush1.msra.mxu0 0.0
        %3760 = vmatprep.subr.mxu0 0.0
        %3761 = vmatpush1.msra.mxu0 0.0
        %3762 = vmatprep.subr.mxu0 0.0
        %3763 = vmatpush1.msra.mxu0 0.0
        %3764 = vmatprep.subr.mxu0 0.0
        %3765 = vmatpush1.msra.mxu0 0.0
        %3766 = vmatprep.subr.mxu0 0.0
        %3767 = vmatpush1.msra.mxu0 0.0
        %3768 = vmatprep.subr.mxu0 0.0
        %3769 = vmatpush1.msra.mxu0 0.0
        %3770 = vmatprep.subr.mxu0 0.0
        %3771 = vmatpush1.msra.mxu0 0.0
        %3772 = vmatprep.subr.mxu0 0.0
        %3773 = vmatpush1.msra.mxu0 0.0
        %3774 = vmatprep.subr.mxu0 0.0
        %3775 = vmatpush1.msra.mxu0 0.0
        %3776 = vmatprep.subr.mxu0 0.0
        %3777 = vmatpush1.msra.mxu0 0.0
        %3778 = vmatprep.subr.mxu0 0.0
        %3779 = vmatpush1.msra.mxu0 0.0
        %3780 = vmatprep.subr.mxu0 0.0
        %3781 = vmatpush1.msra.mxu0 0.0
        %3782 = vmatprep.subr.mxu0 0.0
        %3783 = vmatpush1.msra.mxu0 0.0
        %3784 = vmatprep.mubr.f32.mxu0 0.0
        %3785 = vmatmul.mubr.f32.gmra.mrb[0].mxu0 %v1035
        %v3786 = vpop.f32.mrb[0].mxu0
        %v3787 = vadd.f32 0.0, %v3786
        %v3788 = vpop.f32.mrb[0].mxu0
        %3789 = vmatprep.mubr.f32.mxu0 0.0
        %3790 = vmatmul.mubr.f32.gmra.mrb[0].mxu0 %v1038
        %v3791 = vpop.f32.mrb[0].mxu0
        %v3792 = vadd.f32 0.0, %v3791
        %v3793 = vpop.f32.mrb[0].mxu0
        %3794 = vmatprep.mubr.f32.mxu0 0.0
        %3795 = vmatmul.mubr.f32.gmra.mrb[0].mxu0 %v1041
        %v3796 = vpop.f32.mrb[0].mxu0
        %v3797 = vadd.f32 0.0, %v3796
        %v3798 = vpop.f32.mrb[0].mxu0
        %3799 = vmatprep.mubr.f32.mxu0 0.0
        %3800 = vmatmul.mubr.f32.gmra.mrb[0].mxu0 %v1044
        %v3801 = vpop.f32.mrb[0].mxu0
        %v3802 = vadd.f32 0.0, %v3801
        %v3803 = vpop.f32.mrb[0].mxu0
        %3804 = vmatprep.mubr.f32.mxu0 0.0
        %3805 = vmatmul.mubr.f32.gmra.mrb[0].mxu0 %v1047
        %v3806 = vpop.f32.mrb[0].mxu0
        %v3807 = vadd.f32 0.0, %v3806
        %v3808 = vpop.f32.mrb[0].mxu0
        %3809 = vmatprep.mubr.f32.mxu0 0.0
        %3810 = vmatmul.mubr.f32.gmra.mrb[0].mxu0 %v1050
        %v3811 = vpop.f32.mrb[0].mxu0
        %v3812 = vadd.f32 0.0, %v3811
        %v3813 = vpop.f32.mrb[0].mxu0
        %3814 = vmatprep.mubr.f32.mxu0 0.0
        %3815 = vmatmul.mubr.f32.gmra.mrb[0].mxu0 %v1053
        %v3816 = vpop.f32.mrb[0].mxu0
        %v3817 = vadd.f32 0.0, %v3816
        %v3818 = vpop.f32.mrb[0].mxu0
        %3819 = vmatprep.mubr.f32.mxu0 0.0
        %3820 = vmatmul.mubr.f32.gmra.mrb[0].mxu0 %v1056
        %v3821 = vpop.f32.mrb[0].mxu0
        %v3822 = vadd.f32 0.0, %v3821
        %v3823 = vpop.f32.mrb[0].mxu0
        %3824 = vdwg.mxu0
        %3825 = vmatprep.subr.mxu0 0.0
        %3826 = vmatpush1.msra.mxu0 %v3682
        %3827 = vmatprep.subr.mxu0 0.0
        %3828 = vmatpush1.msra.mxu0 %v3687
        %3829 = vmatprep.subr.mxu0 0.0
        %3830 = vmatpush1.msra.mxu0 %v3692
        %3831 = vmatprep.subr.mxu0 0.0
        %3832 = vmatpush1.msra.mxu0 %v3697
        %3833 = vmatprep.subr.mxu0 0.0
        %3834 = vmatpush1.msra.mxu0 %v3702
        %3835 = vmatprep.subr.mxu0 0.0
        %3836 = vmatpush1.msra.mxu0 %v3707
        %3837 = vmatprep.subr.mxu0 0.0
        %3838 = vmatpush1.msra.mxu0 %v3712
        %3839 = vmatprep.subr.mxu0 0.0
        %3840 = vmatpush1.msra.mxu0 %v3717
        %3841 = vmatprep.subr.mxu0 0.0
        %3842 = vmatpush1.msra.mxu0 0.0
        %3843 = vmatprep.subr.mxu0 0.0
        %3844 = vmatpush1.msra.mxu0 0.0
        %3845 = vmatprep.subr.mxu0 0.0
        %3846 = vmatpush1.msra.mxu0 0.0
        %3847 = vmatprep.subr.mxu0 0.0
        %3848 = vmatpush1.msra.mxu0 0.0
        %3849 = vmatprep.subr.mxu0 0.0
        %3850 = vmatpush1.msra.mxu0 0.0
        %3851 = vmatprep.subr.mxu0 0.0
        %3852 = vmatpush1.msra.mxu0 0.0
        %3853 = vmatprep.subr.mxu0 0.0
        %3854 = vmatpush1.msra.mxu0 0.0
        %3855 = vmatprep.subr.mxu0 0.0
        %3856 = vmatpush1.msra.mxu0 0.0
        %3857 = vmatprep.subr.mxu0 0.0
        %3858 = vmatpush1.msra.mxu0 0.0
        %3859 = vmatprep.subr.mxu0 0.0
        %3860 = vmatpush1.msra.mxu0 0.0
        %3861 = vmatprep.subr.mxu0 0.0
        %3862 = vmatpush1.msra.mxu0 0.0
        %3863 = vmatprep.subr.mxu0 0.0
        %3864 = vmatpush1.msra.mxu0 0.0
        %3865 = vmatprep.subr.mxu0 0.0
        %3866 = vmatpush1.msra.mxu0 0.0
        %3867 = vmatprep.subr.mxu0 0.0
        %3868 = vmatpush1.msra.mxu0 0.0
        %3869 = vmatprep.subr.mxu0 0.0
        %3870 = vmatpush1.msra.mxu0 0.0
        %3871 = vmatprep.subr.mxu0 0.0
        %3872 = vmatpush1.msra.mxu0 0.0
        %3873 = vmatprep.subr.mxu0 0.0
        %3874 = vmatpush1.msra.mxu0 0.0
        %3875 = vmatprep.subr.mxu0 0.0
        %3876 = vmatpush1.msra.mxu0 0.0
        %3877 = vmatprep.subr.mxu0 0.0
        %3878 = vmatpush1.msra.mxu0 0.0
        %3879 = vmatprep.subr.mxu0 0.0
        %3880 = vmatpush1.msra.mxu0 0.0
        %3881 = vmatprep.subr.mxu0 0.0
        %3882 = vmatpush1.msra.mxu0 0.0
        %3883 = vmatprep.subr.mxu0 0.0
        %3884 = vmatpush1.msra.mxu0 0.0
        %3885 = vmatprep.subr.mxu0 0.0
        %3886 = vmatpush1.msra.mxu0 0.0
        %3887 = vmatprep.subr.mxu0 0.0
        %3888 = vmatpush1.msra.mxu0 0.0
        %3889 = vmatprep.mubr.f32.mxu0 0.0
        %3890 = vmatmul.mubr.f32.gmra.mrb[0].mxu0 %v1164
        %v3891 = vpop.f32.mrb[0].mxu0
        %v3892 = vadd.f32 0.0, %v3891
        %v3893 = vpop.f32.mrb[0].mxu0
        %3894 = vmatprep.mubr.f32.mxu0 0.0
        %3895 = vmatmul.mubr.f32.gmra.mrb[0].mxu0 %v1167
        %v3896 = vpop.f32.mrb[0].mxu0
        %v3897 = vadd.f32 0.0, %v3896
        %v3898 = vpop.f32.mrb[0].mxu0
        %3899 = vmatprep.mubr.f32.mxu0 0.0
        %3900 = vmatmul.mubr.f32.gmra.mrb[0].mxu0 %v1170
        %v3901 = vpop.f32.mrb[0].mxu0
        %v3902 = vadd.f32 0.0, %v3901
        %v3903 = vpop.f32.mrb[0].mxu0
        %3904 = vmatprep.mubr.f32.mxu0 0.0
        %3905 = vmatmul.mubr.f32.gmra.mrb[0].mxu0 %v1173
        %v3906 = vpop.f32.mrb[0].mxu0
        %v3907 = vadd.f32 0.0, %v3906
        %v3908 = vpop.f32.mrb[0].mxu0
        %3909 = vmatprep.mubr.f32.mxu0 0.0
        %3910 = vmatmul.mubr.f32.gmra.mrb[0].mxu0 %v1176
        %v3911 = vpop.f32.mrb[0].mxu0
        %v3912 = vadd.f32 0.0, %v3911
        %v3913 = vpop.f32.mrb[0].mxu0
        %3914 = vmatprep.mubr.f32.mxu0 0.0
        %3915 = vmatmul.mubr.f32.gmra.mrb[0].mxu0 %v1179
        %v3916 = vpop.f32.mrb[0].mxu0
        %v3917 = vadd.f32 0.0, %v3916
        %v3918 = vpop.f32.mrb[0].mxu0
        %3919 = vmatprep.mubr.f32.mxu0 0.0
        %3920 = vmatmul.mubr.f32.gmra.mrb[0].mxu0 %v1182
        %v3921 = vpop.f32.mrb[0].mxu0
        %v3922 = vadd.f32 0.0, %v3921
        %v3923 = vpop.f32.mrb[0].mxu0
        %3924 = vmatprep.mubr.f32.mxu0 0.0
        %3925 = vmatmul.mubr.f32.gmra.mrb[0].mxu0 %v1185
        %v3926 = vpop.f32.mrb[0].mxu0
        %v3927 = vadd.f32 0.0, %v3926
        %v3928 = vpop.f32.mrb[0].mxu0
        %3929 = vdwg.mxu0
        %3930 = vmatprep.subr.mxu0 %v785
        %3931 = vmatpush1.msra.mxu0 %v784
        %3932 = vmatprep.subr.mxu0 %v788
        %3933 = vmatpush1.msra.mxu0 %v787
        %3934 = vmatprep.subr.mxu0 %v791
        %3935 = vmatpush1.msra.mxu0 %v790
        %3936 = vmatprep.subr.mxu0 %v794
        %3937 = vmatpush1.msra.mxu0 %v793
        %3938 = vmatprep.subr.mxu0 %v797
        %3939 = vmatpush1.msra.mxu0 %v796
        %3940 = vmatprep.subr.mxu0 %v800
        %3941 = vmatpush1.msra.mxu0 %v799
        %3942 = vmatprep.subr.mxu0 %v803
        %3943 = vmatpush1.msra.mxu0 %v802
        %3944 = vmatprep.subr.mxu0 %v806
        %3945 = vmatpush1.msra.mxu0 %v805
        %3946 = vmatprep.subr.mxu0 %v809
        %3947 = vmatpush1.msra.mxu0 %v808
        %3948 = vmatprep.subr.mxu0 %v812
        %3949 = vmatpush1.msra.mxu0 %v811
        %3950 = vmatprep.subr.mxu0 %v815
        %3951 = vmatpush1.msra.mxu0 %v814
        %3952 = vmatprep.subr.mxu0 %v818
        %3953 = vmatpush1.msra.mxu0 %v817
        %3954 = vmatprep.subr.mxu0 %v821
        %3955 = vmatpush1.msra.mxu0 %v820
        %3956 = vmatprep.subr.mxu0 %v824
        %3957 = vmatpush1.msra.mxu0 %v823
        %3958 = vmatprep.subr.mxu0 %v827
        %3959 = vmatpush1.msra.mxu0 %v826
        %3960 = vmatprep.subr.mxu0 %v830
        %3961 = vmatpush1.msra.mxu0 %v829
        %3962 = vmatprep.subr.mxu0 0.0
        %3963 = vmatpush1.msra.mxu0 0.0
        %3964 = vmatprep.subr.mxu0 0.0
        %3965 = vmatpush1.msra.mxu0 0.0
        %3966 = vmatprep.subr.mxu0 0.0
        %3967 = vmatpush1.msra.mxu0 0.0
        %3968 = vmatprep.subr.mxu0 0.0
        %3969 = vmatpush1.msra.mxu0 0.0
        %3970 = vmatprep.subr.mxu0 0.0
        %3971 = vmatpush1.msra.mxu0 0.0
        %3972 = vmatprep.subr.mxu0 0.0
        %3973 = vmatpush1.msra.mxu0 0.0
        %3974 = vmatprep.subr.mxu0 0.0
        %3975 = vmatpush1.msra.mxu0 0.0
        %3976 = vmatprep.subr.mxu0 0.0
        %3977 = vmatpush1.msra.mxu0 0.0
        %3978 = vmatprep.subr.mxu0 0.0
        %3979 = vmatpush1.msra.mxu0 0.0
        %3980 = vmatprep.subr.mxu0 0.0
        %3981 = vmatpush1.msra.mxu0 0.0
        %3982 = vmatprep.subr.mxu0 0.0
        %3983 = vmatpush1.msra.mxu0 0.0
        %3984 = vmatprep.subr.mxu0 0.0
        %3985 = vmatpush1.msra.mxu0 0.0
        %3986 = vmatprep.subr.mxu0 0.0
        %3987 = vmatpush1.msra.mxu0 0.0
        %3988 = vmatprep.subr.mxu0 0.0
        %3989 = vmatpush1.msra.mxu0 0.0
        %3990 = vmatprep.subr.mxu0 0.0
        %3991 = vmatpush1.msra.mxu0 0.0
        %3992 = vmatprep.subr.mxu0 0.0
        %3993 = vmatpush1.msra.mxu0 0.0
        %3994 = vmatprep.mubr.f32.mxu0 0.0
        %3995 = vmatmul.mubr.f32.gmra.mrb[0].mxu0 %v3787
        %v3996 = vpop.f32.mrb[0].mxu0
        %v3997 = vadd.f32 %v1296, %v3996
        %v3998 = vpop.f32.mrb[0].mxu0
        %v3999 = vadd.f32 %v1300, %v3998
        %4000 = vmatprep.mubr.f32.mxu0 0.0
        %4001 = vmatmul.mubr.f32.gmra.mrb[0].mxu0 %v3792
        %v4002 = vpop.f32.mrb[0].mxu0
        %v4003 = vadd.f32 %v1296, %v4002
        %v4004 = vpop.f32.mrb[0].mxu0
        %v4005 = vadd.f32 %v1300, %v4004
        %4006 = vmatprep.mubr.f32.mxu0 0.0
        %4007 = vmatmul.mubr.f32.gmra.mrb[0].mxu0 %v3797
        %v4008 = vpop.f32.mrb[0].mxu0
        %v4009 = vadd.f32 %v1296, %v4008
        %v4010 = vpop.f32.mrb[0].mxu0
        %v4011 = vadd.f32 %v1300, %v4010
        %4012 = vmatprep.mubr.f32.mxu0 0.0
        %4013 = vmatmul.mubr.f32.gmra.mrb[0].mxu0 %v3802
        %v4014 = vpop.f32.mrb[0].mxu0
        %v4015 = vadd.f32 %v1296, %v4014
        %v4016 = vpop.f32.mrb[0].mxu0
        %v4017 = vadd.f32 %v1300, %v4016
        %4018 = vmatprep.mubr.f32.mxu0 0.0
        %4019 = vmatmul.mubr.f32.gmra.mrb[0].mxu0 %v3807
        %v4020 = vpop.f32.mrb[0].mxu0
        %v4021 = vadd.f32 %v1296, %v4020
        %v4022 = vpop.f32.mrb[0].mxu0
        %v4023 = vadd.f32 %v1300, %v4022
        %4024 = vmatprep.mubr.f32.mxu0 0.0
        %4025 = vmatmul.mubr.f32.gmra.mrb[0].mxu0 %v3812
        %v4026 = vpop.f32.mrb[0].mxu0
        %v4027 = vadd.f32 %v1296, %v4026
        %v4028 = vpop.f32.mrb[0].mxu0
        %v4029 = vadd.f32 %v1300, %v4028
        %4030 = vmatprep.mubr.f32.mxu0 0.0
        %4031 = vmatmul.mubr.f32.gmra.mrb[0].mxu0 %v3817
        %v4032 = vpop.f32.mrb[0].mxu0
        %v4033 = vadd.f32 %v1296, %v4032
        %v4034 = vpop.f32.mrb[0].mxu0
        %v4035 = vadd.f32 %v1300, %v4034
        %4036 = vmatprep.mubr.f32.mxu0 0.0
        %4037 = vmatmul.mubr.f32.gmra.mrb[0].mxu0 %v3822
        %v4038 = vpop.f32.mrb[0].mxu0
        %v4039 = vadd.f32 %v1296, %v4038
        %v4040 = vpop.f32.mrb[0].mxu0
        %v4041 = vadd.f32 %v1300, %v4040
        %4042 = vmatprep.mubr.f32.mxu0 0.0
        %4043 = vmatmul.mubr.f32.gmra.mrb[0].mxu0 %v3892
        %v4044 = vpop.f32.mrb[0].mxu0
        %v4045 = vadd.f32 %v1296, %v4044
        %v4046 = vpop.f32.mrb[0].mxu0
        %v4047 = vadd.f32 %v1300, %v4046
        %4048 = vmatprep.mubr.f32.mxu0 0.0
        %4049 = vmatmul.mubr.f32.gmra.mrb[0].mxu0 %v3897
        %v4050 = vpop.f32.mrb[0].mxu0
        %v4051 = vadd.f32 %v1296, %v4050
        %v4052 = vpop.f32.mrb[0].mxu0
        %v4053 = vadd.f32 %v1300, %v4052
        %4054 = vmatprep.mubr.f32.mxu0 0.0
        %4055 = vmatmul.mubr.f32.gmra.mrb[0].mxu0 %v3902
        %v4056 = vpop.f32.mrb[0].mxu0
        %v4057 = vadd.f32 %v1296, %v4056
        %v4058 = vpop.f32.mrb[0].mxu0
        %v4059 = vadd.f32 %v1300, %v4058
        %4060 = vmatprep.mubr.f32.mxu0 0.0
        %4061 = vmatmul.mubr.f32.gmra.mrb[0].mxu0 %v3907
        %v4062 = vpop.f32.mrb[0].mxu0
        %v4063 = vadd.f32 %v1296, %v4062
        %v4064 = vpop.f32.mrb[0].mxu0
        %v4065 = vadd.f32 %v1300, %v4064
        %4066 = vmatprep.mubr.f32.mxu0 0.0
        %4067 = vmatmul.mubr.f32.gmra.mrb[0].mxu0 %v3912
        %v4068 = vpop.f32.mrb[0].mxu0
        %v4069 = vadd.f32 %v1296, %v4068
        %v4070 = vpop.f32.mrb[0].mxu0
        %v4071 = vadd.f32 %v1300, %v4070
        %4072 = vmatprep.mubr.f32.mxu0 0.0
        %4073 = vmatmul.mubr.f32.gmra.mrb[0].mxu0 %v3917
        %v4074 = vpop.f32.mrb[0].mxu0
        %v4075 = vadd.f32 %v1296, %v4074
        %v4076 = vpop.f32.mrb[0].mxu0
        %v4077 = vadd.f32 %v1300, %v4076
        %4078 = vmatprep.mubr.f32.mxu0 0.0
        %4079 = vmatmul.mubr.f32.gmra.mrb[0].mxu0 %v3922
        %v4080 = vpop.f32.mrb[0].mxu0
        %v4081 = vadd.f32 %v1296, %v4080
        %v4082 = vpop.f32.mrb[0].mxu0
        %v4083 = vadd.f32 %v1300, %v4082
        %4084 = vmatprep.mubr.f32.mxu0 0.0
        %4085 = vmatmul.mubr.f32.gmra.mrb[0].mxu0 %v3927
        %v4086 = vpop.f32.mrb[0].mxu0
        %v4087 = vadd.f32 %v1296, %v4086
        %v4088 = vpop.f32.mrb[0].mxu0
        %v4089 = vadd.f32 %v1300, %v4088
        %4090 = vdwg.mxu0
        %4091 = vmatprep.subr.mxu0 0.0
        %4092 = vmatpush1.msra.mxu0 %v786
        %4093 = vmatprep.subr.mxu0 0.0
        %4094 = vmatpush1.msra.mxu0 %v789
        %4095 = vmatprep.subr.mxu0 0.0
        %4096 = vmatpush1.msra.mxu0 %v792
        %4097 = vmatprep.subr.mxu0 0.0
        %4098 = vmatpush1.msra.mxu0 %v795
        %4099 = vmatprep.subr.mxu0 0.0
        %4100 = vmatpush1.msra.mxu0 %v798
        %4101 = vmatprep.subr.mxu0 0.0
        %4102 = vmatpush1.msra.mxu0 %v801
        %4103 = vmatprep.subr.mxu0 0.0
        %4104 = vmatpush1.msra.mxu0 %v804
        %4105 = vmatprep.subr.mxu0 0.0
        %4106 = vmatpush1.msra.mxu0 %v807
        %4107 = vmatprep.subr.mxu0 0.0
        %4108 = vmatpush1.msra.mxu0 %v810
        %4109 = vmatprep.subr.mxu0 0.0
        %4110 = vmatpush1.msra.mxu0 %v813
        %4111 = vmatprep.subr.mxu0 0.0
        %4112 = vmatpush1.msra.mxu0 %v816
        %4113 = vmatprep.subr.mxu0 0.0
        %4114 = vmatpush1.msra.mxu0 %v819
        %4115 = vmatprep.subr.mxu0 0.0
        %4116 = vmatpush1.msra.mxu0 %v822
        %4117 = vmatprep.subr.mxu0 0.0
        %4118 = vmatpush1.msra.mxu0 %v825
        %4119 = vmatprep.subr.mxu0 0.0
        %4120 = vmatpush1.msra.mxu0 %v828
        %4121 = vmatprep.subr.mxu0 0.0
        %4122 = vmatpush1.msra.mxu0 %v831
        %4123 = vmatprep.subr.mxu0 0.0
        %4124 = vmatpush1.msra.mxu0 0.0
        %4125 = vmatprep.subr.mxu0 0.0
        %4126 = vmatpush1.msra.mxu0 0.0
        %4127 = vmatprep.subr.mxu0 0.0
        %4128 = vmatpush1.msra.mxu0 0.0
        %4129 = vmatprep.subr.mxu0 0.0
        %4130 = vmatpush1.msra.mxu0 0.0
        %4131 = vmatprep.subr.mxu0 0.0
        %4132 = vmatpush1.msra.mxu0 0.0
        %4133 = vmatprep.subr.mxu0 0.0
        %4134 = vmatpush1.msra.mxu0 0.0
        %4135 = vmatprep.subr.mxu0 0.0
        %4136 = vmatpush1.msra.mxu0 0.0
        %4137 = vmatprep.subr.mxu0 0.0
        %4138 = vmatpush1.msra.mxu0 0.0
        %4139 = vmatprep.subr.mxu0 0.0
        %4140 = vmatpush1.msra.mxu0 0.0
        %4141 = vmatprep.subr.mxu0 0.0
        %4142 = vmatpush1.msra.mxu0 0.0
        %4143 = vmatprep.subr.mxu0 0.0
        %4144 = vmatpush1.msra.mxu0 0.0
        %4145 = vmatprep.subr.mxu0 0.0
        %4146 = vmatpush1.msra.mxu0 0.0
        %4147 = vmatprep.subr.mxu0 0.0
        %4148 = vmatpush1.msra.mxu0 0.0
        %4149 = vmatprep.subr.mxu0 0.0
        %4150 = vmatpush1.msra.mxu0 0.0
        %4151 = vmatprep.subr.mxu0 0.0
        %4152 = vmatpush1.msra.mxu0 0.0
        %4153 = vmatprep.subr.mxu0 0.0
        %4154 = vmatpush1.msra.mxu0 0.0
        %4155 = vmatprep.mubr.f32.mxu0 0.0
        %4156 = vmatmul.mubr.f32.gmra.mrb[0].mxu0 %v3787
        %v4157 = vpop.f32.mrb[0].mxu0
        %v4158 = vadd.f32 %v1304, %v4157
        %v4159 = vpop.f32.mrb[0].mxu0
        %4160 = vmatprep.mubr.f32.mxu0 0.0
        %4161 = vmatmul.mubr.f32.gmra.mrb[0].mxu0 %v3792
        %v4162 = vpop.f32.mrb[0].mxu0
        %v4163 = vadd.f32 %v1304, %v4162
        %v4164 = vpop.f32.mrb[0].mxu0
        %4165 = vmatprep.mubr.f32.mxu0 0.0
        %4166 = vmatmul.mubr.f32.gmra.mrb[0].mxu0 %v3797
        %v4167 = vpop.f32.mrb[0].mxu0
        %v4168 = vadd.f32 %v1304, %v4167
        %v4169 = vpop.f32.mrb[0].mxu0
        %4170 = vmatprep.mubr.f32.mxu0 0.0
        %4171 = vmatmul.mubr.f32.gmra.mrb[0].mxu0 %v3802
        %v4172 = vpop.f32.mrb[0].mxu0
        %v4173 = vadd.f32 %v1304, %v4172
        %v4174 = vpop.f32.mrb[0].mxu0
        %4175 = vmatprep.mubr.f32.mxu0 0.0
        %4176 = vmatmul.mubr.f32.gmra.mrb[0].mxu0 %v3807
        %v4177 = vpop.f32.mrb[0].mxu0
        %v4178 = vadd.f32 %v1304, %v4177
        %v4179 = vpop.f32.mrb[0].mxu0
        %4180 = vmatprep.mubr.f32.mxu0 0.0
        %4181 = vmatmul.mubr.f32.gmra.mrb[0].mxu0 %v3812
        %v4182 = vpop.f32.mrb[0].mxu0
        %v4183 = vadd.f32 %v1304, %v4182
        %v4184 = vpop.f32.mrb[0].mxu0
        %4185 = vmatprep.mubr.f32.mxu0 0.0
        %4186 = vmatmul.mubr.f32.gmra.mrb[0].mxu0 %v3817
        %v4187 = vpop.f32.mrb[0].mxu0
        %v4188 = vadd.f32 %v1304, %v4187
        %v4189 = vpop.f32.mrb[0].mxu0
        %4190 = vmatprep.mubr.f32.mxu0 0.0
        %4191 = vmatmul.mubr.f32.gmra.mrb[0].mxu0 %v3822
        %v4192 = vpop.f32.mrb[0].mxu0
        %v4193 = vadd.f32 %v1304, %v4192
        %v4194 = vpop.f32.mrb[0].mxu0
        %4195 = vmatprep.mubr.f32.mxu0 0.0
        %4196 = vmatmul.mubr.f32.gmra.mrb[0].mxu0 %v3892
        %v4197 = vpop.f32.mrb[0].mxu0
        %v4198 = vadd.f32 %v1304, %v4197
        %v4199 = vpop.f32.mrb[0].mxu0
        %4200 = vmatprep.mubr.f32.mxu0 0.0
        %4201 = vmatmul.mubr.f32.gmra.mrb[0].mxu0 %v3897
        %v4202 = vpop.f32.mrb[0].mxu0
        %v4203 = vadd.f32 %v1304, %v4202
        %v4204 = vpop.f32.mrb[0].mxu0
        %4205 = vmatprep.mubr.f32.mxu0 0.0
        %4206 = vmatmul.mubr.f32.gmra.mrb[0].mxu0 %v3902
        %v4207 = vpop.f32.mrb[0].mxu0
        %v4208 = vadd.f32 %v1304, %v4207
        %v4209 = vpop.f32.mrb[0].mxu0
        %4210 = vmatprep.mubr.f32.mxu0 0.0
        %4211 = vmatmul.mubr.f32.gmra.mrb[0].mxu0 %v3907
        %v4212 = vpop.f32.mrb[0].mxu0
        %v4213 = vadd.f32 %v1304, %v4212
        %v4214 = vpop.f32.mrb[0].mxu0
        %4215 = vmatprep.mubr.f32.mxu0 0.0
        %4216 = vmatmul.mubr.f32.gmra.mrb[0].mxu0 %v3912
        %v4217 = vpop.f32.mrb[0].mxu0
        %v4218 = vadd.f32 %v1304, %v4217
        %v4219 = vpop.f32.mrb[0].mxu0
        %4220 = vmatprep.mubr.f32.mxu0 0.0
        %4221 = vmatmul.mubr.f32.gmra.mrb[0].mxu0 %v3917
        %v4222 = vpop.f32.mrb[0].mxu0
        %v4223 = vadd.f32 %v1304, %v4222
        %v4224 = vpop.f32.mrb[0].mxu0
        %4225 = vmatprep.mubr.f32.mxu0 0.0
        %4226 = vmatmul.mubr.f32.gmra.mrb[0].mxu0 %v3922
        %v4227 = vpop.f32.mrb[0].mxu0
        %v4228 = vadd.f32 %v1304, %v4227
        %v4229 = vpop.f32.mrb[0].mxu0
        %4230 = vmatprep.mubr.f32.mxu0 0.0
        %4231 = vmatmul.mubr.f32.gmra.mrb[0].mxu0 %v3927
        %v4232 = vpop.f32.mrb[0].mxu0
        %v4233 = vadd.f32 %v1304, %v4232
        %v4234 = vpop.f32.mrb[0].mxu0
        %4235 = vdwg.mxu0
        %4236 = vmatprep.subr.mxu0 %v834
        %4237 = vmatpush1.msra.mxu0 %v833
        %4238 = vmatprep.subr.mxu0 %v837
        %4239 = vmatpush1.msra.mxu0 %v836
        %4240 = vmatprep.subr.mxu0 %v840
        %4241 = vmatpush1.msra.mxu0 %v839
        %4242 = vmatprep.subr.mxu0 %v843
        %4243 = vmatpush1.msra.mxu0 %v842
        %4244 = vmatprep.subr.mxu0 %v846
        %4245 = vmatpush1.msra.mxu0 %v845
        %4246 = vmatprep.subr.mxu0 %v849
        %4247 = vmatpush1.msra.mxu0 %v848
        %4248 = vmatprep.subr.mxu0 %v852
        %4249 = vmatpush1.msra.mxu0 %v851
        %4250 = vmatprep.subr.mxu0 %v855
        %4251 = vmatpush1.msra.mxu0 %v854
        %4252 = vmatprep.subr.mxu0 %v858
        %4253 = vmatpush1.msra.mxu0 %v857
        %4254 = vmatprep.subr.mxu0 %v861
        %4255 = vmatpush1.msra.mxu0 %v860
        %4256 = vmatprep.subr.mxu0 %v864
        %4257 = vmatpush1.msra.mxu0 %v863
        %4258 = vmatprep.subr.mxu0 %v867
        %4259 = vmatpush1.msra.mxu0 %v866
        %4260 = vmatprep.subr.mxu0 %v870
        %4261 = vmatpush1.msra.mxu0 %v869
        %4262 = vmatprep.subr.mxu0 %v873
        %4263 = vmatpush1.msra.mxu0 %v872
        %4264 = vmatprep.subr.mxu0 %v876
        %4265 = vmatpush1.msra.mxu0 %v875
        %4266 = vmatprep.subr.mxu0 %v879
        %4267 = vmatpush1.msra.mxu0 %v878
        %4268 = vmatprep.subr.mxu0 0.0
        %4269 = vmatpush1.msra.mxu0 0.0
        %4270 = vmatprep.subr.mxu0 0.0
        %4271 = vmatpush1.msra.mxu0 0.0
        %4272 = vmatprep.subr.mxu0 0.0
        %4273 = vmatpush1.msra.mxu0 0.0
        %4274 = vmatprep.subr.mxu0 0.0
        %4275 = vmatpush1.msra.mxu0 0.0
        %4276 = vmatprep.subr.mxu0 0.0
        %4277 = vmatpush1.msra.mxu0 0.0
        %4278 = vmatprep.subr.mxu0 0.0
        %4279 = vmatpush1.msra.mxu0 0.0
        %4280 = vmatprep.subr.mxu0 0.0
        %4281 = vmatpush1.msra.mxu0 0.0
        %4282 = vmatprep.subr.mxu0 0.0
        %4283 = vmatpush1.msra.mxu0 0.0
        %4284 = vmatprep.subr.mxu0 0.0
        %4285 = vmatpush1.msra.mxu0 0.0
        %4286 = vmatprep.subr.mxu0 0.0
        %4287 = vmatpush1.msra.mxu0 0.0
        %4288 = vmatprep.subr.mxu0 0.0
        %4289 = vmatpush1.msra.mxu0 0.0
        %4290 = vmatprep.subr.mxu0 0.0
        %4291 = vmatpush1.msra.mxu0 0.0
        %4292 = vmatprep.subr.mxu0 0.0
        %4293 = vmatpush1.msra.mxu0 0.0
        %4294 = vmatprep.subr.mxu0 0.0
        %4295 = vmatpush1.msra.mxu0 0.0
        %4296 = vmatprep.subr.mxu0 0.0
        %4297 = vmatpush1.msra.mxu0 0.0
        %4298 = vmatprep.subr.mxu0 0.0
        %4299 = vmatpush1.msra.mxu0 0.0
        %4300 = vmatprep.mubr.f32.mxu0 0.0
        %4301 = vmatmul.mubr.f32.gmra.mrb[0].mxu0 %v3559
        %v4302 = vpop.f32.mrb[0].mxu0
        %v4303 = vadd.f32 %v1618, %v4302
        %v4304 = vpop.f32.mrb[0].mxu0
        %v4305 = vadd.f32 %v1622, %v4304
        %4306 = vmatprep.mubr.f32.mxu0 0.0
        %4307 = vmatmul.mubr.f32.gmra.mrb[0].mxu0 %v3560
        %v4308 = vpop.f32.mrb[0].mxu0
        %v4309 = vadd.f32 %v1618, %v4308
        %v4310 = vpop.f32.mrb[0].mxu0
        %v4311 = vadd.f32 %v1622, %v4310
        %4312 = vmatprep.mubr.f32.mxu0 0.0
        %4313 = vmatmul.mubr.f32.gmra.mrb[0].mxu0 %v3561
        %v4314 = vpop.f32.mrb[0].mxu0
        %v4315 = vadd.f32 %v1618, %v4314
        %v4316 = vpop.f32.mrb[0].mxu0
        %v4317 = vadd.f32 %v1622, %v4316
        %4318 = vmatprep.mubr.f32.mxu0 0.0
        %4319 = vmatmul.mubr.f32.gmra.mrb[0].mxu0 %v3562
        %v4320 = vpop.f32.mrb[0].mxu0
        %v4321 = vadd.f32 %v1618, %v4320
        %v4322 = vpop.f32.mrb[0].mxu0
        %v4323 = vadd.f32 %v1622, %v4322
        %4324 = vmatprep.mubr.f32.mxu0 0.0
        %4325 = vmatmul.mubr.f32.gmra.mrb[0].mxu0 %v3563
        %v4326 = vpop.f32.mrb[0].mxu0
        %v4327 = vadd.f32 %v1618, %v4326
        %v4328 = vpop.f32.mrb[0].mxu0
        %v4329 = vadd.f32 %v1622, %v4328
        %4330 = vmatprep.mubr.f32.mxu0 0.0
        %4331 = vmatmul.mubr.f32.gmra.mrb[0].mxu0 %v3564
        %v4332 = vpop.f32.mrb[0].mxu0
        %v4333 = vadd.f32 %v1618, %v4332
        %v4334 = vpop.f32.mrb[0].mxu0
        %v4335 = vadd.f32 %v1622, %v4334
        %4336 = vmatprep.mubr.f32.mxu0 0.0
        %4337 = vmatmul.mubr.f32.gmra.mrb[0].mxu0 %v3565
        %v4338 = vpop.f32.mrb[0].mxu0
        %v4339 = vadd.f32 %v1618, %v4338
        %v4340 = vpop.f32.mrb[0].mxu0
        %v4341 = vadd.f32 %v1622, %v4340
        %4342 = vmatprep.mubr.f32.mxu0 0.0
        %4343 = vmatmul.mubr.f32.gmra.mrb[0].mxu0 %v3566
        %v4344 = vpop.f32.mrb[0].mxu0
        %v4345 = vadd.f32 %v1618, %v4344
        %v4346 = vpop.f32.mrb[0].mxu0
        %v4347 = vadd.f32 %v1622, %v4346
        %4348 = vmatprep.mubr.f32.mxu0 0.0
        %4349 = vmatmul.mubr.f32.gmra.mrb[0].mxu0 %v3567
        %v4350 = vpop.f32.mrb[0].mxu0
        %v4351 = vadd.f32 %v1618, %v4350
        %v4352 = vpop.f32.mrb[0].mxu0
        %v4353 = vadd.f32 %v1622, %v4352
        %4354 = vmatprep.mubr.f32.mxu0 0.0
        %4355 = vmatmul.mubr.f32.gmra.mrb[0].mxu0 %v3568
        %v4356 = vpop.f32.mrb[0].mxu0
        %v4357 = vadd.f32 %v1618, %v4356
        %v4358 = vpop.f32.mrb[0].mxu0
        %v4359 = vadd.f32 %v1622, %v4358
        %4360 = vmatprep.mubr.f32.mxu0 0.0
        %4361 = vmatmul.mubr.f32.gmra.mrb[0].mxu0 %v3569
        %v4362 = vpop.f32.mrb[0].mxu0
        %v4363 = vadd.f32 %v1618, %v4362
        %v4364 = vpop.f32.mrb[0].mxu0
        %v4365 = vadd.f32 %v1622, %v4364
        %4366 = vmatprep.mubr.f32.mxu0 0.0
        %4367 = vmatmul.mubr.f32.gmra.mrb[0].mxu0 %v3570
        %v4368 = vpop.f32.mrb[0].mxu0
        %v4369 = vadd.f32 %v1618, %v4368
        %v4370 = vpop.f32.mrb[0].mxu0
        %v4371 = vadd.f32 %v1622, %v4370
        %4372 = vmatprep.mubr.f32.mxu0 0.0
        %4373 = vmatmul.mubr.f32.gmra.mrb[0].mxu0 %v3571
        %v4374 = vpop.f32.mrb[0].mxu0
        %v4375 = vadd.f32 %v1618, %v4374
        %v4376 = vpop.f32.mrb[0].mxu0
        %v4377 = vadd.f32 %v1622, %v4376
        %4378 = vmatprep.mubr.f32.mxu0 0.0
        %4379 = vmatmul.mubr.f32.gmra.mrb[0].mxu0 %v3572
        %v4380 = vpop.f32.mrb[0].mxu0
        %v4381 = vadd.f32 %v1618, %v4380
        %v4382 = vpop.f32.mrb[0].mxu0
        %v4383 = vadd.f32 %v1622, %v4382
        %4384 = vmatprep.mubr.f32.mxu0 0.0
        %4385 = vmatmul.mubr.f32.gmra.mrb[0].mxu0 %v3573
        %v4386 = vpop.f32.mrb[0].mxu0
        %v4387 = vadd.f32 %v1618, %v4386
        %v4388 = vpop.f32.mrb[0].mxu0
        %v4389 = vadd.f32 %v1622, %v4388
        %4390 = vmatprep.mubr.f32.mxu0 0.0
        %4391 = vmatmul.mubr.f32.gmra.mrb[0].mxu0 %v3574
        %v4392 = vpop.f32.mrb[0].mxu0
        %v4393 = vadd.f32 %v1618, %v4392
        %v4394 = vpop.f32.mrb[0].mxu0
        %v4395 = vadd.f32 %v1622, %v4394
        %4396 = vdwg.mxu0
        %4397 = vmatprep.subr.mxu0 0.0
        %4398 = vmatpush1.msra.mxu0 %v835
        %4399 = vmatprep.subr.mxu0 0.0
        %4400 = vmatpush1.msra.mxu0 %v838
        %4401 = vmatprep.subr.mxu0 0.0
        %4402 = vmatpush1.msra.mxu0 %v841
        %4403 = vmatprep.subr.mxu0 0.0
        %4404 = vmatpush1.msra.mxu0 %v844
        %4405 = vmatprep.subr.mxu0 0.0
        %4406 = vmatpush1.msra.mxu0 %v847
        %4407 = vmatprep.subr.mxu0 0.0
        %4408 = vmatpush1.msra.mxu0 %v850
        %4409 = vmatprep.subr.mxu0 0.0
        %4410 = vmatpush1.msra.mxu0 %v853
        %4411 = vmatprep.subr.mxu0 0.0
        %4412 = vmatpush1.msra.mxu0 %v856
        %4413 = vmatprep.subr.mxu0 0.0
        %4414 = vmatpush1.msra.mxu0 %v859
        %4415 = vmatprep.subr.mxu0 0.0
        %4416 = vmatpush1.msra.mxu0 %v862
        %4417 = vmatprep.subr.mxu0 0.0
        %4418 = vmatpush1.msra.mxu0 %v865
        %4419 = vmatprep.subr.mxu0 0.0
        %4420 = vmatpush1.msra.mxu0 %v868
        %4421 = vmatprep.subr.mxu0 0.0
        %4422 = vmatpush1.msra.mxu0 %v871
        %4423 = vmatprep.subr.mxu0 0.0
        %4424 = vmatpush1.msra.mxu0 %v874
        %4425 = vmatprep.subr.mxu0 0.0
        %4426 = vmatpush1.msra.mxu0 %v877
        %4427 = vmatprep.subr.mxu0 0.0
        %4428 = vmatpush1.msra.mxu0 %v880
        %4429 = vmatprep.subr.mxu0 0.0
        %4430 = vmatpush1.msra.mxu0 0.0
        %4431 = vmatprep.subr.mxu0 0.0
        %4432 = vmatpush1.msra.mxu0 0.0
        %4433 = vmatprep.subr.mxu0 0.0
        %4434 = vmatpush1.msra.mxu0 0.0
        %4435 = vmatprep.subr.mxu0 0.0
        %4436 = vmatpush1.msra.mxu0 0.0
        %4437 = vmatprep.subr.mxu0 0.0
        %4438 = vmatpush1.msra.mxu0 0.0
        %4439 = vmatprep.subr.mxu0 0.0
        %4440 = vmatpush1.msra.mxu0 0.0
        %4441 = vmatprep.subr.mxu0 0.0
        %4442 = vmatpush1.msra.mxu0 0.0
        %4443 = vmatprep.subr.mxu0 0.0
        %4444 = vmatpush1.msra.mxu0 0.0
        %4445 = vmatprep.subr.mxu0 0.0
        %4446 = vmatpush1.msra.mxu0 0.0
        %4447 = vmatprep.subr.mxu0 0.0
        %4448 = vmatpush1.msra.mxu0 0.0
        %4449 = vmatprep.subr.mxu0 0.0
        %4450 = vmatpush1.msra.mxu0 0.0
        %4451 = vmatprep.subr.mxu0 0.0
        %4452 = vmatpush1.msra.mxu0 0.0
        %4453 = vmatprep.subr.mxu0 0.0
        %4454 = vmatpush1.msra.mxu0 0.0
        %4455 = vmatprep.subr.mxu0 0.0
        %4456 = vmatpush1.msra.mxu0 0.0
        %4457 = vmatprep.subr.mxu0 0.0
        %4458 = vmatpush1.msra.mxu0 0.0
        %4459 = vmatprep.subr.mxu0 0.0
        %4460 = vmatpush1.msra.mxu0 0.0
        %4461 = vmatprep.mubr.f32.mxu0 0.0
        %4462 = vmatmul.mubr.f32.gmra.mrb[0].mxu0 %v3559
        %v4463 = vpop.f32.mrb[0].mxu0
        %v4464 = vadd.f32 %v1626, %v4463
        %v4465 = vpop.f32.mrb[0].mxu0
        %4466 = vmatprep.mubr.f32.mxu0 0.0
        %4467 = vmatmul.mubr.f32.gmra.mrb[0].mxu0 %v3560
        %v4468 = vpop.f32.mrb[0].mxu0
        %v4469 = vadd.f32 %v1626, %v4468
        %v4470 = vpop.f32.mrb[0].mxu0
        %4471 = vmatprep.mubr.f32.mxu0 0.0
        %4472 = vmatmul.mubr.f32.gmra.mrb[0].mxu0 %v3561
        %v4473 = vpop.f32.mrb[0].mxu0
        %v4474 = vadd.f32 %v1626, %v4473
        %v4475 = vpop.f32.mrb[0].mxu0
        %4476 = vmatprep.mubr.f32.mxu0 0.0
        %4477 = vmatmul.mubr.f32.gmra.mrb[0].mxu0 %v3562
        %v4478 = vpop.f32.mrb[0].mxu0
        %v4479 = vadd.f32 %v1626, %v4478
        %v4480 = vpop.f32.mrb[0].mxu0
        %4481 = vmatprep.mubr.f32.mxu0 0.0
        %4482 = vmatmul.mubr.f32.gmra.mrb[0].mxu0 %v3563
        %v4483 = vpop.f32.mrb[0].mxu0
        %v4484 = vadd.f32 %v1626, %v4483
        %v4485 = vpop.f32.mrb[0].mxu0
        %4486 = vmatprep.mubr.f32.mxu0 0.0
        %4487 = vmatmul.mubr.f32.gmra.mrb[0].mxu0 %v3564
        %v4488 = vpop.f32.mrb[0].mxu0
        %v4489 = vadd.f32 %v1626, %v4488
        %v4490 = vpop.f32.mrb[0].mxu0
        %4491 = vmatprep.mubr.f32.mxu0 0.0
        %4492 = vmatmul.mubr.f32.gmra.mrb[0].mxu0 %v3565
        %v4493 = vpop.f32.mrb[0].mxu0
        %v4494 = vadd.f32 %v1626, %v4493
        %v4495 = vpop.f32.mrb[0].mxu0
        %4496 = vmatprep.mubr.f32.mxu0 0.0
        %4497 = vmatmul.mubr.f32.gmra.mrb[0].mxu0 %v3566
        %v4498 = vpop.f32.mrb[0].mxu0
        %v4499 = vadd.f32 %v1626, %v4498
        %v4500 = vpop.f32.mrb[0].mxu0
        %4501 = vmatprep.mubr.f32.mxu0 0.0
        %4502 = vmatmul.mubr.f32.gmra.mrb[0].mxu0 %v3567
        %v4503 = vpop.f32.mrb[0].mxu0
        %v4504 = vadd.f32 %v1626, %v4503
        %v4505 = vpop.f32.mrb[0].mxu0
        %4506 = vmatprep.mubr.f32.mxu0 0.0
        %4507 = vmatmul.mubr.f32.gmra.mrb[0].mxu0 %v3568
        %v4508 = vpop.f32.mrb[0].mxu0
        %v4509 = vadd.f32 %v1626, %v4508
        %v4510 = vpop.f32.mrb[0].mxu0
        %4511 = vmatprep.mubr.f32.mxu0 0.0
        %4512 = vmatmul.mubr.f32.gmra.mrb[0].mxu0 %v3569
        %v4513 = vpop.f32.mrb[0].mxu0
        %v4514 = vadd.f32 %v1626, %v4513
        %v4515 = vpop.f32.mrb[0].mxu0
        %4516 = vmatprep.mubr.f32.mxu0 0.0
        %4517 = vmatmul.mubr.f32.gmra.mrb[0].mxu0 %v3570
        %v4518 = vpop.f32.mrb[0].mxu0
        %v4519 = vadd.f32 %v1626, %v4518
        %v4520 = vpop.f32.mrb[0].mxu0
        %4521 = vmatprep.mubr.f32.mxu0 0.0
        %4522 = vmatmul.mubr.f32.gmra.mrb[0].mxu0 %v3571
        %v4523 = vpop.f32.mrb[0].mxu0
        %v4524 = vadd.f32 %v1626, %v4523
        %v4525 = vpop.f32.mrb[0].mxu0
        %4526 = vmatprep.mubr.f32.mxu0 0.0
        %4527 = vmatmul.mubr.f32.gmra.mrb[0].mxu0 %v3572
        %v4528 = vpop.f32.mrb[0].mxu0
        %v4529 = vadd.f32 %v1626, %v4528
        %v4530 = vpop.f32.mrb[0].mxu0
        %4531 = vmatprep.mubr.f32.mxu0 0.0
        %4532 = vmatmul.mubr.f32.gmra.mrb[0].mxu0 %v3573
        %v4533 = vpop.f32.mrb[0].mxu0
        %v4534 = vadd.f32 %v1626, %v4533
        %v4535 = vpop.f32.mrb[0].mxu0
        %4536 = vmatprep.mubr.f32.mxu0 0.0
        %4537 = vmatmul.mubr.f32.gmra.mrb[0].mxu0 %v3574
        %v4538 = vpop.f32.mrb[0].mxu0
        %v4539 = vadd.f32 %v1626, %v4538
        %v4540 = vpop.f32.mrb[0].mxu0
        %4541 = vdwg.mxu0
        %v4542 = vadd.f32 %v3997, %v4303
        %v4543 = vadd.f32 %v4003, %v4309
        %v4544 = vadd.f32 %v4009, %v4315
        %v4545 = vadd.f32 %v4015, %v4321
        %v4546 = vadd.f32 %v4021, %v4327
        %v4547 = vadd.f32 %v4027, %v4333
        %v4548 = vadd.f32 %v4033, %v4339
        %v4549 = vadd.f32 %v4039, %v4345
        %v4550 = vadd.f32 %v4045, %v4351
        %v4551 = vadd.f32 %v4051, %v4357
        %v4552 = vadd.f32 %v4057, %v4363
        %v4553 = vadd.f32 %v4063, %v4369
        %v4554 = vadd.f32 %v4069, %v4375
        %v4555 = vadd.f32 %v4075, %v4381
        %v4556 = vadd.f32 %v4081, %v4387
        %v4557 = vadd.f32 %v4087, %v4393
        %v4558 = vxor.u32 %v4542, 2147483648
        %v4559 = vxor.u32 %v4543, 2147483648
        %v4560 = vxor.u32 %v4544, 2147483648
        %v4561 = vxor.u32 %v4545, 2147483648
        %v4562 = vxor.u32 %v4546, 2147483648
        %v4563 = vxor.u32 %v4547, 2147483648
        %v4564 = vxor.u32 %v4548, 2147483648
        %v4565 = vxor.u32 %v4549, 2147483648
        %v4566 = vxor.u32 %v4550, 2147483648
        %v4567 = vxor.u32 %v4551, 2147483648
        %v4568 = vxor.u32 %v4552, 2147483648
        %v4569 = vxor.u32 %v4553, 2147483648
        %v4570 = vxor.u32 %v4554, 2147483648
        %v4571 = vxor.u32 %v4555, 2147483648
        %v4572 = vxor.u32 %v4556, 2147483648
        %v4573 = vxor.u32 %v4557, 2147483648
        %v4574 = vmul.f32 %v4558, 1.442695
        %v4575 = vpow.pop %v4574
        %v4576 = vmul.f32 %v4559, 1.442695
        %v4577 = vpow.pop %v4576
        %v4578 = vmul.f32 %v4560, 1.442695
        %v4579 = vpow.pop %v4578
        %v4580 = vmul.f32 %v4561, 1.442695
        %v4581 = vpow.pop %v4580
        %v4582 = vmul.f32 %v4562, 1.442695
        %v4583 = vpow.pop %v4582
        %v4584 = vmul.f32 %v4563, 1.442695
        %v4585 = vpow.pop %v4584
        %v4586 = vmul.f32 %v4564, 1.442695
        %v4587 = vpow.pop %v4586
        %v4588 = vmul.f32 %v4565, 1.442695
        %v4589 = vpow.pop %v4588
        %v4590 = vmul.f32 %v4566, 1.442695
        %v4591 = vpow.pop %v4590
        %v4592 = vmul.f32 %v4567, 1.442695
        %v4593 = vpow.pop %v4592
        %v4594 = vmul.f32 %v4568, 1.442695
        %v4595 = vpow.pop %v4594
        %v4596 = vmul.f32 %v4569, 1.442695
        %v4597 = vpow.pop %v4596
        %v4598 = vmul.f32 %v4570, 1.442695
        %v4599 = vpow.pop %v4598
        %v4600 = vmul.f32 %v4571, 1.442695
        %v4601 = vpow.pop %v4600
        %v4602 = vmul.f32 %v4572, 1.442695
        %v4603 = vpow.pop %v4602
        %v4604 = vmul.f32 %v4573, 1.442695
        %v4605 = vpow.pop %v4604
        %v4606 = vadd.f32 %v4575, 1.0
        %v4607 = vadd.f32 %v4577, 1.0
        %v4608 = vadd.f32 %v4579, 1.0
        %v4609 = vadd.f32 %v4581, 1.0
        %v4610 = vadd.f32 %v4583, 1.0
        %v4611 = vadd.f32 %v4585, 1.0
        %v4612 = vadd.f32 %v4587, 1.0
        %v4613 = vadd.f32 %v4589, 1.0
        %v4614 = vadd.f32 %v4591, 1.0
        %v4615 = vadd.f32 %v4593, 1.0
        %v4616 = vadd.f32 %v4595, 1.0
        %v4617 = vadd.f32 %v4597, 1.0
        %v4618 = vadd.f32 %v4599, 1.0
        %v4619 = vadd.f32 %v4601, 1.0
        %v4620 = vadd.f32 %v4603, 1.0
        %v4621 = vadd.f32 %v4605, 1.0
        %v4622 = vrcp.pop %v4606
        %v4623 = vmul.f32 1.0, %v4622
        %v4624 = vrcp.pop %v4607
        %v4625 = vmul.f32 1.0, %v4624
        %v4626 = vrcp.pop %v4608
        %v4627 = vmul.f32 1.0, %v4626
        %v4628 = vrcp.pop %v4609
        %v4629 = vmul.f32 1.0, %v4628
        %v4630 = vrcp.pop %v4610
        %v4631 = vmul.f32 1.0, %v4630
        %v4632 = vrcp.pop %v4611
        %v4633 = vmul.f32 1.0, %v4632
        %v4634 = vrcp.pop %v4612
        %v4635 = vmul.f32 1.0, %v4634
        %v4636 = vrcp.pop %v4613
        %v4637 = vmul.f32 1.0, %v4636
        %v4638 = vrcp.pop %v4614
        %v4639 = vmul.f32 1.0, %v4638
        %v4640 = vrcp.pop %v4615
        %v4641 = vmul.f32 1.0, %v4640
        %v4642 = vrcp.pop %v4616
        %v4643 = vmul.f32 1.0, %v4642
        %v4644 = vrcp.pop %v4617
        %v4645 = vmul.f32 1.0, %v4644
        %v4646 = vrcp.pop %v4618
        %v4647 = vmul.f32 1.0, %v4646
        %v4648 = vrcp.pop %v4619
        %v4649 = vmul.f32 1.0, %v4648
        %v4650 = vrcp.pop %v4620
        %v4651 = vmul.f32 1.0, %v4650
        %v4652 = vrcp.pop %v4621
        %v4653 = vmul.f32 1.0, %v4652
        %v4654 = vadd.f32 %v3999, %v4305
        %v4655 = vadd.f32 %v4005, %v4311
        %v4656 = vadd.f32 %v4011, %v4317
        %v4657 = vadd.f32 %v4017, %v4323
        %v4658 = vadd.f32 %v4023, %v4329
        %v4659 = vadd.f32 %v4029, %v4335
        %v4660 = vadd.f32 %v4035, %v4341
        %v4661 = vadd.f32 %v4041, %v4347
        %v4662 = vadd.f32 %v4047, %v4353
        %v4663 = vadd.f32 %v4053, %v4359
        %v4664 = vadd.f32 %v4059, %v4365
        %v4665 = vadd.f32 %v4065, %v4371
        %v4666 = vadd.f32 %v4071, %v4377
        %v4667 = vadd.f32 %v4077, %v4383
        %v4668 = vadd.f32 %v4083, %v4389
        %v4669 = vadd.f32 %v4089, %v4395
        %v4670 = vxor.u32 %v4654, 2147483648
        %v4671 = vxor.u32 %v4655, 2147483648
        %v4672 = vxor.u32 %v4656, 2147483648
        %v4673 = vxor.u32 %v4657, 2147483648
        %v4674 = vxor.u32 %v4658, 2147483648
        %v4675 = vxor.u32 %v4659, 2147483648
        %v4676 = vxor.u32 %v4660, 2147483648
        %v4677 = vxor.u32 %v4661, 2147483648
        %v4678 = vxor.u32 %v4662, 2147483648
        %v4679 = vxor.u32 %v4663, 2147483648
        %v4680 = vxor.u32 %v4664, 2147483648
        %v4681 = vxor.u32 %v4665, 2147483648
        %v4682 = vxor.u32 %v4666, 2147483648
        %v4683 = vxor.u32 %v4667, 2147483648
        %v4684 = vxor.u32 %v4668, 2147483648
        %v4685 = vxor.u32 %v4669, 2147483648
        %v4686 = vmul.f32 %v4670, 1.442695
        %v4687 = vpow.pop %v4686
        %v4688 = vmul.f32 %v4671, 1.442695
        %v4689 = vpow.pop %v4688
        %v4690 = vmul.f32 %v4672, 1.442695
        %v4691 = vpow.pop %v4690
        %v4692 = vmul.f32 %v4673, 1.442695
        %v4693 = vpow.pop %v4692
        %v4694 = vmul.f32 %v4674, 1.442695
        %v4695 = vpow.pop %v4694
        %v4696 = vmul.f32 %v4675, 1.442695
        %v4697 = vpow.pop %v4696
        %v4698 = vmul.f32 %v4676, 1.442695
        %v4699 = vpow.pop %v4698
        %v4700 = vmul.f32 %v4677, 1.442695
        %v4701 = vpow.pop %v4700
        %v4702 = vmul.f32 %v4678, 1.442695
        %v4703 = vpow.pop %v4702
        %v4704 = vmul.f32 %v4679, 1.442695
        %v4705 = vpow.pop %v4704
        %v4706 = vmul.f32 %v4680, 1.442695
        %v4707 = vpow.pop %v4706
        %v4708 = vmul.f32 %v4681, 1.442695
        %v4709 = vpow.pop %v4708
        %v4710 = vmul.f32 %v4682, 1.442695
        %v4711 = vpow.pop %v4710
        %v4712 = vmul.f32 %v4683, 1.442695
        %v4713 = vpow.pop %v4712
        %v4714 = vmul.f32 %v4684, 1.442695
        %v4715 = vpow.pop %v4714
        %v4716 = vmul.f32 %v4685, 1.442695
        %v4717 = vpow.pop %v4716
        %v4718 = vadd.f32 %v4687, 1.0
        %v4719 = vadd.f32 %v4689, 1.0
        %v4720 = vadd.f32 %v4691, 1.0
        %v4721 = vadd.f32 %v4693, 1.0
        %v4722 = vadd.f32 %v4695, 1.0
        %v4723 = vadd.f32 %v4697, 1.0
        %v4724 = vadd.f32 %v4699, 1.0
        %v4725 = vadd.f32 %v4701, 1.0
        %v4726 = vadd.f32 %v4703, 1.0
        %v4727 = vadd.f32 %v4705, 1.0
        %v4728 = vadd.f32 %v4707, 1.0
        %v4729 = vadd.f32 %v4709, 1.0
        %v4730 = vadd.f32 %v4711, 1.0
        %v4731 = vadd.f32 %v4713, 1.0
        %v4732 = vadd.f32 %v4715, 1.0
        %v4733 = vadd.f32 %v4717, 1.0
        %v4734 = vrcp.pop %v4718
        %v4735 = vmul.f32 1.0, %v4734
        %v4736 = vrcp.pop %v4719
        %v4737 = vmul.f32 1.0, %v4736
        %v4738 = vrcp.pop %v4720
        %v4739 = vmul.f32 1.0, %v4738
        %v4740 = vrcp.pop %v4721
        %v4741 = vmul.f32 1.0, %v4740
        %v4742 = vrcp.pop %v4722
        %v4743 = vmul.f32 1.0, %v4742
        %v4744 = vrcp.pop %v4723
        %v4745 = vmul.f32 1.0, %v4744
        %v4746 = vrcp.pop %v4724
        %v4747 = vmul.f32 1.0, %v4746
        %v4748 = vrcp.pop %v4725
        %v4749 = vmul.f32 1.0, %v4748
        %v4750 = vrcp.pop %v4726
        %v4751 = vmul.f32 1.0, %v4750
        %v4752 = vrcp.pop %v4727
        %v4753 = vmul.f32 1.0, %v4752
        %v4754 = vrcp.pop %v4728
        %v4755 = vmul.f32 1.0, %v4754
        %v4756 = vrcp.pop %v4729
        %v4757 = vmul.f32 1.0, %v4756
        %v4758 = vrcp.pop %v4730
        %v4759 = vmul.f32 1.0, %v4758
        %v4760 = vrcp.pop %v4731
        %v4761 = vmul.f32 1.0, %v4760
        %v4762 = vrcp.pop %v4732
        %v4763 = vmul.f32 1.0, %v4762
        %v4764 = vrcp.pop %v4733
        %v4765 = vmul.f32 1.0, %v4764
        %v4766 = vmul.f32 %v4623, %v4464
        %v4767 = vmul.f32 %v4625, %v4469
        %v4768 = vmul.f32 %v4627, %v4474
        %v4769 = vmul.f32 %v4629, %v4479
        %v4770 = vmul.f32 %v4631, %v4484
        %v4771 = vmul.f32 %v4633, %v4489
        %v4772 = vmul.f32 %v4635, %v4494
        %v4773 = vmul.f32 %v4637, %v4499
        %v4774 = vmul.f32 %v4639, %v4504
        %v4775 = vmul.f32 %v4641, %v4509
        %v4776 = vmul.f32 %v4643, %v4514
        %v4777 = vmul.f32 %v4645, %v4519
        %v4778 = vmul.f32 %v4647, %v4524
        %v4779 = vmul.f32 %v4649, %v4529
        %v4780 = vmul.f32 %v4651, %v4534
        %v4781 = vmul.f32 %v4653, %v4539
        %v4782 = vadd.f32 %v4158, %v4766
        %v4783 = vadd.f32 %v4163, %v4767
        %v4784 = vadd.f32 %v4168, %v4768
        %v4785 = vadd.f32 %v4173, %v4769
        %v4786 = vadd.f32 %v4178, %v4770
        %v4787 = vadd.f32 %v4183, %v4771
        %v4788 = vadd.f32 %v4188, %v4772
        %v4789 = vadd.f32 %v4193, %v4773
        %v4790 = vadd.f32 %v4198, %v4774
        %v4791 = vadd.f32 %v4203, %v4775
        %v4792 = vadd.f32 %v4208, %v4776
        %v4793 = vadd.f32 %v4213, %v4777
        %v4794 = vadd.f32 %v4218, %v4778
        %v4795 = vadd.f32 %v4223, %v4779
        %v4796 = vadd.f32 %v4228, %v4780
        %v4797 = vadd.f32 %v4233, %v4781
        %v4798 = vtanh.pop %v4782
        %v4799 = vtanh.pop %v4783
        %v4800 = vtanh.pop %v4784
        %v4801 = vtanh.pop %v4785
        %v4802 = vtanh.pop %v4786
        %v4803 = vtanh.pop %v4787
        %v4804 = vtanh.pop %v4788
        %v4805 = vtanh.pop %v4789
        %v4806 = vtanh.pop %v4790
        %v4807 = vtanh.pop %v4791
        %v4808 = vtanh.pop %v4792
        %v4809 = vtanh.pop %v4793
        %v4810 = vtanh.pop %v4794
        %v4811 = vtanh.pop %v4795
        %v4812 = vtanh.pop %v4796
        %v4813 = vtanh.pop %v4797
        %v4814 = vsub.f32 1.0, %v4735
        %v4815 = vsub.f32 1.0, %v4737
        %v4816 = vsub.f32 1.0, %v4739
        %v4817 = vsub.f32 1.0, %v4741
        %v4818 = vsub.f32 1.0, %v4743
        %v4819 = vsub.f32 1.0, %v4745
        %v4820 = vsub.f32 1.0, %v4747
        %v4821 = vsub.f32 1.0, %v4749
        %v4822 = vsub.f32 1.0, %v4751
        %v4823 = vsub.f32 1.0, %v4753
        %v4824 = vsub.f32 1.0, %v4755
        %v4825 = vsub.f32 1.0, %v4757
        %v4826 = vsub.f32 1.0, %v4759
        %v4827 = vsub.f32 1.0, %v4761
        %v4828 = vsub.f32 1.0, %v4763
        %v4829 = vsub.f32 1.0, %v4765
        %v4830 = vmul.f32 %v4814, %v4798
        %v4831 = vmul.f32 %v4815, %v4799
        %v4832 = vmul.f32 %v4816, %v4800
        %v4833 = vmul.f32 %v4817, %v4801
        %v4834 = vmul.f32 %v4818, %v4802
        %v4835 = vmul.f32 %v4819, %v4803
        %v4836 = vmul.f32 %v4820, %v4804
        %v4837 = vmul.f32 %v4821, %v4805
        %v4838 = vmul.f32 %v4822, %v4806
        %v4839 = vmul.f32 %v4823, %v4807
        %v4840 = vmul.f32 %v4824, %v4808
        %v4841 = vmul.f32 %v4825, %v4809
        %v4842 = vmul.f32 %v4826, %v4810
        %v4843 = vmul.f32 %v4827, %v4811
        %v4844 = vmul.f32 %v4828, %v4812
        %v4845 = vmul.f32 %v4829, %v4813
        %v4846 = vmul.f32 %v4735, %v3559
        %v4847 = vmul.f32 %v4737, %v3560
        %v4848 = vmul.f32 %v4739, %v3561
        %v4849 = vmul.f32 %v4741, %v3562
        %v4850 = vmul.f32 %v4743, %v3563
        %v4851 = vmul.f32 %v4745, %v3564
        %v4852 = vmul.f32 %v4747, %v3565
        %v4853 = vmul.f32 %v4749, %v3566
        %v4854 = vmul.f32 %v4751, %v3567
        %v4855 = vmul.f32 %v4753, %v3568
        %v4856 = vmul.f32 %v4755, %v3569
        %v4857 = vmul.f32 %v4757, %v3570
        %v4858 = vmul.f32 %v4759, %v3571
        %v4859 = vmul.f32 %v4761, %v3572
        %v4860 = vmul.f32 %v4763, %v3573
        %v4861 = vmul.f32 %v4765, %v3574
        %v4862 = vadd.f32 %v4830, %v4846
        %v4863 = vadd.f32 %v4831, %v4847
        %v4864 = vadd.f32 %v4832, %v4848
        %v4865 = vadd.f32 %v4833, %v4849
        %v4866 = vadd.f32 %v4834, %v4850
        %v4867 = vadd.f32 %v4835, %v4851
        %v4868 = vadd.f32 %v4836, %v4852
        %v4869 = vadd.f32 %v4837, %v4853
        %v4870 = vadd.f32 %v4838, %v4854
        %v4871 = vadd.f32 %v4839, %v4855
        %v4872 = vadd.f32 %v4840, %v4856
        %v4873 = vadd.f32 %v4841, %v4857
        %v4874 = vadd.f32 %v4842, %v4858
        %v4875 = vadd.f32 %v4843, %v4859
        %v4876 = vadd.f32 %v4844, %v4860
        %v4877 = vadd.f32 %v4845, %v4861
        %4878 = vmatprep.subr.mxu0 0.0
        %4879 = vmatpush1.msra.mxu0 %v767
        %4880 = vmatprep.subr.mxu0 0.0
        %4881 = vmatpush1.msra.mxu0 %v768
        %4882 = vmatprep.subr.mxu0 0.0
        %4883 = vmatpush1.msra.mxu0 %v769
        %4884 = vmatprep.subr.mxu0 0.0
        %4885 = vmatpush1.msra.mxu0 %v770
        %4886 = vmatprep.subr.mxu0 0.0
        %4887 = vmatpush1.msra.mxu0 %v771
        %4888 = vmatprep.subr.mxu0 0.0
        %4889 = vmatpush1.msra.mxu0 %v772
        %4890 = vmatprep.subr.mxu0 0.0
        %4891 = vmatpush1.msra.mxu0 %v773
        %4892 = vmatprep.subr.mxu0 0.0
        %4893 = vmatpush1.msra.mxu0 %v774
        %4894 = vmatprep.subr.mxu0 0.0
        %4895 = vmatpush1.msra.mxu0 %v775
        %4896 = vmatprep.subr.mxu0 0.0
        %4897 = vmatpush1.msra.mxu0 %v776
        %4898 = vmatprep.subr.mxu0 0.0
        %4899 = vmatpush1.msra.mxu0 %v777
        %4900 = vmatprep.subr.mxu0 0.0
        %4901 = vmatpush1.msra.mxu0 %v778
        %4902 = vmatprep.subr.mxu0 0.0
        %4903 = vmatpush1.msra.mxu0 %v779
        %4904 = vmatprep.subr.mxu0 0.0
        %4905 = vmatpush1.msra.mxu0 %v780
        %4906 = vmatprep.subr.mxu0 0.0
        %4907 = vmatpush1.msra.mxu0 %v781
        %4908 = vmatprep.subr.mxu0 0.0
        %4909 = vmatpush1.msra.mxu0 %v782
        %4910 = vmatprep.subr.mxu0 0.0
        %4911 = vmatpush1.msra.mxu0 0.0
        %4912 = vmatprep.subr.mxu0 0.0
        %4913 = vmatpush1.msra.mxu0 0.0
        %4914 = vmatprep.subr.mxu0 0.0
        %4915 = vmatpush1.msra.mxu0 0.0
        %4916 = vmatprep.subr.mxu0 0.0
        %4917 = vmatpush1.msra.mxu0 0.0
        %4918 = vmatprep.subr.mxu0 0.0
        %4919 = vmatpush1.msra.mxu0 0.0
        %4920 = vmatprep.subr.mxu0 0.0
        %4921 = vmatpush1.msra.mxu0 0.0
        %4922 = vmatprep.subr.mxu0 0.0
        %4923 = vmatpush1.msra.mxu0 0.0
        %4924 = vmatprep.subr.mxu0 0.0
        %4925 = vmatpush1.msra.mxu0 0.0
        %4926 = vmatprep.subr.mxu0 0.0
        %4927 = vmatpush1.msra.mxu0 0.0
        %4928 = vmatprep.subr.mxu0 0.0
        %4929 = vmatpush1.msra.mxu0 0.0
        %4930 = vmatprep.subr.mxu0 0.0
        %4931 = vmatpush1.msra.mxu0 0.0
        %4932 = vmatprep.subr.mxu0 0.0
        %4933 = vmatpush1.msra.mxu0 0.0
        %4934 = vmatprep.subr.mxu0 0.0
        %4935 = vmatpush1.msra.mxu0 0.0
        %4936 = vmatprep.subr.mxu0 0.0
        %4937 = vmatpush1.msra.mxu0 0.0
        %4938 = vmatprep.subr.mxu0 0.0
        %4939 = vmatpush1.msra.mxu0 0.0
        %4940 = vmatprep.subr.mxu0 0.0
        %4941 = vmatpush1.msra.mxu0 0.0
        %4942 = vmatprep.mubr.f32.mxu0 0.0
        %4943 = vmatmul.mubr.f32.gmra.mrb[0].mxu0 %v4862
        %v4944 = vpop.f32.mrb[0].mxu0
        %v4945 = vadd.f32 %v886, %v4944
        %v4946 = vpop.f32.mrb[0].mxu0
        %4947 = vmatprep.mubr.f32.mxu0 0.0
        %4948 = vmatmul.mubr.f32.gmra.mrb[0].mxu0 %v4863
        %v4949 = vpop.f32.mrb[0].mxu0
        %v4950 = vadd.f32 %v886, %v4949
        %v4951 = vpop.f32.mrb[0].mxu0
        %4952 = vmatprep.mubr.f32.mxu0 0.0
        %4953 = vmatmul.mubr.f32.gmra.mrb[0].mxu0 %v4864
        %v4954 = vpop.f32.mrb[0].mxu0
        %v4955 = vadd.f32 %v886, %v4954
        %v4956 = vpop.f32.mrb[0].mxu0
        %4957 = vmatprep.mubr.f32.mxu0 0.0
        %4958 = vmatmul.mubr.f32.gmra.mrb[0].mxu0 %v4865
        %v4959 = vpop.f32.mrb[0].mxu0
        %v4960 = vadd.f32 %v886, %v4959
        %v4961 = vpop.f32.mrb[0].mxu0
        %4962 = vmatprep.mubr.f32.mxu0 0.0
        %4963 = vmatmul.mubr.f32.gmra.mrb[0].mxu0 %v4866
        %v4964 = vpop.f32.mrb[0].mxu0
        %v4965 = vadd.f32 %v886, %v4964
        %v4966 = vpop.f32.mrb[0].mxu0
        %4967 = vmatprep.mubr.f32.mxu0 0.0
        %4968 = vmatmul.mubr.f32.gmra.mrb[0].mxu0 %v4867
        %v4969 = vpop.f32.mrb[0].mxu0
        %v4970 = vadd.f32 %v886, %v4969
        %v4971 = vpop.f32.mrb[0].mxu0
        %4972 = vmatprep.mubr.f32.mxu0 0.0
        %4973 = vmatmul.mubr.f32.gmra.mrb[0].mxu0 %v4868
        %v4974 = vpop.f32.mrb[0].mxu0
        %v4975 = vadd.f32 %v886, %v4974
        %v4976 = vpop.f32.mrb[0].mxu0
        %4977 = vmatprep.mubr.f32.mxu0 0.0
        %4978 = vmatmul.mubr.f32.gmra.mrb[0].mxu0 %v4869
        %v4979 = vpop.f32.mrb[0].mxu0
        %v4980 = vadd.f32 %v886, %v4979
        %v4981 = vpop.f32.mrb[0].mxu0
        %4982 = vmatprep.mubr.f32.mxu0 0.0
        %4983 = vmatmul.mubr.f32.gmra.mrb[0].mxu0 %v4870
        %v4984 = vpop.f32.mrb[0].mxu0
        %v4985 = vadd.f32 %v886, %v4984
        %v4986 = vpop.f32.mrb[0].mxu0
        %4987 = vmatprep.mubr.f32.mxu0 0.0
        %4988 = vmatmul.mubr.f32.gmra.mrb[0].mxu0 %v4871
        %v4989 = vpop.f32.mrb[0].mxu0
        %v4990 = vadd.f32 %v886, %v4989
        %v4991 = vpop.f32.mrb[0].mxu0
        %4992 = vmatprep.mubr.f32.mxu0 0.0
        %4993 = vmatmul.mubr.f32.gmra.mrb[0].mxu0 %v4872
        %v4994 = vpop.f32.mrb[0].mxu0
        %v4995 = vadd.f32 %v886, %v4994
        %v4996 = vpop.f32.mrb[0].mxu0
        %4997 = vmatprep.mubr.f32.mxu0 0.0
        %4998 = vmatmul.mubr.f32.gmra.mrb[0].mxu0 %v4873
        %v4999 = vpop.f32.mrb[0].mxu0
        %v5000 = vadd.f32 %v886, %v4999
        %v5001 = vpop.f32.mrb[0].mxu0
        %5002 = vmatprep.mubr.f32.mxu0 0.0
        %5003 = vmatmul.mubr.f32.gmra.mrb[0].mxu0 %v4874
        %v5004 = vpop.f32.mrb[0].mxu0
        %v5005 = vadd.f32 %v886, %v5004
        %v5006 = vpop.f32.mrb[0].mxu0
        %5007 = vmatprep.mubr.f32.mxu0 0.0
        %5008 = vmatmul.mubr.f32.gmra.mrb[0].mxu0 %v4875
        %v5009 = vpop.f32.mrb[0].mxu0
        %v5010 = vadd.f32 %v886, %v5009
        %v5011 = vpop.f32.mrb[0].mxu0
        %5012 = vmatprep.mubr.f32.mxu0 0.0
        %5013 = vmatmul.mubr.f32.gmra.mrb[0].mxu0 %v4876
        %v5014 = vpop.f32.mrb[0].mxu0
        %v5015 = vadd.f32 %v886, %v5014
        %v5016 = vpop.f32.mrb[0].mxu0
        %5017 = vmatprep.mubr.f32.mxu0 0.0
        %5018 = vmatmul.mubr.f32.gmra.mrb[0].mxu0 %v4877
        %v5019 = vpop.f32.mrb[0].mxu0
        %v5020 = vadd.f32 %v886, %v5019
        %v5021 = vpop.f32.mrb[0].mxu0
        %5022 = vdwg.mxu0
        %5023 = vmatprep.subr.mxu0 0.0
        %5024 = vmatpush1.msra.mxu0 %v4945
        %5025 = vmatprep.subr.mxu0 0.0
        %5026 = vmatpush1.msra.mxu0 %v4950
        %5027 = vmatprep.subr.mxu0 0.0
        %5028 = vmatpush1.msra.mxu0 %v4955
        %5029 = vmatprep.subr.mxu0 0.0
        %5030 = vmatpush1.msra.mxu0 %v4960
        %5031 = vmatprep.subr.mxu0 0.0
        %5032 = vmatpush1.msra.mxu0 %v4965
        %5033 = vmatprep.subr.mxu0 0.0
        %5034 = vmatpush1.msra.mxu0 %v4970
        %5035 = vmatprep.subr.mxu0 0.0
        %5036 = vmatpush1.msra.mxu0 %v4975
        %5037 = vmatprep.subr.mxu0 0.0
        %5038 = vmatpush1.msra.mxu0 %v4980
        %5039 = vmatprep.subr.mxu0 0.0
        %5040 = vmatpush1.msra.mxu0 0.0
        %5041 = vmatprep.subr.mxu0 0.0
        %5042 = vmatpush1.msra.mxu0 0.0
        %5043 = vmatprep.subr.mxu0 0.0
        %5044 = vmatpush1.msra.mxu0 0.0
        %5045 = vmatprep.subr.mxu0 0.0
        %5046 = vmatpush1.msra.mxu0 0.0
        %5047 = vmatprep.subr.mxu0 0.0
        %5048 = vmatpush1.msra.mxu0 0.0
        %5049 = vmatprep.subr.mxu0 0.0
        %5050 = vmatpush1.msra.mxu0 0.0
        %5051 = vmatprep.subr.mxu0 0.0
        %5052 = vmatpush1.msra.mxu0 0.0
        %5053 = vmatprep.subr.mxu0 0.0
        %5054 = vmatpush1.msra.mxu0 0.0
        %5055 = vmatprep.subr.mxu0 0.0
        %5056 = vmatpush1.msra.mxu0 0.0
        %5057 = vmatprep.subr.mxu0 0.0
        %5058 = vmatpush1.msra.mxu0 0.0
        %5059 = vmatprep.subr.mxu0 0.0
        %5060 = vmatpush1.msra.mxu0 0.0
        %5061 = vmatprep.subr.mxu0 0.0
        %5062 = vmatpush1.msra.mxu0 0.0
        %5063 = vmatprep.subr.mxu0 0.0
        %5064 = vmatpush1.msra.mxu0 0.0
        %5065 = vmatprep.subr.mxu0 0.0
        %5066 = vmatpush1.msra.mxu0 0.0
        %5067 = vmatprep.subr.mxu0 0.0
        %5068 = vmatpush1.msra.mxu0 0.0
        %5069 = vmatprep.subr.mxu0 0.0
        %5070 = vmatpush1.msra.mxu0 0.0
        %5071 = vmatprep.subr.mxu0 0.0
        %5072 = vmatpush1.msra.mxu0 0.0
        %5073 = vmatprep.subr.mxu0 0.0
        %5074 = vmatpush1.msra.mxu0 0.0
        %5075 = vmatprep.subr.mxu0 0.0
        %5076 = vmatpush1.msra.mxu0 0.0
        %5077 = vmatprep.subr.mxu0 0.0
        %5078 = vmatpush1.msra.mxu0 0.0
        %5079 = vmatprep.subr.mxu0 0.0
        %5080 = vmatpush1.msra.mxu0 0.0
        %5081 = vmatprep.subr.mxu0 0.0
        %5082 = vmatpush1.msra.mxu0 0.0
        %5083 = vmatprep.subr.mxu0 0.0
        %5084 = vmatpush1.msra.mxu0 0.0
        %5085 = vmatprep.subr.mxu0 0.0
        %5086 = vmatpush1.msra.mxu0 0.0
        %5087 = vmatprep.mubr.f32.mxu0 0.0
        %5088 = vmatmul.mubr.f32.gmra.mrb[0].mxu0 %v1035
        %v5089 = vpop.f32.mrb[0].mxu0
        %v5090 = vadd.f32 0.0, %v5089
        %v5091 = vpop.f32.mrb[0].mxu0
        %5092 = vmatprep.mubr.f32.mxu0 0.0
        %5093 = vmatmul.mubr.f32.gmra.mrb[0].mxu0 %v1038
        %v5094 = vpop.f32.mrb[0].mxu0
        %v5095 = vadd.f32 0.0, %v5094
        %v5096 = vpop.f32.mrb[0].mxu0
        %5097 = vmatprep.mubr.f32.mxu0 0.0
        %5098 = vmatmul.mubr.f32.gmra.mrb[0].mxu0 %v1041
        %v5099 = vpop.f32.mrb[0].mxu0
        %v5100 = vadd.f32 0.0, %v5099
        %v5101 = vpop.f32.mrb[0].mxu0
        %5102 = vmatprep.mubr.f32.mxu0 0.0
        %5103 = vmatmul.mubr.f32.gmra.mrb[0].mxu0 %v1044
        %v5104 = vpop.f32.mrb[0].mxu0
        %v5105 = vadd.f32 0.0, %v5104
        %v5106 = vpop.f32.mrb[0].mxu0
        %5107 = vmatprep.mubr.f32.mxu0 0.0
        %5108 = vmatmul.mubr.f32.gmra.mrb[0].mxu0 %v1047
        %v5109 = vpop.f32.mrb[0].mxu0
        %v5110 = vadd.f32 0.0, %v5109
        %v5111 = vpop.f32.mrb[0].mxu0
        %5112 = vmatprep.mubr.f32.mxu0 0.0
        %5113 = vmatmul.mubr.f32.gmra.mrb[0].mxu0 %v1050
        %v5114 = vpop.f32.mrb[0].mxu0
        %v5115 = vadd.f32 0.0, %v5114
        %v5116 = vpop.f32.mrb[0].mxu0
        %5117 = vmatprep.mubr.f32.mxu0 0.0
        %5118 = vmatmul.mubr.f32.gmra.mrb[0].mxu0 %v1053
        %v5119 = vpop.f32.mrb[0].mxu0
        %v5120 = vadd.f32 0.0, %v5119
        %v5121 = vpop.f32.mrb[0].mxu0
        %5122 = vmatprep.mubr.f32.mxu0 0.0
        %5123 = vmatmul.mubr.f32.gmra.mrb[0].mxu0 %v1056
        %v5124 = vpop.f32.mrb[0].mxu0
        %v5125 = vadd.f32 0.0, %v5124
        %v5126 = vpop.f32.mrb[0].mxu0
        %5127 = vdwg.mxu0
        %5128 = vmatprep.subr.mxu0 0.0
        %5129 = vmatpush1.msra.mxu0 %v4985
        %5130 = vmatprep.subr.mxu0 0.0
        %5131 = vmatpush1.msra.mxu0 %v4990
        %5132 = vmatprep.subr.mxu0 0.0
        %5133 = vmatpush1.msra.mxu0 %v4995
        %5134 = vmatprep.subr.mxu0 0.0
        %5135 = vmatpush1.msra.mxu0 %v5000
        %5136 = vmatprep.subr.mxu0 0.0
        %5137 = vmatpush1.msra.mxu0 %v5005
        %5138 = vmatprep.subr.mxu0 0.0
        %5139 = vmatpush1.msra.mxu0 %v5010
        %5140 = vmatprep.subr.mxu0 0.0
        %5141 = vmatpush1.msra.mxu0 %v5015
        %5142 = vmatprep.subr.mxu0 0.0
        %5143 = vmatpush1.msra.mxu0 %v5020
        %5144 = vmatprep.subr.mxu0 0.0
        %5145 = vmatpush1.msra.mxu0 0.0
        %5146 = vmatprep.subr.mxu0 0.0
        %5147 = vmatpush1.msra.mxu0 0.0
        %5148 = vmatprep.subr.mxu0 0.0
        %5149 = vmatpush1.msra.mxu0 0.0
        %5150 = vmatprep.subr.mxu0 0.0
        %5151 = vmatpush1.msra.mxu0 0.0
        %5152 = vmatprep.subr.mxu0 0.0
        %5153 = vmatpush1.msra.mxu0 0.0
        %5154 = vmatprep.subr.mxu0 0.0
        %5155 = vmatpush1.msra.mxu0 0.0
        %5156 = vmatprep.subr.mxu0 0.0
        %5157 = vmatpush1.msra.mxu0 0.0
        %5158 = vmatprep.subr.mxu0 0.0
        %5159 = vmatpush1.msra.mxu0 0.0
        %5160 = vmatprep.subr.mxu0 0.0
        %5161 = vmatpush1.msra.mxu0 0.0
        %5162 = vmatprep.subr.mxu0 0.0
        %5163 = vmatpush1.msra.mxu0 0.0
        %5164 = vmatprep.subr.mxu0 0.0
        %5165 = vmatpush1.msra.mxu0 0.0
        %5166 = vmatprep.subr.mxu0 0.0
        %5167 = vmatpush1.msra.mxu0 0.0
        %5168 = vmatprep.subr.mxu0 0.0
        %5169 = vmatpush1.msra.mxu0 0.0
        %5170 = vmatprep.subr.mxu0 0.0
        %5171 = vmatpush1.msra.mxu0 0.0
        %5172 = vmatprep.subr.mxu0 0.0
        %5173 = vmatpush1.msra.mxu0 0.0
        %5174 = vmatprep.subr.mxu0 0.0
        %5175 = vmatpush1.msra.mxu0 0.0
        %5176 = vmatprep.subr.mxu0 0.0
        %5177 = vmatpush1.msra.mxu0 0.0
        %5178 = vmatprep.subr.mxu0 0.0
        %5179 = vmatpush1.msra.mxu0 0.0
        %5180 = vmatprep.subr.mxu0 0.0
        %5181 = vmatpush1.msra.mxu0 0.0
        %5182 = vmatprep.subr.mxu0 0.0
        %5183 = vmatpush1.msra.mxu0 0.0
        %5184 = vmatprep.subr.mxu0 0.0
        %5185 = vmatpush1.msra.mxu0 0.0
        %5186 = vmatprep.subr.mxu0 0.0
        %5187 = vmatpush1.msra.mxu0 0.0
        %5188 = vmatprep.subr.mxu0 0.0
        %5189 = vmatpush1.msra.mxu0 0.0
        %5190 = vmatprep.subr.mxu0 0.0
        %5191 = vmatpush1.msra.mxu0 0.0
        %5192 = vmatprep.mubr.f32.mxu0 0.0
        %5193 = vmatmul.mubr.f32.gmra.mrb[0].mxu0 %v1164
        %v5194 = vpop.f32.mrb[0].mxu0
        %v5195 = vadd.f32 0.0, %v5194
        %v5196 = vpop.f32.mrb[0].mxu0
        %5197 = vmatprep.mubr.f32.mxu0 0.0
        %5198 = vmatmul.mubr.f32.gmra.mrb[0].mxu0 %v1167
        %v5199 = vpop.f32.mrb[0].mxu0
        %v5200 = vadd.f32 0.0, %v5199
        %v5201 = vpop.f32.mrb[0].mxu0
        %5202 = vmatprep.mubr.f32.mxu0 0.0
        %5203 = vmatmul.mubr.f32.gmra.mrb[0].mxu0 %v1170
        %v5204 = vpop.f32.mrb[0].mxu0
        %v5205 = vadd.f32 0.0, %v5204
        %v5206 = vpop.f32.mrb[0].mxu0
        %5207 = vmatprep.mubr.f32.mxu0 0.0
        %5208 = vmatmul.mubr.f32.gmra.mrb[0].mxu0 %v1173
        %v5209 = vpop.f32.mrb[0].mxu0
        %v5210 = vadd.f32 0.0, %v5209
        %v5211 = vpop.f32.mrb[0].mxu0
        %5212 = vmatprep.mubr.f32.mxu0 0.0
        %5213 = vmatmul.mubr.f32.gmra.mrb[0].mxu0 %v1176
        %v5214 = vpop.f32.mrb[0].mxu0
        %v5215 = vadd.f32 0.0, %v5214
        %v5216 = vpop.f32.mrb[0].mxu0
        %5217 = vmatprep.mubr.f32.mxu0 0.0
        %5218 = vmatmul.mubr.f32.gmra.mrb[0].mxu0 %v1179
        %v5219 = vpop.f32.mrb[0].mxu0
        %v5220 = vadd.f32 0.0, %v5219
        %v5221 = vpop.f32.mrb[0].mxu0
        %5222 = vmatprep.mubr.f32.mxu0 0.0
        %5223 = vmatmul.mubr.f32.gmra.mrb[0].mxu0 %v1182
        %v5224 = vpop.f32.mrb[0].mxu0
        %v5225 = vadd.f32 0.0, %v5224
        %v5226 = vpop.f32.mrb[0].mxu0
        %5227 = vmatprep.mubr.f32.mxu0 0.0
        %5228 = vmatmul.mubr.f32.gmra.mrb[0].mxu0 %v1185
        %v5229 = vpop.f32.mrb[0].mxu0
        %v5230 = vadd.f32 0.0, %v5229
        %v5231 = vpop.f32.mrb[0].mxu0
        %5232 = vdwg.mxu0
        %5233 = vmatprep.subr.mxu0 %v785
        %5234 = vmatpush1.msra.mxu0 %v784
        %5235 = vmatprep.subr.mxu0 %v788
        %5236 = vmatpush1.msra.mxu0 %v787
        %5237 = vmatprep.subr.mxu0 %v791
        %5238 = vmatpush1.msra.mxu0 %v790
        %5239 = vmatprep.subr.mxu0 %v794
        %5240 = vmatpush1.msra.mxu0 %v793
        %5241 = vmatprep.subr.mxu0 %v797
        %5242 = vmatpush1.msra.mxu0 %v796
        %5243 = vmatprep.subr.mxu0 %v800
        %5244 = vmatpush1.msra.mxu0 %v799
        %5245 = vmatprep.subr.mxu0 %v803
        %5246 = vmatpush1.msra.mxu0 %v802
        %5247 = vmatprep.subr.mxu0 %v806
        %5248 = vmatpush1.msra.mxu0 %v805
        %5249 = vmatprep.subr.mxu0 %v809
        %5250 = vmatpush1.msra.mxu0 %v808
        %5251 = vmatprep.subr.mxu0 %v812
        %5252 = vmatpush1.msra.mxu0 %v811
        %5253 = vmatprep.subr.mxu0 %v815
        %5254 = vmatpush1.msra.mxu0 %v814
        %5255 = vmatprep.subr.mxu0 %v818
        %5256 = vmatpush1.msra.mxu0 %v817
        %5257 = vmatprep.subr.mxu0 %v821
        %5258 = vmatpush1.msra.mxu0 %v820
        %5259 = vmatprep.subr.mxu0 %v824
        %5260 = vmatpush1.msra.mxu0 %v823
        %5261 = vmatprep.subr.mxu0 %v827
        %5262 = vmatpush1.msra.mxu0 %v826
        %5263 = vmatprep.subr.mxu0 %v830
        %5264 = vmatpush1.msra.mxu0 %v829
        %5265 = vmatprep.subr.mxu0 0.0
        %5266 = vmatpush1.msra.mxu0 0.0
        %5267 = vmatprep.subr.mxu0 0.0
        %5268 = vmatpush1.msra.mxu0 0.0
        %5269 = vmatprep.subr.mxu0 0.0
        %5270 = vmatpush1.msra.mxu0 0.0
        %5271 = vmatprep.subr.mxu0 0.0
        %5272 = vmatpush1.msra.mxu0 0.0
        %5273 = vmatprep.subr.mxu0 0.0
        %5274 = vmatpush1.msra.mxu0 0.0
        %5275 = vmatprep.subr.mxu0 0.0
        %5276 = vmatpush1.msra.mxu0 0.0
        %5277 = vmatprep.subr.mxu0 0.0
        %5278 = vmatpush1.msra.mxu0 0.0
        %5279 = vmatprep.subr.mxu0 0.0
        %5280 = vmatpush1.msra.mxu0 0.0
        %5281 = vmatprep.subr.mxu0 0.0
        %5282 = vmatpush1.msra.mxu0 0.0
        %5283 = vmatprep.subr.mxu0 0.0
        %5284 = vmatpush1.msra.mxu0 0.0
        %5285 = vmatprep.subr.mxu0 0.0
        %5286 = vmatpush1.msra.mxu0 0.0
        %5287 = vmatprep.subr.mxu0 0.0
        %5288 = vmatpush1.msra.mxu0 0.0
        %5289 = vmatprep.subr.mxu0 0.0
        %5290 = vmatpush1.msra.mxu0 0.0
        %5291 = vmatprep.subr.mxu0 0.0
        %5292 = vmatpush1.msra.mxu0 0.0
        %5293 = vmatprep.subr.mxu0 0.0
        %5294 = vmatpush1.msra.mxu0 0.0
        %5295 = vmatprep.subr.mxu0 0.0
        %5296 = vmatpush1.msra.mxu0 0.0
        %5297 = vmatprep.mubr.f32.mxu0 0.0
        %5298 = vmatmul.mubr.f32.gmra.mrb[0].mxu0 %v5090
        %v5299 = vpop.f32.mrb[0].mxu0
        %v5300 = vadd.f32 %v1296, %v5299
        %v5301 = vpop.f32.mrb[0].mxu0
        %v5302 = vadd.f32 %v1300, %v5301
        %5303 = vmatprep.mubr.f32.mxu0 0.0
        %5304 = vmatmul.mubr.f32.gmra.mrb[0].mxu0 %v5095
        %v5305 = vpop.f32.mrb[0].mxu0
        %v5306 = vadd.f32 %v1296, %v5305
        %v5307 = vpop.f32.mrb[0].mxu0
        %v5308 = vadd.f32 %v1300, %v5307
        %5309 = vmatprep.mubr.f32.mxu0 0.0
        %5310 = vmatmul.mubr.f32.gmra.mrb[0].mxu0 %v5100
        %v5311 = vpop.f32.mrb[0].mxu0
        %v5312 = vadd.f32 %v1296, %v5311
        %v5313 = vpop.f32.mrb[0].mxu0
        %v5314 = vadd.f32 %v1300, %v5313
        %5315 = vmatprep.mubr.f32.mxu0 0.0
        %5316 = vmatmul.mubr.f32.gmra.mrb[0].mxu0 %v5105
        %v5317 = vpop.f32.mrb[0].mxu0
        %v5318 = vadd.f32 %v1296, %v5317
        %v5319 = vpop.f32.mrb[0].mxu0
        %v5320 = vadd.f32 %v1300, %v5319
        %5321 = vmatprep.mubr.f32.mxu0 0.0
        %5322 = vmatmul.mubr.f32.gmra.mrb[0].mxu0 %v5110
        %v5323 = vpop.f32.mrb[0].mxu0
        %v5324 = vadd.f32 %v1296, %v5323
        %v5325 = vpop.f32.mrb[0].mxu0
        %v5326 = vadd.f32 %v1300, %v5325
        %5327 = vmatprep.mubr.f32.mxu0 0.0
        %5328 = vmatmul.mubr.f32.gmra.mrb[0].mxu0 %v5115
        %v5329 = vpop.f32.mrb[0].mxu0
        %v5330 = vadd.f32 %v1296, %v5329
        %v5331 = vpop.f32.mrb[0].mxu0
        %v5332 = vadd.f32 %v1300, %v5331
        %5333 = vmatprep.mubr.f32.mxu0 0.0
        %5334 = vmatmul.mubr.f32.gmra.mrb[0].mxu0 %v5120
        %v5335 = vpop.f32.mrb[0].mxu0
        %v5336 = vadd.f32 %v1296, %v5335
        %v5337 = vpop.f32.mrb[0].mxu0
        %v5338 = vadd.f32 %v1300, %v5337
        %5339 = vmatprep.mubr.f32.mxu0 0.0
        %5340 = vmatmul.mubr.f32.gmra.mrb[0].mxu0 %v5125
        %v5341 = vpop.f32.mrb[0].mxu0
        %v5342 = vadd.f32 %v1296, %v5341
        %v5343 = vpop.f32.mrb[0].mxu0
        %v5344 = vadd.f32 %v1300, %v5343
        %5345 = vmatprep.mubr.f32.mxu0 0.0
        %5346 = vmatmul.mubr.f32.gmra.mrb[0].mxu0 %v5195
        %v5347 = vpop.f32.mrb[0].mxu0
        %v5348 = vadd.f32 %v1296, %v5347
        %v5349 = vpop.f32.mrb[0].mxu0
        %v5350 = vadd.f32 %v1300, %v5349
        %5351 = vmatprep.mubr.f32.mxu0 0.0
        %5352 = vmatmul.mubr.f32.gmra.mrb[0].mxu0 %v5200
        %v5353 = vpop.f32.mrb[0].mxu0
        %v5354 = vadd.f32 %v1296, %v5353
        %v5355 = vpop.f32.mrb[0].mxu0
        %v5356 = vadd.f32 %v1300, %v5355
        %5357 = vmatprep.mubr.f32.mxu0 0.0
        %5358 = vmatmul.mubr.f32.gmra.mrb[0].mxu0 %v5205
        %v5359 = vpop.f32.mrb[0].mxu0
        %v5360 = vadd.f32 %v1296, %v5359
        %v5361 = vpop.f32.mrb[0].mxu0
        %v5362 = vadd.f32 %v1300, %v5361
        %5363 = vmatprep.mubr.f32.mxu0 0.0
        %5364 = vmatmul.mubr.f32.gmra.mrb[0].mxu0 %v5210
        %v5365 = vpop.f32.mrb[0].mxu0
        %v5366 = vadd.f32 %v1296, %v5365
        %v5367 = vpop.f32.mrb[0].mxu0
        %v5368 = vadd.f32 %v1300, %v5367
        %5369 = vmatprep.mubr.f32.mxu0 0.0
        %5370 = vmatmul.mubr.f32.gmra.mrb[0].mxu0 %v5215
        %v5371 = vpop.f32.mrb[0].mxu0
        %v5372 = vadd.f32 %v1296, %v5371
        %v5373 = vpop.f32.mrb[0].mxu0
        %v5374 = vadd.f32 %v1300, %v5373
        %5375 = vmatprep.mubr.f32.mxu0 0.0
        %5376 = vmatmul.mubr.f32.gmra.mrb[0].mxu0 %v5220
        %v5377 = vpop.f32.mrb[0].mxu0
        %v5378 = vadd.f32 %v1296, %v5377
        %v5379 = vpop.f32.mrb[0].mxu0
        %v5380 = vadd.f32 %v1300, %v5379
        %5381 = vmatprep.mubr.f32.mxu0 0.0
        %5382 = vmatmul.mubr.f32.gmra.mrb[0].mxu0 %v5225
        %v5383 = vpop.f32.mrb[0].mxu0
        %v5384 = vadd.f32 %v1296, %v5383
        %v5385 = vpop.f32.mrb[0].mxu0
        %v5386 = vadd.f32 %v1300, %v5385
        %5387 = vmatprep.mubr.f32.mxu0 0.0
        %5388 = vmatmul.mubr.f32.gmra.mrb[0].mxu0 %v5230
        %v5389 = vpop.f32.mrb[0].mxu0
        %v5390 = vadd.f32 %v1296, %v5389
        %v5391 = vpop.f32.mrb[0].mxu0
        %v5392 = vadd.f32 %v1300, %v5391
        %5393 = vdwg.mxu0
        %5394 = vmatprep.subr.mxu0 0.0
        %5395 = vmatpush1.msra.mxu0 %v786
        %5396 = vmatprep.subr.mxu0 0.0
        %5397 = vmatpush1.msra.mxu0 %v789
        %5398 = vmatprep.subr.mxu0 0.0
        %5399 = vmatpush1.msra.mxu0 %v792
        %5400 = vmatprep.subr.mxu0 0.0
        %5401 = vmatpush1.msra.mxu0 %v795
        %5402 = vmatprep.subr.mxu0 0.0
        %5403 = vmatpush1.msra.mxu0 %v798
        %5404 = vmatprep.subr.mxu0 0.0
        %5405 = vmatpush1.msra.mxu0 %v801
        %5406 = vmatprep.subr.mxu0 0.0
        %5407 = vmatpush1.msra.mxu0 %v804
        %5408 = vmatprep.subr.mxu0 0.0
        %5409 = vmatpush1.msra.mxu0 %v807
        %5410 = vmatprep.subr.mxu0 0.0
        %5411 = vmatpush1.msra.mxu0 %v810
        %5412 = vmatprep.subr.mxu0 0.0
        %5413 = vmatpush1.msra.mxu0 %v813
        %5414 = vmatprep.subr.mxu0 0.0
        %5415 = vmatpush1.msra.mxu0 %v816
        %5416 = vmatprep.subr.mxu0 0.0
        %5417 = vmatpush1.msra.mxu0 %v819
        %5418 = vmatprep.subr.mxu0 0.0
        %5419 = vmatpush1.msra.mxu0 %v822
        %5420 = vmatprep.subr.mxu0 0.0
        %5421 = vmatpush1.msra.mxu0 %v825
        %5422 = vmatprep.subr.mxu0 0.0
        %5423 = vmatpush1.msra.mxu0 %v828
        %5424 = vmatprep.subr.mxu0 0.0
        %5425 = vmatpush1.msra.mxu0 %v831
        %5426 = vmatprep.subr.mxu0 0.0
        %5427 = vmatpush1.msra.mxu0 0.0
        %5428 = vmatprep.subr.mxu0 0.0
        %5429 = vmatpush1.msra.mxu0 0.0
        %5430 = vmatprep.subr.mxu0 0.0
        %5431 = vmatpush1.msra.mxu0 0.0
        %5432 = vmatprep.subr.mxu0 0.0
        %5433 = vmatpush1.msra.mxu0 0.0
        %5434 = vmatprep.subr.mxu0 0.0
        %5435 = vmatpush1.msra.mxu0 0.0
        %5436 = vmatprep.subr.mxu0 0.0
        %5437 = vmatpush1.msra.mxu0 0.0
        %5438 = vmatprep.subr.mxu0 0.0
        %5439 = vmatpush1.msra.mxu0 0.0
        %5440 = vmatprep.subr.mxu0 0.0
        %5441 = vmatpush1.msra.mxu0 0.0
        %5442 = vmatprep.subr.mxu0 0.0
        %5443 = vmatpush1.msra.mxu0 0.0
        %5444 = vmatprep.subr.mxu0 0.0
        %5445 = vmatpush1.msra.mxu0 0.0
        %5446 = vmatprep.subr.mxu0 0.0
        %5447 = vmatpush1.msra.mxu0 0.0
        %5448 = vmatprep.subr.mxu0 0.0
        %5449 = vmatpush1.msra.mxu0 0.0
        %5450 = vmatprep.subr.mxu0 0.0
        %5451 = vmatpush1.msra.mxu0 0.0
        %5452 = vmatprep.subr.mxu0 0.0
        %5453 = vmatpush1.msra.mxu0 0.0
        %5454 = vmatprep.subr.mxu0 0.0
        %5455 = vmatpush1.msra.mxu0 0.0
        %5456 = vmatprep.subr.mxu0 0.0
        %5457 = vmatpush1.msra.mxu0 0.0
        %5458 = vmatprep.mubr.f32.mxu0 0.0
        %5459 = vmatmul.mubr.f32.gmra.mrb[0].mxu0 %v5090
        %v5460 = vpop.f32.mrb[0].mxu0
        %v5461 = vadd.f32 %v1304, %v5460
        %v5462 = vpop.f32.mrb[0].mxu0
        %5463 = vmatprep.mubr.f32.mxu0 0.0
        %5464 = vmatmul.mubr.f32.gmra.mrb[0].mxu0 %v5095
        %v5465 = vpop.f32.mrb[0].mxu0
        %v5466 = vadd.f32 %v1304, %v5465
        %v5467 = vpop.f32.mrb[0].mxu0
        %5468 = vmatprep.mubr.f32.mxu0 0.0
        %5469 = vmatmul.mubr.f32.gmra.mrb[0].mxu0 %v5100
        %v5470 = vpop.f32.mrb[0].mxu0
        %v5471 = vadd.f32 %v1304, %v5470
        %v5472 = vpop.f32.mrb[0].mxu0
        %5473 = vmatprep.mubr.f32.mxu0 0.0
        %5474 = vmatmul.mubr.f32.gmra.mrb[0].mxu0 %v5105
        %v5475 = vpop.f32.mrb[0].mxu0
        %v5476 = vadd.f32 %v1304, %v5475
        %v5477 = vpop.f32.mrb[0].mxu0
        %5478 = vmatprep.mubr.f32.mxu0 0.0
        %5479 = vmatmul.mubr.f32.gmra.mrb[0].mxu0 %v5110
        %v5480 = vpop.f32.mrb[0].mxu0
        %v5481 = vadd.f32 %v1304, %v5480
        %v5482 = vpop.f32.mrb[0].mxu0
        %5483 = vmatprep.mubr.f32.mxu0 0.0
        %5484 = vmatmul.mubr.f32.gmra.mrb[0].mxu0 %v5115
        %v5485 = vpop.f32.mrb[0].mxu0
        %v5486 = vadd.f32 %v1304, %v5485
        %v5487 = vpop.f32.mrb[0].mxu0
        %5488 = vmatprep.mubr.f32.mxu0 0.0
        %5489 = vmatmul.mubr.f32.gmra.mrb[0].mxu0 %v5120
        %v5490 = vpop.f32.mrb[0].mxu0
        %v5491 = vadd.f32 %v1304, %v5490
        %v5492 = vpop.f32.mrb[0].mxu0
        %5493 = vmatprep.mubr.f32.mxu0 0.0
        %5494 = vmatmul.mubr.f32.gmra.mrb[0].mxu0 %v5125
        %v5495 = vpop.f32.mrb[0].mxu0
        %v5496 = vadd.f32 %v1304, %v5495
        %v5497 = vpop.f32.mrb[0].mxu0
        %5498 = vmatprep.mubr.f32.mxu0 0.0
        %5499 = vmatmul.mubr.f32.gmra.mrb[0].mxu0 %v5195
        %v5500 = vpop.f32.mrb[0].mxu0
        %v5501 = vadd.f32 %v1304, %v5500
        %v5502 = vpop.f32.mrb[0].mxu0
        %5503 = vmatprep.mubr.f32.mxu0 0.0
        %5504 = vmatmul.mubr.f32.gmra.mrb[0].mxu0 %v5200
        %v5505 = vpop.f32.mrb[0].mxu0
        %v5506 = vadd.f32 %v1304, %v5505
        %v5507 = vpop.f32.mrb[0].mxu0
        %5508 = vmatprep.mubr.f32.mxu0 0.0
        %5509 = vmatmul.mubr.f32.gmra.mrb[0].mxu0 %v5205
        %v5510 = vpop.f32.mrb[0].mxu0
        %v5511 = vadd.f32 %v1304, %v5510
        %v5512 = vpop.f32.mrb[0].mxu0
        %5513 = vmatprep.mubr.f32.mxu0 0.0
        %5514 = vmatmul.mubr.f32.gmra.mrb[0].mxu0 %v5210
        %v5515 = vpop.f32.mrb[0].mxu0
        %v5516 = vadd.f32 %v1304, %v5515
        %v5517 = vpop.f32.mrb[0].mxu0
        %5518 = vmatprep.mubr.f32.mxu0 0.0
        %5519 = vmatmul.mubr.f32.gmra.mrb[0].mxu0 %v5215
        %v5520 = vpop.f32.mrb[0].mxu0
        %v5521 = vadd.f32 %v1304, %v5520
        %v5522 = vpop.f32.mrb[0].mxu0
        %5523 = vmatprep.mubr.f32.mxu0 0.0
        %5524 = vmatmul.mubr.f32.gmra.mrb[0].mxu0 %v5220
        %v5525 = vpop.f32.mrb[0].mxu0
        %v5526 = vadd.f32 %v1304, %v5525
        %v5527 = vpop.f32.mrb[0].mxu0
        %5528 = vmatprep.mubr.f32.mxu0 0.0
        %5529 = vmatmul.mubr.f32.gmra.mrb[0].mxu0 %v5225
        %v5530 = vpop.f32.mrb[0].mxu0
        %v5531 = vadd.f32 %v1304, %v5530
        %v5532 = vpop.f32.mrb[0].mxu0
        %5533 = vmatprep.mubr.f32.mxu0 0.0
        %5534 = vmatmul.mubr.f32.gmra.mrb[0].mxu0 %v5230
        %v5535 = vpop.f32.mrb[0].mxu0
        %v5536 = vadd.f32 %v1304, %v5535
        %v5537 = vpop.f32.mrb[0].mxu0
        %5538 = vdwg.mxu0
        %5539 = vmatprep.subr.mxu0 %v834
        %5540 = vmatpush1.msra.mxu0 %v833
        %5541 = vmatprep.subr.mxu0 %v837
        %5542 = vmatpush1.msra.mxu0 %v836
        %5543 = vmatprep.subr.mxu0 %v840
        %5544 = vmatpush1.msra.mxu0 %v839
        %5545 = vmatprep.subr.mxu0 %v843
        %5546 = vmatpush1.msra.mxu0 %v842
        %5547 = vmatprep.subr.mxu0 %v846
        %5548 = vmatpush1.msra.mxu0 %v845
        %5549 = vmatprep.subr.mxu0 %v849
        %5550 = vmatpush1.msra.mxu0 %v848
        %5551 = vmatprep.subr.mxu0 %v852
        %5552 = vmatpush1.msra.mxu0 %v851
        %5553 = vmatprep.subr.mxu0 %v855
        %5554 = vmatpush1.msra.mxu0 %v854
        %5555 = vmatprep.subr.mxu0 %v858
        %5556 = vmatpush1.msra.mxu0 %v857
        %5557 = vmatprep.subr.mxu0 %v861
        %5558 = vmatpush1.msra.mxu0 %v860
        %5559 = vmatprep.subr.mxu0 %v864
        %5560 = vmatpush1.msra.mxu0 %v863
        %5561 = vmatprep.subr.mxu0 %v867
        %5562 = vmatpush1.msra.mxu0 %v866
        %5563 = vmatprep.subr.mxu0 %v870
        %5564 = vmatpush1.msra.mxu0 %v869
        %5565 = vmatprep.subr.mxu0 %v873
        %5566 = vmatpush1.msra.mxu0 %v872
        %5567 = vmatprep.subr.mxu0 %v876
        %5568 = vmatpush1.msra.mxu0 %v875
        %5569 = vmatprep.subr.mxu0 %v879
        %5570 = vmatpush1.msra.mxu0 %v878
        %5571 = vmatprep.subr.mxu0 0.0
        %5572 = vmatpush1.msra.mxu0 0.0
        %5573 = vmatprep.subr.mxu0 0.0
        %5574 = vmatpush1.msra.mxu0 0.0
        %5575 = vmatprep.subr.mxu0 0.0
        %5576 = vmatpush1.msra.mxu0 0.0
        %5577 = vmatprep.subr.mxu0 0.0
        %5578 = vmatpush1.msra.mxu0 0.0
        %5579 = vmatprep.subr.mxu0 0.0
        %5580 = vmatpush1.msra.mxu0 0.0
        %5581 = vmatprep.subr.mxu0 0.0
        %5582 = vmatpush1.msra.mxu0 0.0
        %5583 = vmatprep.subr.mxu0 0.0
        %5584 = vmatpush1.msra.mxu0 0.0
        %5585 = vmatprep.subr.mxu0 0.0
        %5586 = vmatpush1.msra.mxu0 0.0
        %5587 = vmatprep.subr.mxu0 0.0
        %5588 = vmatpush1.msra.mxu0 0.0
        %5589 = vmatprep.subr.mxu0 0.0
        %5590 = vmatpush1.msra.mxu0 0.0
        %5591 = vmatprep.subr.mxu0 0.0
        %5592 = vmatpush1.msra.mxu0 0.0
        %5593 = vmatprep.subr.mxu0 0.0
        %5594 = vmatpush1.msra.mxu0 0.0
        %5595 = vmatprep.subr.mxu0 0.0
        %5596 = vmatpush1.msra.mxu0 0.0
        %5597 = vmatprep.subr.mxu0 0.0
        %5598 = vmatpush1.msra.mxu0 0.0
        %5599 = vmatprep.subr.mxu0 0.0
        %5600 = vmatpush1.msra.mxu0 0.0
        %5601 = vmatprep.subr.mxu0 0.0
        %5602 = vmatpush1.msra.mxu0 0.0
        %5603 = vmatprep.mubr.f32.mxu0 0.0
        %5604 = vmatmul.mubr.f32.gmra.mrb[0].mxu0 %v4862
        %v5605 = vpop.f32.mrb[0].mxu0
        %v5606 = vadd.f32 %v1618, %v5605
        %v5607 = vpop.f32.mrb[0].mxu0
        %v5608 = vadd.f32 %v1622, %v5607
        %5609 = vmatprep.mubr.f32.mxu0 0.0
        %5610 = vmatmul.mubr.f32.gmra.mrb[0].mxu0 %v4863
        %v5611 = vpop.f32.mrb[0].mxu0
        %v5612 = vadd.f32 %v1618, %v5611
        %v5613 = vpop.f32.mrb[0].mxu0
        %v5614 = vadd.f32 %v1622, %v5613
        %5615 = vmatprep.mubr.f32.mxu0 0.0
        %5616 = vmatmul.mubr.f32.gmra.mrb[0].mxu0 %v4864
        %v5617 = vpop.f32.mrb[0].mxu0
        %v5618 = vadd.f32 %v1618, %v5617
        %v5619 = vpop.f32.mrb[0].mxu0
        %v5620 = vadd.f32 %v1622, %v5619
        %5621 = vmatprep.mubr.f32.mxu0 0.0
        %5622 = vmatmul.mubr.f32.gmra.mrb[0].mxu0 %v4865
        %v5623 = vpop.f32.mrb[0].mxu0
        %v5624 = vadd.f32 %v1618, %v5623
        %v5625 = vpop.f32.mrb[0].mxu0
        %v5626 = vadd.f32 %v1622, %v5625
        %5627 = vmatprep.mubr.f32.mxu0 0.0
        %5628 = vmatmul.mubr.f32.gmra.mrb[0].mxu0 %v4866
        %v5629 = vpop.f32.mrb[0].mxu0
        %v5630 = vadd.f32 %v1618, %v5629
        %v5631 = vpop.f32.mrb[0].mxu0
        %v5632 = vadd.f32 %v1622, %v5631
        %5633 = vmatprep.mubr.f32.mxu0 0.0
        %5634 = vmatmul.mubr.f32.gmra.mrb[0].mxu0 %v4867
        %v5635 = vpop.f32.mrb[0].mxu0
        %v5636 = vadd.f32 %v1618, %v5635
        %v5637 = vpop.f32.mrb[0].mxu0
        %v5638 = vadd.f32 %v1622, %v5637
        %5639 = vmatprep.mubr.f32.mxu0 0.0
        %5640 = vmatmul.mubr.f32.gmra.mrb[0].mxu0 %v4868
        %v5641 = vpop.f32.mrb[0].mxu0
        %v5642 = vadd.f32 %v1618, %v5641
        %v5643 = vpop.f32.mrb[0].mxu0
        %v5644 = vadd.f32 %v1622, %v5643
        %5645 = vmatprep.mubr.f32.mxu0 0.0
        %5646 = vmatmul.mubr.f32.gmra.mrb[0].mxu0 %v4869
        %v5647 = vpop.f32.mrb[0].mxu0
        %v5648 = vadd.f32 %v1618, %v5647
        %v5649 = vpop.f32.mrb[0].mxu0
        %v5650 = vadd.f32 %v1622, %v5649
        %5651 = vmatprep.mubr.f32.mxu0 0.0
        %5652 = vmatmul.mubr.f32.gmra.mrb[0].mxu0 %v4870
        %v5653 = vpop.f32.mrb[0].mxu0
        %v5654 = vadd.f32 %v1618, %v5653
        %v5655 = vpop.f32.mrb[0].mxu0
        %v5656 = vadd.f32 %v1622, %v5655
        %5657 = vmatprep.mubr.f32.mxu0 0.0
        %5658 = vmatmul.mubr.f32.gmra.mrb[0].mxu0 %v4871
        %v5659 = vpop.f32.mrb[0].mxu0
        %v5660 = vadd.f32 %v1618, %v5659
        %v5661 = vpop.f32.mrb[0].mxu0
        %v5662 = vadd.f32 %v1622, %v5661
        %5663 = vmatprep.mubr.f32.mxu0 0.0
        %5664 = vmatmul.mubr.f32.gmra.mrb[0].mxu0 %v4872
        %v5665 = vpop.f32.mrb[0].mxu0
        %v5666 = vadd.f32 %v1618, %v5665
        %v5667 = vpop.f32.mrb[0].mxu0
        %v5668 = vadd.f32 %v1622, %v5667
        %5669 = vmatprep.mubr.f32.mxu0 0.0
        %5670 = vmatmul.mubr.f32.gmra.mrb[0].mxu0 %v4873
        %v5671 = vpop.f32.mrb[0].mxu0
        %v5672 = vadd.f32 %v1618, %v5671
        %v5673 = vpop.f32.mrb[0].mxu0
        %v5674 = vadd.f32 %v1622, %v5673
        %5675 = vmatprep.mubr.f32.mxu0 0.0
        %5676 = vmatmul.mubr.f32.gmra.mrb[0].mxu0 %v4874
        %v5677 = vpop.f32.mrb[0].mxu0
        %v5678 = vadd.f32 %v1618, %v5677
        %v5679 = vpop.f32.mrb[0].mxu0
        %v5680 = vadd.f32 %v1622, %v5679
        %5681 = vmatprep.mubr.f32.mxu0 0.0
        %5682 = vmatmul.mubr.f32.gmra.mrb[0].mxu0 %v4875
        %v5683 = vpop.f32.mrb[0].mxu0
        %v5684 = vadd.f32 %v1618, %v5683
        %v5685 = vpop.f32.mrb[0].mxu0
        %v5686 = vadd.f32 %v1622, %v5685
        %5687 = vmatprep.mubr.f32.mxu0 0.0
        %5688 = vmatmul.mubr.f32.gmra.mrb[0].mxu0 %v4876
        %v5689 = vpop.f32.mrb[0].mxu0
        %v5690 = vadd.f32 %v1618, %v5689
        %v5691 = vpop.f32.mrb[0].mxu0
        %v5692 = vadd.f32 %v1622, %v5691
        %5693 = vmatprep.mubr.f32.mxu0 0.0
        %5694 = vmatmul.mubr.f32.gmra.mrb[0].mxu0 %v4877
        %v5695 = vpop.f32.mrb[0].mxu0
        %v5696 = vadd.f32 %v1618, %v5695
        %v5697 = vpop.f32.mrb[0].mxu0
        %v5698 = vadd.f32 %v1622, %v5697
        %5699 = vdwg.mxu0
        %5700 = vmatprep.subr.mxu0 0.0
        %5701 = vmatpush1.msra.mxu0 %v835
        %5702 = vmatprep.subr.mxu0 0.0
        %5703 = vmatpush1.msra.mxu0 %v838
        %5704 = vmatprep.subr.mxu0 0.0
        %5705 = vmatpush1.msra.mxu0 %v841
        %5706 = vmatprep.subr.mxu0 0.0
        %5707 = vmatpush1.msra.mxu0 %v844
        %5708 = vmatprep.subr.mxu0 0.0
        %5709 = vmatpush1.msra.mxu0 %v847
        %5710 = vmatprep.subr.mxu0 0.0
        %5711 = vmatpush1.msra.mxu0 %v850
        %5712 = vmatprep.subr.mxu0 0.0
        %5713 = vmatpush1.msra.mxu0 %v853
        %5714 = vmatprep.subr.mxu0 0.0
        %5715 = vmatpush1.msra.mxu0 %v856
        %5716 = vmatprep.subr.mxu0 0.0
        %5717 = vmatpush1.msra.mxu0 %v859
        %5718 = vmatprep.subr.mxu0 0.0
        %5719 = vmatpush1.msra.mxu0 %v862
        %5720 = vmatprep.subr.mxu0 0.0
        %5721 = vmatpush1.msra.mxu0 %v865
        %5722 = vmatprep.subr.mxu0 0.0
        %5723 = vmatpush1.msra.mxu0 %v868
        %5724 = vmatprep.subr.mxu0 0.0
        %5725 = vmatpush1.msra.mxu0 %v871
        %5726 = vmatprep.subr.mxu0 0.0
        %5727 = vmatpush1.msra.mxu0 %v874
        %5728 = vmatprep.subr.mxu0 0.0
        %5729 = vmatpush1.msra.mxu0 %v877
        %5730 = vmatprep.subr.mxu0 0.0
        %5731 = vmatpush1.msra.mxu0 %v880
        %5732 = vmatprep.subr.mxu0 0.0
        %5733 = vmatpush1.msra.mxu0 0.0
        %5734 = vmatprep.subr.mxu0 0.0
        %5735 = vmatpush1.msra.mxu0 0.0
        %5736 = vmatprep.subr.mxu0 0.0
        %5737 = vmatpush1.msra.mxu0 0.0
        %5738 = vmatprep.subr.mxu0 0.0
        %5739 = vmatpush1.msra.mxu0 0.0
        %5740 = vmatprep.subr.mxu0 0.0
        %5741 = vmatpush1.msra.mxu0 0.0
        %5742 = vmatprep.subr.mxu0 0.0
        %5743 = vmatpush1.msra.mxu0 0.0
        %5744 = vmatprep.subr.mxu0 0.0
        %5745 = vmatpush1.msra.mxu0 0.0
        %5746 = vmatprep.subr.mxu0 0.0
        %5747 = vmatpush1.msra.mxu0 0.0
        %5748 = vmatprep.subr.mxu0 0.0
        %5749 = vmatpush1.msra.mxu0 0.0
        %5750 = vmatprep.subr.mxu0 0.0
        %5751 = vmatpush1.msra.mxu0 0.0
        %5752 = vmatprep.subr.mxu0 0.0
        %5753 = vmatpush1.msra.mxu0 0.0
        %5754 = vmatprep.subr.mxu0 0.0
        %5755 = vmatpush1.msra.mxu0 0.0
        %5756 = vmatprep.subr.mxu0 0.0
        %5757 = vmatpush1.msra.mxu0 0.0
        %5758 = vmatprep.subr.mxu0 0.0
        %5759 = vmatpush1.msra.mxu0 0.0
        %5760 = vmatprep.subr.mxu0 0.0
        %5761 = vmatpush1.msra.mxu0 0.0
        %5762 = vmatprep.subr.mxu0 0.0
        %5763 = vmatpush1.msra.mxu0 0.0
        %5764 = vmatprep.mubr.f32.mxu0 0.0
        %5765 = vmatmul.mubr.f32.gmra.mrb[0].mxu0 %v4862
        %v5766 = vpop.f32.mrb[0].mxu0
        %v5767 = vadd.f32 %v1626, %v5766
        %v5768 = vpop.f32.mrb[0].mxu0
        %5769 = vmatprep.mubr.f32.mxu0 0.0
        %5770 = vmatmul.mubr.f32.gmra.mrb[0].mxu0 %v4863
        %v5771 = vpop.f32.mrb[0].mxu0
        %v5772 = vadd.f32 %v1626, %v5771
        %v5773 = vpop.f32.mrb[0].mxu0
        %5774 = vmatprep.mubr.f32.mxu0 0.0
        %5775 = vmatmul.mubr.f32.gmra.mrb[0].mxu0 %v4864
        %v5776 = vpop.f32.mrb[0].mxu0
        %v5777 = vadd.f32 %v1626, %v5776
        %v5778 = vpop.f32.mrb[0].mxu0
        %5779 = vmatprep.mubr.f32.mxu0 0.0
        %5780 = vmatmul.mubr.f32.gmra.mrb[0].mxu0 %v4865
        %v5781 = vpop.f32.mrb[0].mxu0
        %v5782 = vadd.f32 %v1626, %v5781
        %v5783 = vpop.f32.mrb[0].mxu0
        %5784 = vmatprep.mubr.f32.mxu0 0.0
        %5785 = vmatmul.mubr.f32.gmra.mrb[0].mxu0 %v4866
        %v5786 = vpop.f32.mrb[0].mxu0
        %v5787 = vadd.f32 %v1626, %v5786
        %v5788 = vpop.f32.mrb[0].mxu0
        %5789 = vmatprep.mubr.f32.mxu0 0.0
        %5790 = vmatmul.mubr.f32.gmra.mrb[0].mxu0 %v4867
        %v5791 = vpop.f32.mrb[0].mxu0
        %v5792 = vadd.f32 %v1626, %v5791
        %v5793 = vpop.f32.mrb[0].mxu0
        %5794 = vmatprep.mubr.f32.mxu0 0.0
        %5795 = vmatmul.mubr.f32.gmra.mrb[0].mxu0 %v4868
        %v5796 = vpop.f32.mrb[0].mxu0
        %v5797 = vadd.f32 %v1626, %v5796
        %v5798 = vpop.f32.mrb[0].mxu0
        %5799 = vmatprep.mubr.f32.mxu0 0.0
        %5800 = vmatmul.mubr.f32.gmra.mrb[0].mxu0 %v4869
        %v5801 = vpop.f32.mrb[0].mxu0
        %v5802 = vadd.f32 %v1626, %v5801
        %v5803 = vpop.f32.mrb[0].mxu0
        %5804 = vmatprep.mubr.f32.mxu0 0.0
        %5805 = vmatmul.mubr.f32.gmra.mrb[0].mxu0 %v4870
        %v5806 = vpop.f32.mrb[0].mxu0
        %v5807 = vadd.f32 %v1626, %v5806
        %v5808 = vpop.f32.mrb[0].mxu0
        %5809 = vmatprep.mubr.f32.mxu0 0.0
        %5810 = vmatmul.mubr.f32.gmra.mrb[0].mxu0 %v4871
        %v5811 = vpop.f32.mrb[0].mxu0
        %v5812 = vadd.f32 %v1626, %v5811
        %v5813 = vpop.f32.mrb[0].mxu0
        %5814 = vmatprep.mubr.f32.mxu0 0.0
        %5815 = vmatmul.mubr.f32.gmra.mrb[0].mxu0 %v4872
        %v5816 = vpop.f32.mrb[0].mxu0
        %v5817 = vadd.f32 %v1626, %v5816
        %v5818 = vpop.f32.mrb[0].mxu0
        %5819 = vmatprep.mubr.f32.mxu0 0.0
        %5820 = vmatmul.mubr.f32.gmra.mrb[0].mxu0 %v4873
        %v5821 = vpop.f32.mrb[0].mxu0
        %v5822 = vadd.f32 %v1626, %v5821
        %v5823 = vpop.f32.mrb[0].mxu0
        %5824 = vmatprep.mubr.f32.mxu0 0.0
        %5825 = vmatmul.mubr.f32.gmra.mrb[0].mxu0 %v4874
        %v5826 = vpop.f32.mrb[0].mxu0
        %v5827 = vadd.f32 %v1626, %v5826
        %v5828 = vpop.f32.mrb[0].mxu0
        %5829 = vmatprep.mubr.f32.mxu0 0.0
        %5830 = vmatmul.mubr.f32.gmra.mrb[0].mxu0 %v4875
        %v5831 = vpop.f32.mrb[0].mxu0
        %v5832 = vadd.f32 %v1626, %v5831
        %v5833 = vpop.f32.mrb[0].mxu0
        %5834 = vmatprep.mubr.f32.mxu0 0.0
        %5835 = vmatmul.mubr.f32.gmra.mrb[0].mxu0 %v4876
        %v5836 = vpop.f32.mrb[0].mxu0
        %v5837 = vadd.f32 %v1626, %v5836
        %v5838 = vpop.f32.mrb[0].mxu0
        %5839 = vmatprep.mubr.f32.mxu0 0.0
        %5840 = vmatmul.mubr.f32.gmra.mrb[0].mxu0 %v4877
        %v5841 = vpop.f32.mrb[0].mxu0
        %v5842 = vadd.f32 %v1626, %v5841
        %v5843 = vpop.f32.mrb[0].mxu0
        %5844 = vdwg.mxu0
        %v5845 = vadd.f32 %v5300, %v5606
        %v5846 = vadd.f32 %v5306, %v5612
        %v5847 = vadd.f32 %v5312, %v5618
        %v5848 = vadd.f32 %v5318, %v5624
        %v5849 = vadd.f32 %v5324, %v5630
        %v5850 = vadd.f32 %v5330, %v5636
        %v5851 = vadd.f32 %v5336, %v5642
        %v5852 = vadd.f32 %v5342, %v5648
        %v5853 = vadd.f32 %v5348, %v5654
        %v5854 = vadd.f32 %v5354, %v5660
        %v5855 = vadd.f32 %v5360, %v5666
        %v5856 = vadd.f32 %v5366, %v5672
        %v5857 = vadd.f32 %v5372, %v5678
        %v5858 = vadd.f32 %v5378, %v5684
        %v5859 = vadd.f32 %v5384, %v5690
        %v5860 = vadd.f32 %v5390, %v5696
        %v5861 = vxor.u32 %v5845, 2147483648
        %v5862 = vxor.u32 %v5846, 2147483648
        %v5863 = vxor.u32 %v5847, 2147483648
        %v5864 = vxor.u32 %v5848, 2147483648
        %v5865 = vxor.u32 %v5849, 2147483648
        %v5866 = vxor.u32 %v5850, 2147483648
        %v5867 = vxor.u32 %v5851, 2147483648
        %v5868 = vxor.u32 %v5852, 2147483648
        %v5869 = vxor.u32 %v5853, 2147483648
        %v5870 = vxor.u32 %v5854, 2147483648
        %v5871 = vxor.u32 %v5855, 2147483648
        %v5872 = vxor.u32 %v5856, 2147483648
        %v5873 = vxor.u32 %v5857, 2147483648
        %v5874 = vxor.u32 %v5858, 2147483648
        %v5875 = vxor.u32 %v5859, 2147483648
        %v5876 = vxor.u32 %v5860, 2147483648
        %v5877 = vmul.f32 %v5861, 1.442695
        %v5878 = vpow.pop %v5877
        %v5879 = vmul.f32 %v5862, 1.442695
        %v5880 = vpow.pop %v5879
        %v5881 = vmul.f32 %v5863, 1.442695
        %v5882 = vpow.pop %v5881
        %v5883 = vmul.f32 %v5864, 1.442695
        %v5884 = vpow.pop %v5883
        %v5885 = vmul.f32 %v5865, 1.442695
        %v5886 = vpow.pop %v5885
        %v5887 = vmul.f32 %v5866, 1.442695
        %v5888 = vpow.pop %v5887
        %v5889 = vmul.f32 %v5867, 1.442695
        %v5890 = vpow.pop %v5889
        %v5891 = vmul.f32 %v5868, 1.442695
        %v5892 = vpow.pop %v5891
        %v5893 = vmul.f32 %v5869, 1.442695
        %v5894 = vpow.pop %v5893
        %v5895 = vmul.f32 %v5870, 1.442695
        %v5896 = vpow.pop %v5895
        %v5897 = vmul.f32 %v5871, 1.442695
        %v5898 = vpow.pop %v5897
        %v5899 = vmul.f32 %v5872, 1.442695
        %v5900 = vpow.pop %v5899
        %v5901 = vmul.f32 %v5873, 1.442695
        %v5902 = vpow.pop %v5901
        %v5903 = vmul.f32 %v5874, 1.442695
        %v5904 = vpow.pop %v5903
        %v5905 = vmul.f32 %v5875, 1.442695
        %v5906 = vpow.pop %v5905
        %v5907 = vmul.f32 %v5876, 1.442695
        %v5908 = vpow.pop %v5907
        %v5909 = vadd.f32 %v5878, 1.0
        %v5910 = vadd.f32 %v5880, 1.0
        %v5911 = vadd.f32 %v5882, 1.0
        %v5912 = vadd.f32 %v5884, 1.0
        %v5913 = vadd.f32 %v5886, 1.0
        %v5914 = vadd.f32 %v5888, 1.0
        %v5915 = vadd.f32 %v5890, 1.0
        %v5916 = vadd.f32 %v5892, 1.0
        %v5917 = vadd.f32 %v5894, 1.0
        %v5918 = vadd.f32 %v5896, 1.0
        %v5919 = vadd.f32 %v5898, 1.0
        %v5920 = vadd.f32 %v5900, 1.0
        %v5921 = vadd.f32 %v5902, 1.0
        %v5922 = vadd.f32 %v5904, 1.0
        %v5923 = vadd.f32 %v5906, 1.0
        %v5924 = vadd.f32 %v5908, 1.0
        %v5925 = vrcp.pop %v5909
        %v5926 = vmul.f32 1.0, %v5925
        %v5927 = vrcp.pop %v5910
        %v5928 = vmul.f32 1.0, %v5927
        %v5929 = vrcp.pop %v5911
        %v5930 = vmul.f32 1.0, %v5929
        %v5931 = vrcp.pop %v5912
        %v5932 = vmul.f32 1.0, %v5931
        %v5933 = vrcp.pop %v5913
        %v5934 = vmul.f32 1.0, %v5933
        %v5935 = vrcp.pop %v5914
        %v5936 = vmul.f32 1.0, %v5935
        %v5937 = vrcp.pop %v5915
        %v5938 = vmul.f32 1.0, %v5937
        %v5939 = vrcp.pop %v5916
        %v5940 = vmul.f32 1.0, %v5939
        %v5941 = vrcp.pop %v5917
        %v5942 = vmul.f32 1.0, %v5941
        %v5943 = vrcp.pop %v5918
        %v5944 = vmul.f32 1.0, %v5943
        %v5945 = vrcp.pop %v5919
        %v5946 = vmul.f32 1.0, %v5945
        %v5947 = vrcp.pop %v5920
        %v5948 = vmul.f32 1.0, %v5947
        %v5949 = vrcp.pop %v5921
        %v5950 = vmul.f32 1.0, %v5949
        %v5951 = vrcp.pop %v5922
        %v5952 = vmul.f32 1.0, %v5951
        %v5953 = vrcp.pop %v5923
        %v5954 = vmul.f32 1.0, %v5953
        %v5955 = vrcp.pop %v5924
        %v5956 = vmul.f32 1.0, %v5955
        %v5957 = vadd.f32 %v5302, %v5608
        %v5958 = vadd.f32 %v5308, %v5614
        %v5959 = vadd.f32 %v5314, %v5620
        %v5960 = vadd.f32 %v5320, %v5626
        %v5961 = vadd.f32 %v5326, %v5632
        %v5962 = vadd.f32 %v5332, %v5638
        %v5963 = vadd.f32 %v5338, %v5644
        %v5964 = vadd.f32 %v5344, %v5650
        %v5965 = vadd.f32 %v5350, %v5656
        %v5966 = vadd.f32 %v5356, %v5662
        %v5967 = vadd.f32 %v5362, %v5668
        %v5968 = vadd.f32 %v5368, %v5674
        %v5969 = vadd.f32 %v5374, %v5680
        %v5970 = vadd.f32 %v5380, %v5686
        %v5971 = vadd.f32 %v5386, %v5692
        %v5972 = vadd.f32 %v5392, %v5698
        %v5973 = vxor.u32 %v5957, 2147483648
        %v5974 = vxor.u32 %v5958, 2147483648
        %v5975 = vxor.u32 %v5959, 2147483648
        %v5976 = vxor.u32 %v5960, 2147483648
        %v5977 = vxor.u32 %v5961, 2147483648
        %v5978 = vxor.u32 %v5962, 2147483648
        %v5979 = vxor.u32 %v5963, 2147483648
        %v5980 = vxor.u32 %v5964, 2147483648
        %v5981 = vxor.u32 %v5965, 2147483648
        %v5982 = vxor.u32 %v5966, 2147483648
        %v5983 = vxor.u32 %v5967, 2147483648
        %v5984 = vxor.u32 %v5968, 2147483648
        %v5985 = vxor.u32 %v5969, 2147483648
        %v5986 = vxor.u32 %v5970, 2147483648
        %v5987 = vxor.u32 %v5971, 2147483648
        %v5988 = vxor.u32 %v5972, 2147483648
        %v5989 = vmul.f32 %v5973, 1.442695
        %v5990 = vpow.pop %v5989
        %v5991 = vmul.f32 %v5974, 1.442695
        %v5992 = vpow.pop %v5991
        %v5993 = vmul.f32 %v5975, 1.442695
        %v5994 = vpow.pop %v5993
        %v5995 = vmul.f32 %v5976, 1.442695
        %v5996 = vpow.pop %v5995
        %v5997 = vmul.f32 %v5977, 1.442695
        %v5998 = vpow.pop %v5997
        %v5999 = vmul.f32 %v5978, 1.442695
        %v6000 = vpow.pop %v5999
        %v6001 = vmul.f32 %v5979, 1.442695
        %v6002 = vpow.pop %v6001
        %v6003 = vmul.f32 %v5980, 1.442695
        %v6004 = vpow.pop %v6003
        %v6005 = vmul.f32 %v5981, 1.442695
        %v6006 = vpow.pop %v6005
        %v6007 = vmul.f32 %v5982, 1.442695
        %v6008 = vpow.pop %v6007
        %v6009 = vmul.f32 %v5983, 1.442695
        %v6010 = vpow.pop %v6009
        %v6011 = vmul.f32 %v5984, 1.442695
        %v6012 = vpow.pop %v6011
        %v6013 = vmul.f32 %v5985, 1.442695
        %v6014 = vpow.pop %v6013
        %v6015 = vmul.f32 %v5986, 1.442695
        %v6016 = vpow.pop %v6015
        %v6017 = vmul.f32 %v5987, 1.442695
        %v6018 = vpow.pop %v6017
        %v6019 = vmul.f32 %v5988, 1.442695
        %v6020 = vpow.pop %v6019
        %v6021 = vadd.f32 %v5990, 1.0
        %v6022 = vadd.f32 %v5992, 1.0
        %v6023 = vadd.f32 %v5994, 1.0
        %v6024 = vadd.f32 %v5996, 1.0
        %v6025 = vadd.f32 %v5998, 1.0
        %v6026 = vadd.f32 %v6000, 1.0
        %v6027 = vadd.f32 %v6002, 1.0
        %v6028 = vadd.f32 %v6004, 1.0
        %v6029 = vadd.f32 %v6006, 1.0
        %v6030 = vadd.f32 %v6008, 1.0
        %v6031 = vadd.f32 %v6010, 1.0
        %v6032 = vadd.f32 %v6012, 1.0
        %v6033 = vadd.f32 %v6014, 1.0
        %v6034 = vadd.f32 %v6016, 1.0
        %v6035 = vadd.f32 %v6018, 1.0
        %v6036 = vadd.f32 %v6020, 1.0
        %v6037 = vrcp.pop %v6021
        %v6038 = vmul.f32 1.0, %v6037
        %v6039 = vrcp.pop %v6022
        %v6040 = vmul.f32 1.0, %v6039
        %v6041 = vrcp.pop %v6023
        %v6042 = vmul.f32 1.0, %v6041
        %v6043 = vrcp.pop %v6024
        %v6044 = vmul.f32 1.0, %v6043
        %v6045 = vrcp.pop %v6025
        %v6046 = vmul.f32 1.0, %v6045
        %v6047 = vrcp.pop %v6026
        %v6048 = vmul.f32 1.0, %v6047
        %v6049 = vrcp.pop %v6027
        %v6050 = vmul.f32 1.0, %v6049
        %v6051 = vrcp.pop %v6028
        %v6052 = vmul.f32 1.0, %v6051
        %v6053 = vrcp.pop %v6029
        %v6054 = vmul.f32 1.0, %v6053
        %v6055 = vrcp.pop %v6030
        %v6056 = vmul.f32 1.0, %v6055
        %v6057 = vrcp.pop %v6031
        %v6058 = vmul.f32 1.0, %v6057
        %v6059 = vrcp.pop %v6032
        %v6060 = vmul.f32 1.0, %v6059
        %v6061 = vrcp.pop %v6033
        %v6062 = vmul.f32 1.0, %v6061
        %v6063 = vrcp.pop %v6034
        %v6064 = vmul.f32 1.0, %v6063
        %v6065 = vrcp.pop %v6035
        %v6066 = vmul.f32 1.0, %v6065
        %v6067 = vrcp.pop %v6036
        %v6068 = vmul.f32 1.0, %v6067
        %v6069 = vmul.f32 %v5926, %v5767
        %v6070 = vmul.f32 %v5928, %v5772
        %v6071 = vmul.f32 %v5930, %v5777
        %v6072 = vmul.f32 %v5932, %v5782
        %v6073 = vmul.f32 %v5934, %v5787
        %v6074 = vmul.f32 %v5936, %v5792
        %v6075 = vmul.f32 %v5938, %v5797
        %v6076 = vmul.f32 %v5940, %v5802
        %v6077 = vmul.f32 %v5942, %v5807
        %v6078 = vmul.f32 %v5944, %v5812
        %v6079 = vmul.f32 %v5946, %v5817
        %v6080 = vmul.f32 %v5948, %v5822
        %v6081 = vmul.f32 %v5950, %v5827
        %v6082 = vmul.f32 %v5952, %v5832
        %v6083 = vmul.f32 %v5954, %v5837
        %v6084 = vmul.f32 %v5956, %v5842
        %v6085 = vadd.f32 %v5461, %v6069
        %v6086 = vadd.f32 %v5466, %v6070
        %v6087 = vadd.f32 %v5471, %v6071
        %v6088 = vadd.f32 %v5476, %v6072
        %v6089 = vadd.f32 %v5481, %v6073
        %v6090 = vadd.f32 %v5486, %v6074
        %v6091 = vadd.f32 %v5491, %v6075
        %v6092 = vadd.f32 %v5496, %v6076
        %v6093 = vadd.f32 %v5501, %v6077
        %v6094 = vadd.f32 %v5506, %v6078
        %v6095 = vadd.f32 %v5511, %v6079
        %v6096 = vadd.f32 %v5516, %v6080
        %v6097 = vadd.f32 %v5521, %v6081
        %v6098 = vadd.f32 %v5526, %v6082
        %v6099 = vadd.f32 %v5531, %v6083
        %v6100 = vadd.f32 %v5536, %v6084
        %v6101 = vtanh.pop %v6085
        %v6102 = vtanh.pop %v6086
        %v6103 = vtanh.pop %v6087
        %v6104 = vtanh.pop %v6088
        %v6105 = vtanh.pop %v6089
        %v6106 = vtanh.pop %v6090
        %v6107 = vtanh.pop %v6091
        %v6108 = vtanh.pop %v6092
        %v6109 = vtanh.pop %v6093
        %v6110 = vtanh.pop %v6094
        %v6111 = vtanh.pop %v6095
        %v6112 = vtanh.pop %v6096
        %v6113 = vtanh.pop %v6097
        %v6114 = vtanh.pop %v6098
        %v6115 = vtanh.pop %v6099
        %v6116 = vtanh.pop %v6100
        %v6117 = vsub.f32 1.0, %v6038
        %v6118 = vsub.f32 1.0, %v6040
        %v6119 = vsub.f32 1.0, %v6042
        %v6120 = vsub.f32 1.0, %v6044
        %v6121 = vsub.f32 1.0, %v6046
        %v6122 = vsub.f32 1.0, %v6048
        %v6123 = vsub.f32 1.0, %v6050
        %v6124 = vsub.f32 1.0, %v6052
        %v6125 = vsub.f32 1.0, %v6054
        %v6126 = vsub.f32 1.0, %v6056
        %v6127 = vsub.f32 1.0, %v6058
        %v6128 = vsub.f32 1.0, %v6060
        %v6129 = vsub.f32 1.0, %v6062
        %v6130 = vsub.f32 1.0, %v6064
        %v6131 = vsub.f32 1.0, %v6066
        %v6132 = vsub.f32 1.0, %v6068
        %v6133 = vmul.f32 %v6117, %v6101
        %v6134 = vmul.f32 %v6118, %v6102
        %v6135 = vmul.f32 %v6119, %v6103
        %v6136 = vmul.f32 %v6120, %v6104
        %v6137 = vmul.f32 %v6121, %v6105
        %v6138 = vmul.f32 %v6122, %v6106
        %v6139 = vmul.f32 %v6123, %v6107
        %v6140 = vmul.f32 %v6124, %v6108
        %v6141 = vmul.f32 %v6125, %v6109
        %v6142 = vmul.f32 %v6126, %v6110
        %v6143 = vmul.f32 %v6127, %v6111
        %v6144 = vmul.f32 %v6128, %v6112
        %v6145 = vmul.f32 %v6129, %v6113
        %v6146 = vmul.f32 %v6130, %v6114
        %v6147 = vmul.f32 %v6131, %v6115
        %v6148 = vmul.f32 %v6132, %v6116
        %v6149 = vmul.f32 %v6038, %v4862
        %v6150 = vmul.f32 %v6040, %v4863
        %v6151 = vmul.f32 %v6042, %v4864
        %v6152 = vmul.f32 %v6044, %v4865
        %v6153 = vmul.f32 %v6046, %v4866
        %v6154 = vmul.f32 %v6048, %v4867
        %v6155 = vmul.f32 %v6050, %v4868
        %v6156 = vmul.f32 %v6052, %v4869
        %v6157 = vmul.f32 %v6054, %v4870
        %v6158 = vmul.f32 %v6056, %v4871
        %v6159 = vmul.f32 %v6058, %v4872
        %v6160 = vmul.f32 %v6060, %v4873
        %v6161 = vmul.f32 %v6062, %v4874
        %v6162 = vmul.f32 %v6064, %v4875
        %v6163 = vmul.f32 %v6066, %v4876
        %v6164 = vmul.f32 %v6068, %v4877
        %v6165 = vadd.f32 %v6133, %v6149
        %v6166 = vadd.f32 %v6134, %v6150
        %v6167 = vadd.f32 %v6135, %v6151
        %v6168 = vadd.f32 %v6136, %v6152
        %v6169 = vadd.f32 %v6137, %v6153
        %v6170 = vadd.f32 %v6138, %v6154
        %v6171 = vadd.f32 %v6139, %v6155
        %v6172 = vadd.f32 %v6140, %v6156
        %v6173 = vadd.f32 %v6141, %v6157
        %v6174 = vadd.f32 %v6142, %v6158
        %v6175 = vadd.f32 %v6143, %v6159
        %v6176 = vadd.f32 %v6144, %v6160
        %v6177 = vadd.f32 %v6145, %v6161
        %v6178 = vadd.f32 %v6146, %v6162
        %v6179 = vadd.f32 %v6147, %v6163
        %v6180 = vadd.f32 %v6148, %v6164
        %6181 = vst [vmem:[#allocation2] sm:$0xff] %v6165
        %6182 = vst [vmem:[#allocation2 + $0x8] sm:$0xff] %v6166
        %6183 = vst [vmem:[#allocation2 + $0x10] sm:$0xff] %v6167
        %6184 = vst [vmem:[#allocation2 + $0x18] sm:$0xff] %v6168
        %6185 = vst [vmem:[#allocation2 + $0x20] sm:$0xff] %v6169
        %6186 = vst [vmem:[#allocation2 + $0x28] sm:$0xff] %v6170
        %6187 = vst [vmem:[#allocation2 + $0x30] sm:$0xff] %v6171
        %6188 = vst [vmem:[#allocation2 + $0x38] sm:$0xff] %v6172
        %6189 = vst [vmem:[#allocation2 + $0x40] sm:$0xff] %v6173
        %6190 = vst [vmem:[#allocation2 + $0x48] sm:$0xff] %v6174
        %6191 = vst [vmem:[#allocation2 + $0x50] sm:$0xff] %v6175
        %6192 = vst [vmem:[#allocation2 + $0x58] sm:$0xff] %v6176
        %6193 = vst [vmem:[#allocation2 + $0x60] sm:$0xff] %v6177
        %6194 = vst [vmem:[#allocation2 + $0x68] sm:$0xff] %v6178
        %6195 = vst [vmem:[#allocation2 + $0x70] sm:$0xff] %v6179
        %6196 = vst [vmem:[#allocation2 + $0x78] sm:$0xff] %v6180
        %v6197 = vld [vmem:[#allocation16] sm:$0xff]
        %v6198 = vld [vmem:[#allocation16 + $0x8] sm:$0xff]
        %v6199 = vld [vmem:[#allocation16 + $0x10] sm:$0xff]
        %v6200 = vld [vmem:[#allocation16 + $0x18] sm:$0xff]
        %v6201 = vld [vmem:[#allocation16 + $0x20] sm:$0xff]
        %v6202 = vld [vmem:[#allocation16 + $0x28] sm:$0xff]
        %v6203 = vld [vmem:[#allocation16 + $0x30] sm:$0xff]
        %v6204 = vld [vmem:[#allocation16 + $0x38] sm:$0xff]
        %v6205 = vld [vmem:[#allocation16 + $0x40] sm:$0xff]
        %v6206 = vld [vmem:[#allocation16 + $0x48] sm:$0xff]
        %v6207 = vld [vmem:[#allocation16 + $0x50] sm:$0xff]
        %v6208 = vld [vmem:[#allocation16 + $0x58] sm:$0xff]
        %v6209 = vld [vmem:[#allocation16 + $0x60] sm:$0xff]
        %v6210 = vld [vmem:[#allocation16 + $0x68] sm:$0xff]
        %v6211 = vld [vmem:[#allocation16 + $0x70] sm:$0xff]
        %v6212 = vld [vmem:[#allocation16 + $0x78] sm:$0xff]
        %v6213 = vld [vmem:[%s10] sm:$0x1]
        %v6215 = vlaneseq
        %v6216 = vshrl.u32 %v6215, 7
        %v6217 = vsub.s32 0, %v6216
        %v6218 = vrot.slane %v6213, %v6217
        %6220 = vmatprep.subr.mxu0 0.0
        %6221 = vmatpush1.msra.mxu0 %v6197
        %6222 = vmatprep.subr.mxu0 0.0
        %6223 = vmatpush1.msra.mxu0 %v6198
        %6224 = vmatprep.subr.mxu0 0.0
        %6225 = vmatpush1.msra.mxu0 %v6199
        %6226 = vmatprep.subr.mxu0 0.0
        %6227 = vmatpush1.msra.mxu0 %v6200
        %6228 = vmatprep.subr.mxu0 0.0
        %6229 = vmatpush1.msra.mxu0 %v6201
        %6230 = vmatprep.subr.mxu0 0.0
        %6231 = vmatpush1.msra.mxu0 %v6202
        %6232 = vmatprep.subr.mxu0 0.0
        %6233 = vmatpush1.msra.mxu0 %v6203
        %6234 = vmatprep.subr.mxu0 0.0
        %6235 = vmatpush1.msra.mxu0 %v6204
        %6236 = vmatprep.subr.mxu0 0.0
        %6237 = vmatpush1.msra.mxu0 %v6205
        %6238 = vmatprep.subr.mxu0 0.0
        %6239 = vmatpush1.msra.mxu0 %v6206
        %6240 = vmatprep.subr.mxu0 0.0
        %6241 = vmatpush1.msra.mxu0 %v6207
        %6242 = vmatprep.subr.mxu0 0.0
        %6243 = vmatpush1.msra.mxu0 %v6208
        %6244 = vmatprep.subr.mxu0 0.0
        %6245 = vmatpush1.msra.mxu0 %v6209
        %6246 = vmatprep.subr.mxu0 0.0
        %6247 = vmatpush1.msra.mxu0 %v6210
        %6248 = vmatprep.subr.mxu0 0.0
        %6249 = vmatpush1.msra.mxu0 %v6211
        %6250 = vmatprep.subr.mxu0 0.0
        %6251 = vmatpush1.msra.mxu0 %v6212
        %6252 = vmatprep.subr.mxu0 0.0
        %6253 = vmatpush1.msra.mxu0 0.0
        %6254 = vmatprep.subr.mxu0 0.0
        %6255 = vmatpush1.msra.mxu0 0.0
        %6256 = vmatprep.subr.mxu0 0.0
        %6257 = vmatpush1.msra.mxu0 0.0
        %6258 = vmatprep.subr.mxu0 0.0
        %6259 = vmatpush1.msra.mxu0 0.0
        %6260 = vmatprep.subr.mxu0 0.0
        %6261 = vmatpush1.msra.mxu0 0.0
        %6262 = vmatprep.subr.mxu0 0.0
        %6263 = vmatpush1.msra.mxu0 0.0
        %6264 = vmatprep.subr.mxu0 0.0
        %6265 = vmatpush1.msra.mxu0 0.0
        %6266 = vmatprep.subr.mxu0 0.0
        %6267 = vmatpush1.msra.mxu0 0.0
        %6268 = vmatprep.subr.mxu0 0.0
        %6269 = vmatpush1.msra.mxu0 0.0
        %6270 = vmatprep.subr.mxu0 0.0
        %6271 = vmatpush1.msra.mxu0 0.0
        %6272 = vmatprep.subr.mxu0 0.0
        %6273 = vmatpush1.msra.mxu0 0.0
        %6274 = vmatprep.subr.mxu0 0.0
        %6275 = vmatpush1.msra.mxu0 0.0
        %6276 = vmatprep.subr.mxu0 0.0
        %6277 = vmatpush1.msra.mxu0 0.0
        %6278 = vmatprep.subr.mxu0 0.0
        %6279 = vmatpush1.msra.mxu0 0.0
        %6280 = vmatprep.subr.mxu0 0.0
        %6281 = vmatpush1.msra.mxu0 0.0
        %6282 = vmatprep.subr.mxu0 0.0
        %6283 = vmatpush1.msra.mxu0 0.0
        %6284 = vmatprep.mubr.f32.mxu0 0.0
        %6285 = vmatmul.mubr.f32.gmra.mrb[0].mxu0 %v6165
        %v6286 = vpop.f32.mrb[0].mxu0
        %v6287 = vadd.f32 %v6218, %v6286
        %v6288 = vpop.f32.mrb[0].mxu0
        %6289 = vmatprep.mubr.f32.mxu0 0.0
        %6290 = vmatmul.mubr.f32.gmra.mrb[0].mxu0 %v6166
        %v6291 = vpop.f32.mrb[0].mxu0
        %v6292 = vadd.f32 %v6218, %v6291
        %v6293 = vpop.f32.mrb[0].mxu0
        %6294 = vmatprep.mubr.f32.mxu0 0.0
        %6295 = vmatmul.mubr.f32.gmra.mrb[0].mxu0 %v6167
        %v6296 = vpop.f32.mrb[0].mxu0
        %v6297 = vadd.f32 %v6218, %v6296
        %v6298 = vpop.f32.mrb[0].mxu0
        %6299 = vmatprep.mubr.f32.mxu0 0.0
        %6300 = vmatmul.mubr.f32.gmra.mrb[0].mxu0 %v6168
        %v6301 = vpop.f32.mrb[0].mxu0
        %v6302 = vadd.f32 %v6218, %v6301
        %v6303 = vpop.f32.mrb[0].mxu0
        %6304 = vmatprep.mubr.f32.mxu0 0.0
        %6305 = vmatmul.mubr.f32.gmra.mrb[0].mxu0 %v6169
        %v6306 = vpop.f32.mrb[0].mxu0
        %v6307 = vadd.f32 %v6218, %v6306
        %v6308 = vpop.f32.mrb[0].mxu0
        %6309 = vmatprep.mubr.f32.mxu0 0.0
        %6310 = vmatmul.mubr.f32.gmra.mrb[0].mxu0 %v6170
        %v6311 = vpop.f32.mrb[0].mxu0
        %v6312 = vadd.f32 %v6218, %v6311
        %v6313 = vpop.f32.mrb[0].mxu0
        %6314 = vmatprep.mubr.f32.mxu0 0.0
        %6315 = vmatmul.mubr.f32.gmra.mrb[0].mxu0 %v6171
        %v6316 = vpop.f32.mrb[0].mxu0
        %v6317 = vadd.f32 %v6218, %v6316
        %v6318 = vpop.f32.mrb[0].mxu0
        %6319 = vmatprep.mubr.f32.mxu0 0.0
        %6320 = vmatmul.mubr.f32.gmra.mrb[0].mxu0 %v6172
        %v6321 = vpop.f32.mrb[0].mxu0
        %v6322 = vadd.f32 %v6218, %v6321
        %v6323 = vpop.f32.mrb[0].mxu0
        %6324 = vmatprep.mubr.f32.mxu0 0.0
        %6325 = vmatmul.mubr.f32.gmra.mrb[0].mxu0 %v6173
        %v6326 = vpop.f32.mrb[0].mxu0
        %v6327 = vadd.f32 %v6218, %v6326
        %v6328 = vpop.f32.mrb[0].mxu0
        %6329 = vmatprep.mubr.f32.mxu0 0.0
        %6330 = vmatmul.mubr.f32.gmra.mrb[0].mxu0 %v6174
        %v6331 = vpop.f32.mrb[0].mxu0
        %v6332 = vadd.f32 %v6218, %v6331
        %v6333 = vpop.f32.mrb[0].mxu0
        %6334 = vmatprep.mubr.f32.mxu0 0.0
        %6335 = vmatmul.mubr.f32.gmra.mrb[0].mxu0 %v6175
        %v6336 = vpop.f32.mrb[0].mxu0
        %v6337 = vadd.f32 %v6218, %v6336
        %v6338 = vpop.f32.mrb[0].mxu0
        %6339 = vmatprep.mubr.f32.mxu0 0.0
        %6340 = vmatmul.mubr.f32.gmra.mrb[0].mxu0 %v6176
        %v6341 = vpop.f32.mrb[0].mxu0
        %v6342 = vadd.f32 %v6218, %v6341
        %v6343 = vpop.f32.mrb[0].mxu0
        %6344 = vmatprep.mubr.f32.mxu0 0.0
        %6345 = vmatmul.mubr.f32.gmra.mrb[0].mxu0 %v6177
        %v6346 = vpop.f32.mrb[0].mxu0
        %v6347 = vadd.f32 %v6218, %v6346
        %v6348 = vpop.f32.mrb[0].mxu0
        %6349 = vmatprep.mubr.f32.mxu0 0.0
        %6350 = vmatmul.mubr.f32.gmra.mrb[0].mxu0 %v6178
        %v6351 = vpop.f32.mrb[0].mxu0
        %v6352 = vadd.f32 %v6218, %v6351
        %v6353 = vpop.f32.mrb[0].mxu0
        %6354 = vmatprep.mubr.f32.mxu0 0.0
        %6355 = vmatmul.mubr.f32.gmra.mrb[0].mxu0 %v6179
        %v6356 = vpop.f32.mrb[0].mxu0
        %v6357 = vadd.f32 %v6218, %v6356
        %v6358 = vpop.f32.mrb[0].mxu0
        %6359 = vmatprep.mubr.f32.mxu0 0.0
        %6360 = vmatmul.mubr.f32.gmra.mrb[0].mxu0 %v6180
        %v6361 = vpop.f32.mrb[0].mxu0
        %v6362 = vadd.f32 %v6218, %v6361
        %v6363 = vpop.f32.mrb[0].mxu0
        %6364 = vdwg.mxu0
        %v6365 = vtanh.pop %v6287
        %v6366 = vtanh.pop %v6292
        %v6367 = vtanh.pop %v6297
        %v6368 = vtanh.pop %v6302
        %v6369 = vtanh.pop %v6307
        %v6370 = vtanh.pop %v6312
        %v6371 = vtanh.pop %v6317
        %v6372 = vtanh.pop %v6322
        %v6373 = vtanh.pop %v6327
        %v6374 = vtanh.pop %v6332
        %v6375 = vtanh.pop %v6337
        %v6376 = vtanh.pop %v6342
        %v6377 = vtanh.pop %v6347
        %v6378 = vtanh.pop %v6352
        %v6379 = vtanh.pop %v6357
        %v6380 = vtanh.pop %v6362
        %v6381 = vld [vmem:[#allocation17] sm:$0xff]
        %v6382 = vld [vmem:[#allocation17 + $0x8] sm:$0xff]
        %v6383 = vld [vmem:[#allocation17 + $0x10] sm:$0xff]
        %v6384 = vld [vmem:[#allocation17 + $0x18] sm:$0xff]
        %v6385 = vld [vmem:[#allocation17 + $0x20] sm:$0xff]
        %v6386 = vld [vmem:[#allocation17 + $0x28] sm:$0xff]
        %v6387 = vld [vmem:[#allocation17 + $0x30] sm:$0xff]
        %v6388 = vld [vmem:[#allocation17 + $0x38] sm:$0xff]
        %v6389 = vld [vmem:[#allocation17 + $0x40] sm:$0xff]
        %v6390 = vld [vmem:[#allocation17 + $0x48] sm:$0xff]
        %v6391 = vld [vmem:[#allocation17 + $0x50] sm:$0xff]
        %v6392 = vld [vmem:[#allocation17 + $0x58] sm:$0xff]
        %v6393 = vld [vmem:[#allocation17 + $0x60] sm:$0xff]
        %v6394 = vld [vmem:[#allocation17 + $0x68] sm:$0xff]
        %v6395 = vld [vmem:[#allocation17 + $0x70] sm:$0xff]
        %v6396 = vld [vmem:[#allocation17 + $0x78] sm:$0xff]
        %v6397 = vld [vmem:[%s12] sm:$0x1]
        %v6399 = vlaneseq
        %v6400 = vshrl.u32 %v6399, 7
        %v6401 = vsub.s32 0, %v6400
        %v6402 = vrot.slane %v6397, %v6401
        %6404 = vmatprep.subr.mxu0 0.0
        %6405 = vmatpush1.msra.mxu0 %v6381
        %6406 = vmatprep.subr.mxu0 0.0
        %6407 = vmatpush1.msra.mxu0 %v6382
        %6408 = vmatprep.subr.mxu0 0.0
        %6409 = vmatpush1.msra.mxu0 %v6383
        %6410 = vmatprep.subr.mxu0 0.0
        %6411 = vmatpush1.msra.mxu0 %v6384
        %6412 = vmatprep.subr.mxu0 0.0
        %6413 = vmatpush1.msra.mxu0 %v6385
        %6414 = vmatprep.subr.mxu0 0.0
        %6415 = vmatpush1.msra.mxu0 %v6386
        %6416 = vmatprep.subr.mxu0 0.0
        %6417 = vmatpush1.msra.mxu0 %v6387
        %6418 = vmatprep.subr.mxu0 0.0
        %6419 = vmatpush1.msra.mxu0 %v6388
        %6420 = vmatprep.subr.mxu0 0.0
        %6421 = vmatpush1.msra.mxu0 %v6389
        %6422 = vmatprep.subr.mxu0 0.0
        %6423 = vmatpush1.msra.mxu0 %v6390
        %6424 = vmatprep.subr.mxu0 0.0
        %6425 = vmatpush1.msra.mxu0 %v6391
        %6426 = vmatprep.subr.mxu0 0.0
        %6427 = vmatpush1.msra.mxu0 %v6392
        %6428 = vmatprep.subr.mxu0 0.0
        %6429 = vmatpush1.msra.mxu0 %v6393
        %6430 = vmatprep.subr.mxu0 0.0
        %6431 = vmatpush1.msra.mxu0 %v6394
        %6432 = vmatprep.subr.mxu0 0.0
        %6433 = vmatpush1.msra.mxu0 %v6395
        %6434 = vmatprep.subr.mxu0 0.0
        %6435 = vmatpush1.msra.mxu0 %v6396
        %6436 = vmatprep.subr.mxu0 0.0
        %6437 = vmatpush1.msra.mxu0 0.0
        %6438 = vmatprep.subr.mxu0 0.0
        %6439 = vmatpush1.msra.mxu0 0.0
        %6440 = vmatprep.subr.mxu0 0.0
        %6441 = vmatpush1.msra.mxu0 0.0
        %6442 = vmatprep.subr.mxu0 0.0
        %6443 = vmatpush1.msra.mxu0 0.0
        %6444 = vmatprep.subr.mxu0 0.0
        %6445 = vmatpush1.msra.mxu0 0.0
        %6446 = vmatprep.subr.mxu0 0.0
        %6447 = vmatpush1.msra.mxu0 0.0
        %6448 = vmatprep.subr.mxu0 0.0
        %6449 = vmatpush1.msra.mxu0 0.0
        %6450 = vmatprep.subr.mxu0 0.0
        %6451 = vmatpush1.msra.mxu0 0.0
        %6452 = vmatprep.subr.mxu0 0.0
        %6453 = vmatpush1.msra.mxu0 0.0
        %6454 = vmatprep.subr.mxu0 0.0
        %6455 = vmatpush1.msra.mxu0 0.0
        %6456 = vmatprep.subr.mxu0 0.0
        %6457 = vmatpush1.msra.mxu0 0.0
        %6458 = vmatprep.subr.mxu0 0.0
        %6459 = vmatpush1.msra.mxu0 0.0
        %6460 = vmatprep.subr.mxu0 0.0
        %6461 = vmatpush1.msra.mxu0 0.0
        %6462 = vmatprep.subr.mxu0 0.0
        %6463 = vmatpush1.msra.mxu0 0.0
        %6464 = vmatprep.subr.mxu0 0.0
        %6465 = vmatpush1.msra.mxu0 0.0
        %6466 = vmatprep.subr.mxu0 0.0
        %6467 = vmatpush1.msra.mxu0 0.0
        %6468 = vmatprep.mubr.f32.mxu0 0.0
        %6469 = vmatmul.mubr.f32.gmra.mrb[0].mxu0 %v6365
        %v6470 = vpop.f32.mrb[0].mxu0
        %v6471 = vadd.f32 %v6402, %v6470
        %v6472 = vpop.f32.mrb[0].mxu0
        %6473 = vmatprep.mubr.f32.mxu0 0.0
        %6474 = vmatmul.mubr.f32.gmra.mrb[0].mxu0 %v6366
        %v6475 = vpop.f32.mrb[0].mxu0
        %v6476 = vadd.f32 %v6402, %v6475
        %v6477 = vpop.f32.mrb[0].mxu0
        %6478 = vmatprep.mubr.f32.mxu0 0.0
        %6479 = vmatmul.mubr.f32.gmra.mrb[0].mxu0 %v6367
        %v6480 = vpop.f32.mrb[0].mxu0
        %v6481 = vadd.f32 %v6402, %v6480
        %v6482 = vpop.f32.mrb[0].mxu0
        %6483 = vmatprep.mubr.f32.mxu0 0.0
        %6484 = vmatmul.mubr.f32.gmra.mrb[0].mxu0 %v6368
        %v6485 = vpop.f32.mrb[0].mxu0
        %v6486 = vadd.f32 %v6402, %v6485
        %v6487 = vpop.f32.mrb[0].mxu0
        %6488 = vmatprep.mubr.f32.mxu0 0.0
        %6489 = vmatmul.mubr.f32.gmra.mrb[0].mxu0 %v6369
        %v6490 = vpop.f32.mrb[0].mxu0
        %v6491 = vadd.f32 %v6402, %v6490
        %v6492 = vpop.f32.mrb[0].mxu0
        %6493 = vmatprep.mubr.f32.mxu0 0.0
        %6494 = vmatmul.mubr.f32.gmra.mrb[0].mxu0 %v6370
        %v6495 = vpop.f32.mrb[0].mxu0
        %v6496 = vadd.f32 %v6402, %v6495
        %v6497 = vpop.f32.mrb[0].mxu0
        %6498 = vmatprep.mubr.f32.mxu0 0.0
        %6499 = vmatmul.mubr.f32.gmra.mrb[0].mxu0 %v6371
        %v6500 = vpop.f32.mrb[0].mxu0
        %v6501 = vadd.f32 %v6402, %v6500
        %v6502 = vpop.f32.mrb[0].mxu0
        %6503 = vmatprep.mubr.f32.mxu0 0.0
        %6504 = vmatmul.mubr.f32.gmra.mrb[0].mxu0 %v6372
        %v6505 = vpop.f32.mrb[0].mxu0
        %v6506 = vadd.f32 %v6402, %v6505
        %v6507 = vpop.f32.mrb[0].mxu0
        %6508 = vmatprep.mubr.f32.mxu0 0.0
        %6509 = vmatmul.mubr.f32.gmra.mrb[0].mxu0 %v6373
        %v6510 = vpop.f32.mrb[0].mxu0
        %v6511 = vadd.f32 %v6402, %v6510
        %v6512 = vpop.f32.mrb[0].mxu0
        %6513 = vmatprep.mubr.f32.mxu0 0.0
        %6514 = vmatmul.mubr.f32.gmra.mrb[0].mxu0 %v6374
        %v6515 = vpop.f32.mrb[0].mxu0
        %v6516 = vadd.f32 %v6402, %v6515
        %v6517 = vpop.f32.mrb[0].mxu0
        %6518 = vmatprep.mubr.f32.mxu0 0.0
        %6519 = vmatmul.mubr.f32.gmra.mrb[0].mxu0 %v6375
        %v6520 = vpop.f32.mrb[0].mxu0
        %v6521 = vadd.f32 %v6402, %v6520
        %v6522 = vpop.f32.mrb[0].mxu0
        %6523 = vmatprep.mubr.f32.mxu0 0.0
        %6524 = vmatmul.mubr.f32.gmra.mrb[0].mxu0 %v6376
        %v6525 = vpop.f32.mrb[0].mxu0
        %v6526 = vadd.f32 %v6402, %v6525
        %v6527 = vpop.f32.mrb[0].mxu0
        %6528 = vmatprep.mubr.f32.mxu0 0.0
        %6529 = vmatmul.mubr.f32.gmra.mrb[0].mxu0 %v6377
        %v6530 = vpop.f32.mrb[0].mxu0
        %v6531 = vadd.f32 %v6402, %v6530
        %v6532 = vpop.f32.mrb[0].mxu0
        %6533 = vmatprep.mubr.f32.mxu0 0.0
        %6534 = vmatmul.mubr.f32.gmra.mrb[0].mxu0 %v6378
        %v6535 = vpop.f32.mrb[0].mxu0
        %v6536 = vadd.f32 %v6402, %v6535
        %v6537 = vpop.f32.mrb[0].mxu0
        %6538 = vmatprep.mubr.f32.mxu0 0.0
        %6539 = vmatmul.mubr.f32.gmra.mrb[0].mxu0 %v6379
        %v6540 = vpop.f32.mrb[0].mxu0
        %v6541 = vadd.f32 %v6402, %v6540
        %v6542 = vpop.f32.mrb[0].mxu0
        %6543 = vmatprep.mubr.f32.mxu0 0.0
        %6544 = vmatmul.mubr.f32.gmra.mrb[0].mxu0 %v6380
        %v6545 = vpop.f32.mrb[0].mxu0
        %v6546 = vadd.f32 %v6402, %v6545
        %v6547 = vpop.f32.mrb[0].mxu0
        %6548 = vdwg.mxu0
        %v6549 = vtanh.pop %v6471
        %v6550 = vtanh.pop %v6476
        %v6551 = vtanh.pop %v6481
        %v6552 = vtanh.pop %v6486
        %v6553 = vtanh.pop %v6491
        %v6554 = vtanh.pop %v6496
        %v6555 = vtanh.pop %v6501
        %v6556 = vtanh.pop %v6506
        %v6557 = vtanh.pop %v6511
        %v6558 = vtanh.pop %v6516
        %v6559 = vtanh.pop %v6521
        %v6560 = vtanh.pop %v6526
        %v6561 = vtanh.pop %v6531
        %v6562 = vtanh.pop %v6536
        %v6563 = vtanh.pop %v6541
        %v6564 = vtanh.pop %v6546
        %v6565 = vld [vmem:[%s13] sm:$0xff]
        %v6566 = vld [vmem:[%s13 + $0x8] sm:$0xff]
        %v6567 = vld [vmem:[%s13 + $0x10] sm:$0xff]
        %v6568 = vld [vmem:[%s13 + $0x18] sm:$0xff]
        %v6569 = vld [vmem:[%s13 + $0x20] sm:$0xff]
        %v6570 = vld [vmem:[%s13 + $0x28] sm:$0xff]
        %v6571 = vld [vmem:[%s13 + $0x30] sm:$0xff]
        %v6572 = vld [vmem:[%s13 + $0x38] sm:$0xff]
        %v6573 = vld [vmem:[%s13 + $0x40] sm:$0xff]
        %v6574 = vld [vmem:[%s13 + $0x48] sm:$0xff]
        %v6575 = vld [vmem:[%s13 + $0x50] sm:$0xff]
        %v6576 = vld [vmem:[%s13 + $0x58] sm:$0xff]
        %v6577 = vld [vmem:[%s13 + $0x60] sm:$0xff]
        %v6578 = vld [vmem:[%s13 + $0x68] sm:$0xff]
        %v6579 = vld [vmem:[%s13 + $0x70] sm:$0xff]
        %v6580 = vld [vmem:[%s13 + $0x78] sm:$0xff]
        %v6581 = vld [vmem:[#allocation7] sm:$0x1]
        %v6583 = vlaneseq
        %v6584 = vshrl.u32 %v6583, 7
        %v6585 = vsub.s32 0, %v6584
        %v6586 = vrot.slane %v6581, %v6585
        %6588 = vmatprep.subr.mxu0 0.0
        %6589 = vmatpush1.msra.mxu0 %v6565
        %6590 = vmatprep.subr.mxu0 0.0
        %6591 = vmatpush1.msra.mxu0 %v6566
        %6592 = vmatprep.subr.mxu0 0.0
        %6593 = vmatpush1.msra.mxu0 %v6567
        %6594 = vmatprep.subr.mxu0 0.0
        %6595 = vmatpush1.msra.mxu0 %v6568
        %6596 = vmatprep.subr.mxu0 0.0
        %6597 = vmatpush1.msra.mxu0 %v6569
        %6598 = vmatprep.subr.mxu0 0.0
        %6599 = vmatpush1.msra.mxu0 %v6570
        %6600 = vmatprep.subr.mxu0 0.0
        %6601 = vmatpush1.msra.mxu0 %v6571
        %6602 = vmatprep.subr.mxu0 0.0
        %6603 = vmatpush1.msra.mxu0 %v6572
        %6604 = vmatprep.subr.mxu0 0.0
        %6605 = vmatpush1.msra.mxu0 %v6573
        %6606 = vmatprep.subr.mxu0 0.0
        %6607 = vmatpush1.msra.mxu0 %v6574
        %6608 = vmatprep.subr.mxu0 0.0
        %6609 = vmatpush1.msra.mxu0 %v6575
        %6610 = vmatprep.subr.mxu0 0.0
        %6611 = vmatpush1.msra.mxu0 %v6576
        %6612 = vmatprep.subr.mxu0 0.0
        %6613 = vmatpush1.msra.mxu0 %v6577
        %6614 = vmatprep.subr.mxu0 0.0
        %6615 = vmatpush1.msra.mxu0 %v6578
        %6616 = vmatprep.subr.mxu0 0.0
        %6617 = vmatpush1.msra.mxu0 %v6579
        %6618 = vmatprep.subr.mxu0 0.0
        %6619 = vmatpush1.msra.mxu0 %v6580
        %6620 = vmatprep.subr.mxu0 0.0
        %6621 = vmatpush1.msra.mxu0 0.0
        %6622 = vmatprep.subr.mxu0 0.0
        %6623 = vmatpush1.msra.mxu0 0.0
        %6624 = vmatprep.subr.mxu0 0.0
        %6625 = vmatpush1.msra.mxu0 0.0
        %6626 = vmatprep.subr.mxu0 0.0
        %6627 = vmatpush1.msra.mxu0 0.0
        %6628 = vmatprep.subr.mxu0 0.0
        %6629 = vmatpush1.msra.mxu0 0.0
        %6630 = vmatprep.subr.mxu0 0.0
        %6631 = vmatpush1.msra.mxu0 0.0
        %6632 = vmatprep.subr.mxu0 0.0
        %6633 = vmatpush1.msra.mxu0 0.0
        %6634 = vmatprep.subr.mxu0 0.0
        %6635 = vmatpush1.msra.mxu0 0.0
        %6636 = vmatprep.subr.mxu0 0.0
        %6637 = vmatpush1.msra.mxu0 0.0
        %6638 = vmatprep.subr.mxu0 0.0
        %6639 = vmatpush1.msra.mxu0 0.0
        %6640 = vmatprep.subr.mxu0 0.0
        %6641 = vmatpush1.msra.mxu0 0.0
        %6642 = vmatprep.subr.mxu0 0.0
        %6643 = vmatpush1.msra.mxu0 0.0
        %6644 = vmatprep.subr.mxu0 0.0
        %6645 = vmatpush1.msra.mxu0 0.0
        %6646 = vmatprep.subr.mxu0 0.0
        %6647 = vmatpush1.msra.mxu0 0.0
        %6648 = vmatprep.subr.mxu0 0.0
        %6649 = vmatpush1.msra.mxu0 0.0
        %6650 = vmatprep.subr.mxu0 0.0
        %6651 = vmatpush1.msra.mxu0 0.0
        %6652 = vmatprep.mubr.f32.mxu0 0.0
        %6653 = vmatmul.mubr.f32.gmra.mrb[0].mxu0 %v6549
        %v6654 = vpop.f32.mrb[0].mxu0
        %v6655 = vadd.f32 %v6586, %v6654
        %v6656 = vpop.f32.mrb[0].mxu0
        %6657 = vmatprep.mubr.f32.mxu0 0.0
        %6658 = vmatmul.mubr.f32.gmra.mrb[0].mxu0 %v6550
        %v6659 = vpop.f32.mrb[0].mxu0
        %v6660 = vadd.f32 %v6586, %v6659
        %v6661 = vpop.f32.mrb[0].mxu0
        %6662 = vmatprep.mubr.f32.mxu0 0.0
        %6663 = vmatmul.mubr.f32.gmra.mrb[0].mxu0 %v6551
        %v6664 = vpop.f32.mrb[0].mxu0
        %v6665 = vadd.f32 %v6586, %v6664
        %v6666 = vpop.f32.mrb[0].mxu0
        %6667 = vmatprep.mubr.f32.mxu0 0.0
        %6668 = vmatmul.mubr.f32.gmra.mrb[0].mxu0 %v6552
        %v6669 = vpop.f32.mrb[0].mxu0
        %v6670 = vadd.f32 %v6586, %v6669
        %v6671 = vpop.f32.mrb[0].mxu0
        %6672 = vmatprep.mubr.f32.mxu0 0.0
        %6673 = vmatmul.mubr.f32.gmra.mrb[0].mxu0 %v6553
        %v6674 = vpop.f32.mrb[0].mxu0
        %v6675 = vadd.f32 %v6586, %v6674
        %v6676 = vpop.f32.mrb[0].mxu0
        %6677 = vmatprep.mubr.f32.mxu0 0.0
        %6678 = vmatmul.mubr.f32.gmra.mrb[0].mxu0 %v6554
        %v6679 = vpop.f32.mrb[0].mxu0
        %v6680 = vadd.f32 %v6586, %v6679
        %v6681 = vpop.f32.mrb[0].mxu0
        %6682 = vmatprep.mubr.f32.mxu0 0.0
        %6683 = vmatmul.mubr.f32.gmra.mrb[0].mxu0 %v6555
        %v6684 = vpop.f32.mrb[0].mxu0
        %v6685 = vadd.f32 %v6586, %v6684
        %v6686 = vpop.f32.mrb[0].mxu0
        %6687 = vmatprep.mubr.f32.mxu0 0.0
        %6688 = vmatmul.mubr.f32.gmra.mrb[0].mxu0 %v6556
        %v6689 = vpop.f32.mrb[0].mxu0
        %v6690 = vadd.f32 %v6586, %v6689
        %v6691 = vpop.f32.mrb[0].mxu0
        %6692 = vmatprep.mubr.f32.mxu0 0.0
        %6693 = vmatmul.mubr.f32.gmra.mrb[0].mxu0 %v6557
        %v6694 = vpop.f32.mrb[0].mxu0
        %v6695 = vadd.f32 %v6586, %v6694
        %v6696 = vpop.f32.mrb[0].mxu0
        %6697 = vmatprep.mubr.f32.mxu0 0.0
        %6698 = vmatmul.mubr.f32.gmra.mrb[0].mxu0 %v6558
        %v6699 = vpop.f32.mrb[0].mxu0
        %v6700 = vadd.f32 %v6586, %v6699
        %v6701 = vpop.f32.mrb[0].mxu0
        %6702 = vmatprep.mubr.f32.mxu0 0.0
        %6703 = vmatmul.mubr.f32.gmra.mrb[0].mxu0 %v6559
        %v6704 = vpop.f32.mrb[0].mxu0
        %v6705 = vadd.f32 %v6586, %v6704
        %v6706 = vpop.f32.mrb[0].mxu0
        %6707 = vmatprep.mubr.f32.mxu0 0.0
        %6708 = vmatmul.mubr.f32.gmra.mrb[0].mxu0 %v6560
        %v6709 = vpop.f32.mrb[0].mxu0
        %v6710 = vadd.f32 %v6586, %v6709
        %v6711 = vpop.f32.mrb[0].mxu0
        %6712 = vmatprep.mubr.f32.mxu0 0.0
        %6713 = vmatmul.mubr.f32.gmra.mrb[0].mxu0 %v6561
        %v6714 = vpop.f32.mrb[0].mxu0
        %v6715 = vadd.f32 %v6586, %v6714
        %v6716 = vpop.f32.mrb[0].mxu0
        %6717 = vmatprep.mubr.f32.mxu0 0.0
        %6718 = vmatmul.mubr.f32.gmra.mrb[0].mxu0 %v6562
        %v6719 = vpop.f32.mrb[0].mxu0
        %v6720 = vadd.f32 %v6586, %v6719
        %v6721 = vpop.f32.mrb[0].mxu0
        %6722 = vmatprep.mubr.f32.mxu0 0.0
        %6723 = vmatmul.mubr.f32.gmra.mrb[0].mxu0 %v6563
        %v6724 = vpop.f32.mrb[0].mxu0
        %v6725 = vadd.f32 %v6586, %v6724
        %v6726 = vpop.f32.mrb[0].mxu0
        %6727 = vmatprep.mubr.f32.mxu0 0.0
        %6728 = vmatmul.mubr.f32.gmra.mrb[0].mxu0 %v6564
        %v6729 = vpop.f32.mrb[0].mxu0
        %v6730 = vadd.f32 %v6586, %v6729
        %v6731 = vpop.f32.mrb[0].mxu0
        %6732 = vdwg.mxu0
        %v6733 = vtanh.pop %v6655
        %v6734 = vtanh.pop %v6660
        %v6735 = vtanh.pop %v6665
        %v6736 = vtanh.pop %v6670
        %v6737 = vtanh.pop %v6675
        %v6738 = vtanh.pop %v6680
        %v6739 = vtanh.pop %v6685
        %v6740 = vtanh.pop %v6690
        %v6741 = vtanh.pop %v6695
        %v6742 = vtanh.pop %v6700
        %v6743 = vtanh.pop %v6705
        %v6744 = vtanh.pop %v6710
        %v6745 = vtanh.pop %v6715
        %v6746 = vtanh.pop %v6720
        %v6747 = vtanh.pop %v6725
        %v6748 = vtanh.pop %v6730
        %vm6749 = vcmask 7168
        %6750 = vst.msk [vmem:[#allocation3] sm:$0xff] %vm6749, %v6733
        %6751 = vst.msk [vmem:[#allocation3 + $0x8] sm:$0xff] %vm6749, %v6734
        %6752 = vst.msk [vmem:[#allocation3 + $0x10] sm:$0xff] %vm6749, %v6735
        %6753 = vst.msk [vmem:[#allocation3 + $0x18] sm:$0xff] %vm6749, %v6736
        %6754 = vst.msk [vmem:[#allocation3 + $0x20] sm:$0xff] %vm6749, %v6737
        %6755 = vst.msk [vmem:[#allocation3 + $0x28] sm:$0xff] %vm6749, %v6738
        %6756 = vst.msk [vmem:[#allocation3 + $0x30] sm:$0xff] %vm6749, %v6739
        %6757 = vst.msk [vmem:[#allocation3 + $0x38] sm:$0xff] %vm6749, %v6740
        %6758 = vst.msk [vmem:[#allocation3 + $0x40] sm:$0xff] %vm6749, %v6741
        %6759 = vst.msk [vmem:[#allocation3 + $0x48] sm:$0xff] %vm6749, %v6742
        %6760 = vst.msk [vmem:[#allocation3 + $0x50] sm:$0xff] %vm6749, %v6743
        %6761 = vst.msk [vmem:[#allocation3 + $0x58] sm:$0xff] %vm6749, %v6744
        %6762 = vst.msk [vmem:[#allocation3 + $0x60] sm:$0xff] %vm6749, %v6745
        %6763 = vst.msk [vmem:[#allocation3 + $0x68] sm:$0xff] %vm6749, %v6746
        %6764 = vst.msk [vmem:[#allocation3 + $0x70] sm:$0xff] %vm6749, %v6747
        %6765 = vst.msk [vmem:[#allocation3 + $0x78] sm:$0xff] %vm6749, %v6748
        %v6766 = vld [vmem:[#allocation20] sm:$0xff]
        %v6767 = vld [vmem:[#allocation20 + $0x8] sm:$0xff]
        %v6768 = vld [vmem:[#allocation20 + $0x10] sm:$0xff]
        %v6769 = vld [vmem:[#allocation20 + $0x18] sm:$0xff]
        %v6770 = vld [vmem:[#allocation20 + $0x20] sm:$0xff]
        %v6771 = vld [vmem:[#allocation20 + $0x28] sm:$0xff]
        %v6772 = vld [vmem:[#allocation20 + $0x30] sm:$0xff]
        %v6773 = vld [vmem:[#allocation20 + $0x38] sm:$0xff]
        %v6774 = vld [vmem:[#allocation20 + $0x40] sm:$0xff]
        %v6775 = vld [vmem:[#allocation20 + $0x48] sm:$0xff]
        %v6776 = vld [vmem:[#allocation20 + $0x50] sm:$0xff]
        %v6777 = vld [vmem:[#allocation20 + $0x58] sm:$0xff]
        %v6778 = vld [vmem:[#allocation20 + $0x60] sm:$0xff]
        %v6779 = vld [vmem:[#allocation20 + $0x68] sm:$0xff]
        %v6780 = vld [vmem:[#allocation20 + $0x70] sm:$0xff]
        %v6781 = vld [vmem:[#allocation20 + $0x78] sm:$0xff]
        %v6782 = vld [vmem:[%s18] sm:$0x1]
        %v6784 = vlaneseq
        %v6785 = vshrl.u32 %v6784, 7
        %v6786 = vsub.s32 0, %v6785
        %v6787 = vrot.slane %v6782, %v6786
        %6789 = vmatprep.subr.mxu0 0.0
        %6790 = vmatpush1.msra.mxu0 %v6766
        %6791 = vmatprep.subr.mxu0 0.0
        %6792 = vmatpush1.msra.mxu0 %v6767
        %6793 = vmatprep.subr.mxu0 0.0
        %6794 = vmatpush1.msra.mxu0 %v6768
        %6795 = vmatprep.subr.mxu0 0.0
        %6796 = vmatpush1.msra.mxu0 %v6769
        %6797 = vmatprep.subr.mxu0 0.0
        %6798 = vmatpush1.msra.mxu0 %v6770
        %6799 = vmatprep.subr.mxu0 0.0
        %6800 = vmatpush1.msra.mxu0 %v6771
        %6801 = vmatprep.subr.mxu0 0.0
        %6802 = vmatpush1.msra.mxu0 %v6772
        %6803 = vmatprep.subr.mxu0 0.0
        %6804 = vmatpush1.msra.mxu0 %v6773
        %6805 = vmatprep.subr.mxu0 0.0
        %6806 = vmatpush1.msra.mxu0 %v6774
        %6807 = vmatprep.subr.mxu0 0.0
        %6808 = vmatpush1.msra.mxu0 %v6775
        %6809 = vmatprep.subr.mxu0 0.0
        %6810 = vmatpush1.msra.mxu0 %v6776
        %6811 = vmatprep.subr.mxu0 0.0
        %6812 = vmatpush1.msra.mxu0 %v6777
        %6813 = vmatprep.subr.mxu0 0.0
        %6814 = vmatpush1.msra.mxu0 %v6778
        %6815 = vmatprep.subr.mxu0 0.0
        %6816 = vmatpush1.msra.mxu0 %v6779
        %6817 = vmatprep.subr.mxu0 0.0
        %6818 = vmatpush1.msra.mxu0 %v6780
        %6819 = vmatprep.subr.mxu0 0.0
        %6820 = vmatpush1.msra.mxu0 %v6781
        %6821 = vmatprep.subr.mxu0 0.0
        %6822 = vmatpush1.msra.mxu0 0.0
        %6823 = vmatprep.subr.mxu0 0.0
        %6824 = vmatpush1.msra.mxu0 0.0
        %6825 = vmatprep.subr.mxu0 0.0
        %6826 = vmatpush1.msra.mxu0 0.0
        %6827 = vmatprep.subr.mxu0 0.0
        %6828 = vmatpush1.msra.mxu0 0.0
        %6829 = vmatprep.subr.mxu0 0.0
        %6830 = vmatpush1.msra.mxu0 0.0
        %6831 = vmatprep.subr.mxu0 0.0
        %6832 = vmatpush1.msra.mxu0 0.0
        %6833 = vmatprep.subr.mxu0 0.0
        %6834 = vmatpush1.msra.mxu0 0.0
        %6835 = vmatprep.subr.mxu0 0.0
        %6836 = vmatpush1.msra.mxu0 0.0
        %6837 = vmatprep.subr.mxu0 0.0
        %6838 = vmatpush1.msra.mxu0 0.0
        %6839 = vmatprep.subr.mxu0 0.0
        %6840 = vmatpush1.msra.mxu0 0.0
        %6841 = vmatprep.subr.mxu0 0.0
        %6842 = vmatpush1.msra.mxu0 0.0
        %6843 = vmatprep.subr.mxu0 0.0
        %6844 = vmatpush1.msra.mxu0 0.0
        %6845 = vmatprep.subr.mxu0 0.0
        %6846 = vmatpush1.msra.mxu0 0.0
        %6847 = vmatprep.subr.mxu0 0.0
        %6848 = vmatpush1.msra.mxu0 0.0
        %6849 = vmatprep.subr.mxu0 0.0
        %6850 = vmatpush1.msra.mxu0 0.0
        %6851 = vmatprep.subr.mxu0 0.0
        %6852 = vmatpush1.msra.mxu0 0.0
        %6853 = vmatprep.mubr.f32.mxu0 0.0
        %6854 = vmatmul.mubr.f32.gmra.mrb[0].mxu0 %v6165
        %v6855 = vpop.f32.mrb[0].mxu0
        %v6856 = vadd.f32 %v6787, %v6855
        %v6857 = vpop.f32.mrb[0].mxu0
        %6858 = vmatprep.mubr.f32.mxu0 0.0
        %6859 = vmatmul.mubr.f32.gmra.mrb[0].mxu0 %v6166
        %v6860 = vpop.f32.mrb[0].mxu0
        %v6861 = vadd.f32 %v6787, %v6860
        %v6862 = vpop.f32.mrb[0].mxu0
        %6863 = vmatprep.mubr.f32.mxu0 0.0
        %6864 = vmatmul.mubr.f32.gmra.mrb[0].mxu0 %v6167
        %v6865 = vpop.f32.mrb[0].mxu0
        %v6866 = vadd.f32 %v6787, %v6865
        %v6867 = vpop.f32.mrb[0].mxu0
        %6868 = vmatprep.mubr.f32.mxu0 0.0
        %6869 = vmatmul.mubr.f32.gmra.mrb[0].mxu0 %v6168
        %v6870 = vpop.f32.mrb[0].mxu0
        %v6871 = vadd.f32 %v6787, %v6870
        %v6872 = vpop.f32.mrb[0].mxu0
        %6873 = vmatprep.mubr.f32.mxu0 0.0
        %6874 = vmatmul.mubr.f32.gmra.mrb[0].mxu0 %v6169
        %v6875 = vpop.f32.mrb[0].mxu0
        %v6876 = vadd.f32 %v6787, %v6875
        %v6877 = vpop.f32.mrb[0].mxu0
        %6878 = vmatprep.mubr.f32.mxu0 0.0
        %6879 = vmatmul.mubr.f32.gmra.mrb[0].mxu0 %v6170
        %v6880 = vpop.f32.mrb[0].mxu0
        %v6881 = vadd.f32 %v6787, %v6880
        %v6882 = vpop.f32.mrb[0].mxu0
        %6883 = vmatprep.mubr.f32.mxu0 0.0
        %6884 = vmatmul.mubr.f32.gmra.mrb[0].mxu0 %v6171
        %v6885 = vpop.f32.mrb[0].mxu0
        %v6886 = vadd.f32 %v6787, %v6885
        %v6887 = vpop.f32.mrb[0].mxu0
        %6888 = vmatprep.mubr.f32.mxu0 0.0
        %6889 = vmatmul.mubr.f32.gmra.mrb[0].mxu0 %v6172
        %v6890 = vpop.f32.mrb[0].mxu0
        %v6891 = vadd.f32 %v6787, %v6890
        %v6892 = vpop.f32.mrb[0].mxu0
        %6893 = vmatprep.mubr.f32.mxu0 0.0
        %6894 = vmatmul.mubr.f32.gmra.mrb[0].mxu0 %v6173
        %v6895 = vpop.f32.mrb[0].mxu0
        %v6896 = vadd.f32 %v6787, %v6895
        %v6897 = vpop.f32.mrb[0].mxu0
        %6898 = vmatprep.mubr.f32.mxu0 0.0
        %6899 = vmatmul.mubr.f32.gmra.mrb[0].mxu0 %v6174
        %v6900 = vpop.f32.mrb[0].mxu0
        %v6901 = vadd.f32 %v6787, %v6900
        %v6902 = vpop.f32.mrb[0].mxu0
        %6903 = vmatprep.mubr.f32.mxu0 0.0
        %6904 = vmatmul.mubr.f32.gmra.mrb[0].mxu0 %v6175
        %v6905 = vpop.f32.mrb[0].mxu0
        %v6906 = vadd.f32 %v6787, %v6905
        %v6907 = vpop.f32.mrb[0].mxu0
        %6908 = vmatprep.mubr.f32.mxu0 0.0
        %6909 = vmatmul.mubr.f32.gmra.mrb[0].mxu0 %v6176
        %v6910 = vpop.f32.mrb[0].mxu0
        %v6911 = vadd.f32 %v6787, %v6910
        %v6912 = vpop.f32.mrb[0].mxu0
        %6913 = vmatprep.mubr.f32.mxu0 0.0
        %6914 = vmatmul.mubr.f32.gmra.mrb[0].mxu0 %v6177
        %v6915 = vpop.f32.mrb[0].mxu0
        %v6916 = vadd.f32 %v6787, %v6915
        %v6917 = vpop.f32.mrb[0].mxu0
        %6918 = vmatprep.mubr.f32.mxu0 0.0
        %6919 = vmatmul.mubr.f32.gmra.mrb[0].mxu0 %v6178
        %v6920 = vpop.f32.mrb[0].mxu0
        %v6921 = vadd.f32 %v6787, %v6920
        %v6922 = vpop.f32.mrb[0].mxu0
        %6923 = vmatprep.mubr.f32.mxu0 0.0
        %6924 = vmatmul.mubr.f32.gmra.mrb[0].mxu0 %v6179
        %v6925 = vpop.f32.mrb[0].mxu0
        %v6926 = vadd.f32 %v6787, %v6925
        %v6927 = vpop.f32.mrb[0].mxu0
        %6928 = vmatprep.mubr.f32.mxu0 0.0
        %6929 = vmatmul.mubr.f32.gmra.mrb[0].mxu0 %v6180
        %v6930 = vpop.f32.mrb[0].mxu0
        %v6931 = vadd.f32 %v6787, %v6930
        %v6932 = vpop.f32.mrb[0].mxu0
        %6933 = vdwg.mxu0
        %s6934 = smul.u32 %s50, 2
        %s6935 = smul.u32 %s6934, 128
        %s6936 = sld [smem:[#allocation6 + %s6935]]
        %s6937 = scalar_lea.vmem [#allocation2], %s6936
        %v6938 = vld [vmem:[%s6937] sm:$0x1]
        %s6939 = scalar_lea.vmem [#allocation3], %s6936
        %v6940 = vld [vmem:[%s6939] sm:$0x1]
        %s6941 = sadd.s32 %s6935, 1
        %s6942 = sld [smem:[#allocation6 + %s6941]]
        %s6943 = scalar_lea.vmem [#allocation2], %s6942
        %v6944 = vld [vmem:[%s6943] sm:$0x1]
        %s6945 = scalar_lea.vmem [#allocation3], %s6942
        %v6946 = vld [vmem:[%s6945] sm:$0x1]
        %s6947 = sadd.s32 %s6935, 2
        %s6948 = sld [smem:[#allocation6 + %s6947]]
        %s6949 = scalar_lea.vmem [#allocation2], %s6948
        %v6950 = vld [vmem:[%s6949] sm:$0x1]
        %s6951 = scalar_lea.vmem [#allocation3], %s6948
        %v6952 = vld [vmem:[%s6951] sm:$0x1]
        %s6953 = sadd.s32 %s6935, 3
        %s6954 = sld [smem:[#allocation6 + %s6953]]
        %s6955 = scalar_lea.vmem [#allocation2], %s6954
        %v6956 = vld [vmem:[%s6955] sm:$0x1]
        %s6957 = scalar_lea.vmem [#allocation3], %s6954
        %v6958 = vld [vmem:[%s6957] sm:$0x1]
        %s6959 = sadd.s32 %s6934, 1
        %s6960 = smul.u32 %s6959, 128
        %s6961 = sld [smem:[#allocation6 + %s6960]]
        %s6962 = sadd.s32 %s6961, 64
        %s6963 = scalar_lea.vmem [#allocation2], %s6962
        %v6964 = vld [vmem:[%s6963] sm:$0x1]
        %s6965 = scalar_lea.vmem [#allocation3], %s6962
        %v6966 = vld [vmem:[%s6965] sm:$0x1]
        %s6967 = sadd.s32 %s6960, 1
        %s6968 = sld [smem:[#allocation6 + %s6967]]
        %s6969 = sadd.s32 %s6968, 64
        %s6970 = scalar_lea.vmem [#allocation2], %s6969
        %v6971 = vld [vmem:[%s6970] sm:$0x1]
        %s6972 = scalar_lea.vmem [#allocation3], %s6969
        %v6973 = vld [vmem:[%s6972] sm:$0x1]
        %s6974 = sadd.s32 %s6960, 2
        %s6975 = sld [smem:[#allocation6 + %s6974]]
        %s6976 = sadd.s32 %s6975, 64
        %s6977 = scalar_lea.vmem [#allocation2], %s6976
        %v6978 = vld [vmem:[%s6977] sm:$0x1]
        %s6979 = scalar_lea.vmem [#allocation3], %s6976
        %v6980 = vld [vmem:[%s6979] sm:$0x1]
        %s6981 = sadd.s32 %s6960, 3
        %s6982 = sld [smem:[#allocation6 + %s6981]]
        %s6983 = sadd.s32 %s6982, 64
        %s6984 = scalar_lea.vmem [#allocation2], %s6983
        %v6985 = vld [vmem:[%s6984] sm:$0x1]
        %s6986 = scalar_lea.vmem [#allocation3], %s6983
        %v6987 = vld [vmem:[%s6986] sm:$0x1]
        %v6989 = vrot.slane %v6944, 7
        %v6992 = vrot.slane %v6950, 6
        %v6995 = vrot.slane %v6956, 5
        %v6998 = vrot.slane %v6964, 4
        %v7001 = vrot.slane %v6971, 3
        %v7004 = vrot.slane %v6978, 2
        %v7007 = vrot.slane %v6985, 1
        %vm7009 = vcmask 1040384
        %v7010 = vsel %vm7009, %v6938, %v6989
        %vm7011 = vcmask 1041408
        %v7012 = vsel %vm7011, %v7010, %v6992
        %vm7013 = vcmask 1042432
        %v7014 = vsel %vm7013, %v7012, %v6995
        %vm7015 = vcmask 1043456
        %v7016 = vsel %vm7015, %v7014, %v6998
        %vm7017 = vcmask 1044480
        %v7018 = vsel %vm7017, %v7016, %v7001
        %vm7019 = vcmask 1045504
        %v7020 = vsel %vm7019, %v7018, %v7004
        %vm7021 = vcmask 1046528
        %v7022 = vsel %vm7021, %v7020, %v7007
        %v7023 = vld [vmem:[#allocation19] sm:$0xff]
        %v7024 = vld [vmem:[#allocation19 + $0x8] sm:$0xff]
        %v7025 = vld [vmem:[#allocation19 + $0x10] sm:$0xff]
        %v7026 = vld [vmem:[#allocation19 + $0x18] sm:$0xff]
        %v7027 = vld [vmem:[#allocation19 + $0x20] sm:$0xff]
        %v7028 = vld [vmem:[#allocation19 + $0x28] sm:$0xff]
        %v7029 = vld [vmem:[#allocation19 + $0x30] sm:$0xff]
        %v7030 = vld [vmem:[#allocation19 + $0x38] sm:$0xff]
        %v7031 = vld [vmem:[#allocation19 + $0x40] sm:$0xff]
        %v7032 = vld [vmem:[#allocation19 + $0x48] sm:$0xff]
        %v7033 = vld [vmem:[#allocation19 + $0x50] sm:$0xff]
        %v7034 = vld [vmem:[#allocation19 + $0x58] sm:$0xff]
        %v7035 = vld [vmem:[#allocation19 + $0x60] sm:$0xff]
        %v7036 = vld [vmem:[#allocation19 + $0x68] sm:$0xff]
        %v7037 = vld [vmem:[#allocation19 + $0x70] sm:$0xff]
        %v7038 = vld [vmem:[#allocation19 + $0x78] sm:$0xff]
        %v7039 = vld [vmem:[%s16] sm:$0x1]
        %v7041 = vlaneseq
        %v7042 = vshrl.u32 %v7041, 7
        %v7043 = vsub.s32 0, %v7042
        %v7044 = vrot.slane %v7039, %v7043
        %7046 = vmatprep.subr.mxu0 0.0
        %7047 = vmatpush1.msra.mxu0 %v7023
        %7048 = vmatprep.subr.mxu0 0.0
        %7049 = vmatpush1.msra.mxu0 %v7024
        %7050 = vmatprep.subr.mxu0 0.0
        %7051 = vmatpush1.msra.mxu0 %v7025
        %7052 = vmatprep.subr.mxu0 0.0
        %7053 = vmatpush1.msra.mxu0 %v7026
        %7054 = vmatprep.subr.mxu0 0.0
        %7055 = vmatpush1.msra.mxu0 %v7027
        %7056 = vmatprep.subr.mxu0 0.0
        %7057 = vmatpush1.msra.mxu0 %v7028
        %7058 = vmatprep.subr.mxu0 0.0
        %7059 = vmatpush1.msra.mxu0 %v7029
        %7060 = vmatprep.subr.mxu0 0.0
        %7061 = vmatpush1.msra.mxu0 %v7030
        %7062 = vmatprep.subr.mxu0 0.0
        %7063 = vmatpush1.msra.mxu0 %v7031
        %7064 = vmatprep.subr.mxu0 0.0
        %7065 = vmatpush1.msra.mxu0 %v7032
        %7066 = vmatprep.subr.mxu0 0.0
        %7067 = vmatpush1.msra.mxu0 %v7033
        %7068 = vmatprep.subr.mxu0 0.0
        %7069 = vmatpush1.msra.mxu0 %v7034
        %7070 = vmatprep.subr.mxu0 0.0
        %7071 = vmatpush1.msra.mxu0 %v7035
        %7072 = vmatprep.subr.mxu0 0.0
        %7073 = vmatpush1.msra.mxu0 %v7036
        %7074 = vmatprep.subr.mxu0 0.0
        %7075 = vmatpush1.msra.mxu0 %v7037
        %7076 = vmatprep.subr.mxu0 0.0
        %7077 = vmatpush1.msra.mxu0 %v7038
        %7078 = vmatprep.subr.mxu0 0.0
        %7079 = vmatpush1.msra.mxu0 0.0
        %7080 = vmatprep.subr.mxu0 0.0
        %7081 = vmatpush1.msra.mxu0 0.0
        %7082 = vmatprep.subr.mxu0 0.0
        %7083 = vmatpush1.msra.mxu0 0.0
        %7084 = vmatprep.subr.mxu0 0.0
        %7085 = vmatpush1.msra.mxu0 0.0
        %7086 = vmatprep.subr.mxu0 0.0
        %7087 = vmatpush1.msra.mxu0 0.0
        %7088 = vmatprep.subr.mxu0 0.0
        %7089 = vmatpush1.msra.mxu0 0.0
        %7090 = vmatprep.subr.mxu0 0.0
        %7091 = vmatpush1.msra.mxu0 0.0
        %7092 = vmatprep.subr.mxu0 0.0
        %7093 = vmatpush1.msra.mxu0 0.0
        %7094 = vmatprep.subr.mxu0 0.0
        %7095 = vmatpush1.msra.mxu0 0.0
        %7096 = vmatprep.subr.mxu0 0.0
        %7097 = vmatpush1.msra.mxu0 0.0
        %7098 = vmatprep.subr.mxu0 0.0
        %7099 = vmatpush1.msra.mxu0 0.0
        %7100 = vmatprep.subr.mxu0 0.0
        %7101 = vmatpush1.msra.mxu0 0.0
        %7102 = vmatprep.subr.mxu0 0.0
        %7103 = vmatpush1.msra.mxu0 0.0
        %7104 = vmatprep.subr.mxu0 0.0
        %7105 = vmatpush1.msra.mxu0 0.0
        %7106 = vmatprep.subr.mxu0 0.0
        %7107 = vmatpush1.msra.mxu0 0.0
        %7108 = vmatprep.subr.mxu0 0.0
        %7109 = vmatpush1.msra.mxu0 0.0
        %7110 = vmatprep.mubr.f32.mxu0 0.0
        %7111 = vmatmul.mubr.f32.gmra.mrb[0].mxu0 %v7022
        %v7112 = vpop.f32.mrb[0].mxu0
        %v7113 = vadd.f32 %v7044, %v7112
        %v7114 = vpop.f32.mrb[0].mxu0
        %7115 = vdwg.mxu0
        %v7117 = vcombine.high %v7113, %v7113
        %7119 = vmatprep.subr.mxu0 0.0
        %7120 = vmatpush1.xpose.msra.mxu0 %v7113
        %7121 = vmatprep.subr.mxu0 0.0
        %7122 = vmatpush1.xpose.msra.mxu0 0.0
        %7123 = vmatprep.subr.mxu0 0.0
        %7124 = vmatpush1.xpose.msra.mxu0 0.0
        %7125 = vmatprep.subr.mxu0 0.0
        %7126 = vmatpush1.xpose.msra.mxu0 0.0
        %7127 = vmatprep.subr.mxu0 0.0
        %7128 = vmatpush1.xpose.msra.mxu0 0.0
        %7129 = vmatprep.subr.mxu0 0.0
        %7130 = vmatpush1.xpose.msra.mxu0 0.0
        %7131 = vmatprep.subr.mxu0 0.0
        %7132 = vmatpush1.xpose.msra.mxu0 0.0
        %7133 = vmatprep.subr.mxu0 0.0
        %7134 = vmatpush1.xpose.msra.mxu0 0.0
        %7135 = vmatprep.subr.mxu0 0.0
        %7136 = vmatpush1.xpose.msra.mxu0 0.0
        %7137 = vmatprep.subr.mxu0 0.0
        %7138 = vmatpush1.xpose.msra.mxu0 0.0
        %7139 = vmatprep.subr.mxu0 0.0
        %7140 = vmatpush1.xpose.msra.mxu0 0.0
        %7141 = vmatprep.subr.mxu0 0.0
        %7142 = vmatpush1.xpose.msra.mxu0 0.0
        %7143 = vmatprep.subr.mxu0 0.0
        %7144 = vmatpush1.xpose.msra.mxu0 0.0
        %7145 = vmatprep.subr.mxu0 0.0
        %7146 = vmatpush1.xpose.msra.mxu0 0.0
        %7147 = vmatprep.subr.mxu0 0.0
        %7148 = vmatpush1.xpose.msra.mxu0 0.0
        %7149 = vmatprep.subr.mxu0 0.0
        %7150 = vmatpush1.xpose.msra.mxu0 0.0
        %7151 = vmatprep.subr.mxu0 0.0
        %7152 = vmatpush1.xpose.msra.mxu0 0.0
        %7153 = vmatprep.subr.mxu0 0.0
        %7154 = vmatpush1.xpose.msra.mxu0 0.0
        %7155 = vmatprep.subr.mxu0 0.0
        %7156 = vmatpush1.xpose.msra.mxu0 0.0
        %7157 = vmatprep.subr.mxu0 0.0
        %7158 = vmatpush1.xpose.msra.mxu0 0.0
        %7159 = vmatprep.subr.mxu0 0.0
        %7160 = vmatpush1.xpose.msra.mxu0 0.0
        %7161 = vmatprep.subr.mxu0 0.0
        %7162 = vmatpush1.xpose.msra.mxu0 0.0
        %7163 = vmatprep.subr.mxu0 0.0
        %7164 = vmatpush1.xpose.msra.mxu0 0.0
        %7165 = vmatprep.subr.mxu0 0.0
        %7166 = vmatpush1.xpose.msra.mxu0 0.0
        %7167 = vmatprep.subr.mxu0 0.0
        %7168 = vmatpush1.xpose.msra.mxu0 0.0
        %7169 = vmatprep.subr.mxu0 0.0
        %7170 = vmatpush1.xpose.msra.mxu0 0.0
        %7171 = vmatprep.subr.mxu0 0.0
        %7172 = vmatpush1.xpose.msra.mxu0 0.0
        %7173 = vmatprep.subr.mxu0 0.0
        %7174 = vmatpush1.xpose.msra.mxu0 0.0
        %7175 = vmatprep.subr.mxu0 0.0
        %7176 = vmatpush1.xpose.msra.mxu0 0.0
        %7177 = vmatprep.subr.mxu0 0.0
        %7178 = vmatpush1.xpose.msra.mxu0 0.0
        %7179 = vmatprep.subr.mxu0 0.0
        %7180 = vmatpush1.xpose.msra.mxu0 0.0
        %7181 = vmatprep.subr.mxu0 0.0
        %7182 = vmatpush1.xpose.msra.mxu0 0.0
        %7183 = vmatprep.mubr.f32.mxu0 0.0
        %7184 = vmatmul.mubr.f32.gmra.mrb[0].mxu0 %v6856
        %v7185 = vpop.f32.mrb[0].mxu0
        %v7186 = vadd.f32 0.0, %v7185
        %v7187 = vpop.f32.mrb[0].mxu0
        %7188 = vmatprep.mubr.f32.mxu0 0.0
        %7189 = vmatmul.mubr.f32.gmra.mrb[0].mxu0 %v6861
        %v7190 = vpop.f32.mrb[0].mxu0
        %v7191 = vadd.f32 0.0, %v7190
        %v7192 = vpop.f32.mrb[0].mxu0
        %7193 = vmatprep.mubr.f32.mxu0 0.0
        %7194 = vmatmul.mubr.f32.gmra.mrb[0].mxu0 %v6866
        %v7195 = vpop.f32.mrb[0].mxu0
        %v7196 = vadd.f32 0.0, %v7195
        %v7197 = vpop.f32.mrb[0].mxu0
        %7198 = vmatprep.mubr.f32.mxu0 0.0
        %7199 = vmatmul.mubr.f32.gmra.mrb[0].mxu0 %v6871
        %v7200 = vpop.f32.mrb[0].mxu0
        %v7201 = vadd.f32 0.0, %v7200
        %v7202 = vpop.f32.mrb[0].mxu0
        %7203 = vmatprep.mubr.f32.mxu0 0.0
        %7204 = vmatmul.mubr.f32.gmra.mrb[0].mxu0 %v6876
        %v7205 = vpop.f32.mrb[0].mxu0
        %v7206 = vadd.f32 0.0, %v7205
        %v7207 = vpop.f32.mrb[0].mxu0
        %7208 = vmatprep.mubr.f32.mxu0 0.0
        %7209 = vmatmul.mubr.f32.gmra.mrb[0].mxu0 %v6881
        %v7210 = vpop.f32.mrb[0].mxu0
        %v7211 = vadd.f32 0.0, %v7210
        %v7212 = vpop.f32.mrb[0].mxu0
        %7213 = vmatprep.mubr.f32.mxu0 0.0
        %7214 = vmatmul.mubr.f32.gmra.mrb[0].mxu0 %v6886
        %v7215 = vpop.f32.mrb[0].mxu0
        %v7216 = vadd.f32 0.0, %v7215
        %v7217 = vpop.f32.mrb[0].mxu0
        %7218 = vmatprep.mubr.f32.mxu0 0.0
        %7219 = vmatmul.mubr.f32.gmra.mrb[0].mxu0 %v6891
        %v7220 = vpop.f32.mrb[0].mxu0
        %v7221 = vadd.f32 0.0, %v7220
        %v7222 = vpop.f32.mrb[0].mxu0
        %7223 = vdwg.mxu0
        %7224 = vmatprep.subr.mxu0 0.0
        %7225 = vmatpush1.xpose.msra.mxu0 %v7117
        %7226 = vmatprep.subr.mxu0 0.0
        %7227 = vmatpush1.xpose.msra.mxu0 0.0
        %7228 = vmatprep.subr.mxu0 0.0
        %7229 = vmatpush1.xpose.msra.mxu0 0.0
        %7230 = vmatprep.subr.mxu0 0.0
        %7231 = vmatpush1.xpose.msra.mxu0 0.0
        %7232 = vmatprep.subr.mxu0 0.0
        %7233 = vmatpush1.xpose.msra.mxu0 0.0
        %7234 = vmatprep.subr.mxu0 0.0
        %7235 = vmatpush1.xpose.msra.mxu0 0.0
        %7236 = vmatprep.subr.mxu0 0.0
        %7237 = vmatpush1.xpose.msra.mxu0 0.0
        %7238 = vmatprep.subr.mxu0 0.0
        %7239 = vmatpush1.xpose.msra.mxu0 0.0
        %7240 = vmatprep.subr.mxu0 0.0
        %7241 = vmatpush1.xpose.msra.mxu0 0.0
        %7242 = vmatprep.subr.mxu0 0.0
        %7243 = vmatpush1.xpose.msra.mxu0 0.0
        %7244 = vmatprep.subr.mxu0 0.0
        %7245 = vmatpush1.xpose.msra.mxu0 0.0
        %7246 = vmatprep.subr.mxu0 0.0
        %7247 = vmatpush1.xpose.msra.mxu0 0.0
        %7248 = vmatprep.subr.mxu0 0.0
        %7249 = vmatpush1.xpose.msra.mxu0 0.0
        %7250 = vmatprep.subr.mxu0 0.0
        %7251 = vmatpush1.xpose.msra.mxu0 0.0
        %7252 = vmatprep.subr.mxu0 0.0
        %7253 = vmatpush1.xpose.msra.mxu0 0.0
        %7254 = vmatprep.subr.mxu0 0.0
        %7255 = vmatpush1.xpose.msra.mxu0 0.0
        %7256 = vmatprep.subr.mxu0 0.0
        %7257 = vmatpush1.xpose.msra.mxu0 0.0
        %7258 = vmatprep.subr.mxu0 0.0
        %7259 = vmatpush1.xpose.msra.mxu0 0.0
        %7260 = vmatprep.subr.mxu0 0.0
        %7261 = vmatpush1.xpose.msra.mxu0 0.0
        %7262 = vmatprep.subr.mxu0 0.0
        %7263 = vmatpush1.xpose.msra.mxu0 0.0
        %7264 = vmatprep.subr.mxu0 0.0
        %7265 = vmatpush1.xpose.msra.mxu0 0.0
        %7266 = vmatprep.subr.mxu0 0.0
        %7267 = vmatpush1.xpose.msra.mxu0 0.0
        %7268 = vmatprep.subr.mxu0 0.0
        %7269 = vmatpush1.xpose.msra.mxu0 0.0
        %7270 = vmatprep.subr.mxu0 0.0
        %7271 = vmatpush1.xpose.msra.mxu0 0.0
        %7272 = vmatprep.subr.mxu0 0.0
        %7273 = vmatpush1.xpose.msra.mxu0 0.0
        %7274 = vmatprep.subr.mxu0 0.0
        %7275 = vmatpush1.xpose.msra.mxu0 0.0
        %7276 = vmatprep.subr.mxu0 0.0
        %7277 = vmatpush1.xpose.msra.mxu0 0.0
        %7278 = vmatprep.subr.mxu0 0.0
        %7279 = vmatpush1.xpose.msra.mxu0 0.0
        %7280 = vmatprep.subr.mxu0 0.0
        %7281 = vmatpush1.xpose.msra.mxu0 0.0
        %7282 = vmatprep.subr.mxu0 0.0
        %7283 = vmatpush1.xpose.msra.mxu0 0.0
        %7284 = vmatprep.subr.mxu0 0.0
        %7285 = vmatpush1.xpose.msra.mxu0 0.0
        %7286 = vmatprep.subr.mxu0 0.0
        %7287 = vmatpush1.xpose.msra.mxu0 0.0
        %7288 = vmatprep.mubr.f32.mxu0 0.0
        %7289 = vmatmul.mubr.f32.gmra.mrb[0].mxu0 %v6896
        %v7290 = vpop.f32.mrb[0].mxu0
        %v7291 = vadd.f32 0.0, %v7290
        %v7292 = vpop.f32.mrb[0].mxu0
        %7293 = vmatprep.mubr.f32.mxu0 0.0
        %7294 = vmatmul.mubr.f32.gmra.mrb[0].mxu0 %v6901
        %v7295 = vpop.f32.mrb[0].mxu0
        %v7296 = vadd.f32 0.0, %v7295
        %v7297 = vpop.f32.mrb[0].mxu0
        %7298 = vmatprep.mubr.f32.mxu0 0.0
        %7299 = vmatmul.mubr.f32.gmra.mrb[0].mxu0 %v6906
        %v7300 = vpop.f32.mrb[0].mxu0
        %v7301 = vadd.f32 0.0, %v7300
        %v7302 = vpop.f32.mrb[0].mxu0
        %7303 = vmatprep.mubr.f32.mxu0 0.0
        %7304 = vmatmul.mubr.f32.gmra.mrb[0].mxu0 %v6911
        %v7305 = vpop.f32.mrb[0].mxu0
        %v7306 = vadd.f32 0.0, %v7305
        %v7307 = vpop.f32.mrb[0].mxu0
        %7308 = vmatprep.mubr.f32.mxu0 0.0
        %7309 = vmatmul.mubr.f32.gmra.mrb[0].mxu0 %v6916
        %v7310 = vpop.f32.mrb[0].mxu0
        %v7311 = vadd.f32 0.0, %v7310
        %v7312 = vpop.f32.mrb[0].mxu0
        %7313 = vmatprep.mubr.f32.mxu0 0.0
        %7314 = vmatmul.mubr.f32.gmra.mrb[0].mxu0 %v6921
        %v7315 = vpop.f32.mrb[0].mxu0
        %v7316 = vadd.f32 0.0, %v7315
        %v7317 = vpop.f32.mrb[0].mxu0
        %7318 = vmatprep.mubr.f32.mxu0 0.0
        %7319 = vmatmul.mubr.f32.gmra.mrb[0].mxu0 %v6926
        %v7320 = vpop.f32.mrb[0].mxu0
        %v7321 = vadd.f32 0.0, %v7320
        %v7322 = vpop.f32.mrb[0].mxu0
        %7323 = vmatprep.mubr.f32.mxu0 0.0
        %7324 = vmatmul.mubr.f32.gmra.mrb[0].mxu0 %v6931
        %v7325 = vpop.f32.mrb[0].mxu0
        %v7326 = vadd.f32 0.0, %v7325
        %v7327 = vpop.f32.mrb[0].mxu0
        %7328 = vdwg.mxu0
        %v7329 = vlaneseq
        %v7330 = vand.u32 %v7329, 127
        %v7331 = vlaneseq
        %v7332 = vshrl.u32 %v7331, 7
        %v7333 = vadd.s32 %v7332, 8
        %vm7334 = vcmp.eq.s32.totalorder %v7332, %v7330
        %vm7335 = vcmp.eq.s32.totalorder %v7333, %v7330
        %v7336 = vsel %vm7334, 1, 0
        %v7337 = vsel %vm7335, 1, 0
        %v7338 = vcvt.s32.f32 %v7336
        %v7339 = vcvt.s32.f32 %v7337
        %vm7340 = vcmask 31744
        %7341 = vst.msk [vmem:[#allocation4] sm:$0xff] %vm7340, -10.0
        %7342 = vst.msk [vmem:[#allocation4 + $0x8] sm:$0xff] %vm7340, -10.0
        %vm7343 = vcmp.eq.s32.totalorder %v7330, 0
        %7345 = vset.pattern.permute.xlu0 0
        %7346 = vperm.xlu0 %7345, %v6940
        %v7347 = vpop.permute.xlu0 %7346
        %v7349 = vsel %vm7343, %v7347, 0.0
        %vm7350 = vcmp.eq.s32.totalorder %v7330, 1
        %7352 = vset.pattern.permute.xlu0 0
        %7353 = vperm.xlu0 %7352, %v6946
        %v7354 = vpop.permute.xlu0 %7353
        %v7356 = vsel %vm7350, %v7354, %v7349
        %vm7357 = vcmp.eq.s32.totalorder %v7330, 2
        %7359 = vset.pattern.permute.xlu0 0
        %7360 = vperm.xlu0 %7359, %v6952
        %v7361 = vpop.permute.xlu0 %7360
        %v7363 = vsel %vm7357, %v7361, %v7356
        %vm7364 = vcmp.eq.s32.totalorder %v7330, 3
        %7366 = vset.pattern.permute.xlu0 0
        %7367 = vperm.xlu0 %7366, %v6958
        %v7368 = vpop.permute.xlu0 %7367
        %v7370 = vsel %vm7364, %v7368, %v7363
        %7372 = vset.pattern.permute.xlu0 0
        %7373 = vperm.xlu0 %7372, %v6733
        %v7374 = vpop.permute.xlu0 %7373
        %7377 = vset.pattern.permute.xlu0 0
        %7378 = vperm.xlu0 %7377, %v6734
        %v7379 = vpop.permute.xlu0 %7378
        %7382 = vset.pattern.permute.xlu0 0
        %7383 = vperm.xlu0 %7382, %v6735
        %v7384 = vpop.permute.xlu0 %7383
        %7387 = vset.pattern.permute.xlu0 0
        %7388 = vperm.xlu0 %7387, %v6736
        %v7389 = vpop.permute.xlu0 %7388
        %7392 = vset.pattern.permute.xlu0 0
        %7393 = vperm.xlu0 %7392, %v6737
        %v7394 = vpop.permute.xlu0 %7393
        %7397 = vset.pattern.permute.xlu0 0
        %7398 = vperm.xlu0 %7397, %v6738
        %v7399 = vpop.permute.xlu0 %7398
        %7402 = vset.pattern.permute.xlu0 0
        %7403 = vperm.xlu0 %7402, %v6739
        %v7404 = vpop.permute.xlu0 %7403
        %7407 = vset.pattern.permute.xlu0 0
        %7408 = vperm.xlu0 %7407, %v6740
        %v7409 = vpop.permute.xlu0 %7408
        %v7411 = vadd.f32 %v7186, %v7374
        %v7412 = vadd.f32 %v7191, %v7379
        %v7413 = vadd.f32 %v7196, %v7384
        %v7414 = vadd.f32 %v7201, %v7389
        %v7415 = vadd.f32 %v7206, %v7394
        %v7416 = vadd.f32 %v7211, %v7399
        %v7417 = vadd.f32 %v7216, %v7404
        %v7418 = vadd.f32 %v7221, %v7409
        %v7419 = vlaneseq
        %v7420 = vshrl.u32 %v7419, 7
        %v7421 = vsub.s32 0, %v7420
        %v7422 = vrot.slane %v7370, %v7421
        %v7423 = vadd.f32 %v7411, %v7422
        %v7424 = vadd.f32 %v7412, %v7422
        %v7425 = vadd.f32 %v7413, %v7422
        %v7426 = vadd.f32 %v7414, %v7422
        %v7427 = vadd.f32 %v7415, %v7422
        %v7428 = vadd.f32 %v7416, %v7422
        %v7429 = vadd.f32 %v7417, %v7422
        %v7430 = vadd.f32 %v7418, %v7422
        %7431 = vst.msk [vmem:[#allocation4 + $0x10] sm:$0xff] %vm7340, %v7423
        %7432 = vst.msk [vmem:[#allocation4 + $0x18] sm:$0xff] %vm7340, %v7424
        %7433 = vst.msk [vmem:[#allocation4 + $0x20] sm:$0xff] %vm7340, %v7425
        %7434 = vst.msk [vmem:[#allocation4 + $0x28] sm:$0xff] %vm7340, %v7426
        %7435 = vst.msk [vmem:[#allocation4 + $0x30] sm:$0xff] %vm7340, %v7427
        %7436 = vst.msk [vmem:[#allocation4 + $0x38] sm:$0xff] %vm7340, %v7428
        %7437 = vst.msk [vmem:[#allocation4 + $0x40] sm:$0xff] %vm7340, %v7429
        %7438 = vst.msk [vmem:[#allocation4 + $0x48] sm:$0xff] %vm7340, %v7430
        %s7439 = scalar_lea.vmem [#allocation4], %s6936
        %v7440 = vld [vmem:[%s7439] sm:$0xff]
        %v7441 = vld [vmem:[%s7439 + $0x8] sm:$0xff]
        %v7442 = vsel %vm7343, %v7440, 0.0
        %v7443 = vsel %vm7343, %v7441, 0.0
        %s7444 = scalar_lea.vmem [#allocation4], %s6942
        %v7445 = vld [vmem:[%s7444] sm:$0xff]
        %v7446 = vld [vmem:[%s7444 + $0x8] sm:$0xff]
        %v7447 = vsel %vm7350, %v7445, %v7442
        %v7448 = vsel %vm7350, %v7446, %v7443
        %s7449 = scalar_lea.vmem [#allocation4], %s6948
        %v7450 = vld [vmem:[%s7449] sm:$0xff]
        %v7451 = vld [vmem:[%s7449 + $0x8] sm:$0xff]
        %v7452 = vsel %vm7357, %v7450, %v7447
        %v7453 = vsel %vm7357, %v7451, %v7448
        %s7454 = scalar_lea.vmem [#allocation4], %s6954
        %v7455 = vld [vmem:[%s7454] sm:$0xff]
        %v7456 = vld [vmem:[%s7454 + $0x8] sm:$0xff]
        %v7457 = vsel %vm7364, %v7455, %v7452
        %v7458 = vsel %vm7364, %v7456, %v7453
        %v7459 = vsel %vm7340, %v7457, -inf
        %v7460 = vsel %vm7340, %v7458, -inf
        %v7461 = vmax.f32 %v7459, %v7460
        %v7462 = vrot.slane %v7461, 4
        %v7463 = vmax.f32 %v7461, %v7462
        %v7464 = vrot.slane %v7463, 2
        %v7465 = vmax.f32 %v7463, %v7464
        %v7466 = vrot.slane %v7465, 1
        %v7467 = vmax.f32 %v7465, %v7466
        %v7468 = vsub.f32 %v7457, %v7467
        %v7469 = vsub.f32 %v7458, %v7467
        %v7470 = vmul.f32 %v7468, 1.442695
        %v7471 = vpow.pop %v7470
        %v7472 = vmul.f32 %v7469, 1.442695
        %v7473 = vpow.pop %v7472
        %v7474 = vsel %vm7340, %v7471, 0.0
        %v7475 = vsel %vm7340, %v7473, 0.0
        %v7476 = vadd.f32 %v7474, %v7475
        %v7477 = vrot.slane %v7476, 4
        %v7478 = vadd.f32 %v7476, %v7477
        %v7479 = vrot.slane %v7478, 2
        %v7480 = vadd.f32 %v7478, %v7479
        %v7481 = vrot.slane %v7480, 1
        %v7482 = vadd.f32 %v7480, %v7481
        %v7483 = vrcp.pop %v7482
        %v7484 = vmul.f32 %v7471, %v7483
        %v7485 = vmul.f32 %v7473, %v7483
        %7486 = vxpose.xlu0.b32.start [1/16] %v7484, 128
        %7487 = vxpose.xlu0.b32.cont [2/16] %v7485, 128
        %7488 = vxpose.xlu0.b32.cont [3/16] 0.0, 128
        %7489 = vxpose.xlu0.b32.cont [4/16] 0.0, 128
        %7490 = vxpose.xlu0.b32.cont [5/16] 0.0, 128
        %7491 = vxpose.xlu0.b32.cont [6/16] 0.0, 128
        %7492 = vxpose.xlu0.b32.cont [7/16] 0.0, 128
        %7493 = vxpose.xlu0.b32.cont [8/16] 0.0, 128
        %7494 = vxpose.xlu0.b32.cont [9/16] 0.0, 128
        %7495 = vxpose.xlu0.b32.cont [10/16] 0.0, 128
        %7496 = vxpose.xlu0.b32.cont [11/16] 0.0, 128
        %7497 = vxpose.xlu0.b32.cont [12/16] 0.0, 128
        %7498 = vxpose.xlu0.b32.cont [13/16] 0.0, 128
        %7499 = vxpose.xlu0.b32.cont [14/16] 0.0, 128
        %7500 = vxpose.xlu0.b32.cont [15/16] 0.0, 128
        %7501 = vxpose.xlu0.b32.end [16/16] 0.0, 128
        %v7502 = vpop.trf.xlu0
        %v7503 = vpop.trf.xlu0
        %v7504 = vpop.trf.xlu0
        %v7505 = vpop.trf.xlu0
        %v7506 = vpop.trf.xlu0
        %v7507 = vpop.trf.xlu0
        %v7508 = vpop.trf.xlu0
        %v7509 = vpop.trf.xlu0
        %v7510 = vpop.trf.xlu0
        %v7511 = vpop.trf.xlu0
        %v7512 = vpop.trf.xlu0
        %v7513 = vpop.trf.xlu0
        %v7514 = vpop.trf.xlu0
        %v7515 = vpop.trf.xlu0
        %v7516 = vpop.trf.xlu0
        %v7517 = vpop.trf.xlu0
        %vm7518 = vcmask 130048
        %v7520 = vsel %vm7518, %v7502, 0
        %7522 = vmatprep.subr.mxu0 0.0
        %7523 = vmatpush1.msra.mxu0 %v7338
        %7524 = vmatprep.subr.mxu0 0.0
        %7525 = vmatpush1.msra.mxu0 %v7339
        %7526 = vmatprep.subr.mxu0 0.0
        %7527 = vmatpush1.msra.mxu0 0.0
        %7528 = vmatprep.subr.mxu0 0.0
        %7529 = vmatpush1.msra.mxu0 0.0
        %7530 = vmatprep.subr.mxu0 0.0
        %7531 = vmatpush1.msra.mxu0 0.0
        %7532 = vmatprep.subr.mxu0 0.0
        %7533 = vmatpush1.msra.mxu0 0.0
        %7534 = vmatprep.subr.mxu0 0.0
        %7535 = vmatpush1.msra.mxu0 0.0
        %7536 = vmatprep.subr.mxu0 0.0
        %7537 = vmatpush1.msra.mxu0 0.0
        %7538 = vmatprep.subr.mxu0 0.0
        %7539 = vmatpush1.msra.mxu0 0.0
        %7540 = vmatprep.subr.mxu0 0.0
        %7541 = vmatpush1.msra.mxu0 0.0
        %7542 = vmatprep.subr.mxu0 0.0
        %7543 = vmatpush1.msra.mxu0 0.0
        %7544 = vmatprep.subr.mxu0 0.0
        %7545 = vmatpush1.msra.mxu0 0.0
        %7546 = vmatprep.subr.mxu0 0.0
        %7547 = vmatpush1.msra.mxu0 0.0
        %7548 = vmatprep.subr.mxu0 0.0
        %7549 = vmatpush1.msra.mxu0 0.0
        %7550 = vmatprep.subr.mxu0 0.0
        %7551 = vmatpush1.msra.mxu0 0.0
        %7552 = vmatprep.subr.mxu0 0.0
        %7553 = vmatpush1.msra.mxu0 0.0
        %7554 = vmatprep.subr.mxu0 0.0
        %7555 = vmatpush1.msra.mxu0 0.0
        %7556 = vmatprep.subr.mxu0 0.0
        %7557 = vmatpush1.msra.mxu0 0.0
        %7558 = vmatprep.subr.mxu0 0.0
        %7559 = vmatpush1.msra.mxu0 0.0
        %7560 = vmatprep.subr.mxu0 0.0
        %7561 = vmatpush1.msra.mxu0 0.0
        %7562 = vmatprep.subr.mxu0 0.0
        %7563 = vmatpush1.msra.mxu0 0.0
        %7564 = vmatprep.subr.mxu0 0.0
        %7565 = vmatpush1.msra.mxu0 0.0
        %7566 = vmatprep.subr.mxu0 0.0
        %7567 = vmatpush1.msra.mxu0 0.0
        %7568 = vmatprep.subr.mxu0 0.0
        %7569 = vmatpush1.msra.mxu0 0.0
        %7570 = vmatprep.subr.mxu0 0.0
        %7571 = vmatpush1.msra.mxu0 0.0
        %7572 = vmatprep.subr.mxu0 0.0
        %7573 = vmatpush1.msra.mxu0 0.0
        %7574 = vmatprep.subr.mxu0 0.0
        %7575 = vmatpush1.msra.mxu0 0.0
        %7576 = vmatprep.subr.mxu0 0.0
        %7577 = vmatpush1.msra.mxu0 0.0
        %7578 = vmatprep.subr.mxu0 0.0
        %7579 = vmatpush1.msra.mxu0 0.0
        %7580 = vmatprep.subr.mxu0 0.0
        %7581 = vmatpush1.msra.mxu0 0.0
        %7582 = vmatprep.subr.mxu0 0.0
        %7583 = vmatpush1.msra.mxu0 0.0
        %7584 = vmatprep.subr.mxu0 0.0
        %7585 = vmatpush1.msra.mxu0 0.0
        %7586 = vmatprep.mubr.f32.mxu0 0.0
        %7587 = vmatmul.mubr.f32.gmra.mrb[0].mxu0 %v7520
        %v7588 = vpop.f32.mrb[0].mxu0
        %v7589 = vadd.f32 0.0, %v7588
        %v7590 = vpop.f32.mrb[0].mxu0
        %7591 = vdwg.mxu0
        %7592 = vst [vmem:[%s731] sm:$0xf] 0.0
        %vm7593 = vcmask 125952
        %7594 = vst.msk [vmem:[%s731] sm:$0xf] %vm7593, %v7589
        %7596 = vset.pattern.permute.xlu0 0
        %7597 = vperm.xlu0 %7596, %v6966
        %v7598 = vpop.permute.xlu0 %7597
        %v7600 = vsel %vm7343, %v7598, 0.0
        %7602 = vset.pattern.permute.xlu0 0
        %7603 = vperm.xlu0 %7602, %v6973
        %v7604 = vpop.permute.xlu0 %7603
        %v7606 = vsel %vm7350, %v7604, %v7600
        %7608 = vset.pattern.permute.xlu0 0
        %7609 = vperm.xlu0 %7608, %v6980
        %v7610 = vpop.permute.xlu0 %7609
        %v7612 = vsel %vm7357, %v7610, %v7606
        %7614 = vset.pattern.permute.xlu0 0
        %7615 = vperm.xlu0 %7614, %v6987
        %v7616 = vpop.permute.xlu0 %7615
        %v7618 = vsel %vm7364, %v7616, %v7612
        %7620 = vset.pattern.permute.xlu0 0
        %7621 = vperm.xlu0 %7620, %v6741
        %v7622 = vpop.permute.xlu0 %7621
        %7625 = vset.pattern.permute.xlu0 0
        %7626 = vperm.xlu0 %7625, %v6742
        %v7627 = vpop.permute.xlu0 %7626
        %7630 = vset.pattern.permute.xlu0 0
        %7631 = vperm.xlu0 %7630, %v6743
        %v7632 = vpop.permute.xlu0 %7631
        %7635 = vset.pattern.permute.xlu0 0
        %7636 = vperm.xlu0 %7635, %v6744
        %v7637 = vpop.permute.xlu0 %7636
        %7640 = vset.pattern.permute.xlu0 0
        %7641 = vperm.xlu0 %7640, %v6745
        %v7642 = vpop.permute.xlu0 %7641
        %7645 = vset.pattern.permute.xlu0 0
        %7646 = vperm.xlu0 %7645, %v6746
        %v7647 = vpop.permute.xlu0 %7646
        %7650 = vset.pattern.permute.xlu0 0
        %7651 = vperm.xlu0 %7650, %v6747
        %v7652 = vpop.permute.xlu0 %7651
        %7655 = vset.pattern.permute.xlu0 0
        %7656 = vperm.xlu0 %7655, %v6748
        %v7657 = vpop.permute.xlu0 %7656
        %v7659 = vadd.f32 %v7291, %v7622
        %v7660 = vadd.f32 %v7296, %v7627
        %v7661 = vadd.f32 %v7301, %v7632
        %v7662 = vadd.f32 %v7306, %v7637
        %v7663 = vadd.f32 %v7311, %v7642
        %v7664 = vadd.f32 %v7316, %v7647
        %v7665 = vadd.f32 %v7321, %v7652
        %v7666 = vadd.f32 %v7326, %v7657
        %v7667 = vlaneseq
        %v7668 = vshrl.u32 %v7667, 7
        %v7669 = vsub.s32 0, %v7668
        %v7670 = vrot.slane %v7618, %v7669
        %v7671 = vadd.f32 %v7659, %v7670
        %v7672 = vadd.f32 %v7660, %v7670
        %v7673 = vadd.f32 %v7661, %v7670
        %v7674 = vadd.f32 %v7662, %v7670
        %v7675 = vadd.f32 %v7663, %v7670
        %v7676 = vadd.f32 %v7664, %v7670
        %v7677 = vadd.f32 %v7665, %v7670
        %v7678 = vadd.f32 %v7666, %v7670
        %7679 = vst.msk [vmem:[#allocation4 + $0x10] sm:$0xff] %vm7340, %v7671
        %7680 = vst.msk [vmem:[#allocation4 + $0x18] sm:$0xff] %vm7340, %v7672
        %7681 = vst.msk [vmem:[#allocation4 + $0x20] sm:$0xff] %vm7340, %v7673
        %7682 = vst.msk [vmem:[#allocation4 + $0x28] sm:$0xff] %vm7340, %v7674
        %7683 = vst.msk [vmem:[#allocation4 + $0x30] sm:$0xff] %vm7340, %v7675
        %7684 = vst.msk [vmem:[#allocation4 + $0x38] sm:$0xff] %vm7340, %v7676
        %7685 = vst.msk [vmem:[#allocation4 + $0x40] sm:$0xff] %vm7340, %v7677
        %7686 = vst.msk [vmem:[#allocation4 + $0x48] sm:$0xff] %vm7340, %v7678
        %s7687 = scalar_lea.vmem [#allocation4], %s6961
        %v7688 = vld [vmem:[%s7687] sm:$0xff]
        %v7689 = vld [vmem:[%s7687 + $0x8] sm:$0xff]
        %v7690 = vsel %vm7343, %v7688, 0.0
        %v7691 = vsel %vm7343, %v7689, 0.0
        %s7692 = scalar_lea.vmem [#allocation4], %s6968
        %v7693 = vld [vmem:[%s7692] sm:$0xff]
        %v7694 = vld [vmem:[%s7692 + $0x8] sm:$0xff]
        %v7695 = vsel %vm7350, %v7693, %v7690
        %v7696 = vsel %vm7350, %v7694, %v7691
        %s7697 = scalar_lea.vmem [#allocation4], %s6975
        %v7698 = vld [vmem:[%s7697] sm:$0xff]
        %v7699 = vld [vmem:[%s7697 + $0x8] sm:$0xff]
        %v7700 = vsel %vm7357, %v7698, %v7695
        %v7701 = vsel %vm7357, %v7699, %v7696
        %s7702 = scalar_lea.vmem [#allocation4], %s6982
        %v7703 = vld [vmem:[%s7702] sm:$0xff]
        %v7704 = vld [vmem:[%s7702 + $0x8] sm:$0xff]
        %v7705 = vsel %vm7364, %v7703, %v7700
        %v7706 = vsel %vm7364, %v7704, %v7701
        %v7707 = vsel %vm7340, %v7705, -inf
        %v7708 = vsel %vm7340, %v7706, -inf
        %v7709 = vmax.f32 %v7707, %v7708
        %v7710 = vrot.slane %v7709, 4
        %v7711 = vmax.f32 %v7709, %v7710
        %v7712 = vrot.slane %v7711, 2
        %v7713 = vmax.f32 %v7711, %v7712
        %v7714 = vrot.slane %v7713, 1
        %v7715 = vmax.f32 %v7713, %v7714
        %v7716 = vsub.f32 %v7705, %v7715
        %v7717 = vsub.f32 %v7706, %v7715
        %v7718 = vmul.f32 %v7716, 1.442695
        %v7719 = vpow.pop %v7718
        %v7720 = vmul.f32 %v7717, 1.442695
        %v7721 = vpow.pop %v7720
        %v7722 = vsel %vm7340, %v7719, 0.0
        %v7723 = vsel %vm7340, %v7721, 0.0
        %v7724 = vadd.f32 %v7722, %v7723
        %v7725 = vrot.slane %v7724, 4
        %v7726 = vadd.f32 %v7724, %v7725
        %v7727 = vrot.slane %v7726, 2
        %v7728 = vadd.f32 %v7726, %v7727
        %v7729 = vrot.slane %v7728, 1
        %v7730 = vadd.f32 %v7728, %v7729
        %v7731 = vrcp.pop %v7730
        %v7732 = vmul.f32 %v7719, %v7731
        %v7733 = vmul.f32 %v7721, %v7731
        %7734 = vxpose.xlu0.b32.start [1/16] %v7732, 128
        %7735 = vxpose.xlu0.b32.cont [2/16] %v7733, 128
        %7736 = vxpose.xlu0.b32.cont [3/16] 0.0, 128
        %7737 = vxpose.xlu0.b32.cont [4/16] 0.0, 128
        %7738 = vxpose.xlu0.b32.cont [5/16] 0.0, 128
        %7739 = vxpose.xlu0.b32.cont [6/16] 0.0, 128
        %7740 = vxpose.xlu0.b32.cont [7/16] 0.0, 128
        %7741 = vxpose.xlu0.b32.cont [8/16] 0.0, 128
        %7742 = vxpose.xlu0.b32.cont [9/16] 0.0, 128
        %7743 = vxpose.xlu0.b32.cont [10/16] 0.0, 128
        %7744 = vxpose.xlu0.b32.cont [11/16] 0.0, 128
        %7745 = vxpose.xlu0.b32.cont [12/16] 0.0, 128
        %7746 = vxpose.xlu0.b32.cont [13/16] 0.0, 128
        %7747 = vxpose.xlu0.b32.cont [14/16] 0.0, 128
        %7748 = vxpose.xlu0.b32.cont [15/16] 0.0, 128
        %7749 = vxpose.xlu0.b32.end [16/16] 0.0, 128
        %v7750 = vpop.trf.xlu0
        %v7751 = vpop.trf.xlu0
        %v7752 = vpop.trf.xlu0
        %v7753 = vpop.trf.xlu0
        %v7754 = vpop.trf.xlu0
        %v7755 = vpop.trf.xlu0
        %v7756 = vpop.trf.xlu0
        %v7757 = vpop.trf.xlu0
        %v7758 = vpop.trf.xlu0
        %v7759 = vpop.trf.xlu0
        %v7760 = vpop.trf.xlu0
        %v7761 = vpop.trf.xlu0
        %v7762 = vpop.trf.xlu0
        %v7763 = vpop.trf.xlu0
        %v7764 = vpop.trf.xlu0
        %v7765 = vpop.trf.xlu0
        %v7767 = vsel %vm7518, %v7750, 0
        %7769 = vmatprep.subr.mxu0 0.0
        %7770 = vmatpush1.msra.mxu0 %v7338
        %7771 = vmatprep.subr.mxu0 0.0
        %7772 = vmatpush1.msra.mxu0 %v7339
        %7773 = vmatprep.subr.mxu0 0.0
        %7774 = vmatpush1.msra.mxu0 0.0
        %7775 = vmatprep.subr.mxu0 0.0
        %7776 = vmatpush1.msra.mxu0 0.0
        %7777 = vmatprep.subr.mxu0 0.0
        %7778 = vmatpush1.msra.mxu0 0.0
        %7779 = vmatprep.subr.mxu0 0.0
        %7780 = vmatpush1.msra.mxu0 0.0
        %7781 = vmatprep.subr.mxu0 0.0
        %7782 = vmatpush1.msra.mxu0 0.0
        %7783 = vmatprep.subr.mxu0 0.0
        %7784 = vmatpush1.msra.mxu0 0.0
        %7785 = vmatprep.subr.mxu0 0.0
        %7786 = vmatpush1.msra.mxu0 0.0
        %7787 = vmatprep.subr.mxu0 0.0
        %7788 = vmatpush1.msra.mxu0 0.0
        %7789 = vmatprep.subr.mxu0 0.0
        %7790 = vmatpush1.msra.mxu0 0.0
        %7791 = vmatprep.subr.mxu0 0.0
        %7792 = vmatpush1.msra.mxu0 0.0
        %7793 = vmatprep.subr.mxu0 0.0
        %7794 = vmatpush1.msra.mxu0 0.0
        %7795 = vmatprep.subr.mxu0 0.0
        %7796 = vmatpush1.msra.mxu0 0.0
        %7797 = vmatprep.subr.mxu0 0.0
        %7798 = vmatpush1.msra.mxu0 0.0
        %7799 = vmatprep.subr.mxu0 0.0
        %7800 = vmatpush1.msra.mxu0 0.0
        %7801 = vmatprep.subr.mxu0 0.0
        %7802 = vmatpush1.msra.mxu0 0.0
        %7803 = vmatprep.subr.mxu0 0.0
        %7804 = vmatpush1.msra.mxu0 0.0
        %7805 = vmatprep.subr.mxu0 0.0
        %7806 = vmatpush1.msra.mxu0 0.0
        %7807 = vmatprep.subr.mxu0 0.0
        %7808 = vmatpush1.msra.mxu0 0.0
        %7809 = vmatprep.subr.mxu0 0.0
        %7810 = vmatpush1.msra.mxu0 0.0
        %7811 = vmatprep.subr.mxu0 0.0
        %7812 = vmatpush1.msra.mxu0 0.0
        %7813 = vmatprep.subr.mxu0 0.0
        %7814 = vmatpush1.msra.mxu0 0.0
        %7815 = vmatprep.subr.mxu0 0.0
        %7816 = vmatpush1.msra.mxu0 0.0
        %7817 = vmatprep.subr.mxu0 0.0
        %7818 = vmatpush1.msra.mxu0 0.0
        %7819 = vmatprep.subr.mxu0 0.0
        %7820 = vmatpush1.msra.mxu0 0.0
        %7821 = vmatprep.subr.mxu0 0.0
        %7822 = vmatpush1.msra.mxu0 0.0
        %7823 = vmatprep.subr.mxu0 0.0
        %7824 = vmatpush1.msra.mxu0 0.0
        %7825 = vmatprep.subr.mxu0 0.0
        %7826 = vmatpush1.msra.mxu0 0.0
        %7827 = vmatprep.subr.mxu0 0.0
        %7828 = vmatpush1.msra.mxu0 0.0
        %7829 = vmatprep.subr.mxu0 0.0
        %7830 = vmatpush1.msra.mxu0 0.0
        %7831 = vmatprep.subr.mxu0 0.0
        %7832 = vmatpush1.msra.mxu0 0.0
        %7833 = vmatprep.mubr.f32.mxu0 0.0
        %7834 = vmatmul.mubr.f32.gmra.mrb[0].mxu0 %v7767
        %v7835 = vpop.f32.mrb[0].mxu0
        %v7836 = vadd.f32 0.0, %v7835
        %v7837 = vpop.f32.mrb[0].mxu0
        %7838 = vdwg.mxu0
        %s7839 = scalar_lea.vmem %s731, 4 [#allocation22]
        %7840 = vst [vmem:[%s7839] sm:$0xf] 0.0
        %7841 = vst.msk [vmem:[%s7839] sm:$0xf] %vm7593, %v7836
        %s7842 = sand.u32 %s446, 1
        %s7843 = scalar_lea.sflag [#allocation10], %s7842
        %s7844 = sand.u32 %s446, 1
        %s7845 = smul.addr %s7844, 8
        %s7846 = scalar_lea.vmem [#allocation22], %s7845
        // Predicated region
        $region125: #{tpu_custom_call.1} parent=91 // pred_check
          %p7847 = pneg %p456
        $region126: #{tpu_custom_call.1} parent=91 // pred_check_branch
          %7849 = sbr.rel (%p7847) target = $region128
        $region127: #{tpu_custom_call.1} parent=91 // pred_region
          %s7850 = smul.u32 2, %s50
          %s7852 = ssub.s32 128, 128
          %7853 = vsyncadd %s7843, %s7852
          %s7854 = smul.addr %s7850, 64
          %s7855 = scalar_lea.hbm %s19, %s7854
          %s7856 = sshll.u32 %s7846, 4
          %s7857 = int_to_ptr.vmem [resolvable:$true] %s7856
          %7862 = dma.vmem_to_hbm [thread:$0]  %s7857, 128, %s7855, %s7843, 64, 64, 4
        $region128: #{tpu_custom_call.1} parent=91 // pred_fallthru
          _
      $region92: #{tpu_custom_call.1} parent=5 // pred_fallthru
        _
      %p7863 = scmp.le.s32.totalorder 2, %s45
      // Predicated region
      $region129: #{tpu_custom_call.1} parent=5 // pred_check
        %p7864 = pneg %p7863
      $region130: #{tpu_custom_call.1} parent=5 // pred_check_branch
        %7866 = sbr.rel (%p7864) target = $region132
      $region131: #{tpu_custom_call.1} parent=5 // pred_region
        %s7867 = ssub.s32 %s45, 2
        // Predicated region
        $region133: #{tpu_custom_call.1} parent=131 // pred_check
          %p7868 = pneg %p462
        $region134: #{tpu_custom_call.1} parent=131 // pred_check_branch
          %7870 = sbr.rel (%p7868) target = $region136
        $region135: #{tpu_custom_call.1} parent=131 // pred_region
          %s7871 = sand.u32 %s447, 1
          %s7872 = scalar_lea.sflag [#allocation10], %s7871
          %s7873 = sand.u32 %s447, 1
          %s7874 = smul.addr %s7873, 8
          %s7875 = scalar_lea.vmem [#allocation22], %s7874
          %7876 = dma.done %s7872, 128
        $region136: #{tpu_custom_call.1} parent=131 // pred_fallthru
          _
      $region132: #{tpu_custom_call.1} parent=5 // pred_fallthru
        _
    $region6: #{tpu_custom_call.1} parent=1 // loop_footer
      %s49 = sadd.s32 1, %s45
    $region7: #{tpu_custom_call.1} parent=1 // loop_footer_branch
      %44 = sbr.rel target = $region3
    $region8: #{tpu_custom_call.1} parent=1 // loop_exit
      _
    %7877 = vsyncpa [#allocation9], 1
    %s7878 = scalar_lea.sflag [#allocation9], 1
    %7879 = vsyncpa %s7878, 1
    %7880 = vsyncpa [#allocation12], 1
    %s7881 = scalar_lea.sflag [#allocation12], 1
    %7882 = vsyncpa %s7881, 1
    %7883 = vsyncpa [#allocation15], 1
    %7884 = vsyncpa [#allocation18], 1
    %7885 = vsyncpa [#allocation21], 1
    %7886 = vsyncpa [#allocation10], 1
    %s7887 = scalar_lea.sflag [#allocation10], 1
    %7888 = vsyncpa %s7887, 1

</llo_original>
